<compile_context>
chip_gen: v7x
topology: tpu7x:2x2x1
jax: 0.10.0
libtpu: 0.0.40
codegen_flags: <defaults>
</compile_context>

<pallas_src>
import functools

import numpy as np
import jax
import jax.numpy as jnp
from jax import lax
from jax.experimental import pallas as pl
from jax.experimental.pallas import tpu as pltpu

LANE = 128
SUB = 8


def _round_up(x, m):
    return (x + m - 1) // m * m


def _pick_tile(total, cap, quantum=LANE):
    """Largest multiple of `quantum` that divides `total` and is <= cap."""
    t = min(total, max(cap, quantum))
    t = max((t // quantum) * quantum, quantum)
    while total % t != 0:
        t -= quantum
    return max(t, quantum)


# ----------------------------------------------------------------------------
# Kernel 1: fused ASPP branches with row tiling + manual halo-window DMA.
# Grid = (N, T, K): image, row tile (parallel), Cin tile (reduction, last).
# Per step: DMA rows [t*TH, t*TH + THH) of the padded image for Cin tile k
# into a double-buffered VMEM window, then 28 shifted-window matmuls feed
# four f32 accumulators; per-(t,k) channel sums feed the pool branch.
# ----------------------------------------------------------------------------
def _branches_kernel(xp_hbm, w1_ref, w2_ref, w3_ref, w4_ref,
                     b1_ref, b2_ref, b3_ref, b4_ref,
                     o1_ref, o2_ref, o3_ref, o4_ref, osum_ref,
                     win, sem, acc1, acc2, acc3, acc4,
                     *, TH, THH, W, rmax, rates, K):
    n = pl.program_id(0)
    t = pl.program_id(1)
    k = pl.program_id(2)
    slot = k % 2
    TW = TH * W
    TC = win.shape[-1]

    def dma(kk, s):
        # xp_hbm is (N*K, Hpad, Wp, TC); one halo window per (image, Cin tile).
        return pltpu.make_async_copy(
            xp_hbm.at[n * K + kk, pl.ds(t * TH, THH)],
            win.at[pl.ds(s * THH, THH)],
            sem.at[s])

    @pl.when(k == 0)
    def _prime():
        dma(k, slot).start()            # prime the current window
        acc1[...] = jnp.zeros_like(acc1)
        acc2[...] = jnp.zeros_like(acc2)
        acc3[...] = jnp.zeros_like(acc3)
        acc4[...] = jnp.zeros_like(acc4)

    dma(k, slot).wait()                 # wait for the current window

    @pl.when(k + 1 < K)
    def _prefetch():                    # overlap next Cin tile's DMA
        dma(k + 1, 1 - slot).start()

    base = slot * THH

    # Interior (unpadded) window rows/cols, flattened to pixels.
    x_in = win[pl.ds(base + rmax, TH), pl.ds(rmax, W), :].reshape(TW, TC)

    # 1x1-conv branch.
    acc1[...] += jnp.dot(x_in, w1_ref[...], preferred_element_type=jnp.float32)

    # Per-channel sums for the global-average-pool branch (f32 accumulation
    # inside the reduction, no f32 copy of the tile).
    osum_ref[...] = jnp.sum(x_in, axis=0, keepdims=True, dtype=jnp.float32)

    # Three dilated 3x3 branches: 9 shifted-window matmuls each.
    for w_ref, acc, r in ((w2_ref, acc2, rates[0]),
                          (w3_ref, acc3, rates[1]),
                          (w4_ref, acc4, rates[2])):
        off = rmax - r
        for ky in range(3):
            row0 = base + off + ky * r
            for kx in range(3):
                col0 = off + kx * r
                patch = win[pl.ds(row0, TH), pl.ds(col0, W), :]
                acc[...] += jnp.dot(patch.reshape(TW, TC), w_ref[ky, kx],
                                    preferred_element_type=jnp.float32)

    @pl.when(k == K - 1)
    def _finalize():
        # BN scale is folded into the weights; epilogue = +bias, ReLU.
        o1_ref[...] = jnp.maximum(acc1[...] + b1_ref[...], 0.0).astype(o1_ref.dtype)
        o2_ref[...] = jnp.maximum(acc2[...] + b2_ref[...], 0.0).astype(o2_ref.dtype)
        o3_ref[...] = jnp.maximum(acc3[...] + b3_ref[...], 0.0).astype(o3_ref.dtype)
        o4_ref[...] = jnp.maximum(acc4[...] + b4_ref[...], 0.0).astype(o4_ref.dtype)


# ----------------------------------------------------------------------------
# Kernel 2: row-tiled matmul + bias + ReLU (pooled 1x1 conv, M = batch).
# ----------------------------------------------------------------------------
def _matmul_bias_relu_kernel(x_ref, w_ref, b_ref, o_ref):
    acc = jnp.dot(x_ref[...], w_ref[...], preferred_element_type=jnp.float32)
    o_ref[...] = jnp.maximum(acc + b_ref[...], 0.0).astype(o_ref.dtype)


def conv1x1_bias_relu(x2d, w, bias2d, *, out_dtype, tile_rows=512):
    """x2d: (P, Cin), w: (Cin, Cout), bias2d: (1, Cout) -> (P, Cout)."""
    P, Cin = x2d.shape
    Cout = w.shape[1]
    tm = P if P <= tile_rows else _round_up(tile_rows, SUB)
    return pl.pallas_call(
        _matmul_bias_relu_kernel,
        out_shape=jax.ShapeDtypeStruct((P, Cout), out_dtype),
        grid=(pl.cdiv(P, tm),),
        in_specs=[
            pl.BlockSpec((tm, Cin), lambda i: (i, 0)),
            pl.BlockSpec((Cin, Cout), lambda i: (0, 0)),
            pl.BlockSpec((1, Cout), lambda i: (0, 0)),
        ],
        out_specs=pl.BlockSpec((tm, Cout), lambda i: (i, 0)),
        compiler_params=pltpu.CompilerParams(dimension_semantics=("parallel",)),
    )(x2d, w, bias2d)


# ----------------------------------------------------------------------------
# Kernel 3: fused concat + projection 1x1 conv + bias + ReLU.
# The pooled branch is pre-folded into the per-image bias row, so the kernel
# is just 4 matmuls + epilogue per pixel tile.
# ----------------------------------------------------------------------------
def _project_kernel(x1_ref, x2_ref, x3_ref, x4_ref, w_ref, b_ref, o_ref):
    acc = jnp.dot(x1_ref[...], w_ref[0], preferred_element_type=jnp.float32)
    acc += jnp.dot(x2_ref[...], w_ref[1], preferred_element_type=jnp.float32)
    acc += jnp.dot(x3_ref[...], w_ref[2], preferred_element_type=jnp.float32)
    acc += jnp.dot(x4_ref[...], w_ref[3], preferred_element_type=jnp.float32)
    o_ref[...] = jnp.maximum(acc + b_ref[...], 0.0).astype(o_ref.dtype)


# ----------------------------------------------------------------------------
# ASPP forward (wrapper: NCHW in / NCHW out, like the PyTorch module)
# ----------------------------------------------------------------------------
def aspp_forward(x_nchw, p, rates, *, compute_dtype=jnp.bfloat16,
                 cin_tile=512, row_tile=16, proj_tile=2048):
    N, Cin, H, W = x_nchw.shape
    Cout = p["w1"].shape[-1]
    rmax = max(rates)
    HW = H * W

    # Lane-dense channel padding (padded channels are exactly zero everywhere).
    Cinp = _round_up(Cin, LANE)
    Coutp = _round_up(Cout, LANE)
    TC = _pick_tile(Cinp, cin_tile)
    K = Cinp // TC

    # Row tiling (multiples of 8 so TH*W stays sublane-aligned).
    TH = _round_up(min(max(row_tile, 1), H), SUB)
    T = -(-H // TH)                       # number of row tiles
    THH = _round_up(TH + 2 * rmax, SUB)   # halo window height
    Hpad = (T - 1) * TH + THH             # padded image height
    Wp = _round_up(W + 2 * rmax, SUB)     # padded image width
    HWpad = T * TH * W
    TW = TH * W

    # ---- weight prep: fold BN scale into conv weights, pad, cast ----
    def fold1x1(w, s):
        wf = w.astype(jnp.float32) * s[None, :]
        return jnp.pad(wf, ((0, Cinp - Cin), (0, Coutp - Cout)))

    def fold3x3(w, s):
        wf = w.astype(jnp.float32) * s[None, None, None, :]
        return jnp.pad(wf, ((0, 0), (0, 0), (0, Cinp - Cin), (0, Coutp - Cout)))

    def padb(b):
        return jnp.pad(b, (0, Coutp - Cout)).astype(jnp.float32).reshape(1, Coutp)

    w1 = fold1x1(p["w1"], p["s1"]).astype(compute_dtype); b1 = padb(p["b1"])
    w2 = fold3x3(p["w2"], p["s2"]).astype(compute_dtype); b2 = padb(p["b2"])
    w3 = fold3x3(p["w3"], p["s3"]).astype(compute_dtype); b3 = padb(p["b3"])
    w4 = fold3x3(p["w4"], p["s4"]).astype(compute_dtype); b4 = padb(p["b4"])
    wp = fold1x1(p["wp"], p["sp"]).astype(compute_dtype); bp = padb(p["bp"])

    wproj_f = (p["wproj"].astype(jnp.float32) * p["sproj"][None, :]).reshape(5, Cout, Cout)
    wproj_f = jnp.pad(wproj_f, ((0, 0), (0, Coutp - Cout), (0, Coutp - Cout)))
    wproj_x = wproj_f[:4].astype(compute_dtype)   # for x1..x4
    wproj_pool = wproj_f[4]                       # folded into the bias (f32)
    bproj = padb(p["bproj"])

    # ---- activations: NCHW -> (N, K, H, W, TC), cast, pad spatially ----
    # TODO(synk): avoid materializing the spatial pad in HBM (fetch halos from
    # the unpadded tensor + zero-fill in VMEM); needs dynamic-size DMAs.
    x = x_nchw.astype(compute_dtype)
    x = jnp.pad(x, ((0, 0), (0, Cinp - Cin), (0, 0), (0, 0)))
    x = x.reshape(N, K, TC, H, W)
    x = jnp.transpose(x, (0, 1, 3, 4, 2))
    xp = jnp.pad(x, ((0, 0), (0, 0),
                     (rmax, Hpad - H - rmax),
                     (rmax, Wp - W - rmax),
                     (0, 0)))
    xp = xp.reshape(N * K, Hpad, Wp, TC)

    # ---- fused branches kernel ----
    itemsize = np.dtype(compute_dtype).itemsize
    vmem_est = (2 * THH * Wp * TC * itemsize                       # halo window
                + 2 * (TC * Coutp + 27 * TC * Coutp) * itemsize    # weights (2-buf)
                + 4 * TW * Coutp * 4                               # f32 accumulators
                + 2 * 4 * TW * Coutp * itemsize                    # outputs (2-buf)
                + 8 * Coutp * 4 + 4 * TC * 4)
    vmem_limit = int(min(100 * 2**20, max(32 * 2**20, 2 * vmem_est)))

    kern = functools.partial(_branches_kernel, TH=TH, THH=THH, W=W, rmax=rmax,
                             rates=tuple(rates), K=K)
    x1, x2, x3, x4, osum = pl.pallas_call(
        kern,
        out_shape=(
            jax.ShapeDtypeStruct((N, HWpad, Coutp), compute_dtype),
            jax.ShapeDtypeStruct((N, HWpad, Coutp), compute_dtype),
            jax.ShapeDtypeStruct((N, HWpad, Coutp), compute_dtype),
            jax.ShapeDtypeStruct((N, HWpad, Coutp), compute_dtype),
            jax.ShapeDtypeStruct((N * T, 1, Cinp), jnp.float32),
        ),
        grid=(N, T, K),
        in_specs=[
            pl.BlockSpec(memory_space=pl.ANY),                             # xp (HBM)
            pl.BlockSpec((TC, Coutp), lambda n, t, k: (k, 0)),             # w1
            pl.BlockSpec((3, 3, TC, Coutp), lambda n, t, k: (0, 0, k, 0)),  # w2
            pl.BlockSpec((3, 3, TC, Coutp), lambda n, t, k: (0, 0, k, 0)),  # w3
            pl.BlockSpec((3, 3, TC, Coutp), lambda n, t, k: (0, 0, k, 0)),  # w4
            pl.BlockSpec((1, Coutp), lambda n, t, k: (0, 0)),              # b1
            pl.BlockSpec((1, Coutp), lambda n, t, k: (0, 0)),              # b2
            pl.BlockSpec((1, Coutp), lambda n, t, k: (0, 0)),              # b3
            pl.BlockSpec((1, Coutp), lambda n, t, k: (0, 0)),              # b4
        ],
        out_specs=(
            pl.BlockSpec((pl.Squeezed(), TW, Coutp), lambda n, t, k: (n, t, 0)),
            pl.BlockSpec((pl.Squeezed(), TW, Coutp), lambda n, t, k: (n, t, 0)),
            pl.BlockSpec((pl.Squeezed(), TW, Coutp), lambda n, t, k: (n, t, 0)),
            pl.BlockSpec((pl.Squeezed(), TW, Coutp), lambda n, t, k: (n, t, 0)),
            pl.BlockSpec((pl.Squeezed(), 1, TC), lambda n, t, k: (n * T + t, 0, k)),
        ),
        scratch_shapes=[
            pltpu.VMEM((2 * THH, Wp, TC), compute_dtype),   # double-buffered halo window
            pltpu.SemaphoreType.DMA((2,)),
        ] + [pltpu.VMEM((TW, Coutp), jnp.float32) for _ in range(4)],
        compiler_params=pltpu.CompilerParams(
            dimension_semantics=("parallel", "parallel", "arbitrary"),
            vmem_limit_bytes=vmem_limit),
    )(xp, w1, w2, w3, w4, b1, b2, b3, b4)

    # ---- pooled branch: mean -> 1x1 conv + bias + ReLU (tiny) ----
    xsum = osum.reshape(N, T, Cinp).sum(axis=1)
    pooled_mean = (xsum * (1.0 / HW)).astype(compute_dtype)
    pooled = conv1x1_bias_relu(pooled_mean, wp, bp, out_dtype=compute_dtype)

    # Fold the pooled branch into a per-image projection bias row (bilinear
    # upsample of a 1x1 map == broadcast); removes the M=1 dot from kernel 3.
    proj_bias = bproj + jnp.dot(pooled.astype(jnp.float32), wproj_pool,
                                preferred_element_type=jnp.float32)
    proj_bias = proj_bias.reshape(N, 1, Coutp)

    # ---- fused concat + projection ----
    TP = min(_round_up(proj_tile, SUB), HWpad)
    proj = pl.pallas_call(
        _project_kernel,
        out_shape=jax.ShapeDtypeStruct((N, HWpad, Coutp), compute_dtype),
        grid=(N, pl.cdiv(HWpad, TP)),
        in_specs=[
            pl.BlockSpec((pl.Squeezed(), TP, Coutp), lambda n, s: (n, s, 0)),
            pl.BlockSpec((pl.Squeezed(), TP, Coutp), lambda n, s: (n, s, 0)),
            pl.BlockSpec((pl.Squeezed(), TP, Coutp), lambda n, s: (n, s, 0)),
            pl.BlockSpec((pl.Squeezed(), TP, Coutp), lambda n, s: (n, s, 0)),
            pl.BlockSpec((4, Coutp, Coutp), lambda n, s: (0, 0, 0)),
            pl.BlockSpec((pl.Squeezed(), 1, Coutp), lambda n, s: (n, 0, 0)),
        ],
        out_specs=pl.BlockSpec((pl.Squeezed(), TP, Coutp), lambda n, s: (n, s, 0)),
        compiler_params=pltpu.CompilerParams(
            dimension_semantics=("parallel", "parallel")),
    )(x1, x2, x3, x4, wproj_x, proj_bias)

    # Crop padded rows/channels and return NCHW (dtype = compute_dtype).
    out = proj.reshape(N, T * TH, W, Coutp)[:, :H, :, :Cout]
    return jnp.transpose(out, (0, 3, 1, 2))


# ----------------------------------------------------------------------------
# Deterministic parameter init (conv weights + folded eval-mode BN scale/bias)
# ----------------------------------------------------------------------------
def _make_bn(key, c, eps=1e-5):
    k1, k2, k3, k4 = jax.random.split(key, 4)
    gamma = jax.random.uniform(k1, (c,), jnp.float32, 0.5, 1.5)
    beta = jax.random.normal(k2, (c,), jnp.float32) * 0.1
    mean = jax.random.normal(k3, (c,), jnp.float32) * 0.1
    var = jax.random.uniform(k4, (c,), jnp.float32, 0.5, 1.5)
    scale = gamma / jnp.sqrt(var + eps)
    bias = beta - mean * scale
    return scale, bias


def init_params(key, cin, cout):
    ks = jax.random.split(key, 12)
    p = {}
    p["w1"] = jax.random.normal(ks[0], (cin, cout), jnp.float32) * 0.1
    p["s1"], p["b1"] = _make_bn(ks[1], cout)
    p["w2"] = jax.random.normal(ks[2], (3, 3, cin, cout), jnp.float32) * 0.1
    p["s2"], p["b2"] = _make_bn(ks[3], cout)
    p["w3"] = jax.random.normal(ks[4], (3, 3, cin, cout), jnp.float32) * 0.1
    p["s3"], p["b3"] = _make_bn(ks[5], cout)
    p["w4"] = jax.random.normal(ks[6], (3, 3, cin, cout), jnp.float32) * 0.1
    p["s4"], p["b4"] = _make_bn(ks[7], cout)
    p["wp"] = jax.random.normal(ks[8], (cin, cout), jnp.float32) * 0.1
    p["sp"], p["bp"] = _make_bn(ks[9], cout)
    p["wproj"] = jax.random.normal(ks[10], (5 * cout, cout), jnp.float32) * 0.1
    p["sproj"], p["bproj"] = _make_bn(ks[11], cout)
    return p


# ----------------------------------------------------------------------------
# Pure-JAX reference (lax conv, f32) for correctness checking
# ----------------------------------------------------------------------------
def reference_aspp(x_nchw, p, rates):
    x = jnp.transpose(x_nchw, (0, 2, 3, 1)).astype(jnp.float32)

    def cbr(inp, w, s, b, rate=None):
        if w.ndim == 2:
            w4, pad, dil = w[None, None], [(0, 0), (0, 0)], (1, 1)
        else:
            w4, pad, dil = w, [(rate, rate), (rate, rate)], (rate, rate)
        y = lax.conv_general_dilated(
            inp, w4, (1, 1), pad, rhs_dilation=dil,
            dimension_numbers=("NHWC", "HWIO", "NHWC"))
        return jnp.maximum(y * s + b, 0.0)

    x1 = cbr(x, p["w1"], p["s1"], p["b1"])
    x2 = cbr(x, p["w2"], p["s2"], p["b2"], rates[0])
    x3 = cbr(x, p["w3"], p["s3"], p["b3"], rates[1])
    x4 = cbr(x, p["w4"], p["s4"], p["b4"], rates[2])
    pooled = jnp.mean(x, axis=(1, 2), keepdims=True)
    x5 = cbr(pooled, p["wp"], p["sp"], p["bp"])
    x5 = jnp.broadcast_to(x5, x4.shape)
    xc = jnp.concatenate([x1, x2, x3, x4, x5], axis=-1)
    out = cbr(xc, p["wproj"], p["sproj"], p["bproj"])
    return jnp.transpose(out, (0, 3, 1, 2))


if __name__ == "__main__":
    rates = (6, 12, 18)
    key = jax.random.PRNGKey(0)
    k_a, k_pa, k_b, k_pb = jax.random.split(key, 4)

    # ---- Config A: batch=2, Cin=4, 16x16 (row_tile=8 -> 2 row tiles) ----
    N, Cin, H, W, Cout = 2, 4, 16, 16, 8
    x = jax.random.normal(k_a, (N, Cin, H, W), jnp.float32)
    params = init_params(k_pa, Cin, Cout)
    ref = reference_aspp(x, params, rates)

    out_f32 = jax.block_until_ready(
        aspp_forward(x, params, rates, compute_dtype=jnp.float32, row_tile=8))
    assert out_f32.shape == (N, Cout, H, W)
    np.testing.assert_allclose(np.asarray(out_f32), np.asarray(ref),
                               rtol=1e-4, atol=1e-4)

    out_bf16 = jax.block_until_ready(
        aspp_forward(x, params, rates, compute_dtype=jnp.bfloat16, row_tile=8))
    assert out_bf16.shape == (N, Cout, H, W)
    np.testing.assert_allclose(np.asarray(out_bf16.astype(jnp.float32)),
                               np.asarray(ref), rtol=5e-2, atol=5e-2)

    # ---- Config B: N=1, ragged H/W, Cin>128 so the Cin reduction has K=2
    # steps (exercises the double-buffered halo-window prefetch path). ----
    N2, Cin2, H2, W2, Cout2 = 1, 130, 12, 12, 10
    x2 = jax.random.normal(k_b, (N2, Cin2, H2, W2), jnp.float32)
    params2 = init_params(k_pb, Cin2, Cout2)
    ref2 = reference_aspp(x2, params2, rates)
    out2 = jax.block_until_ready(
        aspp_forward(x2, params2, rates, compute_dtype=jnp.float32,
                     row_tile=8, cin_tile=128))
    assert out2.shape == (N2, Cout2, H2, W2)
    np.testing.assert_allclose(np.asarray(out2), np.asarray(ref2),
                               rtol=5e-3, atol=5e-3)

    print("KERNEL_OK")
</pallas_src>

<mosaic_0001>
module attributes {stable_mosaic.version = 11 : i64} {
  func.func @_branches_kernel(%arg0: i32, %arg1: i32, %arg2: i32, %arg3: memref<2x56x56x128xf32, #tpu.memory_space<any>>, %arg4: memref<128x128xf32, #tpu.memory_space<vmem>>, %arg5: memref<3x3x128x128xf32, #tpu.memory_space<vmem>>, %arg6: memref<3x3x128x128xf32, #tpu.memory_space<vmem>>, %arg7: memref<3x3x128x128xf32, #tpu.memory_space<vmem>>, %arg8: memref<1x128xf32, #tpu.memory_space<vmem>>, %arg9: memref<1x128xf32, #tpu.memory_space<vmem>>, %arg10: memref<1x128xf32, #tpu.memory_space<vmem>>, %arg11: memref<1x128xf32, #tpu.memory_space<vmem>>, %arg12: memref<1x128x128xf32, #tpu.memory_space<vmem>>, %arg13: memref<1x128x128xf32, #tpu.memory_space<vmem>>, %arg14: memref<1x128x128xf32, #tpu.memory_space<vmem>>, %arg15: memref<1x128x128xf32, #tpu.memory_space<vmem>>, %arg16: memref<1x1x128xf32, #tpu.memory_space<vmem>>, %arg17: memref<96x56x128xf32, #tpu.memory_space<vmem>>, %arg18: memref<2x!tpu.dma_semaphore, #tpu.memory_space<semaphore_mem>>, %arg19: memref<128x128xf32, #tpu.memory_space<vmem>>, %arg20: memref<128x128xf32, #tpu.memory_space<vmem>>, %arg21: memref<128x128xf32, #tpu.memory_space<vmem>>, %arg22: memref<128x128xf32, #tpu.memory_space<vmem>>) attributes {dimension_semantics = [#tpu.dimension_semantics<parallel>, #tpu.dimension_semantics<parallel>, #tpu.dimension_semantics<arbitrary>], iteration_bounds = array<i64: 2, 2, 1>, scalar_prefetch = 0 : i64, scratch_operands = 6 : i64, tpu.core_type = #tpu.core_type<tc>, window_params = [{}, {transform_indices = @transform_1, window_bounds = array<i64: 128, 128>}, {transform_indices = @transform_2, window_bounds = array<i64: 3, 3, 128, 128>}, {transform_indices = @transform_3, window_bounds = array<i64: 3, 3, 128, 128>}, {transform_indices = @transform_4, window_bounds = array<i64: 3, 3, 128, 128>}, {pipeline_mode = #tpu.pipeline_mode<synchronous>, transform_indices = @transform_5, window_bounds = array<i64: 1, 128>}, {pipeline_mode = #tpu.pipeline_mode<synchronous>, transform_indices = @transform_6, window_bounds = array<i64: 1, 128>}, {pipeline_mode = #tpu.pipeline_mode<synchronous>, transform_indices = @transform_7, window_bounds = array<i64: 1, 128>}, {pipeline_mode = #tpu.pipeline_mode<synchronous>, transform_indices = @transform_8, window_bounds = array<i64: 1, 128>}, {transform_indices = @transform_9, window_bounds = array<i64: 1, 128, 128>}, {transform_indices = @transform_10, window_bounds = array<i64: 1, 128, 128>}, {transform_indices = @transform_11, window_bounds = array<i64: 1, 128, 128>}, {transform_indices = @transform_12, window_bounds = array<i64: 1, 128, 128>}, {transform_indices = @transform_13, window_bounds = array<i64: 1, 1, 128>}]} {
    %c2_i32 = arith.constant 2 : i32
    %c0_i32 = arith.constant 0 : i32
    %0 = arith.cmpi eq, %c2_i32, %c0_i32 : i32
    %c1_i32 = arith.constant 1 : i32
    %1 = arith.select %0, %c1_i32, %c2_i32 : i32
    %2 = arith.remsi %arg2, %1 : i32
    %c0_i32_0 = arith.constant 0 : i32
    %3 = arith.cmpi ne, %2, %c0_i32_0 : i32
    %c0_i32_1 = arith.constant 0 : i32
    %4 = arith.cmpi slt, %2, %c0_i32_1 : i32
    %c0_i32_2 = arith.constant 0 : i32
    %5 = arith.cmpi slt, %1, %c0_i32_2 : i32
    %6 = arith.xori %4, %5 : i1
    %7 = arith.andi %6, %3 : i1
    %8 = arith.addi %2, %1 : i32
    %9 = arith.select %7, %8, %2 : i32
    %c0_i32_3 = arith.constant 0 : i32
    %10 = arith.cmpi eq, %arg2, %c0_i32_3 : i32
    %11 = arith.extui %10 : i1 to i32
    %c0_i32_4 = arith.constant 0 : i32
    %12 = arith.cmpi ne, %11, %c0_i32_4 : i32
    scf.if %12 {
      %c1_i32_330 = arith.constant 1 : i32
      %305 = arith.muli %arg0, %c1_i32_330 : i32
      %306 = arith.addi %305, %arg2 : i32
      %c8_i32_331 = arith.constant 8 : i32
      %307 = arith.muli %arg1, %c8_i32_331 : i32
      %c48_i32_332 = arith.constant 48 : i32
      %308 = arith.muli %9, %c48_i32_332 : i32
      %c0_i32_333 = arith.constant 0 : i32
      %c0_i32_334 = arith.constant 0 : i32
      %309 = tpu.memref_slice %arg3[%306, %307, %c0_i32_333, %c0_i32_334] : memref<2x56x56x128xf32, #tpu.memory_space<any>> -> memref<1x48x56x128xf32, #tpu.memory_space<any>>
      %310 = tpu.memref_squeeze %309 : memref<1x48x56x128xf32, #tpu.memory_space<any>> -> memref<48x56x128xf32, #tpu.memory_space<any>>
      %c0_i32_335 = arith.constant 0 : i32
      %c0_i32_336 = arith.constant 0 : i32
      %311 = tpu.memref_slice %arg17[%308, %c0_i32_335, %c0_i32_336] : memref<96x56x128xf32, #tpu.memory_space<vmem>> -> memref<48x56x128xf32, #tpu.memory_space<vmem>>
      %312 = tpu.memref_slice %arg18[%9] : memref<2x!tpu.dma_semaphore, #tpu.memory_space<semaphore_mem>> -> memref<1x!tpu.dma_semaphore, #tpu.memory_space<semaphore_mem>>
      %313 = tpu.memref_squeeze %312 : memref<1x!tpu.dma_semaphore, #tpu.memory_space<semaphore_mem>> -> memref<!tpu.dma_semaphore, #tpu.memory_space<semaphore_mem>>
      tpu.enqueue_dma source(%310 : memref<48x56x128xf32, #tpu.memory_space<any>>) target(%311 : memref<48x56x128xf32, #tpu.memory_space<vmem>>) target_semaphore(%313 : memref<!tpu.dma_semaphore, #tpu.memory_space<semaphore_mem>>)
      %cst_337 = arith.constant 0.000000e+00 : f32
      %314 = vector.broadcast %cst_337 : f32 to vector<128x128xf32>
      %c0_338 = arith.constant 0 : index
      %c0_339 = arith.constant 0 : index
      %315 = vector.load %arg19[%c0_338, %c0_339] : memref<128x128xf32, #tpu.memory_space<vmem>>, vector<128x128xf32>
      tpu.vector_store %arg19[%c0_338, %c0_339], %314 {strides = array<i32>} : memref<128x128xf32, #tpu.memory_space<vmem>>, vector<128x128xf32>,
      %cst_340 = arith.constant 0.000000e+00 : f32
      %316 = vector.broadcast %cst_340 : f32 to vector<128x128xf32>
      %c0_341 = arith.constant 0 : index
      %c0_342 = arith.constant 0 : index
      %317 = vector.load %arg20[%c0_341, %c0_342] : memref<128x128xf32, #tpu.memory_space<vmem>>, vector<128x128xf32>
      tpu.vector_store %arg20[%c0_341, %c0_342], %316 {strides = array<i32>} : memref<128x128xf32, #tpu.memory_space<vmem>>, vector<128x128xf32>,
      %cst_343 = arith.constant 0.000000e+00 : f32
      %318 = vector.broadcast %cst_343 : f32 to vector<128x128xf32>
      %c0_344 = arith.constant 0 : index
      %c0_345 = arith.constant 0 : index
      %319 = vector.load %arg21[%c0_344, %c0_345] : memref<128x128xf32, #tpu.memory_space<vmem>>, vector<128x128xf32>
      tpu.vector_store %arg21[%c0_344, %c0_345], %318 {strides = array<i32>} : memref<128x128xf32, #tpu.memory_space<vmem>>, vector<128x128xf32>,
      %cst_346 = arith.constant 0.000000e+00 : f32
      %320 = vector.broadcast %cst_346 : f32 to vector<128x128xf32>
      %c0_347 = arith.constant 0 : index
      %c0_348 = arith.constant 0 : index
      %321 = vector.load %arg22[%c0_347, %c0_348] : memref<128x128xf32, #tpu.memory_space<vmem>>, vector<128x128xf32>
      tpu.vector_store %arg22[%c0_347, %c0_348], %320 {strides = array<i32>} : memref<128x128xf32, #tpu.memory_space<vmem>>, vector<128x128xf32>,
    } else {
    }
    %c1_i32_5 = arith.constant 1 : i32
    %13 = arith.muli %arg0, %c1_i32_5 : i32
    %14 = arith.addi %13, %arg2 : i32
    %c8_i32 = arith.constant 8 : i32
    %15 = arith.muli %arg1, %c8_i32 : i32
    %c48_i32 = arith.constant 48 : i32
    %16 = arith.muli %9, %c48_i32 : i32
    %c0_i32_6 = arith.constant 0 : i32
    %c0_i32_7 = arith.constant 0 : i32
    %17 = tpu.memref_slice %arg3[%14, %15, %c0_i32_6, %c0_i32_7] : memref<2x56x56x128xf32, #tpu.memory_space<any>> -> memref<1x48x56x128xf32, #tpu.memory_space<any>>
    %18 = tpu.memref_squeeze %17 : memref<1x48x56x128xf32, #tpu.memory_space<any>> -> memref<48x56x128xf32, #tpu.memory_space<any>>
    %c0_i32_8 = arith.constant 0 : i32
    %c0_i32_9 = arith.constant 0 : i32
    %19 = tpu.memref_slice %arg17[%16, %c0_i32_8, %c0_i32_9] : memref<96x56x128xf32, #tpu.memory_space<vmem>> -> memref<48x56x128xf32, #tpu.memory_space<vmem>>
    %20 = tpu.memref_slice %arg18[%9] : memref<2x!tpu.dma_semaphore, #tpu.memory_space<semaphore_mem>> -> memref<1x!tpu.dma_semaphore, #tpu.memory_space<semaphore_mem>>
    %21 = tpu.memref_squeeze %20 : memref<1x!tpu.dma_semaphore, #tpu.memory_space<semaphore_mem>> -> memref<!tpu.dma_semaphore, #tpu.memory_space<semaphore_mem>>
    tpu.wait_dma2 semaphore(%21 : memref<!tpu.dma_semaphore, #tpu.memory_space<semaphore_mem>>) src(%18 : memref<48x56x128xf32, #tpu.memory_space<any>>) dst(%19 : memref<48x56x128xf32, #tpu.memory_space<vmem>>)
    %c1_i32_10 = arith.constant 1 : i32
    %22 = arith.addi %arg2, %c1_i32_10 : i32
    %c1_i32_11 = arith.constant 1 : i32
    %23 = arith.cmpi slt, %22, %c1_i32_11 : i32
    %24 = arith.extui %23 : i1 to i32
    %c0_i32_12 = arith.constant 0 : i32
    %25 = arith.cmpi ne, %24, %c0_i32_12 : i32
    scf.if %25 {
      %c1_i32_330 = arith.constant 1 : i32
      %305 = arith.addi %arg2, %c1_i32_330 : i32
      %c1_i32_331 = arith.constant 1 : i32
      %306 = arith.subi %c1_i32_331, %9 : i32
      %c1_i32_332 = arith.constant 1 : i32
      %307 = arith.muli %arg0, %c1_i32_332 : i32
      %308 = arith.addi %307, %305 : i32
      %c8_i32_333 = arith.constant 8 : i32
      %309 = arith.muli %arg1, %c8_i32_333 : i32
      %c48_i32_334 = arith.constant 48 : i32
      %310 = arith.muli %306, %c48_i32_334 : i32
      %c0_i32_335 = arith.constant 0 : i32
      %c0_i32_336 = arith.constant 0 : i32
      %311 = tpu.memref_slice %arg3[%308, %309, %c0_i32_335, %c0_i32_336] : memref<2x56x56x128xf32, #tpu.memory_space<any>> -> memref<1x48x56x128xf32, #tpu.memory_space<any>>
      %312 = tpu.memref_squeeze %311 : memref<1x48x56x128xf32, #tpu.memory_space<any>> -> memref<48x56x128xf32, #tpu.memory_space<any>>
      %c0_i32_337 = arith.constant 0 : i32
      %c0_i32_338 = arith.constant 0 : i32
      %313 = tpu.memref_slice %arg17[%310, %c0_i32_337, %c0_i32_338] : memref<96x56x128xf32, #tpu.memory_space<vmem>> -> memref<48x56x128xf32, #tpu.memory_space<vmem>>
      %314 = tpu.memref_slice %arg18[%306] : memref<2x!tpu.dma_semaphore, #tpu.memory_space<semaphore_mem>> -> memref<1x!tpu.dma_semaphore, #tpu.memory_space<semaphore_mem>>
      %315 = tpu.memref_squeeze %314 : memref<1x!tpu.dma_semaphore, #tpu.memory_space<semaphore_mem>> -> memref<!tpu.dma_semaphore, #tpu.memory_space<semaphore_mem>>
      tpu.enqueue_dma source(%312 : memref<48x56x128xf32, #tpu.memory_space<any>>) target(%313 : memref<48x56x128xf32, #tpu.memory_space<vmem>>) target_semaphore(%315 : memref<!tpu.dma_semaphore, #tpu.memory_space<semaphore_mem>>)
    } else {
    }
    %c48_i32_13 = arith.constant 48 : i32
    %26 = arith.muli %9, %c48_i32_13 : i32
    %c18_i32 = arith.constant 18 : i32
    %27 = arith.addi %26, %c18_i32 : i32
    %28 = arith.index_cast %27 : i32 to index
    %c18 = arith.constant 18 : index
    %c0 = arith.constant 0 : index
    %29 = vector.load %arg17[%28, %c18, %c0] : memref<96x56x128xf32, #tpu.memory_space<vmem>>, vector<8x16x128xf32>
    %30 = vector.shape_cast %29 : vector<8x16x128xf32> to vector<128x128xf32>
    %c0_14 = arith.constant 0 : index
    %c0_15 = arith.constant 0 : index
    %31 = vector.load %arg19[%c0_14, %c0_15] : memref<128x128xf32, #tpu.memory_space<vmem>>, vector<128x128xf32>
    %c0_16 = arith.constant 0 : index
    %c0_17 = arith.constant 0 : index
    %32 = vector.load %arg4[%c0_16, %c0_17] : memref<128x128xf32, #tpu.memory_space<vmem>>, vector<128x128xf32>
    %cst = arith.constant dense<0.000000e+00> : vector<128x128xf32>
    %33 = tpu.matmul %30, %32, %cst {dimension_numbers = #tpu.dot_dimension_numbers<[1], [0], [0], [1], [0, 0, 1, 1], [], []>} : vector<128x128xf32>, vector<128x128xf32>, vector<128x128xf32> -> vector<128x128xf32>
    %34 = arith.addf %31, %33 : vector<128x128xf32>
    %c0_18 = arith.constant 0 : index
    %c0_19 = arith.constant 0 : index
    %35 = vector.load %arg19[%c0_18, %c0_19] : memref<128x128xf32, #tpu.memory_space<vmem>>, vector<128x128xf32>
    tpu.vector_store %arg19[%c0_18, %c0_19], %34 {strides = array<i32>} : memref<128x128xf32, #tpu.memory_space<vmem>>, vector<128x128xf32>,
    %cst_20 = arith.constant dense<0.000000e+00> : vector<128xf32>
    %36 = vector.multi_reduction <add>, %30, %cst_20 [0] : vector<128x128xf32> to vector<128xf32>
    %37 = vector.shape_cast %36 : vector<128xf32> to vector<1x128xf32>
    %c0_21 = arith.constant 0 : index
    %c0_22 = arith.constant 0 : index
    %c0_23 = arith.constant 0 : index
    %38 = vector.load %arg16[%c0_21, %c0_22, %c0_23] : memref<1x1x128xf32, #tpu.memory_space<vmem>>, vector<1x1x128xf32>
    %39 = vector.shape_cast %38 : vector<1x1x128xf32> to vector<1x128xf32>
    %40 = vector.shape_cast %37 : vector<1x128xf32> to vector<1x1x128xf32>
    tpu.vector_store %arg16[%c0_21, %c0_22, %c0_23], %40 {strides = array<i32>} : memref<1x1x128xf32, #tpu.memory_space<vmem>>, vector<1x1x128xf32>,
    %c12_i32 = arith.constant 12 : i32
    %41 = arith.addi %26, %c12_i32 : i32
    %c0_i32_24 = arith.constant 0 : i32
    %42 = arith.addi %41, %c0_i32_24 : i32
    %43 = arith.index_cast %42 : i32 to index
    %c12 = arith.constant 12 : index
    %c0_25 = arith.constant 0 : index
    %44 = vector.load %arg17[%43, %c12, %c0_25] : memref<96x56x128xf32, #tpu.memory_space<vmem>>, vector<8x16x128xf32>
    %c0_26 = arith.constant 0 : index
    %c0_27 = arith.constant 0 : index
    %45 = vector.load %arg20[%c0_26, %c0_27] : memref<128x128xf32, #tpu.memory_space<vmem>>, vector<128x128xf32>
    %46 = vector.shape_cast %44 : vector<8x16x128xf32> to vector<128x128xf32>
    %c0_28 = arith.constant 0 : index
    %c0_29 = arith.constant 0 : index
    %c0_30 = arith.constant 0 : index
    %c0_31 = arith.constant 0 : index
    %47 = vector.load %arg5[%c0_28, %c0_29, %c0_30, %c0_31] : memref<3x3x128x128xf32, #tpu.memory_space<vmem>>, vector<1x1x128x128xf32>
    %48 = vector.shape_cast %47 : vector<1x1x128x128xf32> to vector<128x128xf32>
    %cst_32 = arith.constant dense<0.000000e+00> : vector<128x128xf32>
    %49 = tpu.matmul %46, %48, %cst_32 {dimension_numbers = #tpu.dot_dimension_numbers<[1], [0], [0], [1], [0, 0, 1, 1], [], []>} : vector<128x128xf32>, vector<128x128xf32>, vector<128x128xf32> -> vector<128x128xf32>
    %50 = arith.addf %45, %49 : vector<128x128xf32>
    %c0_33 = arith.constant 0 : index
    %c0_34 = arith.constant 0 : index
    %51 = vector.load %arg20[%c0_33, %c0_34] : memref<128x128xf32, #tpu.memory_space<vmem>>, vector<128x128xf32>
    tpu.vector_store %arg20[%c0_33, %c0_34], %50 {strides = array<i32>} : memref<128x128xf32, #tpu.memory_space<vmem>>, vector<128x128xf32>,
    %52 = arith.index_cast %42 : i32 to index
    %c18_35 = arith.constant 18 : index
    %c0_36 = arith.constant 0 : index
    %53 = vector.load %arg17[%52, %c18_35, %c0_36] : memref<96x56x128xf32, #tpu.memory_space<vmem>>, vector<8x16x128xf32>
    %c0_37 = arith.constant 0 : index
    %c0_38 = arith.constant 0 : index
    %54 = vector.load %arg20[%c0_37, %c0_38] : memref<128x128xf32, #tpu.memory_space<vmem>>, vector<128x128xf32>
    %55 = vector.shape_cast %53 : vector<8x16x128xf32> to vector<128x128xf32>
    %c0_39 = arith.constant 0 : index
    %c1 = arith.constant 1 : index
    %c0_40 = arith.constant 0 : index
    %c0_41 = arith.constant 0 : index
    %56 = vector.load %arg5[%c0_39, %c1, %c0_40, %c0_41] : memref<3x3x128x128xf32, #tpu.memory_space<vmem>>, vector<1x1x128x128xf32>
    %57 = vector.shape_cast %56 : vector<1x1x128x128xf32> to vector<128x128xf32>
    %cst_42 = arith.constant dense<0.000000e+00> : vector<128x128xf32>
    %58 = tpu.matmul %55, %57, %cst_42 {dimension_numbers = #tpu.dot_dimension_numbers<[1], [0], [0], [1], [0, 0, 1, 1], [], []>} : vector<128x128xf32>, vector<128x128xf32>, vector<128x128xf32> -> vector<128x128xf32>
    %59 = arith.addf %54, %58 : vector<128x128xf32>
    %c0_43 = arith.constant 0 : index
    %c0_44 = arith.constant 0 : index
    %60 = vector.load %arg20[%c0_43, %c0_44] : memref<128x128xf32, #tpu.memory_space<vmem>>, vector<128x128xf32>
    tpu.vector_store %arg20[%c0_43, %c0_44], %59 {strides = array<i32>} : memref<128x128xf32, #tpu.memory_space<vmem>>, vector<128x128xf32>,
    %61 = arith.index_cast %42 : i32 to index
    %c24 = arith.constant 24 : index
    %c0_45 = arith.constant 0 : index
    %62 = vector.load %arg17[%61, %c24, %c0_45] : memref<96x56x128xf32, #tpu.memory_space<vmem>>, vector<8x16x128xf32>
    %c0_46 = arith.constant 0 : index
    %c0_47 = arith.constant 0 : index
    %63 = vector.load %arg20[%c0_46, %c0_47] : memref<128x128xf32, #tpu.memory_space<vmem>>, vector<128x128xf32>
    %64 = vector.shape_cast %62 : vector<8x16x128xf32> to vector<128x128xf32>
    %c0_48 = arith.constant 0 : index
    %c2 = arith.constant 2 : index
    %c0_49 = arith.constant 0 : index
    %c0_50 = arith.constant 0 : index
    %65 = vector.load %arg5[%c0_48, %c2, %c0_49, %c0_50] : memref<3x3x128x128xf32, #tpu.memory_space<vmem>>, vector<1x1x128x128xf32>
    %66 = vector.shape_cast %65 : vector<1x1x128x128xf32> to vector<128x128xf32>
    %cst_51 = arith.constant dense<0.000000e+00> : vector<128x128xf32>
    %67 = tpu.matmul %64, %66, %cst_51 {dimension_numbers = #tpu.dot_dimension_numbers<[1], [0], [0], [1], [0, 0, 1, 1], [], []>} : vector<128x128xf32>, vector<128x128xf32>, vector<128x128xf32> -> vector<128x128xf32>
    %68 = arith.addf %63, %67 : vector<128x128xf32>
    %c0_52 = arith.constant 0 : index
    %c0_53 = arith.constant 0 : index
    %69 = vector.load %arg20[%c0_52, %c0_53] : memref<128x128xf32, #tpu.memory_space<vmem>>, vector<128x128xf32>
    tpu.vector_store %arg20[%c0_52, %c0_53], %68 {strides = array<i32>} : memref<128x128xf32, #tpu.memory_space<vmem>>, vector<128x128xf32>,
    %c12_i32_54 = arith.constant 12 : i32
    %70 = arith.addi %26, %c12_i32_54 : i32
    %c6_i32 = arith.constant 6 : i32
    %71 = arith.addi %70, %c6_i32 : i32
    %72 = arith.index_cast %71 : i32 to index
    %c12_55 = arith.constant 12 : index
    %c0_56 = arith.constant 0 : index
    %73 = vector.load %arg17[%72, %c12_55, %c0_56] : memref<96x56x128xf32, #tpu.memory_space<vmem>>, vector<8x16x128xf32>
    %c0_57 = arith.constant 0 : index
    %c0_58 = arith.constant 0 : index
    %74 = vector.load %arg20[%c0_57, %c0_58] : memref<128x128xf32, #tpu.memory_space<vmem>>, vector<128x128xf32>
    %75 = vector.shape_cast %73 : vector<8x16x128xf32> to vector<128x128xf32>
    %c1_59 = arith.constant 1 : index
    %c0_60 = arith.constant 0 : index
    %c0_61 = arith.constant 0 : index
    %c0_62 = arith.constant 0 : index
    %76 = vector.load %arg5[%c1_59, %c0_60, %c0_61, %c0_62] : memref<3x3x128x128xf32, #tpu.memory_space<vmem>>, vector<1x1x128x128xf32>
    %77 = vector.shape_cast %76 : vector<1x1x128x128xf32> to vector<128x128xf32>
    %cst_63 = arith.constant dense<0.000000e+00> : vector<128x128xf32>
    %78 = tpu.matmul %75, %77, %cst_63 {dimension_numbers = #tpu.dot_dimension_numbers<[1], [0], [0], [1], [0, 0, 1, 1], [], []>} : vector<128x128xf32>, vector<128x128xf32>, vector<128x128xf32> -> vector<128x128xf32>
    %79 = arith.addf %74, %78 : vector<128x128xf32>
    %c0_64 = arith.constant 0 : index
    %c0_65 = arith.constant 0 : index
    %80 = vector.load %arg20[%c0_64, %c0_65] : memref<128x128xf32, #tpu.memory_space<vmem>>, vector<128x128xf32>
    tpu.vector_store %arg20[%c0_64, %c0_65], %79 {strides = array<i32>} : memref<128x128xf32, #tpu.memory_space<vmem>>, vector<128x128xf32>,
    %81 = arith.index_cast %71 : i32 to index
    %c18_66 = arith.constant 18 : index
    %c0_67 = arith.constant 0 : index
    %82 = vector.load %arg17[%81, %c18_66, %c0_67] : memref<96x56x128xf32, #tpu.memory_space<vmem>>, vector<8x16x128xf32>
    %c0_68 = arith.constant 0 : index
    %c0_69 = arith.constant 0 : index
    %83 = vector.load %arg20[%c0_68, %c0_69] : memref<128x128xf32, #tpu.memory_space<vmem>>, vector<128x128xf32>
    %84 = vector.shape_cast %82 : vector<8x16x128xf32> to vector<128x128xf32>
    %c1_70 = arith.constant 1 : index
    %c1_71 = arith.constant 1 : index
    %c0_72 = arith.constant 0 : index
    %c0_73 = arith.constant 0 : index
    %85 = vector.load %arg5[%c1_70, %c1_71, %c0_72, %c0_73] : memref<3x3x128x128xf32, #tpu.memory_space<vmem>>, vector<1x1x128x128xf32>
    %86 = vector.shape_cast %85 : vector<1x1x128x128xf32> to vector<128x128xf32>
    %cst_74 = arith.constant dense<0.000000e+00> : vector<128x128xf32>
    %87 = tpu.matmul %84, %86, %cst_74 {dimension_numbers = #tpu.dot_dimension_numbers<[1], [0], [0], [1], [0, 0, 1, 1], [], []>} : vector<128x128xf32>, vector<128x128xf32>, vector<128x128xf32> -> vector<128x128xf32>
    %88 = arith.addf %83, %87 : vector<128x128xf32>
    %c0_75 = arith.constant 0 : index
    %c0_76 = arith.constant 0 : index
    %89 = vector.load %arg20[%c0_75, %c0_76] : memref<128x128xf32, #tpu.memory_space<vmem>>, vector<128x128xf32>
    tpu.vector_store %arg20[%c0_75, %c0_76], %88 {strides = array<i32>} : memref<128x128xf32, #tpu.memory_space<vmem>>, vector<128x128xf32>,
    %90 = arith.index_cast %71 : i32 to index
    %c24_77 = arith.constant 24 : index
    %c0_78 = arith.constant 0 : index
    %91 = vector.load %arg17[%90, %c24_77, %c0_78] : memref<96x56x128xf32, #tpu.memory_space<vmem>>, vector<8x16x128xf32>
    %c0_79 = arith.constant 0 : index
    %c0_80 = arith.constant 0 : index
    %92 = vector.load %arg20[%c0_79, %c0_80] : memref<128x128xf32, #tpu.memory_space<vmem>>, vector<128x128xf32>
    %93 = vector.shape_cast %91 : vector<8x16x128xf32> to vector<128x128xf32>
    %c1_81 = arith.constant 1 : index
    %c2_82 = arith.constant 2 : index
    %c0_83 = arith.constant 0 : index
    %c0_84 = arith.constant 0 : index
    %94 = vector.load %arg5[%c1_81, %c2_82, %c0_83, %c0_84] : memref<3x3x128x128xf32, #tpu.memory_space<vmem>>, vector<1x1x128x128xf32>
    %95 = vector.shape_cast %94 : vector<1x1x128x128xf32> to vector<128x128xf32>
    %cst_85 = arith.constant dense<0.000000e+00> : vector<128x128xf32>
    %96 = tpu.matmul %93, %95, %cst_85 {dimension_numbers = #tpu.dot_dimension_numbers<[1], [0], [0], [1], [0, 0, 1, 1], [], []>} : vector<128x128xf32>, vector<128x128xf32>, vector<128x128xf32> -> vector<128x128xf32>
    %97 = arith.addf %92, %96 : vector<128x128xf32>
    %c0_86 = arith.constant 0 : index
    %c0_87 = arith.constant 0 : index
    %98 = vector.load %arg20[%c0_86, %c0_87] : memref<128x128xf32, #tpu.memory_space<vmem>>, vector<128x128xf32>
    tpu.vector_store %arg20[%c0_86, %c0_87], %97 {strides = array<i32>} : memref<128x128xf32, #tpu.memory_space<vmem>>, vector<128x128xf32>,
    %c12_i32_88 = arith.constant 12 : i32
    %99 = arith.addi %26, %c12_i32_88 : i32
    %c12_i32_89 = arith.constant 12 : i32
    %100 = arith.addi %99, %c12_i32_89 : i32
    %101 = arith.index_cast %100 : i32 to index
    %c12_90 = arith.constant 12 : index
    %c0_91 = arith.constant 0 : index
    %102 = vector.load %arg17[%101, %c12_90, %c0_91] : memref<96x56x128xf32, #tpu.memory_space<vmem>>, vector<8x16x128xf32>
    %c0_92 = arith.constant 0 : index
    %c0_93 = arith.constant 0 : index
    %103 = vector.load %arg20[%c0_92, %c0_93] : memref<128x128xf32, #tpu.memory_space<vmem>>, vector<128x128xf32>
    %104 = vector.shape_cast %102 : vector<8x16x128xf32> to vector<128x128xf32>
    %c2_94 = arith.constant 2 : index
    %c0_95 = arith.constant 0 : index
    %c0_96 = arith.constant 0 : index
    %c0_97 = arith.constant 0 : index
    %105 = vector.load %arg5[%c2_94, %c0_95, %c0_96, %c0_97] : memref<3x3x128x128xf32, #tpu.memory_space<vmem>>, vector<1x1x128x128xf32>
    %106 = vector.shape_cast %105 : vector<1x1x128x128xf32> to vector<128x128xf32>
    %cst_98 = arith.constant dense<0.000000e+00> : vector<128x128xf32>
    %107 = tpu.matmul %104, %106, %cst_98 {dimension_numbers = #tpu.dot_dimension_numbers<[1], [0], [0], [1], [0, 0, 1, 1], [], []>} : vector<128x128xf32>, vector<128x128xf32>, vector<128x128xf32> -> vector<128x128xf32>
    %108 = arith.addf %103, %107 : vector<128x128xf32>
    %c0_99 = arith.constant 0 : index
    %c0_100 = arith.constant 0 : index
    %109 = vector.load %arg20[%c0_99, %c0_100] : memref<128x128xf32, #tpu.memory_space<vmem>>, vector<128x128xf32>
    tpu.vector_store %arg20[%c0_99, %c0_100], %108 {strides = array<i32>} : memref<128x128xf32, #tpu.memory_space<vmem>>, vector<128x128xf32>,
    %110 = arith.index_cast %100 : i32 to index
    %c18_101 = arith.constant 18 : index
    %c0_102 = arith.constant 0 : index
    %111 = vector.load %arg17[%110, %c18_101, %c0_102] : memref<96x56x128xf32, #tpu.memory_space<vmem>>, vector<8x16x128xf32>
    %c0_103 = arith.constant 0 : index
    %c0_104 = arith.constant 0 : index
    %112 = vector.load %arg20[%c0_103, %c0_104] : memref<128x128xf32, #tpu.memory_space<vmem>>, vector<128x128xf32>
    %113 = vector.shape_cast %111 : vector<8x16x128xf32> to vector<128x128xf32>
    %c2_105 = arith.constant 2 : index
    %c1_106 = arith.constant 1 : index
    %c0_107 = arith.constant 0 : index
    %c0_108 = arith.constant 0 : index
    %114 = vector.load %arg5[%c2_105, %c1_106, %c0_107, %c0_108] : memref<3x3x128x128xf32, #tpu.memory_space<vmem>>, vector<1x1x128x128xf32>
    %115 = vector.shape_cast %114 : vector<1x1x128x128xf32> to vector<128x128xf32>
    %cst_109 = arith.constant dense<0.000000e+00> : vector<128x128xf32>
    %116 = tpu.matmul %113, %115, %cst_109 {dimension_numbers = #tpu.dot_dimension_numbers<[1], [0], [0], [1], [0, 0, 1, 1], [], []>} : vector<128x128xf32>, vector<128x128xf32>, vector<128x128xf32> -> vector<128x128xf32>
    %117 = arith.addf %112, %116 : vector<128x128xf32>
    %c0_110 = arith.constant 0 : index
    %c0_111 = arith.constant 0 : index
    %118 = vector.load %arg20[%c0_110, %c0_111] : memref<128x128xf32, #tpu.memory_space<vmem>>, vector<128x128xf32>
    tpu.vector_store %arg20[%c0_110, %c0_111], %117 {strides = array<i32>} : memref<128x128xf32, #tpu.memory_space<vmem>>, vector<128x128xf32>,
    %119 = arith.index_cast %100 : i32 to index
    %c24_112 = arith.constant 24 : index
    %c0_113 = arith.constant 0 : index
    %120 = vector.load %arg17[%119, %c24_112, %c0_113] : memref<96x56x128xf32, #tpu.memory_space<vmem>>, vector<8x16x128xf32>
    %c0_114 = arith.constant 0 : index
    %c0_115 = arith.constant 0 : index
    %121 = vector.load %arg20[%c0_114, %c0_115] : memref<128x128xf32, #tpu.memory_space<vmem>>, vector<128x128xf32>
    %122 = vector.shape_cast %120 : vector<8x16x128xf32> to vector<128x128xf32>
    %c2_116 = arith.constant 2 : index
    %c2_117 = arith.constant 2 : index
    %c0_118 = arith.constant 0 : index
    %c0_119 = arith.constant 0 : index
    %123 = vector.load %arg5[%c2_116, %c2_117, %c0_118, %c0_119] : memref<3x3x128x128xf32, #tpu.memory_space<vmem>>, vector<1x1x128x128xf32>
    %124 = vector.shape_cast %123 : vector<1x1x128x128xf32> to vector<128x128xf32>
    %cst_120 = arith.constant dense<0.000000e+00> : vector<128x128xf32>
    %125 = tpu.matmul %122, %124, %cst_120 {dimension_numbers = #tpu.dot_dimension_numbers<[1], [0], [0], [1], [0, 0, 1, 1], [], []>} : vector<128x128xf32>, vector<128x128xf32>, vector<128x128xf32> -> vector<128x128xf32>
    %126 = arith.addf %121, %125 : vector<128x128xf32>
    %c0_121 = arith.constant 0 : index
    %c0_122 = arith.constant 0 : index
    %127 = vector.load %arg20[%c0_121, %c0_122] : memref<128x128xf32, #tpu.memory_space<vmem>>, vector<128x128xf32>
    tpu.vector_store %arg20[%c0_121, %c0_122], %126 {strides = array<i32>} : memref<128x128xf32, #tpu.memory_space<vmem>>, vector<128x128xf32>,
    %c6_i32_123 = arith.constant 6 : i32
    %128 = arith.addi %26, %c6_i32_123 : i32
    %c0_i32_124 = arith.constant 0 : i32
    %129 = arith.addi %128, %c0_i32_124 : i32
    %130 = arith.index_cast %129 : i32 to index
    %c6 = arith.constant 6 : index
    %c0_125 = arith.constant 0 : index
    %131 = vector.load %arg17[%130, %c6, %c0_125] : memref<96x56x128xf32, #tpu.memory_space<vmem>>, vector<8x16x128xf32>
    %c0_126 = arith.constant 0 : index
    %c0_127 = arith.constant 0 : index
    %132 = vector.load %arg21[%c0_126, %c0_127] : memref<128x128xf32, #tpu.memory_space<vmem>>, vector<128x128xf32>
    %133 = vector.shape_cast %131 : vector<8x16x128xf32> to vector<128x128xf32>
    %c0_128 = arith.constant 0 : index
    %c0_129 = arith.constant 0 : index
    %c0_130 = arith.constant 0 : index
    %c0_131 = arith.constant 0 : index
    %134 = vector.load %arg6[%c0_128, %c0_129, %c0_130, %c0_131] : memref<3x3x128x128xf32, #tpu.memory_space<vmem>>, vector<1x1x128x128xf32>
    %135 = vector.shape_cast %134 : vector<1x1x128x128xf32> to vector<128x128xf32>
    %cst_132 = arith.constant dense<0.000000e+00> : vector<128x128xf32>
    %136 = tpu.matmul %133, %135, %cst_132 {dimension_numbers = #tpu.dot_dimension_numbers<[1], [0], [0], [1], [0, 0, 1, 1], [], []>} : vector<128x128xf32>, vector<128x128xf32>, vector<128x128xf32> -> vector<128x128xf32>
    %137 = arith.addf %132, %136 : vector<128x128xf32>
    %c0_133 = arith.constant 0 : index
    %c0_134 = arith.constant 0 : index
    %138 = vector.load %arg21[%c0_133, %c0_134] : memref<128x128xf32, #tpu.memory_space<vmem>>, vector<128x128xf32>
    tpu.vector_store %arg21[%c0_133, %c0_134], %137 {strides = array<i32>} : memref<128x128xf32, #tpu.memory_space<vmem>>, vector<128x128xf32>,
    %139 = arith.index_cast %129 : i32 to index
    %c18_135 = arith.constant 18 : index
    %c0_136 = arith.constant 0 : index
    %140 = vector.load %arg17[%139, %c18_135, %c0_136] : memref<96x56x128xf32, #tpu.memory_space<vmem>>, vector<8x16x128xf32>
    %c0_137 = arith.constant 0 : index
    %c0_138 = arith.constant 0 : index
    %141 = vector.load %arg21[%c0_137, %c0_138] : memref<128x128xf32, #tpu.memory_space<vmem>>, vector<128x128xf32>
    %142 = vector.shape_cast %140 : vector<8x16x128xf32> to vector<128x128xf32>
    %c0_139 = arith.constant 0 : index
    %c1_140 = arith.constant 1 : index
    %c0_141 = arith.constant 0 : index
    %c0_142 = arith.constant 0 : index
    %143 = vector.load %arg6[%c0_139, %c1_140, %c0_141, %c0_142] : memref<3x3x128x128xf32, #tpu.memory_space<vmem>>, vector<1x1x128x128xf32>
    %144 = vector.shape_cast %143 : vector<1x1x128x128xf32> to vector<128x128xf32>
    %cst_143 = arith.constant dense<0.000000e+00> : vector<128x128xf32>
    %145 = tpu.matmul %142, %144, %cst_143 {dimension_numbers = #tpu.dot_dimension_numbers<[1], [0], [0], [1], [0, 0, 1, 1], [], []>} : vector<128x128xf32>, vector<128x128xf32>, vector<128x128xf32> -> vector<128x128xf32>
    %146 = arith.addf %141, %145 : vector<128x128xf32>
    %c0_144 = arith.constant 0 : index
    %c0_145 = arith.constant 0 : index
    %147 = vector.load %arg21[%c0_144, %c0_145] : memref<128x128xf32, #tpu.memory_space<vmem>>, vector<128x128xf32>
    tpu.vector_store %arg21[%c0_144, %c0_145], %146 {strides = array<i32>} : memref<128x128xf32, #tpu.memory_space<vmem>>, vector<128x128xf32>,
    %148 = arith.index_cast %129 : i32 to index
    %c30 = arith.constant 30 : index
    %c0_146 = arith.constant 0 : index
    %149 = vector.load %arg17[%148, %c30, %c0_146] : memref<96x56x128xf32, #tpu.memory_space<vmem>>, vector<8x16x128xf32>
    %c0_147 = arith.constant 0 : index
    %c0_148 = arith.constant 0 : index
    %150 = vector.load %arg21[%c0_147, %c0_148] : memref<128x128xf32, #tpu.memory_space<vmem>>, vector<128x128xf32>
    %151 = vector.shape_cast %149 : vector<8x16x128xf32> to vector<128x128xf32>
    %c0_149 = arith.constant 0 : index
    %c2_150 = arith.constant 2 : index
    %c0_151 = arith.constant 0 : index
    %c0_152 = arith.constant 0 : index
    %152 = vector.load %arg6[%c0_149, %c2_150, %c0_151, %c0_152] : memref<3x3x128x128xf32, #tpu.memory_space<vmem>>, vector<1x1x128x128xf32>
    %153 = vector.shape_cast %152 : vector<1x1x128x128xf32> to vector<128x128xf32>
    %cst_153 = arith.constant dense<0.000000e+00> : vector<128x128xf32>
    %154 = tpu.matmul %151, %153, %cst_153 {dimension_numbers = #tpu.dot_dimension_numbers<[1], [0], [0], [1], [0, 0, 1, 1], [], []>} : vector<128x128xf32>, vector<128x128xf32>, vector<128x128xf32> -> vector<128x128xf32>
    %155 = arith.addf %150, %154 : vector<128x128xf32>
    %c0_154 = arith.constant 0 : index
    %c0_155 = arith.constant 0 : index
    %156 = vector.load %arg21[%c0_154, %c0_155] : memref<128x128xf32, #tpu.memory_space<vmem>>, vector<128x128xf32>
    tpu.vector_store %arg21[%c0_154, %c0_155], %155 {strides = array<i32>} : memref<128x128xf32, #tpu.memory_space<vmem>>, vector<128x128xf32>,
    %c6_i32_156 = arith.constant 6 : i32
    %157 = arith.addi %26, %c6_i32_156 : i32
    %c12_i32_157 = arith.constant 12 : i32
    %158 = arith.addi %157, %c12_i32_157 : i32
    %159 = arith.index_cast %158 : i32 to index
    %c6_158 = arith.constant 6 : index
    %c0_159 = arith.constant 0 : index
    %160 = vector.load %arg17[%159, %c6_158, %c0_159] : memref<96x56x128xf32, #tpu.memory_space<vmem>>, vector<8x16x128xf32>
    %c0_160 = arith.constant 0 : index
    %c0_161 = arith.constant 0 : index
    %161 = vector.load %arg21[%c0_160, %c0_161] : memref<128x128xf32, #tpu.memory_space<vmem>>, vector<128x128xf32>
    %162 = vector.shape_cast %160 : vector<8x16x128xf32> to vector<128x128xf32>
    %c1_162 = arith.constant 1 : index
    %c0_163 = arith.constant 0 : index
    %c0_164 = arith.constant 0 : index
    %c0_165 = arith.constant 0 : index
    %163 = vector.load %arg6[%c1_162, %c0_163, %c0_164, %c0_165] : memref<3x3x128x128xf32, #tpu.memory_space<vmem>>, vector<1x1x128x128xf32>
    %164 = vector.shape_cast %163 : vector<1x1x128x128xf32> to vector<128x128xf32>
    %cst_166 = arith.constant dense<0.000000e+00> : vector<128x128xf32>
    %165 = tpu.matmul %162, %164, %cst_166 {dimension_numbers = #tpu.dot_dimension_numbers<[1], [0], [0], [1], [0, 0, 1, 1], [], []>} : vector<128x128xf32>, vector<128x128xf32>, vector<128x128xf32> -> vector<128x128xf32>
    %166 = arith.addf %161, %165 : vector<128x128xf32>
    %c0_167 = arith.constant 0 : index
    %c0_168 = arith.constant 0 : index
    %167 = vector.load %arg21[%c0_167, %c0_168] : memref<128x128xf32, #tpu.memory_space<vmem>>, vector<128x128xf32>
    tpu.vector_store %arg21[%c0_167, %c0_168], %166 {strides = array<i32>} : memref<128x128xf32, #tpu.memory_space<vmem>>, vector<128x128xf32>,
    %168 = arith.index_cast %158 : i32 to index
    %c18_169 = arith.constant 18 : index
    %c0_170 = arith.constant 0 : index
    %169 = vector.load %arg17[%168, %c18_169, %c0_170] : memref<96x56x128xf32, #tpu.memory_space<vmem>>, vector<8x16x128xf32>
    %c0_171 = arith.constant 0 : index
    %c0_172 = arith.constant 0 : index
    %170 = vector.load %arg21[%c0_171, %c0_172] : memref<128x128xf32, #tpu.memory_space<vmem>>, vector<128x128xf32>
    %171 = vector.shape_cast %169 : vector<8x16x128xf32> to vector<128x128xf32>
    %c1_173 = arith.constant 1 : index
    %c1_174 = arith.constant 1 : index
    %c0_175 = arith.constant 0 : index
    %c0_176 = arith.constant 0 : index
    %172 = vector.load %arg6[%c1_173, %c1_174, %c0_175, %c0_176] : memref<3x3x128x128xf32, #tpu.memory_space<vmem>>, vector<1x1x128x128xf32>
    %173 = vector.shape_cast %172 : vector<1x1x128x128xf32> to vector<128x128xf32>
    %cst_177 = arith.constant dense<0.000000e+00> : vector<128x128xf32>
    %174 = tpu.matmul %171, %173, %cst_177 {dimension_numbers = #tpu.dot_dimension_numbers<[1], [0], [0], [1], [0, 0, 1, 1], [], []>} : vector<128x128xf32>, vector<128x128xf32>, vector<128x128xf32> -> vector<128x128xf32>
    %175 = arith.addf %170, %174 : vector<128x128xf32>
    %c0_178 = arith.constant 0 : index
    %c0_179 = arith.constant 0 : index
    %176 = vector.load %arg21[%c0_178, %c0_179] : memref<128x128xf32, #tpu.memory_space<vmem>>, vector<128x128xf32>
    tpu.vector_store %arg21[%c0_178, %c0_179], %175 {strides = array<i32>} : memref<128x128xf32, #tpu.memory_space<vmem>>, vector<128x128xf32>,
    %177 = arith.index_cast %158 : i32 to index
    %c30_180 = arith.constant 30 : index
    %c0_181 = arith.constant 0 : index
    %178 = vector.load %arg17[%177, %c30_180, %c0_181] : memref<96x56x128xf32, #tpu.memory_space<vmem>>, vector<8x16x128xf32>
    %c0_182 = arith.constant 0 : index
    %c0_183 = arith.constant 0 : index
    %179 = vector.load %arg21[%c0_182, %c0_183] : memref<128x128xf32, #tpu.memory_space<vmem>>, vector<128x128xf32>
    %180 = vector.shape_cast %178 : vector<8x16x128xf32> to vector<128x128xf32>
    %c1_184 = arith.constant 1 : index
    %c2_185 = arith.constant 2 : index
    %c0_186 = arith.constant 0 : index
    %c0_187 = arith.constant 0 : index
    %181 = vector.load %arg6[%c1_184, %c2_185, %c0_186, %c0_187] : memref<3x3x128x128xf32, #tpu.memory_space<vmem>>, vector<1x1x128x128xf32>
    %182 = vector.shape_cast %181 : vector<1x1x128x128xf32> to vector<128x128xf32>
    %cst_188 = arith.constant dense<0.000000e+00> : vector<128x128xf32>
    %183 = tpu.matmul %180, %182, %cst_188 {dimension_numbers = #tpu.dot_dimension_numbers<[1], [0], [0], [1], [0, 0, 1, 1], [], []>} : vector<128x128xf32>, vector<128x128xf32>, vector<128x128xf32> -> vector<128x128xf32>
    %184 = arith.addf %179, %183 : vector<128x128xf32>
    %c0_189 = arith.constant 0 : index
    %c0_190 = arith.constant 0 : index
    %185 = vector.load %arg21[%c0_189, %c0_190] : memref<128x128xf32, #tpu.memory_space<vmem>>, vector<128x128xf32>
    tpu.vector_store %arg21[%c0_189, %c0_190], %184 {strides = array<i32>} : memref<128x128xf32, #tpu.memory_space<vmem>>, vector<128x128xf32>,
    %c6_i32_191 = arith.constant 6 : i32
    %186 = arith.addi %26, %c6_i32_191 : i32
    %c24_i32 = arith.constant 24 : i32
    %187 = arith.addi %186, %c24_i32 : i32
    %188 = arith.index_cast %187 : i32 to index
    %c6_192 = arith.constant 6 : index
    %c0_193 = arith.constant 0 : index
    %189 = vector.load %arg17[%188, %c6_192, %c0_193] : memref<96x56x128xf32, #tpu.memory_space<vmem>>, vector<8x16x128xf32>
    %c0_194 = arith.constant 0 : index
    %c0_195 = arith.constant 0 : index
    %190 = vector.load %arg21[%c0_194, %c0_195] : memref<128x128xf32, #tpu.memory_space<vmem>>, vector<128x128xf32>
    %191 = vector.shape_cast %189 : vector<8x16x128xf32> to vector<128x128xf32>
    %c2_196 = arith.constant 2 : index
    %c0_197 = arith.constant 0 : index
    %c0_198 = arith.constant 0 : index
    %c0_199 = arith.constant 0 : index
    %192 = vector.load %arg6[%c2_196, %c0_197, %c0_198, %c0_199] : memref<3x3x128x128xf32, #tpu.memory_space<vmem>>, vector<1x1x128x128xf32>
    %193 = vector.shape_cast %192 : vector<1x1x128x128xf32> to vector<128x128xf32>
    %cst_200 = arith.constant dense<0.000000e+00> : vector<128x128xf32>
    %194 = tpu.matmul %191, %193, %cst_200 {dimension_numbers = #tpu.dot_dimension_numbers<[1], [0], [0], [1], [0, 0, 1, 1], [], []>} : vector<128x128xf32>, vector<128x128xf32>, vector<128x128xf32> -> vector<128x128xf32>
    %195 = arith.addf %190, %194 : vector<128x128xf32>
    %c0_201 = arith.constant 0 : index
    %c0_202 = arith.constant 0 : index
    %196 = vector.load %arg21[%c0_201, %c0_202] : memref<128x128xf32, #tpu.memory_space<vmem>>, vector<128x128xf32>
    tpu.vector_store %arg21[%c0_201, %c0_202], %195 {strides = array<i32>} : memref<128x128xf32, #tpu.memory_space<vmem>>, vector<128x128xf32>,
    %197 = arith.index_cast %187 : i32 to index
    %c18_203 = arith.constant 18 : index
    %c0_204 = arith.constant 0 : index
    %198 = vector.load %arg17[%197, %c18_203, %c0_204] : memref<96x56x128xf32, #tpu.memory_space<vmem>>, vector<8x16x128xf32>
    %c0_205 = arith.constant 0 : index
    %c0_206 = arith.constant 0 : index
    %199 = vector.load %arg21[%c0_205, %c0_206] : memref<128x128xf32, #tpu.memory_space<vmem>>, vector<128x128xf32>
    %200 = vector.shape_cast %198 : vector<8x16x128xf32> to vector<128x128xf32>
    %c2_207 = arith.constant 2 : index
    %c1_208 = arith.constant 1 : index
    %c0_209 = arith.constant 0 : index
    %c0_210 = arith.constant 0 : index
    %201 = vector.load %arg6[%c2_207, %c1_208, %c0_209, %c0_210] : memref<3x3x128x128xf32, #tpu.memory_space<vmem>>, vector<1x1x128x128xf32>
    %202 = vector.shape_cast %201 : vector<1x1x128x128xf32> to vector<128x128xf32>
    %cst_211 = arith.constant dense<0.000000e+00> : vector<128x128xf32>
    %203 = tpu.matmul %200, %202, %cst_211 {dimension_numbers = #tpu.dot_dimension_numbers<[1], [0], [0], [1], [0, 0, 1, 1], [], []>} : vector<128x128xf32>, vector<128x128xf32>, vector<128x128xf32> -> vector<128x128xf32>
    %204 = arith.addf %199, %203 : vector<128x128xf32>
    %c0_212 = arith.constant 0 : index
    %c0_213 = arith.constant 0 : index
    %205 = vector.load %arg21[%c0_212, %c0_213] : memref<128x128xf32, #tpu.memory_space<vmem>>, vector<128x128xf32>
    tpu.vector_store %arg21[%c0_212, %c0_213], %204 {strides = array<i32>} : memref<128x128xf32, #tpu.memory_space<vmem>>, vector<128x128xf32>,
    %206 = arith.index_cast %187 : i32 to index
    %c30_214 = arith.constant 30 : index
    %c0_215 = arith.constant 0 : index
    %207 = vector.load %arg17[%206, %c30_214, %c0_215] : memref<96x56x128xf32, #tpu.memory_space<vmem>>, vector<8x16x128xf32>
    %c0_216 = arith.constant 0 : index
    %c0_217 = arith.constant 0 : index
    %208 = vector.load %arg21[%c0_216, %c0_217] : memref<128x128xf32, #tpu.memory_space<vmem>>, vector<128x128xf32>
    %209 = vector.shape_cast %207 : vector<8x16x128xf32> to vector<128x128xf32>
    %c2_218 = arith.constant 2 : index
    %c2_219 = arith.constant 2 : index
    %c0_220 = arith.constant 0 : index
    %c0_221 = arith.constant 0 : index
    %210 = vector.load %arg6[%c2_218, %c2_219, %c0_220, %c0_221] : memref<3x3x128x128xf32, #tpu.memory_space<vmem>>, vector<1x1x128x128xf32>
    %211 = vector.shape_cast %210 : vector<1x1x128x128xf32> to vector<128x128xf32>
    %cst_222 = arith.constant dense<0.000000e+00> : vector<128x128xf32>
    %212 = tpu.matmul %209, %211, %cst_222 {dimension_numbers = #tpu.dot_dimension_numbers<[1], [0], [0], [1], [0, 0, 1, 1], [], []>} : vector<128x128xf32>, vector<128x128xf32>, vector<128x128xf32> -> vector<128x128xf32>
    %213 = arith.addf %208, %212 : vector<128x128xf32>
    %c0_223 = arith.constant 0 : index
    %c0_224 = arith.constant 0 : index
    %214 = vector.load %arg21[%c0_223, %c0_224] : memref<128x128xf32, #tpu.memory_space<vmem>>, vector<128x128xf32>
    tpu.vector_store %arg21[%c0_223, %c0_224], %213 {strides = array<i32>} : memref<128x128xf32, #tpu.memory_space<vmem>>, vector<128x128xf32>,
    %c0_i32_225 = arith.constant 0 : i32
    %215 = arith.addi %26, %c0_i32_225 : i32
    %c0_i32_226 = arith.constant 0 : i32
    %216 = arith.addi %215, %c0_i32_226 : i32
    %217 = arith.index_cast %216 : i32 to index
    %c0_227 = arith.constant 0 : index
    %c0_228 = arith.constant 0 : index
    %218 = vector.load %arg17[%217, %c0_227, %c0_228] : memref<96x56x128xf32, #tpu.memory_space<vmem>>, vector<8x16x128xf32>
    %c0_229 = arith.constant 0 : index
    %c0_230 = arith.constant 0 : index
    %219 = vector.load %arg22[%c0_229, %c0_230] : memref<128x128xf32, #tpu.memory_space<vmem>>, vector<128x128xf32>
    %220 = vector.shape_cast %218 : vector<8x16x128xf32> to vector<128x128xf32>
    %c0_231 = arith.constant 0 : index
    %c0_232 = arith.constant 0 : index
    %c0_233 = arith.constant 0 : index
    %c0_234 = arith.constant 0 : index
    %221 = vector.load %arg7[%c0_231, %c0_232, %c0_233, %c0_234] : memref<3x3x128x128xf32, #tpu.memory_space<vmem>>, vector<1x1x128x128xf32>
    %222 = vector.shape_cast %221 : vector<1x1x128x128xf32> to vector<128x128xf32>
    %cst_235 = arith.constant dense<0.000000e+00> : vector<128x128xf32>
    %223 = tpu.matmul %220, %222, %cst_235 {dimension_numbers = #tpu.dot_dimension_numbers<[1], [0], [0], [1], [0, 0, 1, 1], [], []>} : vector<128x128xf32>, vector<128x128xf32>, vector<128x128xf32> -> vector<128x128xf32>
    %224 = arith.addf %219, %223 : vector<128x128xf32>
    %c0_236 = arith.constant 0 : index
    %c0_237 = arith.constant 0 : index
    %225 = vector.load %arg22[%c0_236, %c0_237] : memref<128x128xf32, #tpu.memory_space<vmem>>, vector<128x128xf32>
    tpu.vector_store %arg22[%c0_236, %c0_237], %224 {strides = array<i32>} : memref<128x128xf32, #tpu.memory_space<vmem>>, vector<128x128xf32>,
    %226 = arith.index_cast %216 : i32 to index
    %c18_238 = arith.constant 18 : index
    %c0_239 = arith.constant 0 : index
    %227 = vector.load %arg17[%226, %c18_238, %c0_239] : memref<96x56x128xf32, #tpu.memory_space<vmem>>, vector<8x16x128xf32>
    %c0_240 = arith.constant 0 : index
    %c0_241 = arith.constant 0 : index
    %228 = vector.load %arg22[%c0_240, %c0_241] : memref<128x128xf32, #tpu.memory_space<vmem>>, vector<128x128xf32>
    %229 = vector.shape_cast %227 : vector<8x16x128xf32> to vector<128x128xf32>
    %c0_242 = arith.constant 0 : index
    %c1_243 = arith.constant 1 : index
    %c0_244 = arith.constant 0 : index
    %c0_245 = arith.constant 0 : index
    %230 = vector.load %arg7[%c0_242, %c1_243, %c0_244, %c0_245] : memref<3x3x128x128xf32, #tpu.memory_space<vmem>>, vector<1x1x128x128xf32>
    %231 = vector.shape_cast %230 : vector<1x1x128x128xf32> to vector<128x128xf32>
    %cst_246 = arith.constant dense<0.000000e+00> : vector<128x128xf32>
    %232 = tpu.matmul %229, %231, %cst_246 {dimension_numbers = #tpu.dot_dimension_numbers<[1], [0], [0], [1], [0, 0, 1, 1], [], []>} : vector<128x128xf32>, vector<128x128xf32>, vector<128x128xf32> -> vector<128x128xf32>
    %233 = arith.addf %228, %232 : vector<128x128xf32>
    %c0_247 = arith.constant 0 : index
    %c0_248 = arith.constant 0 : index
    %234 = vector.load %arg22[%c0_247, %c0_248] : memref<128x128xf32, #tpu.memory_space<vmem>>, vector<128x128xf32>
    tpu.vector_store %arg22[%c0_247, %c0_248], %233 {strides = array<i32>} : memref<128x128xf32, #tpu.memory_space<vmem>>, vector<128x128xf32>,
    %235 = arith.index_cast %216 : i32 to index
    %c36 = arith.constant 36 : index
    %c0_249 = arith.constant 0 : index
    %236 = vector.load %arg17[%235, %c36, %c0_249] : memref<96x56x128xf32, #tpu.memory_space<vmem>>, vector<8x16x128xf32>
    %c0_250 = arith.constant 0 : index
    %c0_251 = arith.constant 0 : index
    %237 = vector.load %arg22[%c0_250, %c0_251] : memref<128x128xf32, #tpu.memory_space<vmem>>, vector<128x128xf32>
    %238 = vector.shape_cast %236 : vector<8x16x128xf32> to vector<128x128xf32>
    %c0_252 = arith.constant 0 : index
    %c2_253 = arith.constant 2 : index
    %c0_254 = arith.constant 0 : index
    %c0_255 = arith.constant 0 : index
    %239 = vector.load %arg7[%c0_252, %c2_253, %c0_254, %c0_255] : memref<3x3x128x128xf32, #tpu.memory_space<vmem>>, vector<1x1x128x128xf32>
    %240 = vector.shape_cast %239 : vector<1x1x128x128xf32> to vector<128x128xf32>
    %cst_256 = arith.constant dense<0.000000e+00> : vector<128x128xf32>
    %241 = tpu.matmul %238, %240, %cst_256 {dimension_numbers = #tpu.dot_dimension_numbers<[1], [0], [0], [1], [0, 0, 1, 1], [], []>} : vector<128x128xf32>, vector<128x128xf32>, vector<128x128xf32> -> vector<128x128xf32>
    %242 = arith.addf %237, %241 : vector<128x128xf32>
    %c0_257 = arith.constant 0 : index
    %c0_258 = arith.constant 0 : index
    %243 = vector.load %arg22[%c0_257, %c0_258] : memref<128x128xf32, #tpu.memory_space<vmem>>, vector<128x128xf32>
    tpu.vector_store %arg22[%c0_257, %c0_258], %242 {strides = array<i32>} : memref<128x128xf32, #tpu.memory_space<vmem>>, vector<128x128xf32>,
    %c0_i32_259 = arith.constant 0 : i32
    %244 = arith.addi %26, %c0_i32_259 : i32
    %c18_i32_260 = arith.constant 18 : i32
    %245 = arith.addi %244, %c18_i32_260 : i32
    %246 = arith.index_cast %245 : i32 to index
    %c0_261 = arith.constant 0 : index
    %c0_262 = arith.constant 0 : index
    %247 = vector.load %arg17[%246, %c0_261, %c0_262] : memref<96x56x128xf32, #tpu.memory_space<vmem>>, vector<8x16x128xf32>
    %c0_263 = arith.constant 0 : index
    %c0_264 = arith.constant 0 : index
    %248 = vector.load %arg22[%c0_263, %c0_264] : memref<128x128xf32, #tpu.memory_space<vmem>>, vector<128x128xf32>
    %249 = vector.shape_cast %247 : vector<8x16x128xf32> to vector<128x128xf32>
    %c1_265 = arith.constant 1 : index
    %c0_266 = arith.constant 0 : index
    %c0_267 = arith.constant 0 : index
    %c0_268 = arith.constant 0 : index
    %250 = vector.load %arg7[%c1_265, %c0_266, %c0_267, %c0_268] : memref<3x3x128x128xf32, #tpu.memory_space<vmem>>, vector<1x1x128x128xf32>
    %251 = vector.shape_cast %250 : vector<1x1x128x128xf32> to vector<128x128xf32>
    %cst_269 = arith.constant dense<0.000000e+00> : vector<128x128xf32>
    %252 = tpu.matmul %249, %251, %cst_269 {dimension_numbers = #tpu.dot_dimension_numbers<[1], [0], [0], [1], [0, 0, 1, 1], [], []>} : vector<128x128xf32>, vector<128x128xf32>, vector<128x128xf32> -> vector<128x128xf32>
    %253 = arith.addf %248, %252 : vector<128x128xf32>
    %c0_270 = arith.constant 0 : index
    %c0_271 = arith.constant 0 : index
    %254 = vector.load %arg22[%c0_270, %c0_271] : memref<128x128xf32, #tpu.memory_space<vmem>>, vector<128x128xf32>
    tpu.vector_store %arg22[%c0_270, %c0_271], %253 {strides = array<i32>} : memref<128x128xf32, #tpu.memory_space<vmem>>, vector<128x128xf32>,
    %255 = arith.index_cast %245 : i32 to index
    %c18_272 = arith.constant 18 : index
    %c0_273 = arith.constant 0 : index
    %256 = vector.load %arg17[%255, %c18_272, %c0_273] : memref<96x56x128xf32, #tpu.memory_space<vmem>>, vector<8x16x128xf32>
    %c0_274 = arith.constant 0 : index
    %c0_275 = arith.constant 0 : index
    %257 = vector.load %arg22[%c0_274, %c0_275] : memref<128x128xf32, #tpu.memory_space<vmem>>, vector<128x128xf32>
    %258 = vector.shape_cast %256 : vector<8x16x128xf32> to vector<128x128xf32>
    %c1_276 = arith.constant 1 : index
    %c1_277 = arith.constant 1 : index
    %c0_278 = arith.constant 0 : index
    %c0_279 = arith.constant 0 : index
    %259 = vector.load %arg7[%c1_276, %c1_277, %c0_278, %c0_279] : memref<3x3x128x128xf32, #tpu.memory_space<vmem>>, vector<1x1x128x128xf32>
    %260 = vector.shape_cast %259 : vector<1x1x128x128xf32> to vector<128x128xf32>
    %cst_280 = arith.constant dense<0.000000e+00> : vector<128x128xf32>
    %261 = tpu.matmul %258, %260, %cst_280 {dimension_numbers = #tpu.dot_dimension_numbers<[1], [0], [0], [1], [0, 0, 1, 1], [], []>} : vector<128x128xf32>, vector<128x128xf32>, vector<128x128xf32> -> vector<128x128xf32>
    %262 = arith.addf %257, %261 : vector<128x128xf32>
    %c0_281 = arith.constant 0 : index
    %c0_282 = arith.constant 0 : index
    %263 = vector.load %arg22[%c0_281, %c0_282] : memref<128x128xf32, #tpu.memory_space<vmem>>, vector<128x128xf32>
    tpu.vector_store %arg22[%c0_281, %c0_282], %262 {strides = array<i32>} : memref<128x128xf32, #tpu.memory_space<vmem>>, vector<128x128xf32>,
    %264 = arith.index_cast %245 : i32 to index
    %c36_283 = arith.constant 36 : index
    %c0_284 = arith.constant 0 : index
    %265 = vector.load %arg17[%264, %c36_283, %c0_284] : memref<96x56x128xf32, #tpu.memory_space<vmem>>, vector<8x16x128xf32>
    %c0_285 = arith.constant 0 : index
    %c0_286 = arith.constant 0 : index
    %266 = vector.load %arg22[%c0_285, %c0_286] : memref<128x128xf32, #tpu.memory_space<vmem>>, vector<128x128xf32>
    %267 = vector.shape_cast %265 : vector<8x16x128xf32> to vector<128x128xf32>
    %c1_287 = arith.constant 1 : index
    %c2_288 = arith.constant 2 : index
    %c0_289 = arith.constant 0 : index
    %c0_290 = arith.constant 0 : index
    %268 = vector.load %arg7[%c1_287, %c2_288, %c0_289, %c0_290] : memref<3x3x128x128xf32, #tpu.memory_space<vmem>>, vector<1x1x128x128xf32>
    %269 = vector.shape_cast %268 : vector<1x1x128x128xf32> to vector<128x128xf32>
    %cst_291 = arith.constant dense<0.000000e+00> : vector<128x128xf32>
    %270 = tpu.matmul %267, %269, %cst_291 {dimension_numbers = #tpu.dot_dimension_numbers<[1], [0], [0], [1], [0, 0, 1, 1], [], []>} : vector<128x128xf32>, vector<128x128xf32>, vector<128x128xf32> -> vector<128x128xf32>
    %271 = arith.addf %266, %270 : vector<128x128xf32>
    %c0_292 = arith.constant 0 : index
    %c0_293 = arith.constant 0 : index
    %272 = vector.load %arg22[%c0_292, %c0_293] : memref<128x128xf32, #tpu.memory_space<vmem>>, vector<128x128xf32>
    tpu.vector_store %arg22[%c0_292, %c0_293], %271 {strides = array<i32>} : memref<128x128xf32, #tpu.memory_space<vmem>>, vector<128x128xf32>,
    %c0_i32_294 = arith.constant 0 : i32
    %273 = arith.addi %26, %c0_i32_294 : i32
    %c36_i32 = arith.constant 36 : i32
    %274 = arith.addi %273, %c36_i32 : i32
    %275 = arith.index_cast %274 : i32 to index
    %c0_295 = arith.constant 0 : index
    %c0_296 = arith.constant 0 : index
    %276 = vector.load %arg17[%275, %c0_295, %c0_296] : memref<96x56x128xf32, #tpu.memory_space<vmem>>, vector<8x16x128xf32>
    %c0_297 = arith.constant 0 : index
    %c0_298 = arith.constant 0 : index
    %277 = vector.load %arg22[%c0_297, %c0_298] : memref<128x128xf32, #tpu.memory_space<vmem>>, vector<128x128xf32>
    %278 = vector.shape_cast %276 : vector<8x16x128xf32> to vector<128x128xf32>
    %c2_299 = arith.constant 2 : index
    %c0_300 = arith.constant 0 : index
    %c0_301 = arith.constant 0 : index
    %c0_302 = arith.constant 0 : index
    %279 = vector.load %arg7[%c2_299, %c0_300, %c0_301, %c0_302] : memref<3x3x128x128xf32, #tpu.memory_space<vmem>>, vector<1x1x128x128xf32>
    %280 = vector.shape_cast %279 : vector<1x1x128x128xf32> to vector<128x128xf32>
    %cst_303 = arith.constant dense<0.000000e+00> : vector<128x128xf32>
    %281 = tpu.matmul %278, %280, %cst_303 {dimension_numbers = #tpu.dot_dimension_numbers<[1], [0], [0], [1], [0, 0, 1, 1], [], []>} : vector<128x128xf32>, vector<128x128xf32>, vector<128x128xf32> -> vector<128x128xf32>
    %282 = arith.addf %277, %281 : vector<128x128xf32>
    %c0_304 = arith.constant 0 : index
    %c0_305 = arith.constant 0 : index
    %283 = vector.load %arg22[%c0_304, %c0_305] : memref<128x128xf32, #tpu.memory_space<vmem>>, vector<128x128xf32>
    tpu.vector_store %arg22[%c0_304, %c0_305], %282 {strides = array<i32>} : memref<128x128xf32, #tpu.memory_space<vmem>>, vector<128x128xf32>,
    %284 = arith.index_cast %274 : i32 to index
    %c18_306 = arith.constant 18 : index
    %c0_307 = arith.constant 0 : index
    %285 = vector.load %arg17[%284, %c18_306, %c0_307] : memref<96x56x128xf32, #tpu.memory_space<vmem>>, vector<8x16x128xf32>
    %c0_308 = arith.constant 0 : index
    %c0_309 = arith.constant 0 : index
    %286 = vector.load %arg22[%c0_308, %c0_309] : memref<128x128xf32, #tpu.memory_space<vmem>>, vector<128x128xf32>
    %287 = vector.shape_cast %285 : vector<8x16x128xf32> to vector<128x128xf32>
    %c2_310 = arith.constant 2 : index
    %c1_311 = arith.constant 1 : index
    %c0_312 = arith.constant 0 : index
    %c0_313 = arith.constant 0 : index
    %288 = vector.load %arg7[%c2_310, %c1_311, %c0_312, %c0_313] : memref<3x3x128x128xf32, #tpu.memory_space<vmem>>, vector<1x1x128x128xf32>
    %289 = vector.shape_cast %288 : vector<1x1x128x128xf32> to vector<128x128xf32>
    %cst_314 = arith.constant dense<0.000000e+00> : vector<128x128xf32>
    %290 = tpu.matmul %287, %289, %cst_314 {dimension_numbers = #tpu.dot_dimension_numbers<[1], [0], [0], [1], [0, 0, 1, 1], [], []>} : vector<128x128xf32>, vector<128x128xf32>, vector<128x128xf32> -> vector<128x128xf32>
    %291 = arith.addf %286, %290 : vector<128x128xf32>
    %c0_315 = arith.constant 0 : index
    %c0_316 = arith.constant 0 : index
    %292 = vector.load %arg22[%c0_315, %c0_316] : memref<128x128xf32, #tpu.memory_space<vmem>>, vector<128x128xf32>
    tpu.vector_store %arg22[%c0_315, %c0_316], %291 {strides = array<i32>} : memref<128x128xf32, #tpu.memory_space<vmem>>, vector<128x128xf32>,
    %293 = arith.index_cast %274 : i32 to index
    %c36_317 = arith.constant 36 : index
    %c0_318 = arith.constant 0 : index
    %294 = vector.load %arg17[%293, %c36_317, %c0_318] : memref<96x56x128xf32, #tpu.memory_space<vmem>>, vector<8x16x128xf32>
    %c0_319 = arith.constant 0 : index
    %c0_320 = arith.constant 0 : index
    %295 = vector.load %arg22[%c0_319, %c0_320] : memref<128x128xf32, #tpu.memory_space<vmem>>, vector<128x128xf32>
    %296 = vector.shape_cast %294 : vector<8x16x128xf32> to vector<128x128xf32>
    %c2_321 = arith.constant 2 : index
    %c2_322 = arith.constant 2 : index
    %c0_323 = arith.constant 0 : index
    %c0_324 = arith.constant 0 : index
    %297 = vector.load %arg7[%c2_321, %c2_322, %c0_323, %c0_324] : memref<3x3x128x128xf32, #tpu.memory_space<vmem>>, vector<1x1x128x128xf32>
    %298 = vector.shape_cast %297 : vector<1x1x128x128xf32> to vector<128x128xf32>
    %cst_325 = arith.constant dense<0.000000e+00> : vector<128x128xf32>
    %299 = tpu.matmul %296, %298, %cst_325 {dimension_numbers = #tpu.dot_dimension_numbers<[1], [0], [0], [1], [0, 0, 1, 1], [], []>} : vector<128x128xf32>, vector<128x128xf32>, vector<128x128xf32> -> vector<128x128xf32>
    %300 = arith.addf %295, %299 : vector<128x128xf32>
    %c0_326 = arith.constant 0 : index
    %c0_327 = arith.constant 0 : index
    %301 = vector.load %arg22[%c0_326, %c0_327] : memref<128x128xf32, #tpu.memory_space<vmem>>, vector<128x128xf32>
    tpu.vector_store %arg22[%c0_326, %c0_327], %300 {strides = array<i32>} : memref<128x128xf32, #tpu.memory_space<vmem>>, vector<128x128xf32>,
    %c0_i32_328 = arith.constant 0 : i32
    %302 = arith.cmpi eq, %arg2, %c0_i32_328 : i32
    %303 = arith.extui %302 : i1 to i32
    %c0_i32_329 = arith.constant 0 : i32
    %304 = arith.cmpi ne, %303, %c0_i32_329 : i32
    scf.if %304 {
      %c0_330 = arith.constant 0 : index
      %c0_331 = arith.constant 0 : index
      %305 = vector.load %arg19[%c0_330, %c0_331] : memref<128x128xf32, #tpu.memory_space<vmem>>, vector<128x128xf32>
      %c0_332 = arith.constant 0 : index
      %c0_333 = arith.constant 0 : index
      %306 = vector.load %arg8[%c0_332, %c0_333] : memref<1x128xf32, #tpu.memory_space<vmem>>, vector<1x128xf32>
      %307 = vector.broadcast %306 : vector<1x128xf32> to vector<128x128xf32>
      %308 = arith.addf %305, %307 : vector<128x128xf32>
      %cst_334 = arith.constant 0.000000e+00 : f32
      %309 = vector.broadcast %cst_334 : f32 to vector<128x128xf32>
      %310 = arith.maximumf %308, %309 : vector<128x128xf32>
      %c0_335 = arith.constant 0 : index
      %c0_336 = arith.constant 0 : index
      %c0_337 = arith.constant 0 : index
      %311 = vector.load %arg12[%c0_335, %c0_336, %c0_337] : memref<1x128x128xf32, #tpu.memory_space<vmem>>, vector<1x128x128xf32>
      %312 = vector.shape_cast %311 : vector<1x128x128xf32> to vector<128x128xf32>
      %313 = vector.shape_cast %310 : vector<128x128xf32> to vector<1x128x128xf32>
      tpu.vector_store %arg12[%c0_335, %c0_336, %c0_337], %313 {strides = array<i32>} : memref<1x128x128xf32, #tpu.memory_space<vmem>>, vector<1x128x128xf32>,
      %c0_338 = arith.constant 0 : index
      %c0_339 = arith.constant 0 : index
      %314 = vector.load %arg20[%c0_338, %c0_339] : memref<128x128xf32, #tpu.memory_space<vmem>>, vector<128x128xf32>
      %c0_340 = arith.constant 0 : index
      %c0_341 = arith.constant 0 : index
      %315 = vector.load %arg9[%c0_340, %c0_341] : memref<1x128xf32, #tpu.memory_space<vmem>>, vector<1x128xf32>
      %316 = vector.broadcast %315 : vector<1x128xf32> to vector<128x128xf32>
      %317 = arith.addf %314, %316 : vector<128x128xf32>
      %cst_342 = arith.constant 0.000000e+00 : f32
      %318 = vector.broadcast %cst_342 : f32 to vector<128x128xf32>
      %319 = arith.maximumf %317, %318 : vector<128x128xf32>
      %c0_343 = arith.constant 0 : index
      %c0_344 = arith.constant 0 : index
      %c0_345 = arith.constant 0 : index
      %320 = vector.load %arg13[%c0_343, %c0_344, %c0_345] : memref<1x128x128xf32, #tpu.memory_space<vmem>>, vector<1x128x128xf32>
      %321 = vector.shape_cast %320 : vector<1x128x128xf32> to vector<128x128xf32>
      %322 = vector.shape_cast %319 : vector<128x128xf32> to vector<1x128x128xf32>
      tpu.vector_store %arg13[%c0_343, %c0_344, %c0_345], %322 {strides = array<i32>} : memref<1x128x128xf32, #tpu.memory_space<vmem>>, vector<1x128x128xf32>,
      %c0_346 = arith.constant 0 : index
      %c0_347 = arith.constant 0 : index
      %323 = vector.load %arg21[%c0_346, %c0_347] : memref<128x128xf32, #tpu.memory_space<vmem>>, vector<128x128xf32>
      %c0_348 = arith.constant 0 : index
      %c0_349 = arith.constant 0 : index
      %324 = vector.load %arg10[%c0_348, %c0_349] : memref<1x128xf32, #tpu.memory_space<vmem>>, vector<1x128xf32>
      %325 = vector.broadcast %324 : vector<1x128xf32> to vector<128x128xf32>
      %326 = arith.addf %323, %325 : vector<128x128xf32>
      %cst_350 = arith.constant 0.000000e+00 : f32
      %327 = vector.broadcast %cst_350 : f32 to vector<128x128xf32>
      %328 = arith.maximumf %326, %327 : vector<128x128xf32>
      %c0_351 = arith.constant 0 : index
      %c0_352 = arith.constant 0 : index
      %c0_353 = arith.constant 0 : index
      %329 = vector.load %arg14[%c0_351, %c0_352, %c0_353] : memref<1x128x128xf32, #tpu.memory_space<vmem>>, vector<1x128x128xf32>
      %330 = vector.shape_cast %329 : vector<1x128x128xf32> to vector<128x128xf32>
      %331 = vector.shape_cast %328 : vector<128x128xf32> to vector<1x128x128xf32>
      tpu.vector_store %arg14[%c0_351, %c0_352, %c0_353], %331 {strides = array<i32>} : memref<1x128x128xf32, #tpu.memory_space<vmem>>, vector<1x128x128xf32>,
      %c0_354 = arith.constant 0 : index
      %c0_355 = arith.constant 0 : index
      %332 = vector.load %arg22[%c0_354, %c0_355] : memref<128x128xf32, #tpu.memory_space<vmem>>, vector<128x128xf32>
      %c0_356 = arith.constant 0 : index
      %c0_357 = arith.constant 0 : index
      %333 = vector.load %arg11[%c0_356, %c0_357] : memref<1x128xf32, #tpu.memory_space<vmem>>, vector<1x128xf32>
      %334 = vector.broadcast %333 : vector<1x128xf32> to vector<128x128xf32>
      %335 = arith.addf %332, %334 : vector<128x128xf32>
      %cst_358 = arith.constant 0.000000e+00 : f32
      %336 = vector.broadcast %cst_358 : f32 to vector<128x128xf32>
      %337 = arith.maximumf %335, %336 : vector<128x128xf32>
      %c0_359 = arith.constant 0 : index
      %c0_360 = arith.constant 0 : index
      %c0_361 = arith.constant 0 : index
      %338 = vector.load %arg15[%c0_359, %c0_360, %c0_361] : memref<1x128x128xf32, #tpu.memory_space<vmem>>, vector<1x128x128xf32>
      %339 = vector.shape_cast %338 : vector<1x128x128xf32> to vector<128x128xf32>
      %340 = vector.shape_cast %337 : vector<128x128xf32> to vector<1x128x128xf32>
      tpu.vector_store %arg15[%c0_359, %c0_360, %c0_361], %340 {strides = array<i32>} : memref<1x128x128xf32, #tpu.memory_space<vmem>>, vector<1x128x128xf32>,
    } else {
    }
    return
  }
  func.func @transform_1(%arg0: i32, %arg1: i32, %arg2: i32) -> (i32, i32) {
    %c0_i32 = arith.constant 0 : i32
    %c0_i32_0 = arith.constant 0 : i32
    return %arg2, %c0_i32 : i32, i32
  }
  func.func @transform_2(%arg0: i32, %arg1: i32, %arg2: i32) -> (i32, i32, i32, i32) {
    %c0_i32 = arith.constant 0 : i32
    %c0_i32_0 = arith.constant 0 : i32
    %c0_i32_1 = arith.constant 0 : i32
    %c0_i32_2 = arith.constant 0 : i32
    return %c0_i32, %c0_i32_0, %arg2, %c0_i32_1 : i32, i32, i32, i32
  }
  func.func @transform_3(%arg0: i32, %arg1: i32, %arg2: i32) -> (i32, i32, i32, i32) {
    %c0_i32 = arith.constant 0 : i32
    %c0_i32_0 = arith.constant 0 : i32
    %c0_i32_1 = arith.constant 0 : i32
    %c0_i32_2 = arith.constant 0 : i32
    return %c0_i32, %c0_i32_0, %arg2, %c0_i32_1 : i32, i32, i32, i32
  }
  func.func @transform_4(%arg0: i32, %arg1: i32, %arg2: i32) -> (i32, i32, i32, i32) {
    %c0_i32 = arith.constant 0 : i32
    %c0_i32_0 = arith.constant 0 : i32
    %c0_i32_1 = arith.constant 0 : i32
    %c0_i32_2 = arith.constant 0 : i32
    return %c0_i32, %c0_i32_0, %arg2, %c0_i32_1 : i32, i32, i32, i32
  }
  func.func @transform_5(%arg0: i32, %arg1: i32, %arg2: i32) -> (i32, i32) {
    %c0_i32 = arith.constant 0 : i32
    %c0_i32_0 = arith.constant 0 : i32
    %c0_i32_1 = arith.constant 0 : i32
    return %c0_i32, %c0_i32_0 : i32, i32
  }
  func.func @transform_6(%arg0: i32, %arg1: i32, %arg2: i32) -> (i32, i32) {
    %c0_i32 = arith.constant 0 : i32
    %c0_i32_0 = arith.constant 0 : i32
    %c0_i32_1 = arith.constant 0 : i32
    return %c0_i32, %c0_i32_0 : i32, i32
  }
  func.func @transform_7(%arg0: i32, %arg1: i32, %arg2: i32) -> (i32, i32) {
    %c0_i32 = arith.constant 0 : i32
    %c0_i32_0 = arith.constant 0 : i32
    %c0_i32_1 = arith.constant 0 : i32
    return %c0_i32, %c0_i32_0 : i32, i32
  }
  func.func @transform_8(%arg0: i32, %arg1: i32, %arg2: i32) -> (i32, i32) {
    %c0_i32 = arith.constant 0 : i32
    %c0_i32_0 = arith.constant 0 : i32
    %c0_i32_1 = arith.constant 0 : i32
    return %c0_i32, %c0_i32_0 : i32, i32
  }
  func.func @transform_9(%arg0: i32, %arg1: i32, %arg2: i32) -> (i32, i32, i32) {
    %c0_i32 = arith.constant 0 : i32
    %c0_i32_0 = arith.constant 0 : i32
    return %arg0, %arg1, %c0_i32 : i32, i32, i32
  }
  func.func @transform_10(%arg0: i32, %arg1: i32, %arg2: i32) -> (i32, i32, i32) {
    %c0_i32 = arith.constant 0 : i32
    %c0_i32_0 = arith.constant 0 : i32
    return %arg0, %arg1, %c0_i32 : i32, i32, i32
  }
  func.func @transform_11(%arg0: i32, %arg1: i32, %arg2: i32) -> (i32, i32, i32) {
    %c0_i32 = arith.constant 0 : i32
    %c0_i32_0 = arith.constant 0 : i32
    return %arg0, %arg1, %c0_i32 : i32, i32, i32
  }
  func.func @transform_12(%arg0: i32, %arg1: i32, %arg2: i32) -> (i32, i32, i32) {
    %c0_i32 = arith.constant 0 : i32
    %c0_i32_0 = arith.constant 0 : i32
    return %arg0, %arg1, %c0_i32 : i32, i32, i32
  }
  func.func @transform_13(%arg0: i32, %arg1: i32, %arg2: i32) -> (i32, i32, i32) {
    %c2_i32 = arith.constant 2 : i32
    %0 = arith.muli %arg0, %c2_i32 : i32
    %1 = arith.addi %0, %arg1 : i32
    %c0_i32 = arith.constant 0 : i32
    %c0_i32_0 = arith.constant 0 : i32
    return %1, %c0_i32, %arg2 : i32, i32, i32
  }
}

</mosaic_0001>

<llo_original>
// kernel: tpu_custom_call.1
$region0: #{tpu_custom_call.1}
  #allocation0 [shape = 'u32[]', space=smem, size = 0x4, offset = 0x4, fixed_abs, tag = 'smem constant byte address 0x4 - core index']
  #allocation1 [shape = 'u32[144,128]{1,0:T(1,128)}', space=vmem, size = 0x12000, scoped, tag = 'internal scratch']
  #allocation2 [shape = 'f32[96,56,128]{2,1,0:T(8,128)}', space=vmem, size = 0x2a0000, scoped, tag = 'scratch operand']
  #allocation3 [shape = 's32[2]{0}', space=sflag, size = 0x8, scoped, tag = 'scratch operand']
  #allocation4 [shape = 'f32[128,128]{1,0:T(8,128)}', space=vmem, size = 0x10000, scoped, tag = 'scratch operand']
  #allocation5 [shape = 'f32[128,128]{1,0:T(8,128)}', space=vmem, size = 0x10000, scoped, tag = 'scratch operand']
  #allocation6 [shape = 'f32[128,128]{1,0:T(8,128)}', space=vmem, size = 0x10000, scoped, tag = 'scratch operand']
  #allocation7 [shape = 'f32[128,128]{1,0:T(8,128)}', space=vmem, size = 0x10000, scoped, tag = 'scratch operand']
  #allocation29 [shape = 's32[]', space=sflag, size = 0x4, offset = 0, fixed_abs, tag = 'sflag constant byte address 0x0 - dummy sync flag']
  #allocation30 [shape = 's32[]', space=sflag, size = 0x4, offset = 0, fixed_abs, tag = 'sflag constant byte address 0x0 - dummy sync flag']
  #allocation31 [shape = 'u32[]', space=smem, size = 0x4, offset = 0x44, fixed_abs, tag = 'smem constant byte address 0x44 - assertion arg 0']
  #allocation32 [shape = 'u32[]', space=smem, size = 0x4, offset = 0x48, fixed_abs, tag = 'smem constant byte address 0x48 - assertion arg 1']
  #allocation33 [shape = 's32[]', space=sflag, size = 0x4, offset = 0, fixed_abs, tag = 'sflag constant byte address 0x0 - dummy sync flag']
  #allocation34 [shape = 's32[]', space=sflag, size = 0x4, offset = 0, fixed_abs, tag = 'sflag constant byte address 0x0 - dummy sync flag']
  %s0 = inlined_call_operand.hbm [shape: f32[2,56,56,128], index: 0, kind: input, shape index: {}]
  %s1 = inlined_call_operand.hbm [shape: f32[128,128], index: 1, kind: input, shape index: {}]
  %s2 = inlined_call_operand.hbm [shape: f32[3,3,128,128], index: 2, kind: input, shape index: {}]
  %s3 = inlined_call_operand.hbm [shape: f32[3,3,128,128], index: 3, kind: input, shape index: {}]
  %s4 = inlined_call_operand.hbm [shape: f32[3,3,128,128], index: 4, kind: input, shape index: {}]
  %s5 = inlined_call_operand.hbm [shape: f32[1,128], index: 5, kind: input, shape index: {}]
  %s6 = inlined_call_operand.hbm [shape: f32[1,128], index: 6, kind: input, shape index: {}]
  %s7 = inlined_call_operand.hbm [shape: f32[1,128], index: 7, kind: input, shape index: {}]
  %s8 = inlined_call_operand.hbm [shape: f32[1,128], index: 8, kind: input, shape index: {}]
  %s9 = inlined_call_operand.hbm [shape: f32[2,256,128], index: 9, kind: output, shape index: {0}]
  %s10 = inlined_call_operand.hbm [shape: f32[2,256,128], index: 10, kind: output, shape index: {1}]
  %s11 = inlined_call_operand.hbm [shape: f32[2,256,128], index: 11, kind: output, shape index: {2}]
  %s12 = inlined_call_operand.hbm [shape: f32[2,256,128], index: 12, kind: output, shape index: {3}]
  %s13 = inlined_call_operand.hbm [shape: f32[4,1,128], index: 13, kind: output, shape index: {4}]
  %14 = xla_tuple %s9, %s10, %s11, %s12, %s13
  %s15 = sld [smem:[#allocation0]]
  $region149: #{tpu_custom_call.1} parent=0
    _
  %s17 = ssub.s32 1, %s15
  %s18 = scalar_select 0, %s17, %s15
  $region1: #{tpu_custom_call.1} parent=0
    #allocation8 [shape = 'u8[65536]{0}', space=vmem, size = 0x10000, scoped, tag = 'input window, operand 1, single buffered']
    #allocation9 [shape = 's32[2]{0}', space=sflag, size = 0x8, scoped, tag = 'scoped memory for tpu_custom_call.1']
    #allocation10 [shape = 's32[2]{0}', space=sflag, size = 0x8, scoped, tag = 'scoped memory for tpu_custom_call.1']
    #allocation11 [shape = 'u8[589824]{0}', space=vmem, size = 0x90000, scoped, tag = 'input window, operand 2, single buffered']
    #allocation12 [shape = 's32[1]{0}', space=sflag, size = 0x4, scoped, tag = 'scoped memory for tpu_custom_call.1']
    #allocation13 [shape = 'u8[589824]{0}', space=vmem, size = 0x90000, scoped, tag = 'input window, operand 3, single buffered']
    #allocation14 [shape = 'u8[589824]{0}', space=vmem, size = 0x90000, scoped, tag = 'input window, operand 4, single buffered']
    #allocation15 [shape = 's32[1]{0}', space=sflag, size = 0x4, scoped, tag = 'scoped memory for tpu_custom_call.1']
    #allocation16 [shape = 'u8[512]{0}', space=vmem, size = 0x400, scoped, tag = 'input window, operand 5, single buffered']
    #allocation17 [shape = 'u8[512]{0}', space=vmem, size = 0x400, scoped, tag = 'input window, operand 6, single buffered']
    #allocation18 [shape = 's32[1]{0}', space=sflag, size = 0x4, scoped, tag = 'scoped memory for tpu_custom_call.1']
    #allocation19 [shape = 'u8[512]{0}', space=vmem, size = 0x400, scoped, tag = 'input window, operand 7, single buffered']
    #allocation20 [shape = 'u8[512]{0}', space=vmem, size = 0x400, scoped, tag = 'input window, operand 8, single buffered']
    #allocation21 [shape = 's32[1]{0}', space=sflag, size = 0x4, scoped, tag = 'scoped memory for tpu_custom_call.1']
    #allocation22 [shape = 'u8[131072]{0}', space=vmem, size = 0x20000, scoped, tag = 'output window, operand 0']
    #allocation23 [shape = 'u8[131072]{0}', space=vmem, size = 0x20000, scoped, tag = 'output window, operand 1']
    #allocation24 [shape = 's32[2]{0}', space=sflag, size = 0x8, scoped, tag = 'scoped memory for tpu_custom_call.1']
    #allocation25 [shape = 'u8[131072]{0}', space=vmem, size = 0x20000, scoped, tag = 'output window, operand 2']
    #allocation26 [shape = 'u8[131072]{0}', space=vmem, size = 0x20000, scoped, tag = 'output window, operand 3']
    #allocation27 [shape = 's32[2]{0}', space=sflag, size = 0x8, scoped, tag = 'scoped memory for tpu_custom_call.1']
    #allocation28 [shape = 'u8[1024]{0}', space=vmem, size = 0x400, scoped, tag = 'output window, operand 4']
    %19 = vsyncpa [#allocation9], 0
    %20 = vsyncpa [#allocation12], 0
    %21 = vsyncpa [#allocation15], 0
    %22 = vsyncpa [#allocation18], 0
    %23 = vsyncpa [#allocation21], 0
    %24 = vsyncpa [#allocation10], 0
    %s25 = scalar_lea.sflag [#allocation10], 1
    %26 = vsyncpa %s25, 0
    %27 = vsyncpa [#allocation24], 0
    %s28 = scalar_lea.sflag [#allocation24], 1
    %29 = vsyncpa %s28, 0
    %30 = vsyncpa [#allocation27], 0
    %s31 = scalar_lea.sflag [#allocation27], 1
    %32 = vsyncpa %s31, 0
    loop: start=0, step=1, limit=6
    $region2: #{tpu_custom_call.1} parent=1 // loop_pre_header
      _
    $region3: #{tpu_custom_call.1} parent=1 // loop_header
      %s34 = sphi 0, %s38
      %p35 = scmp.ge.s32.totalorder %s34, 6
      %s41 = sphi 0, %s60
      %s42 = sphi 0, %s56
      %s43 = sphi 0, %s52
      %s44 = sphi 0, %s41
      %s45 = sphi 0, %s42
      %s46 = sphi 0, %s43
      %s47 = sphi 0, %s44
      %s48 = sphi 0, %s45
      %s49 = sphi 0, %s46
      %s63 = sphi 0, %s65
      %s66 = sphi 0, %s63
      %s67 = sphi 0, %s66
      %s83 = sphi 0, %s67
      %s89 = sphi 0, %s91
      %s92 = sphi 0, %s89
      %s93 = sphi 0, %s92
      %s109 = sphi 0, %s93
      %s115 = sphi 0, %s117
      %s118 = sphi 0, %s115
      %s119 = sphi 0, %s118
      %s135 = sphi 0, %s119
      %s141 = sphi 0, %s143
      %s144 = sphi 0, %s141
      %s145 = sphi 0, %s144
      %s161 = sphi 0, %s145
      %s165 = sphi 0, %s165
      %s167 = sphi 0, %s165
      %s168 = sphi 0, %s167
      %s182 = sphi 0, %s168
      %s186 = sphi 0, %s186
      %s188 = sphi 0, %s186
      %s189 = sphi 0, %s188
      %s203 = sphi 0, %s189
      %s207 = sphi 0, %s207
      %s209 = sphi 0, %s207
      %s210 = sphi 0, %s209
      %s224 = sphi 0, %s210
      %s228 = sphi 0, %s228
      %s230 = sphi 0, %s228
      %s231 = sphi 0, %s230
      %s245 = sphi 0, %s231
      %s253 = sphi 0, %s255
      %s256 = sphi 0, %s253
      %s257 = sphi 0, %s256
      %s273 = sphi 0, %s257
      %s281 = sphi 0, %s283
      %s284 = sphi 0, %s281
      %s285 = sphi 0, %s284
      %s301 = sphi 0, %s285
      %s309 = sphi 0, %s311
      %s312 = sphi 0, %s309
      %s313 = sphi 0, %s312
      %s329 = sphi 0, %s313
      %s337 = sphi 0, %s339
      %s340 = sphi 0, %s337
      %s341 = sphi 0, %s340
      %s357 = sphi 0, %s341
      %s369 = sphi 0, %s371
      %s372 = sphi 0, %s369
      %s373 = sphi 0, %s372
      %s389 = sphi 0, %s373
    $region4: #{tpu_custom_call.1} parent=1 // loop_header_branch
      %37 = sbr.rel (%p35) target = $region8
    $region5: #{tpu_custom_call.1} parent=1 // loop_body
      %s39 = ssub.s32 %s34, 1
      %s40 = ssub.s32 %s34, 2
      %s50 = sadd.s32 1, %s43
      %p51 = scmp.ge.s32.totalorder %s50, 1
      %s52 = scalar_select %p51, 0, %s50
      %s53 = sadd.s32 1, %s42
      %s54 = scalar_select %p51, %s53, %s42
      %p55 = scmp.ge.s32.totalorder %s54, 2
      %s56 = scalar_select %p55, 0, %s54
      %s57 = sadd.s32 1, %s41
      %s58 = scalar_select %p55, %s57, %s41
      %p59 = scmp.ge.s32.totalorder %s58, 2
      %s60 = scalar_select %p59, 0, %s58
      %s61 = ssub.s32 %s43, %s52
      %p62 = scmp.eq.s32.totalorder %s61, 0
      %s64 = sadd.s32 %s63, 1
      %s65 = scalar_select %p62, %s63, %s64
      %p68 = pneg %p62
      %p69 = scmp.eq.s32.totalorder %s34, 3
      %p70 = por %p68, %p69
      %p71 = scmp.ne.s32.totalorder %s63, %s66
      %p72 = scmp.eq.s32.totalorder %s34, 0
      %p73 = por %p71, %p72
      %p74 = scmp.ne.s32.totalorder %s63, %s66
      %p75 = scmp.eq.s32.totalorder %s39, 3
      %p76 = por %p74, %p75
      %p77 = scmp.ne.s32.totalorder %s66, %s67
      %p78 = scmp.eq.s32.totalorder %s39, 0
      %p79 = por %p77, %p78
      %p80 = scmp.ne.s32.totalorder %s66, %s67
      %p81 = scmp.eq.s32.totalorder %s40, 3
      %p82 = por %p80, %p81
      %p84 = scmp.ne.s32.totalorder %s67, %s83
      %p85 = scmp.eq.s32.totalorder %s40, 0
      %p86 = por %p84, %p85
      %s87 = ssub.s32 %s43, %s52
      %p88 = scmp.eq.s32.totalorder %s87, 0
      %s90 = sadd.s32 %s89, 1
      %s91 = scalar_select %p88, %s89, %s90
      %p94 = pneg %p88
      %p95 = scmp.eq.s32.totalorder %s34, 3
      %p96 = por %p94, %p95
      %p97 = scmp.ne.s32.totalorder %s89, %s92
      %p98 = scmp.eq.s32.totalorder %s34, 0
      %p99 = por %p97, %p98
      %p100 = scmp.ne.s32.totalorder %s89, %s92
      %p101 = scmp.eq.s32.totalorder %s39, 3
      %p102 = por %p100, %p101
      %p103 = scmp.ne.s32.totalorder %s92, %s93
      %p104 = scmp.eq.s32.totalorder %s39, 0
      %p105 = por %p103, %p104
      %p106 = scmp.ne.s32.totalorder %s92, %s93
      %p107 = scmp.eq.s32.totalorder %s40, 3
      %p108 = por %p106, %p107
      %p110 = scmp.ne.s32.totalorder %s93, %s109
      %p111 = scmp.eq.s32.totalorder %s40, 0
      %p112 = por %p110, %p111
      %s113 = ssub.s32 %s43, %s52
      %p114 = scmp.eq.s32.totalorder %s113, 0
      %s116 = sadd.s32 %s115, 1
      %s117 = scalar_select %p114, %s115, %s116
      %p120 = pneg %p114
      %p121 = scmp.eq.s32.totalorder %s34, 3
      %p122 = por %p120, %p121
      %p123 = scmp.ne.s32.totalorder %s115, %s118
      %p124 = scmp.eq.s32.totalorder %s34, 0
      %p125 = por %p123, %p124
      %p126 = scmp.ne.s32.totalorder %s115, %s118
      %p127 = scmp.eq.s32.totalorder %s39, 3
      %p128 = por %p126, %p127
      %p129 = scmp.ne.s32.totalorder %s118, %s119
      %p130 = scmp.eq.s32.totalorder %s39, 0
      %p131 = por %p129, %p130
      %p132 = scmp.ne.s32.totalorder %s118, %s119
      %p133 = scmp.eq.s32.totalorder %s40, 3
      %p134 = por %p132, %p133
      %p136 = scmp.ne.s32.totalorder %s119, %s135
      %p137 = scmp.eq.s32.totalorder %s40, 0
      %p138 = por %p136, %p137
      %s139 = ssub.s32 %s43, %s52
      %p140 = scmp.eq.s32.totalorder %s139, 0
      %s142 = sadd.s32 %s141, 1
      %s143 = scalar_select %p140, %s141, %s142
      %p146 = pneg %p140
      %p147 = scmp.eq.s32.totalorder %s34, 3
      %p148 = por %p146, %p147
      %p149 = scmp.ne.s32.totalorder %s141, %s144
      %p150 = scmp.eq.s32.totalorder %s34, 0
      %p151 = por %p149, %p150
      %p152 = scmp.ne.s32.totalorder %s141, %s144
      %p153 = scmp.eq.s32.totalorder %s39, 3
      %p154 = por %p152, %p153
      %p155 = scmp.ne.s32.totalorder %s144, %s145
      %p156 = scmp.eq.s32.totalorder %s39, 0
      %p157 = por %p155, %p156
      %p158 = scmp.ne.s32.totalorder %s144, %s145
      %p159 = scmp.eq.s32.totalorder %s40, 3
      %p160 = por %p158, %p159
      %p162 = scmp.ne.s32.totalorder %s145, %s161
      %p163 = scmp.eq.s32.totalorder %s40, 0
      %p164 = por %p162, %p163
      %s166 = sadd.s32 %s165, 1
      %p169 = scmp.eq.s32.totalorder %s34, 3
      %p170 = scmp.ne.s32.totalorder %s165, %s167
      %p171 = scmp.eq.s32.totalorder %s34, 0
      %p172 = por %p170, %p171
      %p173 = scmp.ne.s32.totalorder %s165, %s167
      %p174 = scmp.eq.s32.totalorder %s39, 3
      %p175 = por %p173, %p174
      %p176 = scmp.ne.s32.totalorder %s167, %s168
      %p177 = scmp.eq.s32.totalorder %s39, 0
      %p178 = por %p176, %p177
      %p179 = scmp.ne.s32.totalorder %s167, %s168
      %p180 = scmp.eq.s32.totalorder %s40, 3
      %p181 = por %p179, %p180
      %p183 = scmp.ne.s32.totalorder %s168, %s182
      %p184 = scmp.eq.s32.totalorder %s40, 0
      %p185 = por %p183, %p184
      %s187 = sadd.s32 %s186, 1
      %p190 = scmp.eq.s32.totalorder %s34, 3
      %p191 = scmp.ne.s32.totalorder %s186, %s188
      %p192 = scmp.eq.s32.totalorder %s34, 0
      %p193 = por %p191, %p192
      %p194 = scmp.ne.s32.totalorder %s186, %s188
      %p195 = scmp.eq.s32.totalorder %s39, 3
      %p196 = por %p194, %p195
      %p197 = scmp.ne.s32.totalorder %s188, %s189
      %p198 = scmp.eq.s32.totalorder %s39, 0
      %p199 = por %p197, %p198
      %p200 = scmp.ne.s32.totalorder %s188, %s189
      %p201 = scmp.eq.s32.totalorder %s40, 3
      %p202 = por %p200, %p201
      %p204 = scmp.ne.s32.totalorder %s189, %s203
      %p205 = scmp.eq.s32.totalorder %s40, 0
      %p206 = por %p204, %p205
      %s208 = sadd.s32 %s207, 1
      %p211 = scmp.eq.s32.totalorder %s34, 3
      %p212 = scmp.ne.s32.totalorder %s207, %s209
      %p213 = scmp.eq.s32.totalorder %s34, 0
      %p214 = por %p212, %p213
      %p215 = scmp.ne.s32.totalorder %s207, %s209
      %p216 = scmp.eq.s32.totalorder %s39, 3
      %p217 = por %p215, %p216
      %p218 = scmp.ne.s32.totalorder %s209, %s210
      %p219 = scmp.eq.s32.totalorder %s39, 0
      %p220 = por %p218, %p219
      %p221 = scmp.ne.s32.totalorder %s209, %s210
      %p222 = scmp.eq.s32.totalorder %s40, 3
      %p223 = por %p221, %p222
      %p225 = scmp.ne.s32.totalorder %s210, %s224
      %p226 = scmp.eq.s32.totalorder %s40, 0
      %p227 = por %p225, %p226
      %s229 = sadd.s32 %s228, 1
      %p232 = scmp.eq.s32.totalorder %s34, 3
      %p233 = scmp.ne.s32.totalorder %s228, %s230
      %p234 = scmp.eq.s32.totalorder %s34, 0
      %p235 = por %p233, %p234
      %p236 = scmp.ne.s32.totalorder %s228, %s230
      %p237 = scmp.eq.s32.totalorder %s39, 3
      %p238 = por %p236, %p237
      %p239 = scmp.ne.s32.totalorder %s230, %s231
      %p240 = scmp.eq.s32.totalorder %s39, 0
      %p241 = por %p239, %p240
      %p242 = scmp.ne.s32.totalorder %s230, %s231
      %p243 = scmp.eq.s32.totalorder %s40, 3
      %p244 = por %p242, %p243
      %p246 = scmp.ne.s32.totalorder %s231, %s245
      %p247 = scmp.eq.s32.totalorder %s40, 0
      %p248 = por %p246, %p247
      %s249 = ssub.s32 %s41, %s60
      %s250 = ssub.s32 %s42, %s56
      %s251 = sor.u32 %s249, %s250
      %p252 = scmp.eq.s32.totalorder %s251, 0
      %s254 = sadd.s32 %s253, 1
      %s255 = scalar_select %p252, %s253, %s254
      %p258 = pneg %p252
      %p259 = scmp.eq.s32.totalorder %s34, 3
      %p260 = por %p258, %p259
      %p261 = scmp.ne.s32.totalorder %s253, %s256
      %p262 = scmp.eq.s32.totalorder %s34, 0
      %p263 = por %p261, %p262
      %p264 = scmp.ne.s32.totalorder %s253, %s256
      %p265 = scmp.eq.s32.totalorder %s39, 3
      %p266 = por %p264, %p265
      %p267 = scmp.ne.s32.totalorder %s256, %s257
      %p268 = scmp.eq.s32.totalorder %s39, 0
      %p269 = por %p267, %p268
      %p270 = scmp.ne.s32.totalorder %s256, %s257
      %p271 = scmp.eq.s32.totalorder %s40, 3
      %p272 = por %p270, %p271
      %p274 = scmp.ne.s32.totalorder %s257, %s273
      %p275 = scmp.eq.s32.totalorder %s40, 0
      %p276 = por %p274, %p275
      %s277 = ssub.s32 %s41, %s60
      %s278 = ssub.s32 %s42, %s56
      %s279 = sor.u32 %s277, %s278
      %p280 = scmp.eq.s32.totalorder %s279, 0
      %s282 = sadd.s32 %s281, 1
      %s283 = scalar_select %p280, %s281, %s282
      %p286 = pneg %p280
      %p287 = scmp.eq.s32.totalorder %s34, 3
      %p288 = por %p286, %p287
      %p289 = scmp.ne.s32.totalorder %s281, %s284
      %p290 = scmp.eq.s32.totalorder %s34, 0
      %p291 = por %p289, %p290
      %p292 = scmp.ne.s32.totalorder %s281, %s284
      %p293 = scmp.eq.s32.totalorder %s39, 3
      %p294 = por %p292, %p293
      %p295 = scmp.ne.s32.totalorder %s284, %s285
      %p296 = scmp.eq.s32.totalorder %s39, 0
      %p297 = por %p295, %p296
      %p298 = scmp.ne.s32.totalorder %s284, %s285
      %p299 = scmp.eq.s32.totalorder %s40, 3
      %p300 = por %p298, %p299
      %p302 = scmp.ne.s32.totalorder %s285, %s301
      %p303 = scmp.eq.s32.totalorder %s40, 0
      %p304 = por %p302, %p303
      %s305 = ssub.s32 %s41, %s60
      %s306 = ssub.s32 %s42, %s56
      %s307 = sor.u32 %s305, %s306
      %p308 = scmp.eq.s32.totalorder %s307, 0
      %s310 = sadd.s32 %s309, 1
      %s311 = scalar_select %p308, %s309, %s310
      %p314 = pneg %p308
      %p315 = scmp.eq.s32.totalorder %s34, 3
      %p316 = por %p314, %p315
      %p317 = scmp.ne.s32.totalorder %s309, %s312
      %p318 = scmp.eq.s32.totalorder %s34, 0
      %p319 = por %p317, %p318
      %p320 = scmp.ne.s32.totalorder %s309, %s312
      %p321 = scmp.eq.s32.totalorder %s39, 3
      %p322 = por %p320, %p321
      %p323 = scmp.ne.s32.totalorder %s312, %s313
      %p324 = scmp.eq.s32.totalorder %s39, 0
      %p325 = por %p323, %p324
      %p326 = scmp.ne.s32.totalorder %s312, %s313
      %p327 = scmp.eq.s32.totalorder %s40, 3
      %p328 = por %p326, %p327
      %p330 = scmp.ne.s32.totalorder %s313, %s329
      %p331 = scmp.eq.s32.totalorder %s40, 0
      %p332 = por %p330, %p331
      %s333 = ssub.s32 %s41, %s60
      %s334 = ssub.s32 %s42, %s56
      %s335 = sor.u32 %s333, %s334
      %p336 = scmp.eq.s32.totalorder %s335, 0
      %s338 = sadd.s32 %s337, 1
      %s339 = scalar_select %p336, %s337, %s338
      %p342 = pneg %p336
      %p343 = scmp.eq.s32.totalorder %s34, 3
      %p344 = por %p342, %p343
      %p345 = scmp.ne.s32.totalorder %s337, %s340
      %p346 = scmp.eq.s32.totalorder %s34, 0
      %p347 = por %p345, %p346
      %p348 = scmp.ne.s32.totalorder %s337, %s340
      %p349 = scmp.eq.s32.totalorder %s39, 3
      %p350 = por %p348, %p349
      %p351 = scmp.ne.s32.totalorder %s340, %s341
      %p352 = scmp.eq.s32.totalorder %s39, 0
      %p353 = por %p351, %p352
      %p354 = scmp.ne.s32.totalorder %s340, %s341
      %p355 = scmp.eq.s32.totalorder %s40, 3
      %p356 = por %p354, %p355
      %p358 = scmp.ne.s32.totalorder %s341, %s357
      %p359 = scmp.eq.s32.totalorder %s40, 0
      %p360 = por %p358, %p359
      %s361 = smul.u32 %s41, 2
      %s362 = sadd.s32 %s361, %s42
      %s363 = smul.u32 %s60, 2
      %s364 = sadd.s32 %s363, %s56
      %s365 = ssub.s32 %s362, %s364
      %s366 = ssub.s32 %s43, %s52
      %s367 = sor.u32 %s365, %s366
      %p368 = scmp.eq.s32.totalorder %s367, 0
      %s370 = sadd.s32 %s369, 1
      %s371 = scalar_select %p368, %s369, %s370
      %p374 = pneg %p368
      %p375 = scmp.eq.s32.totalorder %s34, 3
      %p376 = por %p374, %p375
      %p377 = scmp.ne.s32.totalorder %s369, %s372
      %p378 = scmp.eq.s32.totalorder %s34, 0
      %p379 = por %p377, %p378
      %p380 = scmp.ne.s32.totalorder %s369, %s372
      %p381 = scmp.eq.s32.totalorder %s39, 3
      %p382 = por %p380, %p381
      %p383 = scmp.ne.s32.totalorder %s372, %s373
      %p384 = scmp.eq.s32.totalorder %s39, 0
      %p385 = por %p383, %p384
      %p386 = scmp.ne.s32.totalorder %s372, %s373
      %p387 = scmp.eq.s32.totalorder %s40, 3
      %p388 = por %p386, %p387
      %p390 = scmp.ne.s32.totalorder %s373, %s389
      %p391 = scmp.eq.s32.totalorder %s40, 0
      %p392 = por %p390, %p391
      %p393 = scmp.le.s32.totalorder 1, %s34
      %p394 = scmp.lt.s32.totalorder %s34, 5
      %p395 = pnand %p393, %p394
      %p396 = pneg %p395
      // Predicated region
      $region9: #{tpu_custom_call.1} parent=5 // pred_check
        _
      $region10: #{tpu_custom_call.1} parent=5 // pred_check_branch
        %398 = sbr.rel (%p395) target = $region12
      $region11: #{tpu_custom_call.1} parent=5 // pred_region
        %s399 = ssub.s32 %s34, 1
        // Predicated region
        $region13: #{tpu_custom_call.1} parent=11 // pred_check
          %p400 = pneg %p79
        $region14: #{tpu_custom_call.1} parent=11 // pred_check_branch
          %402 = sbr.rel (%p400) target = $region16
        $region15: #{tpu_custom_call.1} parent=11 // pred_region
          %s403 = smul.u32 16, %s46
          %s405 = ssub.s32 2048, 2048
          %406 = vsyncadd [#allocation9], %s405
          %s407 = smul.addr %s403, 128
          %s408 = scalar_lea.hbm %s1, %s407
          %s409 = sshll.u32 [#allocation8], 4
          %s410 = int_to_ptr.vmem [resolvable:$true] %s409
          %415 = dma.hbm_to_vmem [thread:$0]  %s408, 2048, %s410, [#allocation9], 128, 128, 8
        $region16: #{tpu_custom_call.1} parent=11 // pred_fallthru
          _
        // Predicated region
        $region17: #{tpu_custom_call.1} parent=11 // pred_check
          %p416 = pneg %p105
        $region18: #{tpu_custom_call.1} parent=11 // pred_check_branch
          %418 = sbr.rel (%p416) target = $region20
        $region19: #{tpu_custom_call.1} parent=11 // pred_region
          %s419 = smul.u32 16, %s46
          %s421 = ssub.s32 18432, 18432
          %422 = vsyncadd [#allocation12], %s421
          %s423 = smul.addr %s419, 128
          %s424 = scalar_lea.hbm %s2, %s423
          %s425 = sshll.u32 [#allocation11], 4
          %s426 = int_to_ptr.vmem [resolvable:$true] %s425
          %431 = dma.hbm_to_vmem [thread:$0]  %s424, 18432, %s426, [#allocation12], 128, 128, 8
        $region20: #{tpu_custom_call.1} parent=11 // pred_fallthru
          _
        // Predicated region
        $region21: #{tpu_custom_call.1} parent=11 // pred_check
          %p432 = pneg %p131
        $region22: #{tpu_custom_call.1} parent=11 // pred_check_branch
          %434 = sbr.rel (%p432) target = $region24
        $region23: #{tpu_custom_call.1} parent=11 // pred_region
          %s435 = smul.u32 16, %s46
          %s437 = ssub.s32 18432, 18432
          %438 = vsyncadd [#allocation12], %s437
          %s439 = smul.addr %s435, 128
          %s440 = scalar_lea.hbm %s3, %s439
          %s441 = sshll.u32 [#allocation13], 4
          %s442 = int_to_ptr.vmem [resolvable:$true] %s441
          %447 = dma.hbm_to_vmem [thread:$0]  %s440, 18432, %s442, [#allocation12], 128, 128, 8
        $region24: #{tpu_custom_call.1} parent=11 // pred_fallthru
          _
        // Predicated region
        $region25: #{tpu_custom_call.1} parent=11 // pred_check
          %p448 = pneg %p157
        $region26: #{tpu_custom_call.1} parent=11 // pred_check_branch
          %450 = sbr.rel (%p448) target = $region28
        $region27: #{tpu_custom_call.1} parent=11 // pred_region
          %s451 = smul.u32 16, %s46
          %s453 = ssub.s32 18432, 18432
          %454 = vsyncadd [#allocation15], %s453
          %s455 = smul.addr %s451, 128
          %s456 = scalar_lea.hbm %s4, %s455
          %s457 = sshll.u32 [#allocation14], 4
          %s458 = int_to_ptr.vmem [resolvable:$true] %s457
          %463 = dma.hbm_to_vmem [thread:$0]  %s456, 18432, %s458, [#allocation15], 128, 128, 8
        $region28: #{tpu_custom_call.1} parent=11 // pred_fallthru
          _
        // Predicated region
        $region29: #{tpu_custom_call.1} parent=11 // pred_check
          %p464 = pneg %p178
        $region30: #{tpu_custom_call.1} parent=11 // pred_check_branch
          %466 = sbr.rel (%p464) target = $region32
        $region31: #{tpu_custom_call.1} parent=11 // pred_region
          %s468 = ssub.s32 16, 16
          %469 = vsyncadd [#allocation15], %s468
          %s471 = sshll.u32 [#allocation16], 4
          %s472 = int_to_ptr.vmem [resolvable:$true] %s471
          %474 = dma.hbm_to_vmem [thread:$0]  %s5, 16, %s472, [#allocation15]
        $region32: #{tpu_custom_call.1} parent=11 // pred_fallthru
          _
        // Predicated region
        $region33: #{tpu_custom_call.1} parent=11 // pred_check
          %p475 = pneg %p199
        $region34: #{tpu_custom_call.1} parent=11 // pred_check_branch
          %477 = sbr.rel (%p475) target = $region36
        $region35: #{tpu_custom_call.1} parent=11 // pred_region
          %s479 = ssub.s32 16, 16
          %480 = vsyncadd [#allocation18], %s479
          %s482 = sshll.u32 [#allocation17], 4
          %s483 = int_to_ptr.vmem [resolvable:$true] %s482
          %485 = dma.hbm_to_vmem [thread:$0]  %s6, 16, %s483, [#allocation18]
        $region36: #{tpu_custom_call.1} parent=11 // pred_fallthru
          _
        // Predicated region
        $region37: #{tpu_custom_call.1} parent=11 // pred_check
          %p486 = pneg %p220
        $region38: #{tpu_custom_call.1} parent=11 // pred_check_branch
          %488 = sbr.rel (%p486) target = $region40
        $region39: #{tpu_custom_call.1} parent=11 // pred_region
          %s490 = ssub.s32 16, 16
          %491 = vsyncadd [#allocation18], %s490
          %s493 = sshll.u32 [#allocation19], 4
          %s494 = int_to_ptr.vmem [resolvable:$true] %s493
          %496 = dma.hbm_to_vmem [thread:$0]  %s7, 16, %s494, [#allocation18]
        $region40: #{tpu_custom_call.1} parent=11 // pred_fallthru
          _
        // Predicated region
        $region41: #{tpu_custom_call.1} parent=11 // pred_check
          %p497 = pneg %p241
        $region42: #{tpu_custom_call.1} parent=11 // pred_check_branch
          %499 = sbr.rel (%p497) target = $region44
        $region43: #{tpu_custom_call.1} parent=11 // pred_region
          %s501 = ssub.s32 16, 16
          %502 = vsyncadd [#allocation21], %s501
          %s504 = sshll.u32 [#allocation20], 4
          %s505 = int_to_ptr.vmem [resolvable:$true] %s504
          %507 = dma.hbm_to_vmem [thread:$0]  %s8, 16, %s505, [#allocation21]
        $region44: #{tpu_custom_call.1} parent=11 // pred_fallthru
          _
      $region12: #{tpu_custom_call.1} parent=5 // pred_fallthru
        _
      %p508 = scmp.lt.s32.totalorder %s34, 4
      // Predicated region
      $region45: #{tpu_custom_call.1} parent=5 // pred_check
        %p509 = pneg %p508
      $region46: #{tpu_custom_call.1} parent=5 // pred_check_branch
        %511 = sbr.rel (%p509) target = $region48
      $region47: #{tpu_custom_call.1} parent=5 // pred_region
        _
      $region48: #{tpu_custom_call.1} parent=5 // pred_fallthru
        _
      %p512 = scmp.le.s32.totalorder 1, %s34
      %p513 = scmp.lt.s32.totalorder %s34, 5
      %p514 = pnand %p512, %p513
      %p515 = pneg %p514
      // Predicated region
      $region49: #{tpu_custom_call.1} parent=5 // pred_check
        _
      $region50: #{tpu_custom_call.1} parent=5 // pred_check_branch
        %517 = sbr.rel (%p514) target = $region52
      $region51: #{tpu_custom_call.1} parent=5 // pred_region
        %s518 = ssub.s32 %s34, 1
        // Predicated region
        $region53: #{tpu_custom_call.1} parent=51 // pred_check
          %p519 = pneg %p79
        $region54: #{tpu_custom_call.1} parent=51 // pred_check_branch
          %521 = sbr.rel (%p519) target = $region56
        $region55: #{tpu_custom_call.1} parent=51 // pred_region
          %522 = dma.done [#allocation9], 2048
        $region56: #{tpu_custom_call.1} parent=51 // pred_fallthru
          _
        // Predicated region
        $region57: #{tpu_custom_call.1} parent=51 // pred_check
          %p523 = pneg %p105
        $region58: #{tpu_custom_call.1} parent=51 // pred_check_branch
          %525 = sbr.rel (%p523) target = $region60
        $region59: #{tpu_custom_call.1} parent=51 // pred_region
          %526 = dma.done [#allocation12], 18432
        $region60: #{tpu_custom_call.1} parent=51 // pred_fallthru
          _
        // Predicated region
        $region61: #{tpu_custom_call.1} parent=51 // pred_check
          %p527 = pneg %p131
        $region62: #{tpu_custom_call.1} parent=51 // pred_check_branch
          %529 = sbr.rel (%p527) target = $region64
        $region63: #{tpu_custom_call.1} parent=51 // pred_region
          %530 = dma.done [#allocation12], 18432
        $region64: #{tpu_custom_call.1} parent=51 // pred_fallthru
          _
        // Predicated region
        $region65: #{tpu_custom_call.1} parent=51 // pred_check
          %p531 = pneg %p157
        $region66: #{tpu_custom_call.1} parent=51 // pred_check_branch
          %533 = sbr.rel (%p531) target = $region68
        $region67: #{tpu_custom_call.1} parent=51 // pred_region
          %534 = dma.done [#allocation15], 18432
        $region68: #{tpu_custom_call.1} parent=51 // pred_fallthru
          _
        // Predicated region
        $region69: #{tpu_custom_call.1} parent=51 // pred_check
          %p535 = pneg %p178
        $region70: #{tpu_custom_call.1} parent=51 // pred_check_branch
          %537 = sbr.rel (%p535) target = $region72
        $region71: #{tpu_custom_call.1} parent=51 // pred_region
          %538 = dma.done [#allocation15], 16
        $region72: #{tpu_custom_call.1} parent=51 // pred_fallthru
          _
        // Predicated region
        $region73: #{tpu_custom_call.1} parent=51 // pred_check
          %p539 = pneg %p199
        $region74: #{tpu_custom_call.1} parent=51 // pred_check_branch
          %541 = sbr.rel (%p539) target = $region76
        $region75: #{tpu_custom_call.1} parent=51 // pred_region
          %542 = dma.done [#allocation18], 16
        $region76: #{tpu_custom_call.1} parent=51 // pred_fallthru
          _
        // Predicated region
        $region77: #{tpu_custom_call.1} parent=51 // pred_check
          %p543 = pneg %p220
        $region78: #{tpu_custom_call.1} parent=51 // pred_check_branch
          %545 = sbr.rel (%p543) target = $region80
        $region79: #{tpu_custom_call.1} parent=51 // pred_region
          %546 = dma.done [#allocation18], 16
        $region80: #{tpu_custom_call.1} parent=51 // pred_fallthru
          _
        // Predicated region
        $region81: #{tpu_custom_call.1} parent=51 // pred_check
          %p547 = pneg %p241
        $region82: #{tpu_custom_call.1} parent=51 // pred_check_branch
          %549 = sbr.rel (%p547) target = $region84
        $region83: #{tpu_custom_call.1} parent=51 // pred_region
          %550 = dma.done [#allocation21], 16
        $region84: #{tpu_custom_call.1} parent=51 // pred_fallthru
          _
        %p551 = pneg %p79
        %p552 = pneg %p76
        %p553 = pneg %p105
        %p554 = pneg %p102
        %p555 = pneg %p131
        %p556 = pneg %p128
        %p557 = pneg %p157
        %p558 = pneg %p154
        %p559 = pneg %p178
        %p560 = pneg %p175
        %p561 = pneg %p199
        %p562 = pneg %p196
        %p563 = pneg %p220
        %p564 = pneg %p217
        %p565 = pneg %p241
        %p566 = pneg %p238
        %p567 = pneg %p269
        %p568 = pneg %p266
        %s569 = sand.u32 %s256, 1
        %s570 = scalar_lea.sflag [#allocation10], %s569
        %s571 = sand.u32 %s256, 1
        %s572 = smul.addr %s571, 128
        %s573 = scalar_lea.vmem [#allocation22], %s572
        %p574 = pneg %p297
        %p575 = pneg %p294
        %s576 = sand.u32 %s39, 1
        %s577 = scalar_lea.sflag [#allocation24], %s576
        %s578 = sand.u32 %s284, 1
        %s579 = smul.addr %s578, 128
        %s580 = scalar_lea.vmem [#allocation23], %s579
        %p581 = pneg %p325
        %p582 = pneg %p322
        %s583 = sand.u32 %s39, 1
        %s584 = scalar_lea.sflag [#allocation24], %s583
        %s585 = sand.u32 %s312, 1
        %s586 = smul.addr %s585, 128
        %s587 = scalar_lea.vmem [#allocation25], %s586
        %p588 = pneg %p353
        %p589 = pneg %p350
        %s590 = sand.u32 %s39, 1
        %s591 = scalar_lea.sflag [#allocation27], %s590
        %s592 = sand.u32 %s340, 1
        %s593 = smul.addr %s592, 128
        %s594 = scalar_lea.vmem [#allocation26], %s593
        %p595 = pneg %p385
        %p596 = pneg %p382
        %s597 = sand.u32 %s39, 1
        %s598 = scalar_lea.sflag [#allocation27], %s597
        %s599 = sand.u32 %s372, 1
        %s600 = scalar_lea.vmem [#allocation28], %s599
        %s601 = smul.u32 16, %s46
        %s602 = smul.u32 16, %s46
        %s603 = smul.u32 16, %s46
        %s604 = smul.u32 16, %s46
        %s605 = smul.u32 16, %s45
        %s606 = smul.u32 16, %s45
        %s607 = smul.u32 16, %s45
        %s608 = smul.u32 16, %s45
        %s609 = smul.u32 %s44, 2
        %s610 = sadd.s32 %s609, %s45
        %p611 = scmp.lt.s32.totalorder %s46, 0
        %s612 = ssub.s32 0, %s46
        %s613 = scalar_select %p611, %s612, %s46
        %s614 = sand.u32 %s613, 1
        %s615 = ssub.s32 0, %s614
        %s616 = scalar_select %p611, %s615, %s614
        %p617 = scmp.ne.s32.totalorder %s616, 0
        %p618 = scmp.lt.s32.totalorder %s616, 0
        %p619 = pnand %p618, %p617
        %p620 = pneg %p619
        %s621 = sadd.s32 %s616, 2
        %s622 = scalar_select %p620, %s621, %s616
        %p623 = scmp.eq.s32.totalorder %s46, 0
        // Predicated region
        $region85: #{tpu_custom_call.1} parent=51 // pred_check
          %p624 = pneg %p623
        $region86: #{tpu_custom_call.1} parent=51 // pred_check_branch
          %626 = sbr.rel (%p624) target = $region88
        $region87: #{tpu_custom_call.1} parent=51 // pred_region
          %s627 = sadd.s32 %s44, %s46
          %s628 = smul.u32 %s45, 8
          %s629 = smul.u32 %s622, 48
          %s630 = smul.u32 %s628, 56
          %s631 = smul.u32 %s627, 3136
          %s632 = sadd.s32 %s630, %s631
          %s633 = smul.addr %s632, 16
          %s634 = scalar_lea.hbm %s0, %s633
          %s635 = smul.u32 %s629, 56
          %s636 = scalar_lea.vmem [#allocation2], %s635
          %s637 = scalar_lea.sflag [#allocation3], %s622
          // Predicated region
          $region89: #{tpu_custom_call.1} parent=87 // pred_check
            _
          $region90: #{tpu_custom_call.1} parent=87 // pred_check_branch
            %639 = sbr.rel target = $region92
          $region91: #{tpu_custom_call.1} parent=87 // pred_region
            %640 = sst [smem:[#allocation31]] [#allocation30]
            %641 = sst [smem:[#allocation32]] [#allocation29]
          $region92: #{tpu_custom_call.1} parent=87 // pred_fallthru
            _
          %643 = shalt.err (0)
          %s645 = sshll.u32 %s636, 4
          %s646 = int_to_ptr.vmem [resolvable:$true] %s645
          %648 = dma.hbm_to_vmem [thread:$0]  %s634, 43008, %s646, %s637
          %649 = vst [vmem:[#allocation4] sm:$0xff] 0.0
          %650 = vst [vmem:[#allocation4 + $0x8] sm:$0xff] 0.0
          %651 = vst [vmem:[#allocation4 + $0x10] sm:$0xff] 0.0
          %652 = vst [vmem:[#allocation4 + $0x18] sm:$0xff] 0.0
          %653 = vst [vmem:[#allocation4 + $0x20] sm:$0xff] 0.0
          %654 = vst [vmem:[#allocation4 + $0x28] sm:$0xff] 0.0
          %655 = vst [vmem:[#allocation4 + $0x30] sm:$0xff] 0.0
          %656 = vst [vmem:[#allocation4 + $0x38] sm:$0xff] 0.0
          %657 = vst [vmem:[#allocation4 + $0x40] sm:$0xff] 0.0
          %658 = vst [vmem:[#allocation4 + $0x48] sm:$0xff] 0.0
          %659 = vst [vmem:[#allocation4 + $0x50] sm:$0xff] 0.0
          %660 = vst [vmem:[#allocation4 + $0x58] sm:$0xff] 0.0
          %661 = vst [vmem:[#allocation4 + $0x60] sm:$0xff] 0.0
          %662 = vst [vmem:[#allocation4 + $0x68] sm:$0xff] 0.0
          %663 = vst [vmem:[#allocation4 + $0x70] sm:$0xff] 0.0
          %664 = vst [vmem:[#allocation4 + $0x78] sm:$0xff] 0.0
          %665 = vst [vmem:[#allocation5] sm:$0xff] 0.0
          %666 = vst [vmem:[#allocation5 + $0x8] sm:$0xff] 0.0
          %667 = vst [vmem:[#allocation5 + $0x10] sm:$0xff] 0.0
          %668 = vst [vmem:[#allocation5 + $0x18] sm:$0xff] 0.0
          %669 = vst [vmem:[#allocation5 + $0x20] sm:$0xff] 0.0
          %670 = vst [vmem:[#allocation5 + $0x28] sm:$0xff] 0.0
          %671 = vst [vmem:[#allocation5 + $0x30] sm:$0xff] 0.0
          %672 = vst [vmem:[#allocation5 + $0x38] sm:$0xff] 0.0
          %673 = vst [vmem:[#allocation5 + $0x40] sm:$0xff] 0.0
          %674 = vst [vmem:[#allocation5 + $0x48] sm:$0xff] 0.0
          %675 = vst [vmem:[#allocation5 + $0x50] sm:$0xff] 0.0
          %676 = vst [vmem:[#allocation5 + $0x58] sm:$0xff] 0.0
          %677 = vst [vmem:[#allocation5 + $0x60] sm:$0xff] 0.0
          %678 = vst [vmem:[#allocation5 + $0x68] sm:$0xff] 0.0
          %679 = vst [vmem:[#allocation5 + $0x70] sm:$0xff] 0.0
          %680 = vst [vmem:[#allocation5 + $0x78] sm:$0xff] 0.0
          %681 = vst [vmem:[#allocation6] sm:$0xff] 0.0
          %682 = vst [vmem:[#allocation6 + $0x8] sm:$0xff] 0.0
          %683 = vst [vmem:[#allocation6 + $0x10] sm:$0xff] 0.0
          %684 = vst [vmem:[#allocation6 + $0x18] sm:$0xff] 0.0
          %685 = vst [vmem:[#allocation6 + $0x20] sm:$0xff] 0.0
          %686 = vst [vmem:[#allocation6 + $0x28] sm:$0xff] 0.0
          %687 = vst [vmem:[#allocation6 + $0x30] sm:$0xff] 0.0
          %688 = vst [vmem:[#allocation6 + $0x38] sm:$0xff] 0.0
          %689 = vst [vmem:[#allocation6 + $0x40] sm:$0xff] 0.0
          %690 = vst [vmem:[#allocation6 + $0x48] sm:$0xff] 0.0
          %691 = vst [vmem:[#allocation6 + $0x50] sm:$0xff] 0.0
          %692 = vst [vmem:[#allocation6 + $0x58] sm:$0xff] 0.0
          %693 = vst [vmem:[#allocation6 + $0x60] sm:$0xff] 0.0
          %694 = vst [vmem:[#allocation6 + $0x68] sm:$0xff] 0.0
          %695 = vst [vmem:[#allocation6 + $0x70] sm:$0xff] 0.0
          %696 = vst [vmem:[#allocation6 + $0x78] sm:$0xff] 0.0
          %697 = vst [vmem:[#allocation7] sm:$0xff] 0.0
          %698 = vst [vmem:[#allocation7 + $0x8] sm:$0xff] 0.0
          %699 = vst [vmem:[#allocation7 + $0x10] sm:$0xff] 0.0
          %700 = vst [vmem:[#allocation7 + $0x18] sm:$0xff] 0.0
          %701 = vst [vmem:[#allocation7 + $0x20] sm:$0xff] 0.0
          %702 = vst [vmem:[#allocation7 + $0x28] sm:$0xff] 0.0
          %703 = vst [vmem:[#allocation7 + $0x30] sm:$0xff] 0.0
          %704 = vst [vmem:[#allocation7 + $0x38] sm:$0xff] 0.0
          %705 = vst [vmem:[#allocation7 + $0x40] sm:$0xff] 0.0
          %706 = vst [vmem:[#allocation7 + $0x48] sm:$0xff] 0.0
          %707 = vst [vmem:[#allocation7 + $0x50] sm:$0xff] 0.0
          %708 = vst [vmem:[#allocation7 + $0x58] sm:$0xff] 0.0
          %709 = vst [vmem:[#allocation7 + $0x60] sm:$0xff] 0.0
          %710 = vst [vmem:[#allocation7 + $0x68] sm:$0xff] 0.0
          %711 = vst [vmem:[#allocation7 + $0x70] sm:$0xff] 0.0
          %712 = vst [vmem:[#allocation7 + $0x78] sm:$0xff] 0.0
        $region88: #{tpu_custom_call.1} parent=51 // pred_fallthru
          _
        %s713 = smul.u32 %s45, 8
        %s714 = smul.u32 %s622, 48
        %s715 = scalar_lea.sflag [#allocation3], %s622
        %s716 = smul.u32 48, 56
        %s717 = smul.u32 %s716, 1
        %s718 = sshll.u32 %s717, 4
        %719 = dma.done %s715, %s718
        %s720 = sadd.s32 %s46, 1
        %p721 = scmp.lt.s32.totalorder %s720, 1
        // Predicated region
        $region93: #{tpu_custom_call.1} parent=51 // pred_check
          %p722 = pneg %p721
        $region94: #{tpu_custom_call.1} parent=51 // pred_check_branch
          %724 = sbr.rel (%p722) target = $region96
        $region95: #{tpu_custom_call.1} parent=51 // pred_region
          %s725 = ssub.s32 1, %s622
          %s726 = sadd.s32 %s44, %s720
          %s727 = smul.u32 %s725, 48
          %s728 = smul.u32 %s713, 56
          %s729 = smul.u32 %s726, 3136
          %s730 = sadd.s32 %s728, %s729
          %s731 = smul.addr %s730, 16
          %s732 = scalar_lea.hbm %s0, %s731
          %s733 = smul.u32 %s727, 56
          %s734 = scalar_lea.vmem [#allocation2], %s733
          %s735 = scalar_lea.sflag [#allocation3], %s725
          // Predicated region
          $region97: #{tpu_custom_call.1} parent=95 // pred_check
            _
          $region98: #{tpu_custom_call.1} parent=95 // pred_check_branch
            %737 = sbr.rel target = $region100
          $region99: #{tpu_custom_call.1} parent=95 // pred_region
            %738 = sst [smem:[#allocation31]] [#allocation34]
            %739 = sst [smem:[#allocation32]] [#allocation33]
          $region100: #{tpu_custom_call.1} parent=95 // pred_fallthru
            _
          %741 = shalt.err (0)
          %s743 = sshll.u32 %s734, 4
          %s744 = int_to_ptr.vmem [resolvable:$true] %s743
          %746 = dma.hbm_to_vmem [thread:$0]  %s732, 43008, %s744, %s735
        $region96: #{tpu_custom_call.1} parent=51 // pred_fallthru
          _
        %s747 = sadd.s32 %s714, 18
        %s748 = smul.u32 %s747, 56
        %s749 = scalar_lea.vmem [#allocation2], %s748
        %v750 = vld [vmem:[%s749 + $0x12] sm:$0xff]
        %v751 = vld [vmem:[%s749 + $0x1a] sm:$0xff]
        %v752 = vld [vmem:[%s749 + $0x4a] sm:$0xff]
        %v753 = vld [vmem:[%s749 + $0x52] sm:$0xff]
        %v754 = vld [vmem:[%s749 + $0x82] sm:$0xff]
        %v755 = vld [vmem:[%s749 + $0x8a] sm:$0xff]
        %v756 = vld [vmem:[%s749 + $0xba] sm:$0xff]
        %v757 = vld [vmem:[%s749 + $0xc2] sm:$0xff]
        %v758 = vld [vmem:[%s749 + $0xf2] sm:$0xff]
        %v759 = vld [vmem:[%s749 + $0xfa] sm:$0xff]
        %v760 = vld [vmem:[%s749 + $0x12a] sm:$0xff]
        %v761 = vld [vmem:[%s749 + $0x132] sm:$0xff]
        %v762 = vld [vmem:[%s749 + $0x162] sm:$0xff]
        %v763 = vld [vmem:[%s749 + $0x16a] sm:$0xff]
        %v764 = vld [vmem:[%s749 + $0x19a] sm:$0xff]
        %v765 = vld [vmem:[%s749 + $0x1a2] sm:$0xff]
        %v766 = vld [vmem:[#allocation4] sm:$0xff]
        %v767 = vld [vmem:[#allocation4 + $0x8] sm:$0xff]
        %v768 = vld [vmem:[#allocation4 + $0x10] sm:$0xff]
        %v769 = vld [vmem:[#allocation4 + $0x18] sm:$0xff]
        %v770 = vld [vmem:[#allocation4 + $0x20] sm:$0xff]
        %v771 = vld [vmem:[#allocation4 + $0x28] sm:$0xff]
        %v772 = vld [vmem:[#allocation4 + $0x30] sm:$0xff]
        %v773 = vld [vmem:[#allocation4 + $0x38] sm:$0xff]
        %v774 = vld [vmem:[#allocation4 + $0x40] sm:$0xff]
        %v775 = vld [vmem:[#allocation4 + $0x48] sm:$0xff]
        %v776 = vld [vmem:[#allocation4 + $0x50] sm:$0xff]
        %v777 = vld [vmem:[#allocation4 + $0x58] sm:$0xff]
        %v778 = vld [vmem:[#allocation4 + $0x60] sm:$0xff]
        %v779 = vld [vmem:[#allocation4 + $0x68] sm:$0xff]
        %v780 = vld [vmem:[#allocation4 + $0x70] sm:$0xff]
        %v781 = vld [vmem:[#allocation4 + $0x78] sm:$0xff]
        %v782 = vld [vmem:[#allocation8] sm:$0xff]
        %v783 = vld [vmem:[#allocation8 + $0x8] sm:$0xff]
        %v784 = vld [vmem:[#allocation8 + $0x10] sm:$0xff]
        %v785 = vld [vmem:[#allocation8 + $0x18] sm:$0xff]
        %v786 = vld [vmem:[#allocation8 + $0x20] sm:$0xff]
        %v787 = vld [vmem:[#allocation8 + $0x28] sm:$0xff]
        %v788 = vld [vmem:[#allocation8 + $0x30] sm:$0xff]
        %v789 = vld [vmem:[#allocation8 + $0x38] sm:$0xff]
        %v790 = vld [vmem:[#allocation8 + $0x40] sm:$0xff]
        %v791 = vld [vmem:[#allocation8 + $0x48] sm:$0xff]
        %v792 = vld [vmem:[#allocation8 + $0x50] sm:$0xff]
        %v793 = vld [vmem:[#allocation8 + $0x58] sm:$0xff]
        %v794 = vld [vmem:[#allocation8 + $0x60] sm:$0xff]
        %v795 = vld [vmem:[#allocation8 + $0x68] sm:$0xff]
        %v796 = vld [vmem:[#allocation8 + $0x70] sm:$0xff]
        %v797 = vld [vmem:[#allocation8 + $0x78] sm:$0xff]
        %798 = vmatprep.subr.mxu0 0.0
        %799 = vmatpush1.msra.mxu0 %v782
        %800 = vmatprep.subr.mxu0 0.0
        %801 = vmatpush1.msra.mxu0 %v783
        %802 = vmatprep.subr.mxu0 0.0
        %803 = vmatpush1.msra.mxu0 %v784
        %804 = vmatprep.subr.mxu0 0.0
        %805 = vmatpush1.msra.mxu0 %v785
        %806 = vmatprep.subr.mxu0 0.0
        %807 = vmatpush1.msra.mxu0 %v786
        %808 = vmatprep.subr.mxu0 0.0
        %809 = vmatpush1.msra.mxu0 %v787
        %810 = vmatprep.subr.mxu0 0.0
        %811 = vmatpush1.msra.mxu0 %v788
        %812 = vmatprep.subr.mxu0 0.0
        %813 = vmatpush1.msra.mxu0 %v789
        %814 = vmatprep.subr.mxu0 0.0
        %815 = vmatpush1.msra.mxu0 %v790
        %816 = vmatprep.subr.mxu0 0.0
        %817 = vmatpush1.msra.mxu0 %v791
        %818 = vmatprep.subr.mxu0 0.0
        %819 = vmatpush1.msra.mxu0 %v792
        %820 = vmatprep.subr.mxu0 0.0
        %821 = vmatpush1.msra.mxu0 %v793
        %822 = vmatprep.subr.mxu0 0.0
        %823 = vmatpush1.msra.mxu0 %v794
        %824 = vmatprep.subr.mxu0 0.0
        %825 = vmatpush1.msra.mxu0 %v795
        %826 = vmatprep.subr.mxu0 0.0
        %827 = vmatpush1.msra.mxu0 %v796
        %828 = vmatprep.subr.mxu0 0.0
        %829 = vmatpush1.msra.mxu0 %v797
        %830 = vmatprep.subr.mxu0 0.0
        %831 = vmatpush1.msra.mxu0 0.0
        %832 = vmatprep.subr.mxu0 0.0
        %833 = vmatpush1.msra.mxu0 0.0
        %834 = vmatprep.subr.mxu0 0.0
        %835 = vmatpush1.msra.mxu0 0.0
        %836 = vmatprep.subr.mxu0 0.0
        %837 = vmatpush1.msra.mxu0 0.0
        %838 = vmatprep.subr.mxu0 0.0
        %839 = vmatpush1.msra.mxu0 0.0
        %840 = vmatprep.subr.mxu0 0.0
        %841 = vmatpush1.msra.mxu0 0.0
        %842 = vmatprep.subr.mxu0 0.0
        %843 = vmatpush1.msra.mxu0 0.0
        %844 = vmatprep.subr.mxu0 0.0
        %845 = vmatpush1.msra.mxu0 0.0
        %846 = vmatprep.subr.mxu0 0.0
        %847 = vmatpush1.msra.mxu0 0.0
        %848 = vmatprep.subr.mxu0 0.0
        %849 = vmatpush1.msra.mxu0 0.0
        %850 = vmatprep.subr.mxu0 0.0
        %851 = vmatpush1.msra.mxu0 0.0
        %852 = vmatprep.subr.mxu0 0.0
        %853 = vmatpush1.msra.mxu0 0.0
        %854 = vmatprep.subr.mxu0 0.0
        %855 = vmatpush1.msra.mxu0 0.0
        %856 = vmatprep.subr.mxu0 0.0
        %857 = vmatpush1.msra.mxu0 0.0
        %858 = vmatprep.subr.mxu0 0.0
        %859 = vmatpush1.msra.mxu0 0.0
        %860 = vmatprep.subr.mxu0 0.0
        %861 = vmatpush1.msra.mxu0 0.0
        %862 = vmatprep.mubr.f32.mxu0 0.0
        %863 = vmatmul.mubr.f32.gmra.mrb[0].mxu0 %v750
        %v864 = vpop.f32.mrb[0].mxu0
        %v865 = vadd.f32 0.0, %v864
        %v866 = vpop.f32.mrb[0].mxu0
        %867 = vmatprep.mubr.f32.mxu0 0.0
        %868 = vmatmul.mubr.f32.gmra.mrb[0].mxu0 %v751
        %v869 = vpop.f32.mrb[0].mxu0
        %v870 = vadd.f32 0.0, %v869
        %v871 = vpop.f32.mrb[0].mxu0
        %872 = vmatprep.mubr.f32.mxu0 0.0
        %873 = vmatmul.mubr.f32.gmra.mrb[0].mxu0 %v752
        %v874 = vpop.f32.mrb[0].mxu0
        %v875 = vadd.f32 0.0, %v874
        %v876 = vpop.f32.mrb[0].mxu0
        %877 = vmatprep.mubr.f32.mxu0 0.0
        %878 = vmatmul.mubr.f32.gmra.mrb[0].mxu0 %v753
        %v879 = vpop.f32.mrb[0].mxu0
        %v880 = vadd.f32 0.0, %v879
        %v881 = vpop.f32.mrb[0].mxu0
        %882 = vmatprep.mubr.f32.mxu0 0.0
        %883 = vmatmul.mubr.f32.gmra.mrb[0].mxu0 %v754
        %v884 = vpop.f32.mrb[0].mxu0
        %v885 = vadd.f32 0.0, %v884
        %v886 = vpop.f32.mrb[0].mxu0
        %887 = vmatprep.mubr.f32.mxu0 0.0
        %888 = vmatmul.mubr.f32.gmra.mrb[0].mxu0 %v755
        %v889 = vpop.f32.mrb[0].mxu0
        %v890 = vadd.f32 0.0, %v889
        %v891 = vpop.f32.mrb[0].mxu0
        %892 = vmatprep.mubr.f32.mxu0 0.0
        %893 = vmatmul.mubr.f32.gmra.mrb[0].mxu0 %v756
        %v894 = vpop.f32.mrb[0].mxu0
        %v895 = vadd.f32 0.0, %v894
        %v896 = vpop.f32.mrb[0].mxu0
        %897 = vmatprep.mubr.f32.mxu0 0.0
        %898 = vmatmul.mubr.f32.gmra.mrb[0].mxu0 %v757
        %v899 = vpop.f32.mrb[0].mxu0
        %v900 = vadd.f32 0.0, %v899
        %v901 = vpop.f32.mrb[0].mxu0
        %902 = vmatprep.mubr.f32.mxu0 0.0
        %903 = vmatmul.mubr.f32.gmra.mrb[0].mxu0 %v758
        %v904 = vpop.f32.mrb[0].mxu0
        %v905 = vadd.f32 0.0, %v904
        %v906 = vpop.f32.mrb[0].mxu0
        %907 = vmatprep.mubr.f32.mxu0 0.0
        %908 = vmatmul.mubr.f32.gmra.mrb[0].mxu0 %v759
        %v909 = vpop.f32.mrb[0].mxu0
        %v910 = vadd.f32 0.0, %v909
        %v911 = vpop.f32.mrb[0].mxu0
        %912 = vmatprep.mubr.f32.mxu0 0.0
        %913 = vmatmul.mubr.f32.gmra.mrb[0].mxu0 %v760
        %v914 = vpop.f32.mrb[0].mxu0
        %v915 = vadd.f32 0.0, %v914
        %v916 = vpop.f32.mrb[0].mxu0
        %917 = vmatprep.mubr.f32.mxu0 0.0
        %918 = vmatmul.mubr.f32.gmra.mrb[0].mxu0 %v761
        %v919 = vpop.f32.mrb[0].mxu0
        %v920 = vadd.f32 0.0, %v919
        %v921 = vpop.f32.mrb[0].mxu0
        %922 = vmatprep.mubr.f32.mxu0 0.0
        %923 = vmatmul.mubr.f32.gmra.mrb[0].mxu0 %v762
        %v924 = vpop.f32.mrb[0].mxu0
        %v925 = vadd.f32 0.0, %v924
        %v926 = vpop.f32.mrb[0].mxu0
        %927 = vmatprep.mubr.f32.mxu0 0.0
        %928 = vmatmul.mubr.f32.gmra.mrb[0].mxu0 %v763
        %v929 = vpop.f32.mrb[0].mxu0
        %v930 = vadd.f32 0.0, %v929
        %v931 = vpop.f32.mrb[0].mxu0
        %932 = vmatprep.mubr.f32.mxu0 0.0
        %933 = vmatmul.mubr.f32.gmra.mrb[0].mxu0 %v764
        %v934 = vpop.f32.mrb[0].mxu0
        %v935 = vadd.f32 0.0, %v934
        %v936 = vpop.f32.mrb[0].mxu0
        %937 = vmatprep.mubr.f32.mxu0 0.0
        %938 = vmatmul.mubr.f32.gmra.mrb[0].mxu0 %v765
        %v939 = vpop.f32.mrb[0].mxu0
        %v940 = vadd.f32 0.0, %v939
        %v941 = vpop.f32.mrb[0].mxu0
        %942 = vdwg.mxu0
        %v943 = vadd.f32 %v766, %v865
        %v944 = vadd.f32 %v767, %v870
        %v945 = vadd.f32 %v768, %v875
        %v946 = vadd.f32 %v769, %v880
        %v947 = vadd.f32 %v770, %v885
        %v948 = vadd.f32 %v771, %v890
        %v949 = vadd.f32 %v772, %v895
        %v950 = vadd.f32 %v773, %v900
        %v951 = vadd.f32 %v774, %v905
        %v952 = vadd.f32 %v775, %v910
        %v953 = vadd.f32 %v776, %v915
        %v954 = vadd.f32 %v777, %v920
        %v955 = vadd.f32 %v778, %v925
        %v956 = vadd.f32 %v779, %v930
        %v957 = vadd.f32 %v780, %v935
        %v958 = vadd.f32 %v781, %v940
        %959 = vst [vmem:[#allocation4] sm:$0xff] %v943
        %960 = vst [vmem:[#allocation4 + $0x8] sm:$0xff] %v944
        %961 = vst [vmem:[#allocation4 + $0x10] sm:$0xff] %v945
        %962 = vst [vmem:[#allocation4 + $0x18] sm:$0xff] %v946
        %963 = vst [vmem:[#allocation4 + $0x20] sm:$0xff] %v947
        %964 = vst [vmem:[#allocation4 + $0x28] sm:$0xff] %v948
        %965 = vst [vmem:[#allocation4 + $0x30] sm:$0xff] %v949
        %966 = vst [vmem:[#allocation4 + $0x38] sm:$0xff] %v950
        %967 = vst [vmem:[#allocation4 + $0x40] sm:$0xff] %v951
        %968 = vst [vmem:[#allocation4 + $0x48] sm:$0xff] %v952
        %969 = vst [vmem:[#allocation4 + $0x50] sm:$0xff] %v953
        %970 = vst [vmem:[#allocation4 + $0x58] sm:$0xff] %v954
        %971 = vst [vmem:[#allocation4 + $0x60] sm:$0xff] %v955
        %972 = vst [vmem:[#allocation4 + $0x68] sm:$0xff] %v956
        %973 = vst [vmem:[#allocation4 + $0x70] sm:$0xff] %v957
        %974 = vst [vmem:[#allocation4 + $0x78] sm:$0xff] %v958
        %v975 = vadd.f32 %v750, %v751
        %v976 = vadd.f32 %v975, %v752
        %v977 = vadd.f32 %v976, %v753
        %v978 = vadd.f32 %v977, %v754
        %v979 = vadd.f32 %v978, %v755
        %v980 = vadd.f32 %v979, %v756
        %v981 = vadd.f32 %v980, %v757
        %v982 = vadd.f32 %v981, %v758
        %v983 = vadd.f32 %v982, %v759
        %v984 = vadd.f32 %v983, %v760
        %v985 = vadd.f32 %v984, %v761
        %v986 = vadd.f32 %v985, %v762
        %v987 = vadd.f32 %v986, %v763
        %v988 = vadd.f32 %v987, %v764
        %v989 = vadd.f32 %v988, %v765
        %v990 = vrot.slane %v989, 4
        %v991 = vadd.f32 %v989, %v990
        %v992 = vrot.slane %v991, 2
        %v993 = vadd.f32 %v991, %v992
        %v994 = vrot.slane %v993, 1
        %v995 = vadd.f32 %v993, %v994
        %996 = vst [vmem:[%s600] sm:$0x1] %v995
        %s997 = sadd.s32 %s714, 12
        %s998 = smul.u32 %s997, 56
        %s999 = scalar_lea.vmem [#allocation2], %s998
        %v1000 = vld [vmem:[%s999 + $0xc] sm:$0xff]
        %v1001 = vld [vmem:[%s999 + $0x14] sm:$0xff]
        %v1002 = vld [vmem:[%s999 + $0x44] sm:$0xff]
        %v1003 = vld [vmem:[%s999 + $0x4c] sm:$0xff]
        %v1004 = vld [vmem:[%s999 + $0x7c] sm:$0xff]
        %v1005 = vld [vmem:[%s999 + $0x84] sm:$0xff]
        %v1006 = vld [vmem:[%s999 + $0xb4] sm:$0xff]
        %v1007 = vld [vmem:[%s999 + $0xbc] sm:$0xff]
        %v1008 = vld [vmem:[%s999 + $0xec] sm:$0xff]
        %v1009 = vld [vmem:[%s999 + $0xf4] sm:$0xff]
        %v1010 = vld [vmem:[%s999 + $0x124] sm:$0xff]
        %v1011 = vld [vmem:[%s999 + $0x12c] sm:$0xff]
        %v1012 = vld [vmem:[%s999 + $0x15c] sm:$0xff]
        %v1013 = vld [vmem:[%s999 + $0x164] sm:$0xff]
        %v1014 = vld [vmem:[%s999 + $0x194] sm:$0xff]
        %v1015 = vld [vmem:[%s999 + $0x19c] sm:$0xff]
        %v1016 = vld [vmem:[#allocation5] sm:$0xff]
        %v1017 = vld [vmem:[#allocation5 + $0x8] sm:$0xff]
        %v1018 = vld [vmem:[#allocation5 + $0x10] sm:$0xff]
        %v1019 = vld [vmem:[#allocation5 + $0x18] sm:$0xff]
        %v1020 = vld [vmem:[#allocation5 + $0x20] sm:$0xff]
        %v1021 = vld [vmem:[#allocation5 + $0x28] sm:$0xff]
        %v1022 = vld [vmem:[#allocation5 + $0x30] sm:$0xff]
        %v1023 = vld [vmem:[#allocation5 + $0x38] sm:$0xff]
        %v1024 = vld [vmem:[#allocation5 + $0x40] sm:$0xff]
        %v1025 = vld [vmem:[#allocation5 + $0x48] sm:$0xff]
        %v1026 = vld [vmem:[#allocation5 + $0x50] sm:$0xff]
        %v1027 = vld [vmem:[#allocation5 + $0x58] sm:$0xff]
        %v1028 = vld [vmem:[#allocation5 + $0x60] sm:$0xff]
        %v1029 = vld [vmem:[#allocation5 + $0x68] sm:$0xff]
        %v1030 = vld [vmem:[#allocation5 + $0x70] sm:$0xff]
        %v1031 = vld [vmem:[#allocation5 + $0x78] sm:$0xff]
        %v1032 = vld [vmem:[#allocation11] sm:$0xff]
        %v1033 = vld [vmem:[#allocation11 + $0x8] sm:$0xff]
        %v1034 = vld [vmem:[#allocation11 + $0x10] sm:$0xff]
        %v1035 = vld [vmem:[#allocation11 + $0x18] sm:$0xff]
        %v1036 = vld [vmem:[#allocation11 + $0x20] sm:$0xff]
        %v1037 = vld [vmem:[#allocation11 + $0x28] sm:$0xff]
        %v1038 = vld [vmem:[#allocation11 + $0x30] sm:$0xff]
        %v1039 = vld [vmem:[#allocation11 + $0x38] sm:$0xff]
        %v1040 = vld [vmem:[#allocation11 + $0x40] sm:$0xff]
        %v1041 = vld [vmem:[#allocation11 + $0x48] sm:$0xff]
        %v1042 = vld [vmem:[#allocation11 + $0x50] sm:$0xff]
        %v1043 = vld [vmem:[#allocation11 + $0x58] sm:$0xff]
        %v1044 = vld [vmem:[#allocation11 + $0x60] sm:$0xff]
        %v1045 = vld [vmem:[#allocation11 + $0x68] sm:$0xff]
        %v1046 = vld [vmem:[#allocation11 + $0x70] sm:$0xff]
        %v1047 = vld [vmem:[#allocation11 + $0x78] sm:$0xff]
        %1048 = vmatprep.subr.mxu0 0.0
        %1049 = vmatpush1.msra.mxu0 %v1032
        %1050 = vmatprep.subr.mxu0 0.0
        %1051 = vmatpush1.msra.mxu0 %v1033
        %1052 = vmatprep.subr.mxu0 0.0
        %1053 = vmatpush1.msra.mxu0 %v1034
        %1054 = vmatprep.subr.mxu0 0.0
        %1055 = vmatpush1.msra.mxu0 %v1035
        %1056 = vmatprep.subr.mxu0 0.0
        %1057 = vmatpush1.msra.mxu0 %v1036
        %1058 = vmatprep.subr.mxu0 0.0
        %1059 = vmatpush1.msra.mxu0 %v1037
        %1060 = vmatprep.subr.mxu0 0.0
        %1061 = vmatpush1.msra.mxu0 %v1038
        %1062 = vmatprep.subr.mxu0 0.0
        %1063 = vmatpush1.msra.mxu0 %v1039
        %1064 = vmatprep.subr.mxu0 0.0
        %1065 = vmatpush1.msra.mxu0 %v1040
        %1066 = vmatprep.subr.mxu0 0.0
        %1067 = vmatpush1.msra.mxu0 %v1041
        %1068 = vmatprep.subr.mxu0 0.0
        %1069 = vmatpush1.msra.mxu0 %v1042
        %1070 = vmatprep.subr.mxu0 0.0
        %1071 = vmatpush1.msra.mxu0 %v1043
        %1072 = vmatprep.subr.mxu0 0.0
        %1073 = vmatpush1.msra.mxu0 %v1044
        %1074 = vmatprep.subr.mxu0 0.0
        %1075 = vmatpush1.msra.mxu0 %v1045
        %1076 = vmatprep.subr.mxu0 0.0
        %1077 = vmatpush1.msra.mxu0 %v1046
        %1078 = vmatprep.subr.mxu0 0.0
        %1079 = vmatpush1.msra.mxu0 %v1047
        %1080 = vmatprep.subr.mxu0 0.0
        %1081 = vmatpush1.msra.mxu0 0.0
        %1082 = vmatprep.subr.mxu0 0.0
        %1083 = vmatpush1.msra.mxu0 0.0
        %1084 = vmatprep.subr.mxu0 0.0
        %1085 = vmatpush1.msra.mxu0 0.0
        %1086 = vmatprep.subr.mxu0 0.0
        %1087 = vmatpush1.msra.mxu0 0.0
        %1088 = vmatprep.subr.mxu0 0.0
        %1089 = vmatpush1.msra.mxu0 0.0
        %1090 = vmatprep.subr.mxu0 0.0
        %1091 = vmatpush1.msra.mxu0 0.0
        %1092 = vmatprep.subr.mxu0 0.0
        %1093 = vmatpush1.msra.mxu0 0.0
        %1094 = vmatprep.subr.mxu0 0.0
        %1095 = vmatpush1.msra.mxu0 0.0
        %1096 = vmatprep.subr.mxu0 0.0
        %1097 = vmatpush1.msra.mxu0 0.0
        %1098 = vmatprep.subr.mxu0 0.0
        %1099 = vmatpush1.msra.mxu0 0.0
        %1100 = vmatprep.subr.mxu0 0.0
        %1101 = vmatpush1.msra.mxu0 0.0
        %1102 = vmatprep.subr.mxu0 0.0
        %1103 = vmatpush1.msra.mxu0 0.0
        %1104 = vmatprep.subr.mxu0 0.0
        %1105 = vmatpush1.msra.mxu0 0.0
        %1106 = vmatprep.subr.mxu0 0.0
        %1107 = vmatpush1.msra.mxu0 0.0
        %1108 = vmatprep.subr.mxu0 0.0
        %1109 = vmatpush1.msra.mxu0 0.0
        %1110 = vmatprep.subr.mxu0 0.0
        %1111 = vmatpush1.msra.mxu0 0.0
        %1112 = vmatprep.mubr.f32.mxu0 0.0
        %1113 = vmatmul.mubr.f32.gmra.mrb[0].mxu0 %v1000
        %v1114 = vpop.f32.mrb[0].mxu0
        %v1115 = vadd.f32 0.0, %v1114
        %v1116 = vpop.f32.mrb[0].mxu0
        %1117 = vmatprep.mubr.f32.mxu0 0.0
        %1118 = vmatmul.mubr.f32.gmra.mrb[0].mxu0 %v1001
        %v1119 = vpop.f32.mrb[0].mxu0
        %v1120 = vadd.f32 0.0, %v1119
        %v1121 = vpop.f32.mrb[0].mxu0
        %1122 = vmatprep.mubr.f32.mxu0 0.0
        %1123 = vmatmul.mubr.f32.gmra.mrb[0].mxu0 %v1002
        %v1124 = vpop.f32.mrb[0].mxu0
        %v1125 = vadd.f32 0.0, %v1124
        %v1126 = vpop.f32.mrb[0].mxu0
        %1127 = vmatprep.mubr.f32.mxu0 0.0
        %1128 = vmatmul.mubr.f32.gmra.mrb[0].mxu0 %v1003
        %v1129 = vpop.f32.mrb[0].mxu0
        %v1130 = vadd.f32 0.0, %v1129
        %v1131 = vpop.f32.mrb[0].mxu0
        %1132 = vmatprep.mubr.f32.mxu0 0.0
        %1133 = vmatmul.mubr.f32.gmra.mrb[0].mxu0 %v1004
        %v1134 = vpop.f32.mrb[0].mxu0
        %v1135 = vadd.f32 0.0, %v1134
        %v1136 = vpop.f32.mrb[0].mxu0
        %1137 = vmatprep.mubr.f32.mxu0 0.0
        %1138 = vmatmul.mubr.f32.gmra.mrb[0].mxu0 %v1005
        %v1139 = vpop.f32.mrb[0].mxu0
        %v1140 = vadd.f32 0.0, %v1139
        %v1141 = vpop.f32.mrb[0].mxu0
        %1142 = vmatprep.mubr.f32.mxu0 0.0
        %1143 = vmatmul.mubr.f32.gmra.mrb[0].mxu0 %v1006
        %v1144 = vpop.f32.mrb[0].mxu0
        %v1145 = vadd.f32 0.0, %v1144
        %v1146 = vpop.f32.mrb[0].mxu0
        %1147 = vmatprep.mubr.f32.mxu0 0.0
        %1148 = vmatmul.mubr.f32.gmra.mrb[0].mxu0 %v1007
        %v1149 = vpop.f32.mrb[0].mxu0
        %v1150 = vadd.f32 0.0, %v1149
        %v1151 = vpop.f32.mrb[0].mxu0
        %1152 = vmatprep.mubr.f32.mxu0 0.0
        %1153 = vmatmul.mubr.f32.gmra.mrb[0].mxu0 %v1008
        %v1154 = vpop.f32.mrb[0].mxu0
        %v1155 = vadd.f32 0.0, %v1154
        %v1156 = vpop.f32.mrb[0].mxu0
        %1157 = vmatprep.mubr.f32.mxu0 0.0
        %1158 = vmatmul.mubr.f32.gmra.mrb[0].mxu0 %v1009
        %v1159 = vpop.f32.mrb[0].mxu0
        %v1160 = vadd.f32 0.0, %v1159
        %v1161 = vpop.f32.mrb[0].mxu0
        %1162 = vmatprep.mubr.f32.mxu0 0.0
        %1163 = vmatmul.mubr.f32.gmra.mrb[0].mxu0 %v1010
        %v1164 = vpop.f32.mrb[0].mxu0
        %v1165 = vadd.f32 0.0, %v1164
        %v1166 = vpop.f32.mrb[0].mxu0
        %1167 = vmatprep.mubr.f32.mxu0 0.0
        %1168 = vmatmul.mubr.f32.gmra.mrb[0].mxu0 %v1011
        %v1169 = vpop.f32.mrb[0].mxu0
        %v1170 = vadd.f32 0.0, %v1169
        %v1171 = vpop.f32.mrb[0].mxu0
        %1172 = vmatprep.mubr.f32.mxu0 0.0
        %1173 = vmatmul.mubr.f32.gmra.mrb[0].mxu0 %v1012
        %v1174 = vpop.f32.mrb[0].mxu0
        %v1175 = vadd.f32 0.0, %v1174
        %v1176 = vpop.f32.mrb[0].mxu0
        %1177 = vmatprep.mubr.f32.mxu0 0.0
        %1178 = vmatmul.mubr.f32.gmra.mrb[0].mxu0 %v1013
        %v1179 = vpop.f32.mrb[0].mxu0
        %v1180 = vadd.f32 0.0, %v1179
        %v1181 = vpop.f32.mrb[0].mxu0
        %1182 = vmatprep.mubr.f32.mxu0 0.0
        %1183 = vmatmul.mubr.f32.gmra.mrb[0].mxu0 %v1014
        %v1184 = vpop.f32.mrb[0].mxu0
        %v1185 = vadd.f32 0.0, %v1184
        %v1186 = vpop.f32.mrb[0].mxu0
        %1187 = vmatprep.mubr.f32.mxu0 0.0
        %1188 = vmatmul.mubr.f32.gmra.mrb[0].mxu0 %v1015
        %v1189 = vpop.f32.mrb[0].mxu0
        %v1190 = vadd.f32 0.0, %v1189
        %v1191 = vpop.f32.mrb[0].mxu0
        %1192 = vdwg.mxu0
        %v1193 = vadd.f32 %v1016, %v1115
        %v1194 = vadd.f32 %v1017, %v1120
        %v1195 = vadd.f32 %v1018, %v1125
        %v1196 = vadd.f32 %v1019, %v1130
        %v1197 = vadd.f32 %v1020, %v1135
        %v1198 = vadd.f32 %v1021, %v1140
        %v1199 = vadd.f32 %v1022, %v1145
        %v1200 = vadd.f32 %v1023, %v1150
        %v1201 = vadd.f32 %v1024, %v1155
        %v1202 = vadd.f32 %v1025, %v1160
        %v1203 = vadd.f32 %v1026, %v1165
        %v1204 = vadd.f32 %v1027, %v1170
        %v1205 = vadd.f32 %v1028, %v1175
        %v1206 = vadd.f32 %v1029, %v1180
        %v1207 = vadd.f32 %v1030, %v1185
        %v1208 = vadd.f32 %v1031, %v1190
        %1209 = vst [vmem:[#allocation5] sm:$0xff] %v1193
        %1210 = vst [vmem:[#allocation5 + $0x8] sm:$0xff] %v1194
        %1211 = vst [vmem:[#allocation5 + $0x10] sm:$0xff] %v1195
        %1212 = vst [vmem:[#allocation5 + $0x18] sm:$0xff] %v1196
        %1213 = vst [vmem:[#allocation5 + $0x20] sm:$0xff] %v1197
        %1214 = vst [vmem:[#allocation5 + $0x28] sm:$0xff] %v1198
        %1215 = vst [vmem:[#allocation5 + $0x30] sm:$0xff] %v1199
        %1216 = vst [vmem:[#allocation5 + $0x38] sm:$0xff] %v1200
        %1217 = vst [vmem:[#allocation5 + $0x40] sm:$0xff] %v1201
        %1218 = vst [vmem:[#allocation5 + $0x48] sm:$0xff] %v1202
        %1219 = vst [vmem:[#allocation5 + $0x50] sm:$0xff] %v1203
        %1220 = vst [vmem:[#allocation5 + $0x58] sm:$0xff] %v1204
        %1221 = vst [vmem:[#allocation5 + $0x60] sm:$0xff] %v1205
        %1222 = vst [vmem:[#allocation5 + $0x68] sm:$0xff] %v1206
        %1223 = vst [vmem:[#allocation5 + $0x70] sm:$0xff] %v1207
        %1224 = vst [vmem:[#allocation5 + $0x78] sm:$0xff] %v1208
        %v1225 = vld [vmem:[%s999 + $0x12] sm:$0xff]
        %v1226 = vld [vmem:[%s999 + $0x1a] sm:$0xff]
        %v1227 = vld [vmem:[%s999 + $0x4a] sm:$0xff]
        %v1228 = vld [vmem:[%s999 + $0x52] sm:$0xff]
        %v1229 = vld [vmem:[%s999 + $0x82] sm:$0xff]
        %v1230 = vld [vmem:[%s999 + $0x8a] sm:$0xff]
        %v1231 = vld [vmem:[%s999 + $0xba] sm:$0xff]
        %v1232 = vld [vmem:[%s999 + $0xc2] sm:$0xff]
        %v1233 = vld [vmem:[%s999 + $0xf2] sm:$0xff]
        %v1234 = vld [vmem:[%s999 + $0xfa] sm:$0xff]
        %v1235 = vld [vmem:[%s999 + $0x12a] sm:$0xff]
        %v1236 = vld [vmem:[%s999 + $0x132] sm:$0xff]
        %v1237 = vld [vmem:[%s999 + $0x162] sm:$0xff]
        %v1238 = vld [vmem:[%s999 + $0x16a] sm:$0xff]
        %v1239 = vld [vmem:[%s999 + $0x19a] sm:$0xff]
        %v1240 = vld [vmem:[%s999 + $0x1a2] sm:$0xff]
        %v1241 = vld [vmem:[#allocation5] sm:$0xff]
        %v1242 = vld [vmem:[#allocation5 + $0x8] sm:$0xff]
        %v1243 = vld [vmem:[#allocation5 + $0x10] sm:$0xff]
        %v1244 = vld [vmem:[#allocation5 + $0x18] sm:$0xff]
        %v1245 = vld [vmem:[#allocation5 + $0x20] sm:$0xff]
        %v1246 = vld [vmem:[#allocation5 + $0x28] sm:$0xff]
        %v1247 = vld [vmem:[#allocation5 + $0x30] sm:$0xff]
        %v1248 = vld [vmem:[#allocation5 + $0x38] sm:$0xff]
        %v1249 = vld [vmem:[#allocation5 + $0x40] sm:$0xff]
        %v1250 = vld [vmem:[#allocation5 + $0x48] sm:$0xff]
        %v1251 = vld [vmem:[#allocation5 + $0x50] sm:$0xff]
        %v1252 = vld [vmem:[#allocation5 + $0x58] sm:$0xff]
        %v1253 = vld [vmem:[#allocation5 + $0x60] sm:$0xff]
        %v1254 = vld [vmem:[#allocation5 + $0x68] sm:$0xff]
        %v1255 = vld [vmem:[#allocation5 + $0x70] sm:$0xff]
        %v1256 = vld [vmem:[#allocation5 + $0x78] sm:$0xff]
        %s1257 = scalar_lea.vmem [#allocation11], 128
        %v1258 = vld [vmem:[%s1257] sm:$0xff]
        %v1259 = vld [vmem:[%s1257 + $0x8] sm:$0xff]
        %v1260 = vld [vmem:[%s1257 + $0x10] sm:$0xff]
        %v1261 = vld [vmem:[%s1257 + $0x18] sm:$0xff]
        %v1262 = vld [vmem:[%s1257 + $0x20] sm:$0xff]
        %v1263 = vld [vmem:[%s1257 + $0x28] sm:$0xff]
        %v1264 = vld [vmem:[%s1257 + $0x30] sm:$0xff]
        %v1265 = vld [vmem:[%s1257 + $0x38] sm:$0xff]
        %v1266 = vld [vmem:[%s1257 + $0x40] sm:$0xff]
        %v1267 = vld [vmem:[%s1257 + $0x48] sm:$0xff]
        %v1268 = vld [vmem:[%s1257 + $0x50] sm:$0xff]
        %v1269 = vld [vmem:[%s1257 + $0x58] sm:$0xff]
        %v1270 = vld [vmem:[%s1257 + $0x60] sm:$0xff]
        %v1271 = vld [vmem:[%s1257 + $0x68] sm:$0xff]
        %v1272 = vld [vmem:[%s1257 + $0x70] sm:$0xff]
        %v1273 = vld [vmem:[%s1257 + $0x78] sm:$0xff]
        %1274 = vmatprep.subr.mxu0 0.0
        %1275 = vmatpush1.msra.mxu0 %v1258
        %1276 = vmatprep.subr.mxu0 0.0
        %1277 = vmatpush1.msra.mxu0 %v1259
        %1278 = vmatprep.subr.mxu0 0.0
        %1279 = vmatpush1.msra.mxu0 %v1260
        %1280 = vmatprep.subr.mxu0 0.0
        %1281 = vmatpush1.msra.mxu0 %v1261
        %1282 = vmatprep.subr.mxu0 0.0
        %1283 = vmatpush1.msra.mxu0 %v1262
        %1284 = vmatprep.subr.mxu0 0.0
        %1285 = vmatpush1.msra.mxu0 %v1263
        %1286 = vmatprep.subr.mxu0 0.0
        %1287 = vmatpush1.msra.mxu0 %v1264
        %1288 = vmatprep.subr.mxu0 0.0
        %1289 = vmatpush1.msra.mxu0 %v1265
        %1290 = vmatprep.subr.mxu0 0.0
        %1291 = vmatpush1.msra.mxu0 %v1266
        %1292 = vmatprep.subr.mxu0 0.0
        %1293 = vmatpush1.msra.mxu0 %v1267
        %1294 = vmatprep.subr.mxu0 0.0
        %1295 = vmatpush1.msra.mxu0 %v1268
        %1296 = vmatprep.subr.mxu0 0.0
        %1297 = vmatpush1.msra.mxu0 %v1269
        %1298 = vmatprep.subr.mxu0 0.0
        %1299 = vmatpush1.msra.mxu0 %v1270
        %1300 = vmatprep.subr.mxu0 0.0
        %1301 = vmatpush1.msra.mxu0 %v1271
        %1302 = vmatprep.subr.mxu0 0.0
        %1303 = vmatpush1.msra.mxu0 %v1272
        %1304 = vmatprep.subr.mxu0 0.0
        %1305 = vmatpush1.msra.mxu0 %v1273
        %1306 = vmatprep.subr.mxu0 0.0
        %1307 = vmatpush1.msra.mxu0 0.0
        %1308 = vmatprep.subr.mxu0 0.0
        %1309 = vmatpush1.msra.mxu0 0.0
        %1310 = vmatprep.subr.mxu0 0.0
        %1311 = vmatpush1.msra.mxu0 0.0
        %1312 = vmatprep.subr.mxu0 0.0
        %1313 = vmatpush1.msra.mxu0 0.0
        %1314 = vmatprep.subr.mxu0 0.0
        %1315 = vmatpush1.msra.mxu0 0.0
        %1316 = vmatprep.subr.mxu0 0.0
        %1317 = vmatpush1.msra.mxu0 0.0
        %1318 = vmatprep.subr.mxu0 0.0
        %1319 = vmatpush1.msra.mxu0 0.0
        %1320 = vmatprep.subr.mxu0 0.0
        %1321 = vmatpush1.msra.mxu0 0.0
        %1322 = vmatprep.subr.mxu0 0.0
        %1323 = vmatpush1.msra.mxu0 0.0
        %1324 = vmatprep.subr.mxu0 0.0
        %1325 = vmatpush1.msra.mxu0 0.0
        %1326 = vmatprep.subr.mxu0 0.0
        %1327 = vmatpush1.msra.mxu0 0.0
        %1328 = vmatprep.subr.mxu0 0.0
        %1329 = vmatpush1.msra.mxu0 0.0
        %1330 = vmatprep.subr.mxu0 0.0
        %1331 = vmatpush1.msra.mxu0 0.0
        %1332 = vmatprep.subr.mxu0 0.0
        %1333 = vmatpush1.msra.mxu0 0.0
        %1334 = vmatprep.subr.mxu0 0.0
        %1335 = vmatpush1.msra.mxu0 0.0
        %1336 = vmatprep.subr.mxu0 0.0
        %1337 = vmatpush1.msra.mxu0 0.0
        %1338 = vmatprep.mubr.f32.mxu0 0.0
        %1339 = vmatmul.mubr.f32.gmra.mrb[0].mxu0 %v1225
        %v1340 = vpop.f32.mrb[0].mxu0
        %v1341 = vadd.f32 0.0, %v1340
        %v1342 = vpop.f32.mrb[0].mxu0
        %1343 = vmatprep.mubr.f32.mxu0 0.0
        %1344 = vmatmul.mubr.f32.gmra.mrb[0].mxu0 %v1226
        %v1345 = vpop.f32.mrb[0].mxu0
        %v1346 = vadd.f32 0.0, %v1345
        %v1347 = vpop.f32.mrb[0].mxu0
        %1348 = vmatprep.mubr.f32.mxu0 0.0
        %1349 = vmatmul.mubr.f32.gmra.mrb[0].mxu0 %v1227
        %v1350 = vpop.f32.mrb[0].mxu0
        %v1351 = vadd.f32 0.0, %v1350
        %v1352 = vpop.f32.mrb[0].mxu0
        %1353 = vmatprep.mubr.f32.mxu0 0.0
        %1354 = vmatmul.mubr.f32.gmra.mrb[0].mxu0 %v1228
        %v1355 = vpop.f32.mrb[0].mxu0
        %v1356 = vadd.f32 0.0, %v1355
        %v1357 = vpop.f32.mrb[0].mxu0
        %1358 = vmatprep.mubr.f32.mxu0 0.0
        %1359 = vmatmul.mubr.f32.gmra.mrb[0].mxu0 %v1229
        %v1360 = vpop.f32.mrb[0].mxu0
        %v1361 = vadd.f32 0.0, %v1360
        %v1362 = vpop.f32.mrb[0].mxu0
        %1363 = vmatprep.mubr.f32.mxu0 0.0
        %1364 = vmatmul.mubr.f32.gmra.mrb[0].mxu0 %v1230
        %v1365 = vpop.f32.mrb[0].mxu0
        %v1366 = vadd.f32 0.0, %v1365
        %v1367 = vpop.f32.mrb[0].mxu0
        %1368 = vmatprep.mubr.f32.mxu0 0.0
        %1369 = vmatmul.mubr.f32.gmra.mrb[0].mxu0 %v1231
        %v1370 = vpop.f32.mrb[0].mxu0
        %v1371 = vadd.f32 0.0, %v1370
        %v1372 = vpop.f32.mrb[0].mxu0
        %1373 = vmatprep.mubr.f32.mxu0 0.0
        %1374 = vmatmul.mubr.f32.gmra.mrb[0].mxu0 %v1232
        %v1375 = vpop.f32.mrb[0].mxu0
        %v1376 = vadd.f32 0.0, %v1375
        %v1377 = vpop.f32.mrb[0].mxu0
        %1378 = vmatprep.mubr.f32.mxu0 0.0
        %1379 = vmatmul.mubr.f32.gmra.mrb[0].mxu0 %v1233
        %v1380 = vpop.f32.mrb[0].mxu0
        %v1381 = vadd.f32 0.0, %v1380
        %v1382 = vpop.f32.mrb[0].mxu0
        %1383 = vmatprep.mubr.f32.mxu0 0.0
        %1384 = vmatmul.mubr.f32.gmra.mrb[0].mxu0 %v1234
        %v1385 = vpop.f32.mrb[0].mxu0
        %v1386 = vadd.f32 0.0, %v1385
        %v1387 = vpop.f32.mrb[0].mxu0
        %1388 = vmatprep.mubr.f32.mxu0 0.0
        %1389 = vmatmul.mubr.f32.gmra.mrb[0].mxu0 %v1235
        %v1390 = vpop.f32.mrb[0].mxu0
        %v1391 = vadd.f32 0.0, %v1390
        %v1392 = vpop.f32.mrb[0].mxu0
        %1393 = vmatprep.mubr.f32.mxu0 0.0
        %1394 = vmatmul.mubr.f32.gmra.mrb[0].mxu0 %v1236
        %v1395 = vpop.f32.mrb[0].mxu0
        %v1396 = vadd.f32 0.0, %v1395
        %v1397 = vpop.f32.mrb[0].mxu0
        %1398 = vmatprep.mubr.f32.mxu0 0.0
        %1399 = vmatmul.mubr.f32.gmra.mrb[0].mxu0 %v1237
        %v1400 = vpop.f32.mrb[0].mxu0
        %v1401 = vadd.f32 0.0, %v1400
        %v1402 = vpop.f32.mrb[0].mxu0
        %1403 = vmatprep.mubr.f32.mxu0 0.0
        %1404 = vmatmul.mubr.f32.gmra.mrb[0].mxu0 %v1238
        %v1405 = vpop.f32.mrb[0].mxu0
        %v1406 = vadd.f32 0.0, %v1405
        %v1407 = vpop.f32.mrb[0].mxu0
        %1408 = vmatprep.mubr.f32.mxu0 0.0
        %1409 = vmatmul.mubr.f32.gmra.mrb[0].mxu0 %v1239
        %v1410 = vpop.f32.mrb[0].mxu0
        %v1411 = vadd.f32 0.0, %v1410
        %v1412 = vpop.f32.mrb[0].mxu0
        %1413 = vmatprep.mubr.f32.mxu0 0.0
        %1414 = vmatmul.mubr.f32.gmra.mrb[0].mxu0 %v1240
        %v1415 = vpop.f32.mrb[0].mxu0
        %v1416 = vadd.f32 0.0, %v1415
        %v1417 = vpop.f32.mrb[0].mxu0
        %1418 = vdwg.mxu0
        %v1419 = vadd.f32 %v1241, %v1341
        %v1420 = vadd.f32 %v1242, %v1346
        %v1421 = vadd.f32 %v1243, %v1351
        %v1422 = vadd.f32 %v1244, %v1356
        %v1423 = vadd.f32 %v1245, %v1361
        %v1424 = vadd.f32 %v1246, %v1366
        %v1425 = vadd.f32 %v1247, %v1371
        %v1426 = vadd.f32 %v1248, %v1376
        %v1427 = vadd.f32 %v1249, %v1381
        %v1428 = vadd.f32 %v1250, %v1386
        %v1429 = vadd.f32 %v1251, %v1391
        %v1430 = vadd.f32 %v1252, %v1396
        %v1431 = vadd.f32 %v1253, %v1401
        %v1432 = vadd.f32 %v1254, %v1406
        %v1433 = vadd.f32 %v1255, %v1411
        %v1434 = vadd.f32 %v1256, %v1416
        %1435 = vst [vmem:[#allocation5] sm:$0xff] %v1419
        %1436 = vst [vmem:[#allocation5 + $0x8] sm:$0xff] %v1420
        %1437 = vst [vmem:[#allocation5 + $0x10] sm:$0xff] %v1421
        %1438 = vst [vmem:[#allocation5 + $0x18] sm:$0xff] %v1422
        %1439 = vst [vmem:[#allocation5 + $0x20] sm:$0xff] %v1423
        %1440 = vst [vmem:[#allocation5 + $0x28] sm:$0xff] %v1424
        %1441 = vst [vmem:[#allocation5 + $0x30] sm:$0xff] %v1425
        %1442 = vst [vmem:[#allocation5 + $0x38] sm:$0xff] %v1426
        %1443 = vst [vmem:[#allocation5 + $0x40] sm:$0xff] %v1427
        %1444 = vst [vmem:[#allocation5 + $0x48] sm:$0xff] %v1428
        %1445 = vst [vmem:[#allocation5 + $0x50] sm:$0xff] %v1429
        %1446 = vst [vmem:[#allocation5 + $0x58] sm:$0xff] %v1430
        %1447 = vst [vmem:[#allocation5 + $0x60] sm:$0xff] %v1431
        %1448 = vst [vmem:[#allocation5 + $0x68] sm:$0xff] %v1432
        %1449 = vst [vmem:[#allocation5 + $0x70] sm:$0xff] %v1433
        %1450 = vst [vmem:[#allocation5 + $0x78] sm:$0xff] %v1434
        %v1451 = vld [vmem:[%s999 + $0x18] sm:$0xff]
        %v1452 = vld [vmem:[%s999 + $0x20] sm:$0xff]
        %v1453 = vld [vmem:[%s999 + $0x50] sm:$0xff]
        %v1454 = vld [vmem:[%s999 + $0x58] sm:$0xff]
        %v1455 = vld [vmem:[%s999 + $0x88] sm:$0xff]
        %v1456 = vld [vmem:[%s999 + $0x90] sm:$0xff]
        %v1457 = vld [vmem:[%s999 + $0xc0] sm:$0xff]
        %v1458 = vld [vmem:[%s999 + $0xc8] sm:$0xff]
        %v1459 = vld [vmem:[%s999 + $0xf8] sm:$0xff]
        %v1460 = vld [vmem:[%s999 + $0x100] sm:$0xff]
        %v1461 = vld [vmem:[%s999 + $0x130] sm:$0xff]
        %v1462 = vld [vmem:[%s999 + $0x138] sm:$0xff]
        %v1463 = vld [vmem:[%s999 + $0x168] sm:$0xff]
        %v1464 = vld [vmem:[%s999 + $0x170] sm:$0xff]
        %v1465 = vld [vmem:[%s999 + $0x1a0] sm:$0xff]
        %v1466 = vld [vmem:[%s999 + $0x1a8] sm:$0xff]
        %v1467 = vld [vmem:[#allocation5] sm:$0xff]
        %v1468 = vld [vmem:[#allocation5 + $0x8] sm:$0xff]
        %v1469 = vld [vmem:[#allocation5 + $0x10] sm:$0xff]
        %v1470 = vld [vmem:[#allocation5 + $0x18] sm:$0xff]
        %v1471 = vld [vmem:[#allocation5 + $0x20] sm:$0xff]
        %v1472 = vld [vmem:[#allocation5 + $0x28] sm:$0xff]
        %v1473 = vld [vmem:[#allocation5 + $0x30] sm:$0xff]
        %v1474 = vld [vmem:[#allocation5 + $0x38] sm:$0xff]
        %v1475 = vld [vmem:[#allocation5 + $0x40] sm:$0xff]
        %v1476 = vld [vmem:[#allocation5 + $0x48] sm:$0xff]
        %v1477 = vld [vmem:[#allocation5 + $0x50] sm:$0xff]
        %v1478 = vld [vmem:[#allocation5 + $0x58] sm:$0xff]
        %v1479 = vld [vmem:[#allocation5 + $0x60] sm:$0xff]
        %v1480 = vld [vmem:[#allocation5 + $0x68] sm:$0xff]
        %v1481 = vld [vmem:[#allocation5 + $0x70] sm:$0xff]
        %v1482 = vld [vmem:[#allocation5 + $0x78] sm:$0xff]
        %s1483 = scalar_lea.vmem [#allocation11], 256
        %v1484 = vld [vmem:[%s1483] sm:$0xff]
        %v1485 = vld [vmem:[%s1483 + $0x8] sm:$0xff]
        %v1486 = vld [vmem:[%s1483 + $0x10] sm:$0xff]
        %v1487 = vld [vmem:[%s1483 + $0x18] sm:$0xff]
        %v1488 = vld [vmem:[%s1483 + $0x20] sm:$0xff]
        %v1489 = vld [vmem:[%s1483 + $0x28] sm:$0xff]
        %v1490 = vld [vmem:[%s1483 + $0x30] sm:$0xff]
        %v1491 = vld [vmem:[%s1483 + $0x38] sm:$0xff]
        %v1492 = vld [vmem:[%s1483 + $0x40] sm:$0xff]
        %v1493 = vld [vmem:[%s1483 + $0x48] sm:$0xff]
        %v1494 = vld [vmem:[%s1483 + $0x50] sm:$0xff]
        %v1495 = vld [vmem:[%s1483 + $0x58] sm:$0xff]
        %v1496 = vld [vmem:[%s1483 + $0x60] sm:$0xff]
        %v1497 = vld [vmem:[%s1483 + $0x68] sm:$0xff]
        %v1498 = vld [vmem:[%s1483 + $0x70] sm:$0xff]
        %v1499 = vld [vmem:[%s1483 + $0x78] sm:$0xff]
        %1500 = vmatprep.subr.mxu0 0.0
        %1501 = vmatpush1.msra.mxu0 %v1484
        %1502 = vmatprep.subr.mxu0 0.0
        %1503 = vmatpush1.msra.mxu0 %v1485
        %1504 = vmatprep.subr.mxu0 0.0
        %1505 = vmatpush1.msra.mxu0 %v1486
        %1506 = vmatprep.subr.mxu0 0.0
        %1507 = vmatpush1.msra.mxu0 %v1487
        %1508 = vmatprep.subr.mxu0 0.0
        %1509 = vmatpush1.msra.mxu0 %v1488
        %1510 = vmatprep.subr.mxu0 0.0
        %1511 = vmatpush1.msra.mxu0 %v1489
        %1512 = vmatprep.subr.mxu0 0.0
        %1513 = vmatpush1.msra.mxu0 %v1490
        %1514 = vmatprep.subr.mxu0 0.0
        %1515 = vmatpush1.msra.mxu0 %v1491
        %1516 = vmatprep.subr.mxu0 0.0
        %1517 = vmatpush1.msra.mxu0 %v1492
        %1518 = vmatprep.subr.mxu0 0.0
        %1519 = vmatpush1.msra.mxu0 %v1493
        %1520 = vmatprep.subr.mxu0 0.0
        %1521 = vmatpush1.msra.mxu0 %v1494
        %1522 = vmatprep.subr.mxu0 0.0
        %1523 = vmatpush1.msra.mxu0 %v1495
        %1524 = vmatprep.subr.mxu0 0.0
        %1525 = vmatpush1.msra.mxu0 %v1496
        %1526 = vmatprep.subr.mxu0 0.0
        %1527 = vmatpush1.msra.mxu0 %v1497
        %1528 = vmatprep.subr.mxu0 0.0
        %1529 = vmatpush1.msra.mxu0 %v1498
        %1530 = vmatprep.subr.mxu0 0.0
        %1531 = vmatpush1.msra.mxu0 %v1499
        %1532 = vmatprep.subr.mxu0 0.0
        %1533 = vmatpush1.msra.mxu0 0.0
        %1534 = vmatprep.subr.mxu0 0.0
        %1535 = vmatpush1.msra.mxu0 0.0
        %1536 = vmatprep.subr.mxu0 0.0
        %1537 = vmatpush1.msra.mxu0 0.0
        %1538 = vmatprep.subr.mxu0 0.0
        %1539 = vmatpush1.msra.mxu0 0.0
        %1540 = vmatprep.subr.mxu0 0.0
        %1541 = vmatpush1.msra.mxu0 0.0
        %1542 = vmatprep.subr.mxu0 0.0
        %1543 = vmatpush1.msra.mxu0 0.0
        %1544 = vmatprep.subr.mxu0 0.0
        %1545 = vmatpush1.msra.mxu0 0.0
        %1546 = vmatprep.subr.mxu0 0.0
        %1547 = vmatpush1.msra.mxu0 0.0
        %1548 = vmatprep.subr.mxu0 0.0
        %1549 = vmatpush1.msra.mxu0 0.0
        %1550 = vmatprep.subr.mxu0 0.0
        %1551 = vmatpush1.msra.mxu0 0.0
        %1552 = vmatprep.subr.mxu0 0.0
        %1553 = vmatpush1.msra.mxu0 0.0
        %1554 = vmatprep.subr.mxu0 0.0
        %1555 = vmatpush1.msra.mxu0 0.0
        %1556 = vmatprep.subr.mxu0 0.0
        %1557 = vmatpush1.msra.mxu0 0.0
        %1558 = vmatprep.subr.mxu0 0.0
        %1559 = vmatpush1.msra.mxu0 0.0
        %1560 = vmatprep.subr.mxu0 0.0
        %1561 = vmatpush1.msra.mxu0 0.0
        %1562 = vmatprep.subr.mxu0 0.0
        %1563 = vmatpush1.msra.mxu0 0.0
        %1564 = vmatprep.mubr.f32.mxu0 0.0
        %1565 = vmatmul.mubr.f32.gmra.mrb[0].mxu0 %v1451
        %v1566 = vpop.f32.mrb[0].mxu0
        %v1567 = vadd.f32 0.0, %v1566
        %v1568 = vpop.f32.mrb[0].mxu0
        %1569 = vmatprep.mubr.f32.mxu0 0.0
        %1570 = vmatmul.mubr.f32.gmra.mrb[0].mxu0 %v1452
        %v1571 = vpop.f32.mrb[0].mxu0
        %v1572 = vadd.f32 0.0, %v1571
        %v1573 = vpop.f32.mrb[0].mxu0
        %1574 = vmatprep.mubr.f32.mxu0 0.0
        %1575 = vmatmul.mubr.f32.gmra.mrb[0].mxu0 %v1453
        %v1576 = vpop.f32.mrb[0].mxu0
        %v1577 = vadd.f32 0.0, %v1576
        %v1578 = vpop.f32.mrb[0].mxu0
        %1579 = vmatprep.mubr.f32.mxu0 0.0
        %1580 = vmatmul.mubr.f32.gmra.mrb[0].mxu0 %v1454
        %v1581 = vpop.f32.mrb[0].mxu0
        %v1582 = vadd.f32 0.0, %v1581
        %v1583 = vpop.f32.mrb[0].mxu0
        %1584 = vmatprep.mubr.f32.mxu0 0.0
        %1585 = vmatmul.mubr.f32.gmra.mrb[0].mxu0 %v1455
        %v1586 = vpop.f32.mrb[0].mxu0
        %v1587 = vadd.f32 0.0, %v1586
        %v1588 = vpop.f32.mrb[0].mxu0
        %1589 = vmatprep.mubr.f32.mxu0 0.0
        %1590 = vmatmul.mubr.f32.gmra.mrb[0].mxu0 %v1456
        %v1591 = vpop.f32.mrb[0].mxu0
        %v1592 = vadd.f32 0.0, %v1591
        %v1593 = vpop.f32.mrb[0].mxu0
        %1594 = vmatprep.mubr.f32.mxu0 0.0
        %1595 = vmatmul.mubr.f32.gmra.mrb[0].mxu0 %v1457
        %v1596 = vpop.f32.mrb[0].mxu0
        %v1597 = vadd.f32 0.0, %v1596
        %v1598 = vpop.f32.mrb[0].mxu0
        %1599 = vmatprep.mubr.f32.mxu0 0.0
        %1600 = vmatmul.mubr.f32.gmra.mrb[0].mxu0 %v1458
        %v1601 = vpop.f32.mrb[0].mxu0
        %v1602 = vadd.f32 0.0, %v1601
        %v1603 = vpop.f32.mrb[0].mxu0
        %1604 = vmatprep.mubr.f32.mxu0 0.0
        %1605 = vmatmul.mubr.f32.gmra.mrb[0].mxu0 %v1459
        %v1606 = vpop.f32.mrb[0].mxu0
        %v1607 = vadd.f32 0.0, %v1606
        %v1608 = vpop.f32.mrb[0].mxu0
        %1609 = vmatprep.mubr.f32.mxu0 0.0
        %1610 = vmatmul.mubr.f32.gmra.mrb[0].mxu0 %v1460
        %v1611 = vpop.f32.mrb[0].mxu0
        %v1612 = vadd.f32 0.0, %v1611
        %v1613 = vpop.f32.mrb[0].mxu0
        %1614 = vmatprep.mubr.f32.mxu0 0.0
        %1615 = vmatmul.mubr.f32.gmra.mrb[0].mxu0 %v1461
        %v1616 = vpop.f32.mrb[0].mxu0
        %v1617 = vadd.f32 0.0, %v1616
        %v1618 = vpop.f32.mrb[0].mxu0
        %1619 = vmatprep.mubr.f32.mxu0 0.0
        %1620 = vmatmul.mubr.f32.gmra.mrb[0].mxu0 %v1462
        %v1621 = vpop.f32.mrb[0].mxu0
        %v1622 = vadd.f32 0.0, %v1621
        %v1623 = vpop.f32.mrb[0].mxu0
        %1624 = vmatprep.mubr.f32.mxu0 0.0
        %1625 = vmatmul.mubr.f32.gmra.mrb[0].mxu0 %v1463
        %v1626 = vpop.f32.mrb[0].mxu0
        %v1627 = vadd.f32 0.0, %v1626
        %v1628 = vpop.f32.mrb[0].mxu0
        %1629 = vmatprep.mubr.f32.mxu0 0.0
        %1630 = vmatmul.mubr.f32.gmra.mrb[0].mxu0 %v1464
        %v1631 = vpop.f32.mrb[0].mxu0
        %v1632 = vadd.f32 0.0, %v1631
        %v1633 = vpop.f32.mrb[0].mxu0
        %1634 = vmatprep.mubr.f32.mxu0 0.0
        %1635 = vmatmul.mubr.f32.gmra.mrb[0].mxu0 %v1465
        %v1636 = vpop.f32.mrb[0].mxu0
        %v1637 = vadd.f32 0.0, %v1636
        %v1638 = vpop.f32.mrb[0].mxu0
        %1639 = vmatprep.mubr.f32.mxu0 0.0
        %1640 = vmatmul.mubr.f32.gmra.mrb[0].mxu0 %v1466
        %v1641 = vpop.f32.mrb[0].mxu0
        %v1642 = vadd.f32 0.0, %v1641
        %v1643 = vpop.f32.mrb[0].mxu0
        %1644 = vdwg.mxu0
        %v1645 = vadd.f32 %v1467, %v1567
        %v1646 = vadd.f32 %v1468, %v1572
        %v1647 = vadd.f32 %v1469, %v1577
        %v1648 = vadd.f32 %v1470, %v1582
        %v1649 = vadd.f32 %v1471, %v1587
        %v1650 = vadd.f32 %v1472, %v1592
        %v1651 = vadd.f32 %v1473, %v1597
        %v1652 = vadd.f32 %v1474, %v1602
        %v1653 = vadd.f32 %v1475, %v1607
        %v1654 = vadd.f32 %v1476, %v1612
        %v1655 = vadd.f32 %v1477, %v1617
        %v1656 = vadd.f32 %v1478, %v1622
        %v1657 = vadd.f32 %v1479, %v1627
        %v1658 = vadd.f32 %v1480, %v1632
        %v1659 = vadd.f32 %v1481, %v1637
        %v1660 = vadd.f32 %v1482, %v1642
        %1661 = vst [vmem:[#allocation5] sm:$0xff] %v1645
        %1662 = vst [vmem:[#allocation5 + $0x8] sm:$0xff] %v1646
        %1663 = vst [vmem:[#allocation5 + $0x10] sm:$0xff] %v1647
        %1664 = vst [vmem:[#allocation5 + $0x18] sm:$0xff] %v1648
        %1665 = vst [vmem:[#allocation5 + $0x20] sm:$0xff] %v1649
        %1666 = vst [vmem:[#allocation5 + $0x28] sm:$0xff] %v1650
        %1667 = vst [vmem:[#allocation5 + $0x30] sm:$0xff] %v1651
        %1668 = vst [vmem:[#allocation5 + $0x38] sm:$0xff] %v1652
        %1669 = vst [vmem:[#allocation5 + $0x40] sm:$0xff] %v1653
        %1670 = vst [vmem:[#allocation5 + $0x48] sm:$0xff] %v1654
        %1671 = vst [vmem:[#allocation5 + $0x50] sm:$0xff] %v1655
        %1672 = vst [vmem:[#allocation5 + $0x58] sm:$0xff] %v1656
        %1673 = vst [vmem:[#allocation5 + $0x60] sm:$0xff] %v1657
        %1674 = vst [vmem:[#allocation5 + $0x68] sm:$0xff] %v1658
        %1675 = vst [vmem:[#allocation5 + $0x70] sm:$0xff] %v1659
        %1676 = vst [vmem:[#allocation5 + $0x78] sm:$0xff] %v1660
        %v1677 = vld [vmem:[%s749 + $0xc] sm:$0xff]
        %v1678 = vld [vmem:[%s749 + $0x14] sm:$0xff]
        %v1679 = vld [vmem:[%s749 + $0x44] sm:$0xff]
        %v1680 = vld [vmem:[%s749 + $0x4c] sm:$0xff]
        %v1681 = vld [vmem:[%s749 + $0x7c] sm:$0xff]
        %v1682 = vld [vmem:[%s749 + $0x84] sm:$0xff]
        %v1683 = vld [vmem:[%s749 + $0xb4] sm:$0xff]
        %v1684 = vld [vmem:[%s749 + $0xbc] sm:$0xff]
        %v1685 = vld [vmem:[%s749 + $0xec] sm:$0xff]
        %v1686 = vld [vmem:[%s749 + $0xf4] sm:$0xff]
        %v1687 = vld [vmem:[%s749 + $0x124] sm:$0xff]
        %v1688 = vld [vmem:[%s749 + $0x12c] sm:$0xff]
        %v1689 = vld [vmem:[%s749 + $0x15c] sm:$0xff]
        %v1690 = vld [vmem:[%s749 + $0x164] sm:$0xff]
        %v1691 = vld [vmem:[%s749 + $0x194] sm:$0xff]
        %v1692 = vld [vmem:[%s749 + $0x19c] sm:$0xff]
        %v1693 = vld [vmem:[#allocation5] sm:$0xff]
        %v1694 = vld [vmem:[#allocation5 + $0x8] sm:$0xff]
        %v1695 = vld [vmem:[#allocation5 + $0x10] sm:$0xff]
        %v1696 = vld [vmem:[#allocation5 + $0x18] sm:$0xff]
        %v1697 = vld [vmem:[#allocation5 + $0x20] sm:$0xff]
        %v1698 = vld [vmem:[#allocation5 + $0x28] sm:$0xff]
        %v1699 = vld [vmem:[#allocation5 + $0x30] sm:$0xff]
        %v1700 = vld [vmem:[#allocation5 + $0x38] sm:$0xff]
        %v1701 = vld [vmem:[#allocation5 + $0x40] sm:$0xff]
        %v1702 = vld [vmem:[#allocation5 + $0x48] sm:$0xff]
        %v1703 = vld [vmem:[#allocation5 + $0x50] sm:$0xff]
        %v1704 = vld [vmem:[#allocation5 + $0x58] sm:$0xff]
        %v1705 = vld [vmem:[#allocation5 + $0x60] sm:$0xff]
        %v1706 = vld [vmem:[#allocation5 + $0x68] sm:$0xff]
        %v1707 = vld [vmem:[#allocation5 + $0x70] sm:$0xff]
        %v1708 = vld [vmem:[#allocation5 + $0x78] sm:$0xff]
        %s1709 = scalar_lea.vmem [#allocation11], 384
        %v1710 = vld [vmem:[%s1709] sm:$0xff]
        %v1711 = vld [vmem:[%s1709 + $0x8] sm:$0xff]
        %v1712 = vld [vmem:[%s1709 + $0x10] sm:$0xff]
        %v1713 = vld [vmem:[%s1709 + $0x18] sm:$0xff]
        %v1714 = vld [vmem:[%s1709 + $0x20] sm:$0xff]
        %v1715 = vld [vmem:[%s1709 + $0x28] sm:$0xff]
        %v1716 = vld [vmem:[%s1709 + $0x30] sm:$0xff]
        %v1717 = vld [vmem:[%s1709 + $0x38] sm:$0xff]
        %v1718 = vld [vmem:[%s1709 + $0x40] sm:$0xff]
        %v1719 = vld [vmem:[%s1709 + $0x48] sm:$0xff]
        %v1720 = vld [vmem:[%s1709 + $0x50] sm:$0xff]
        %v1721 = vld [vmem:[%s1709 + $0x58] sm:$0xff]
        %v1722 = vld [vmem:[%s1709 + $0x60] sm:$0xff]
        %v1723 = vld [vmem:[%s1709 + $0x68] sm:$0xff]
        %v1724 = vld [vmem:[%s1709 + $0x70] sm:$0xff]
        %v1725 = vld [vmem:[%s1709 + $0x78] sm:$0xff]
        %1726 = vmatprep.subr.mxu0 0.0
        %1727 = vmatpush1.msra.mxu0 %v1710
        %1728 = vmatprep.subr.mxu0 0.0
        %1729 = vmatpush1.msra.mxu0 %v1711
        %1730 = vmatprep.subr.mxu0 0.0
        %1731 = vmatpush1.msra.mxu0 %v1712
        %1732 = vmatprep.subr.mxu0 0.0
        %1733 = vmatpush1.msra.mxu0 %v1713
        %1734 = vmatprep.subr.mxu0 0.0
        %1735 = vmatpush1.msra.mxu0 %v1714
        %1736 = vmatprep.subr.mxu0 0.0
        %1737 = vmatpush1.msra.mxu0 %v1715
        %1738 = vmatprep.subr.mxu0 0.0
        %1739 = vmatpush1.msra.mxu0 %v1716
        %1740 = vmatprep.subr.mxu0 0.0
        %1741 = vmatpush1.msra.mxu0 %v1717
        %1742 = vmatprep.subr.mxu0 0.0
        %1743 = vmatpush1.msra.mxu0 %v1718
        %1744 = vmatprep.subr.mxu0 0.0
        %1745 = vmatpush1.msra.mxu0 %v1719
        %1746 = vmatprep.subr.mxu0 0.0
        %1747 = vmatpush1.msra.mxu0 %v1720
        %1748 = vmatprep.subr.mxu0 0.0
        %1749 = vmatpush1.msra.mxu0 %v1721
        %1750 = vmatprep.subr.mxu0 0.0
        %1751 = vmatpush1.msra.mxu0 %v1722
        %1752 = vmatprep.subr.mxu0 0.0
        %1753 = vmatpush1.msra.mxu0 %v1723
        %1754 = vmatprep.subr.mxu0 0.0
        %1755 = vmatpush1.msra.mxu0 %v1724
        %1756 = vmatprep.subr.mxu0 0.0
        %1757 = vmatpush1.msra.mxu0 %v1725
        %1758 = vmatprep.subr.mxu0 0.0
        %1759 = vmatpush1.msra.mxu0 0.0
        %1760 = vmatprep.subr.mxu0 0.0
        %1761 = vmatpush1.msra.mxu0 0.0
        %1762 = vmatprep.subr.mxu0 0.0
        %1763 = vmatpush1.msra.mxu0 0.0
        %1764 = vmatprep.subr.mxu0 0.0
        %1765 = vmatpush1.msra.mxu0 0.0
        %1766 = vmatprep.subr.mxu0 0.0
        %1767 = vmatpush1.msra.mxu0 0.0
        %1768 = vmatprep.subr.mxu0 0.0
        %1769 = vmatpush1.msra.mxu0 0.0
        %1770 = vmatprep.subr.mxu0 0.0
        %1771 = vmatpush1.msra.mxu0 0.0
        %1772 = vmatprep.subr.mxu0 0.0
        %1773 = vmatpush1.msra.mxu0 0.0
        %1774 = vmatprep.subr.mxu0 0.0
        %1775 = vmatpush1.msra.mxu0 0.0
        %1776 = vmatprep.subr.mxu0 0.0
        %1777 = vmatpush1.msra.mxu0 0.0
        %1778 = vmatprep.subr.mxu0 0.0
        %1779 = vmatpush1.msra.mxu0 0.0
        %1780 = vmatprep.subr.mxu0 0.0
        %1781 = vmatpush1.msra.mxu0 0.0
        %1782 = vmatprep.subr.mxu0 0.0
        %1783 = vmatpush1.msra.mxu0 0.0
        %1784 = vmatprep.subr.mxu0 0.0
        %1785 = vmatpush1.msra.mxu0 0.0
        %1786 = vmatprep.subr.mxu0 0.0
        %1787 = vmatpush1.msra.mxu0 0.0
        %1788 = vmatprep.subr.mxu0 0.0
        %1789 = vmatpush1.msra.mxu0 0.0
        %1790 = vmatprep.mubr.f32.mxu0 0.0
        %1791 = vmatmul.mubr.f32.gmra.mrb[0].mxu0 %v1677
        %v1792 = vpop.f32.mrb[0].mxu0
        %v1793 = vadd.f32 0.0, %v1792
        %v1794 = vpop.f32.mrb[0].mxu0
        %1795 = vmatprep.mubr.f32.mxu0 0.0
        %1796 = vmatmul.mubr.f32.gmra.mrb[0].mxu0 %v1678
        %v1797 = vpop.f32.mrb[0].mxu0
        %v1798 = vadd.f32 0.0, %v1797
        %v1799 = vpop.f32.mrb[0].mxu0
        %1800 = vmatprep.mubr.f32.mxu0 0.0
        %1801 = vmatmul.mubr.f32.gmra.mrb[0].mxu0 %v1679
        %v1802 = vpop.f32.mrb[0].mxu0
        %v1803 = vadd.f32 0.0, %v1802
        %v1804 = vpop.f32.mrb[0].mxu0
        %1805 = vmatprep.mubr.f32.mxu0 0.0
        %1806 = vmatmul.mubr.f32.gmra.mrb[0].mxu0 %v1680
        %v1807 = vpop.f32.mrb[0].mxu0
        %v1808 = vadd.f32 0.0, %v1807
        %v1809 = vpop.f32.mrb[0].mxu0
        %1810 = vmatprep.mubr.f32.mxu0 0.0
        %1811 = vmatmul.mubr.f32.gmra.mrb[0].mxu0 %v1681
        %v1812 = vpop.f32.mrb[0].mxu0
        %v1813 = vadd.f32 0.0, %v1812
        %v1814 = vpop.f32.mrb[0].mxu0
        %1815 = vmatprep.mubr.f32.mxu0 0.0
        %1816 = vmatmul.mubr.f32.gmra.mrb[0].mxu0 %v1682
        %v1817 = vpop.f32.mrb[0].mxu0
        %v1818 = vadd.f32 0.0, %v1817
        %v1819 = vpop.f32.mrb[0].mxu0
        %1820 = vmatprep.mubr.f32.mxu0 0.0
        %1821 = vmatmul.mubr.f32.gmra.mrb[0].mxu0 %v1683
        %v1822 = vpop.f32.mrb[0].mxu0
        %v1823 = vadd.f32 0.0, %v1822
        %v1824 = vpop.f32.mrb[0].mxu0
        %1825 = vmatprep.mubr.f32.mxu0 0.0
        %1826 = vmatmul.mubr.f32.gmra.mrb[0].mxu0 %v1684
        %v1827 = vpop.f32.mrb[0].mxu0
        %v1828 = vadd.f32 0.0, %v1827
        %v1829 = vpop.f32.mrb[0].mxu0
        %1830 = vmatprep.mubr.f32.mxu0 0.0
        %1831 = vmatmul.mubr.f32.gmra.mrb[0].mxu0 %v1685
        %v1832 = vpop.f32.mrb[0].mxu0
        %v1833 = vadd.f32 0.0, %v1832
        %v1834 = vpop.f32.mrb[0].mxu0
        %1835 = vmatprep.mubr.f32.mxu0 0.0
        %1836 = vmatmul.mubr.f32.gmra.mrb[0].mxu0 %v1686
        %v1837 = vpop.f32.mrb[0].mxu0
        %v1838 = vadd.f32 0.0, %v1837
        %v1839 = vpop.f32.mrb[0].mxu0
        %1840 = vmatprep.mubr.f32.mxu0 0.0
        %1841 = vmatmul.mubr.f32.gmra.mrb[0].mxu0 %v1687
        %v1842 = vpop.f32.mrb[0].mxu0
        %v1843 = vadd.f32 0.0, %v1842
        %v1844 = vpop.f32.mrb[0].mxu0
        %1845 = vmatprep.mubr.f32.mxu0 0.0
        %1846 = vmatmul.mubr.f32.gmra.mrb[0].mxu0 %v1688
        %v1847 = vpop.f32.mrb[0].mxu0
        %v1848 = vadd.f32 0.0, %v1847
        %v1849 = vpop.f32.mrb[0].mxu0
        %1850 = vmatprep.mubr.f32.mxu0 0.0
        %1851 = vmatmul.mubr.f32.gmra.mrb[0].mxu0 %v1689
        %v1852 = vpop.f32.mrb[0].mxu0
        %v1853 = vadd.f32 0.0, %v1852
        %v1854 = vpop.f32.mrb[0].mxu0
        %1855 = vmatprep.mubr.f32.mxu0 0.0
        %1856 = vmatmul.mubr.f32.gmra.mrb[0].mxu0 %v1690
        %v1857 = vpop.f32.mrb[0].mxu0
        %v1858 = vadd.f32 0.0, %v1857
        %v1859 = vpop.f32.mrb[0].mxu0
        %1860 = vmatprep.mubr.f32.mxu0 0.0
        %1861 = vmatmul.mubr.f32.gmra.mrb[0].mxu0 %v1691
        %v1862 = vpop.f32.mrb[0].mxu0
        %v1863 = vadd.f32 0.0, %v1862
        %v1864 = vpop.f32.mrb[0].mxu0
        %1865 = vmatprep.mubr.f32.mxu0 0.0
        %1866 = vmatmul.mubr.f32.gmra.mrb[0].mxu0 %v1692
        %v1867 = vpop.f32.mrb[0].mxu0
        %v1868 = vadd.f32 0.0, %v1867
        %v1869 = vpop.f32.mrb[0].mxu0
        %1870 = vdwg.mxu0
        %v1871 = vadd.f32 %v1693, %v1793
        %v1872 = vadd.f32 %v1694, %v1798
        %v1873 = vadd.f32 %v1695, %v1803
        %v1874 = vadd.f32 %v1696, %v1808
        %v1875 = vadd.f32 %v1697, %v1813
        %v1876 = vadd.f32 %v1698, %v1818
        %v1877 = vadd.f32 %v1699, %v1823
        %v1878 = vadd.f32 %v1700, %v1828
        %v1879 = vadd.f32 %v1701, %v1833
        %v1880 = vadd.f32 %v1702, %v1838
        %v1881 = vadd.f32 %v1703, %v1843
        %v1882 = vadd.f32 %v1704, %v1848
        %v1883 = vadd.f32 %v1705, %v1853
        %v1884 = vadd.f32 %v1706, %v1858
        %v1885 = vadd.f32 %v1707, %v1863
        %v1886 = vadd.f32 %v1708, %v1868
        %1887 = vst [vmem:[#allocation5] sm:$0xff] %v1871
        %1888 = vst [vmem:[#allocation5 + $0x8] sm:$0xff] %v1872
        %1889 = vst [vmem:[#allocation5 + $0x10] sm:$0xff] %v1873
        %1890 = vst [vmem:[#allocation5 + $0x18] sm:$0xff] %v1874
        %1891 = vst [vmem:[#allocation5 + $0x20] sm:$0xff] %v1875
        %1892 = vst [vmem:[#allocation5 + $0x28] sm:$0xff] %v1876
        %1893 = vst [vmem:[#allocation5 + $0x30] sm:$0xff] %v1877
        %1894 = vst [vmem:[#allocation5 + $0x38] sm:$0xff] %v1878
        %1895 = vst [vmem:[#allocation5 + $0x40] sm:$0xff] %v1879
        %1896 = vst [vmem:[#allocation5 + $0x48] sm:$0xff] %v1880
        %1897 = vst [vmem:[#allocation5 + $0x50] sm:$0xff] %v1881
        %1898 = vst [vmem:[#allocation5 + $0x58] sm:$0xff] %v1882
        %1899 = vst [vmem:[#allocation5 + $0x60] sm:$0xff] %v1883
        %1900 = vst [vmem:[#allocation5 + $0x68] sm:$0xff] %v1884
        %1901 = vst [vmem:[#allocation5 + $0x70] sm:$0xff] %v1885
        %1902 = vst [vmem:[#allocation5 + $0x78] sm:$0xff] %v1886
        %v1903 = vld [vmem:[%s749 + $0x12] sm:$0xff]
        %v1904 = vld [vmem:[%s749 + $0x1a] sm:$0xff]
        %v1905 = vld [vmem:[%s749 + $0x4a] sm:$0xff]
        %v1906 = vld [vmem:[%s749 + $0x52] sm:$0xff]
        %v1907 = vld [vmem:[%s749 + $0x82] sm:$0xff]
        %v1908 = vld [vmem:[%s749 + $0x8a] sm:$0xff]
        %v1909 = vld [vmem:[%s749 + $0xba] sm:$0xff]
        %v1910 = vld [vmem:[%s749 + $0xc2] sm:$0xff]
        %v1911 = vld [vmem:[%s749 + $0xf2] sm:$0xff]
        %v1912 = vld [vmem:[%s749 + $0xfa] sm:$0xff]
        %v1913 = vld [vmem:[%s749 + $0x12a] sm:$0xff]
        %v1914 = vld [vmem:[%s749 + $0x132] sm:$0xff]
        %v1915 = vld [vmem:[%s749 + $0x162] sm:$0xff]
        %v1916 = vld [vmem:[%s749 + $0x16a] sm:$0xff]
        %v1917 = vld [vmem:[%s749 + $0x19a] sm:$0xff]
        %v1918 = vld [vmem:[%s749 + $0x1a2] sm:$0xff]
        %v1919 = vld [vmem:[#allocation5] sm:$0xff]
        %v1920 = vld [vmem:[#allocation5 + $0x8] sm:$0xff]
        %v1921 = vld [vmem:[#allocation5 + $0x10] sm:$0xff]
        %v1922 = vld [vmem:[#allocation5 + $0x18] sm:$0xff]
        %v1923 = vld [vmem:[#allocation5 + $0x20] sm:$0xff]
        %v1924 = vld [vmem:[#allocation5 + $0x28] sm:$0xff]
        %v1925 = vld [vmem:[#allocation5 + $0x30] sm:$0xff]
        %v1926 = vld [vmem:[#allocation5 + $0x38] sm:$0xff]
        %v1927 = vld [vmem:[#allocation5 + $0x40] sm:$0xff]
        %v1928 = vld [vmem:[#allocation5 + $0x48] sm:$0xff]
        %v1929 = vld [vmem:[#allocation5 + $0x50] sm:$0xff]
        %v1930 = vld [vmem:[#allocation5 + $0x58] sm:$0xff]
        %v1931 = vld [vmem:[#allocation5 + $0x60] sm:$0xff]
        %v1932 = vld [vmem:[#allocation5 + $0x68] sm:$0xff]
        %v1933 = vld [vmem:[#allocation5 + $0x70] sm:$0xff]
        %v1934 = vld [vmem:[#allocation5 + $0x78] sm:$0xff]
        %s1935 = scalar_lea.vmem [#allocation11], 512
        %v1936 = vld [vmem:[%s1935] sm:$0xff]
        %v1937 = vld [vmem:[%s1935 + $0x8] sm:$0xff]
        %v1938 = vld [vmem:[%s1935 + $0x10] sm:$0xff]
        %v1939 = vld [vmem:[%s1935 + $0x18] sm:$0xff]
        %v1940 = vld [vmem:[%s1935 + $0x20] sm:$0xff]
        %v1941 = vld [vmem:[%s1935 + $0x28] sm:$0xff]
        %v1942 = vld [vmem:[%s1935 + $0x30] sm:$0xff]
        %v1943 = vld [vmem:[%s1935 + $0x38] sm:$0xff]
        %v1944 = vld [vmem:[%s1935 + $0x40] sm:$0xff]
        %v1945 = vld [vmem:[%s1935 + $0x48] sm:$0xff]
        %v1946 = vld [vmem:[%s1935 + $0x50] sm:$0xff]
        %v1947 = vld [vmem:[%s1935 + $0x58] sm:$0xff]
        %v1948 = vld [vmem:[%s1935 + $0x60] sm:$0xff]
        %v1949 = vld [vmem:[%s1935 + $0x68] sm:$0xff]
        %v1950 = vld [vmem:[%s1935 + $0x70] sm:$0xff]
        %v1951 = vld [vmem:[%s1935 + $0x78] sm:$0xff]
        %1952 = vmatprep.subr.mxu0 0.0
        %1953 = vmatpush1.msra.mxu0 %v1936
        %1954 = vmatprep.subr.mxu0 0.0
        %1955 = vmatpush1.msra.mxu0 %v1937
        %1956 = vmatprep.subr.mxu0 0.0
        %1957 = vmatpush1.msra.mxu0 %v1938
        %1958 = vmatprep.subr.mxu0 0.0
        %1959 = vmatpush1.msra.mxu0 %v1939
        %1960 = vmatprep.subr.mxu0 0.0
        %1961 = vmatpush1.msra.mxu0 %v1940
        %1962 = vmatprep.subr.mxu0 0.0
        %1963 = vmatpush1.msra.mxu0 %v1941
        %1964 = vmatprep.subr.mxu0 0.0
        %1965 = vmatpush1.msra.mxu0 %v1942
        %1966 = vmatprep.subr.mxu0 0.0
        %1967 = vmatpush1.msra.mxu0 %v1943
        %1968 = vmatprep.subr.mxu0 0.0
        %1969 = vmatpush1.msra.mxu0 %v1944
        %1970 = vmatprep.subr.mxu0 0.0
        %1971 = vmatpush1.msra.mxu0 %v1945
        %1972 = vmatprep.subr.mxu0 0.0
        %1973 = vmatpush1.msra.mxu0 %v1946
        %1974 = vmatprep.subr.mxu0 0.0
        %1975 = vmatpush1.msra.mxu0 %v1947
        %1976 = vmatprep.subr.mxu0 0.0
        %1977 = vmatpush1.msra.mxu0 %v1948
        %1978 = vmatprep.subr.mxu0 0.0
        %1979 = vmatpush1.msra.mxu0 %v1949
        %1980 = vmatprep.subr.mxu0 0.0
        %1981 = vmatpush1.msra.mxu0 %v1950
        %1982 = vmatprep.subr.mxu0 0.0
        %1983 = vmatpush1.msra.mxu0 %v1951
        %1984 = vmatprep.subr.mxu0 0.0
        %1985 = vmatpush1.msra.mxu0 0.0
        %1986 = vmatprep.subr.mxu0 0.0
        %1987 = vmatpush1.msra.mxu0 0.0
        %1988 = vmatprep.subr.mxu0 0.0
        %1989 = vmatpush1.msra.mxu0 0.0
        %1990 = vmatprep.subr.mxu0 0.0
        %1991 = vmatpush1.msra.mxu0 0.0
        %1992 = vmatprep.subr.mxu0 0.0
        %1993 = vmatpush1.msra.mxu0 0.0
        %1994 = vmatprep.subr.mxu0 0.0
        %1995 = vmatpush1.msra.mxu0 0.0
        %1996 = vmatprep.subr.mxu0 0.0
        %1997 = vmatpush1.msra.mxu0 0.0
        %1998 = vmatprep.subr.mxu0 0.0
        %1999 = vmatpush1.msra.mxu0 0.0
        %2000 = vmatprep.subr.mxu0 0.0
        %2001 = vmatpush1.msra.mxu0 0.0
        %2002 = vmatprep.subr.mxu0 0.0
        %2003 = vmatpush1.msra.mxu0 0.0
        %2004 = vmatprep.subr.mxu0 0.0
        %2005 = vmatpush1.msra.mxu0 0.0
        %2006 = vmatprep.subr.mxu0 0.0
        %2007 = vmatpush1.msra.mxu0 0.0
        %2008 = vmatprep.subr.mxu0 0.0
        %2009 = vmatpush1.msra.mxu0 0.0
        %2010 = vmatprep.subr.mxu0 0.0
        %2011 = vmatpush1.msra.mxu0 0.0
        %2012 = vmatprep.subr.mxu0 0.0
        %2013 = vmatpush1.msra.mxu0 0.0
        %2014 = vmatprep.subr.mxu0 0.0
        %2015 = vmatpush1.msra.mxu0 0.0
        %2016 = vmatprep.mubr.f32.mxu0 0.0
        %2017 = vmatmul.mubr.f32.gmra.mrb[0].mxu0 %v1903
        %v2018 = vpop.f32.mrb[0].mxu0
        %v2019 = vadd.f32 0.0, %v2018
        %v2020 = vpop.f32.mrb[0].mxu0
        %2021 = vmatprep.mubr.f32.mxu0 0.0
        %2022 = vmatmul.mubr.f32.gmra.mrb[0].mxu0 %v1904
        %v2023 = vpop.f32.mrb[0].mxu0
        %v2024 = vadd.f32 0.0, %v2023
        %v2025 = vpop.f32.mrb[0].mxu0
        %2026 = vmatprep.mubr.f32.mxu0 0.0
        %2027 = vmatmul.mubr.f32.gmra.mrb[0].mxu0 %v1905
        %v2028 = vpop.f32.mrb[0].mxu0
        %v2029 = vadd.f32 0.0, %v2028
        %v2030 = vpop.f32.mrb[0].mxu0
        %2031 = vmatprep.mubr.f32.mxu0 0.0
        %2032 = vmatmul.mubr.f32.gmra.mrb[0].mxu0 %v1906
        %v2033 = vpop.f32.mrb[0].mxu0
        %v2034 = vadd.f32 0.0, %v2033
        %v2035 = vpop.f32.mrb[0].mxu0
        %2036 = vmatprep.mubr.f32.mxu0 0.0
        %2037 = vmatmul.mubr.f32.gmra.mrb[0].mxu0 %v1907
        %v2038 = vpop.f32.mrb[0].mxu0
        %v2039 = vadd.f32 0.0, %v2038
        %v2040 = vpop.f32.mrb[0].mxu0
        %2041 = vmatprep.mubr.f32.mxu0 0.0
        %2042 = vmatmul.mubr.f32.gmra.mrb[0].mxu0 %v1908
        %v2043 = vpop.f32.mrb[0].mxu0
        %v2044 = vadd.f32 0.0, %v2043
        %v2045 = vpop.f32.mrb[0].mxu0
        %2046 = vmatprep.mubr.f32.mxu0 0.0
        %2047 = vmatmul.mubr.f32.gmra.mrb[0].mxu0 %v1909
        %v2048 = vpop.f32.mrb[0].mxu0
        %v2049 = vadd.f32 0.0, %v2048
        %v2050 = vpop.f32.mrb[0].mxu0
        %2051 = vmatprep.mubr.f32.mxu0 0.0
        %2052 = vmatmul.mubr.f32.gmra.mrb[0].mxu0 %v1910
        %v2053 = vpop.f32.mrb[0].mxu0
        %v2054 = vadd.f32 0.0, %v2053
        %v2055 = vpop.f32.mrb[0].mxu0
        %2056 = vmatprep.mubr.f32.mxu0 0.0
        %2057 = vmatmul.mubr.f32.gmra.mrb[0].mxu0 %v1911
        %v2058 = vpop.f32.mrb[0].mxu0
        %v2059 = vadd.f32 0.0, %v2058
        %v2060 = vpop.f32.mrb[0].mxu0
        %2061 = vmatprep.mubr.f32.mxu0 0.0
        %2062 = vmatmul.mubr.f32.gmra.mrb[0].mxu0 %v1912
        %v2063 = vpop.f32.mrb[0].mxu0
        %v2064 = vadd.f32 0.0, %v2063
        %v2065 = vpop.f32.mrb[0].mxu0
        %2066 = vmatprep.mubr.f32.mxu0 0.0
        %2067 = vmatmul.mubr.f32.gmra.mrb[0].mxu0 %v1913
        %v2068 = vpop.f32.mrb[0].mxu0
        %v2069 = vadd.f32 0.0, %v2068
        %v2070 = vpop.f32.mrb[0].mxu0
        %2071 = vmatprep.mubr.f32.mxu0 0.0
        %2072 = vmatmul.mubr.f32.gmra.mrb[0].mxu0 %v1914
        %v2073 = vpop.f32.mrb[0].mxu0
        %v2074 = vadd.f32 0.0, %v2073
        %v2075 = vpop.f32.mrb[0].mxu0
        %2076 = vmatprep.mubr.f32.mxu0 0.0
        %2077 = vmatmul.mubr.f32.gmra.mrb[0].mxu0 %v1915
        %v2078 = vpop.f32.mrb[0].mxu0
        %v2079 = vadd.f32 0.0, %v2078
        %v2080 = vpop.f32.mrb[0].mxu0
        %2081 = vmatprep.mubr.f32.mxu0 0.0
        %2082 = vmatmul.mubr.f32.gmra.mrb[0].mxu0 %v1916
        %v2083 = vpop.f32.mrb[0].mxu0
        %v2084 = vadd.f32 0.0, %v2083
        %v2085 = vpop.f32.mrb[0].mxu0
        %2086 = vmatprep.mubr.f32.mxu0 0.0
        %2087 = vmatmul.mubr.f32.gmra.mrb[0].mxu0 %v1917
        %v2088 = vpop.f32.mrb[0].mxu0
        %v2089 = vadd.f32 0.0, %v2088
        %v2090 = vpop.f32.mrb[0].mxu0
        %2091 = vmatprep.mubr.f32.mxu0 0.0
        %2092 = vmatmul.mubr.f32.gmra.mrb[0].mxu0 %v1918
        %v2093 = vpop.f32.mrb[0].mxu0
        %v2094 = vadd.f32 0.0, %v2093
        %v2095 = vpop.f32.mrb[0].mxu0
        %2096 = vdwg.mxu0
        %v2097 = vadd.f32 %v1919, %v2019
        %v2098 = vadd.f32 %v1920, %v2024
        %v2099 = vadd.f32 %v1921, %v2029
        %v2100 = vadd.f32 %v1922, %v2034
        %v2101 = vadd.f32 %v1923, %v2039
        %v2102 = vadd.f32 %v1924, %v2044
        %v2103 = vadd.f32 %v1925, %v2049
        %v2104 = vadd.f32 %v1926, %v2054
        %v2105 = vadd.f32 %v1927, %v2059
        %v2106 = vadd.f32 %v1928, %v2064
        %v2107 = vadd.f32 %v1929, %v2069
        %v2108 = vadd.f32 %v1930, %v2074
        %v2109 = vadd.f32 %v1931, %v2079
        %v2110 = vadd.f32 %v1932, %v2084
        %v2111 = vadd.f32 %v1933, %v2089
        %v2112 = vadd.f32 %v1934, %v2094
        %2113 = vst [vmem:[#allocation5] sm:$0xff] %v2097
        %2114 = vst [vmem:[#allocation5 + $0x8] sm:$0xff] %v2098
        %2115 = vst [vmem:[#allocation5 + $0x10] sm:$0xff] %v2099
        %2116 = vst [vmem:[#allocation5 + $0x18] sm:$0xff] %v2100
        %2117 = vst [vmem:[#allocation5 + $0x20] sm:$0xff] %v2101
        %2118 = vst [vmem:[#allocation5 + $0x28] sm:$0xff] %v2102
        %2119 = vst [vmem:[#allocation5 + $0x30] sm:$0xff] %v2103
        %2120 = vst [vmem:[#allocation5 + $0x38] sm:$0xff] %v2104
        %2121 = vst [vmem:[#allocation5 + $0x40] sm:$0xff] %v2105
        %2122 = vst [vmem:[#allocation5 + $0x48] sm:$0xff] %v2106
        %2123 = vst [vmem:[#allocation5 + $0x50] sm:$0xff] %v2107
        %2124 = vst [vmem:[#allocation5 + $0x58] sm:$0xff] %v2108
        %2125 = vst [vmem:[#allocation5 + $0x60] sm:$0xff] %v2109
        %2126 = vst [vmem:[#allocation5 + $0x68] sm:$0xff] %v2110
        %2127 = vst [vmem:[#allocation5 + $0x70] sm:$0xff] %v2111
        %2128 = vst [vmem:[#allocation5 + $0x78] sm:$0xff] %v2112
        %v2129 = vld [vmem:[%s749 + $0x18] sm:$0xff]
        %v2130 = vld [vmem:[%s749 + $0x20] sm:$0xff]
        %v2131 = vld [vmem:[%s749 + $0x50] sm:$0xff]
        %v2132 = vld [vmem:[%s749 + $0x58] sm:$0xff]
        %v2133 = vld [vmem:[%s749 + $0x88] sm:$0xff]
        %v2134 = vld [vmem:[%s749 + $0x90] sm:$0xff]
        %v2135 = vld [vmem:[%s749 + $0xc0] sm:$0xff]
        %v2136 = vld [vmem:[%s749 + $0xc8] sm:$0xff]
        %v2137 = vld [vmem:[%s749 + $0xf8] sm:$0xff]
        %v2138 = vld [vmem:[%s749 + $0x100] sm:$0xff]
        %v2139 = vld [vmem:[%s749 + $0x130] sm:$0xff]
        %v2140 = vld [vmem:[%s749 + $0x138] sm:$0xff]
        %v2141 = vld [vmem:[%s749 + $0x168] sm:$0xff]
        %v2142 = vld [vmem:[%s749 + $0x170] sm:$0xff]
        %v2143 = vld [vmem:[%s749 + $0x1a0] sm:$0xff]
        %v2144 = vld [vmem:[%s749 + $0x1a8] sm:$0xff]
        %v2145 = vld [vmem:[#allocation5] sm:$0xff]
        %v2146 = vld [vmem:[#allocation5 + $0x8] sm:$0xff]
        %v2147 = vld [vmem:[#allocation5 + $0x10] sm:$0xff]
        %v2148 = vld [vmem:[#allocation5 + $0x18] sm:$0xff]
        %v2149 = vld [vmem:[#allocation5 + $0x20] sm:$0xff]
        %v2150 = vld [vmem:[#allocation5 + $0x28] sm:$0xff]
        %v2151 = vld [vmem:[#allocation5 + $0x30] sm:$0xff]
        %v2152 = vld [vmem:[#allocation5 + $0x38] sm:$0xff]
        %v2153 = vld [vmem:[#allocation5 + $0x40] sm:$0xff]
        %v2154 = vld [vmem:[#allocation5 + $0x48] sm:$0xff]
        %v2155 = vld [vmem:[#allocation5 + $0x50] sm:$0xff]
        %v2156 = vld [vmem:[#allocation5 + $0x58] sm:$0xff]
        %v2157 = vld [vmem:[#allocation5 + $0x60] sm:$0xff]
        %v2158 = vld [vmem:[#allocation5 + $0x68] sm:$0xff]
        %v2159 = vld [vmem:[#allocation5 + $0x70] sm:$0xff]
        %v2160 = vld [vmem:[#allocation5 + $0x78] sm:$0xff]
        %s2161 = scalar_lea.vmem [#allocation11], 640
        %v2162 = vld [vmem:[%s2161] sm:$0xff]
        %v2163 = vld [vmem:[%s2161 + $0x8] sm:$0xff]
        %v2164 = vld [vmem:[%s2161 + $0x10] sm:$0xff]
        %v2165 = vld [vmem:[%s2161 + $0x18] sm:$0xff]
        %v2166 = vld [vmem:[%s2161 + $0x20] sm:$0xff]
        %v2167 = vld [vmem:[%s2161 + $0x28] sm:$0xff]
        %v2168 = vld [vmem:[%s2161 + $0x30] sm:$0xff]
        %v2169 = vld [vmem:[%s2161 + $0x38] sm:$0xff]
        %v2170 = vld [vmem:[%s2161 + $0x40] sm:$0xff]
        %v2171 = vld [vmem:[%s2161 + $0x48] sm:$0xff]
        %v2172 = vld [vmem:[%s2161 + $0x50] sm:$0xff]
        %v2173 = vld [vmem:[%s2161 + $0x58] sm:$0xff]
        %v2174 = vld [vmem:[%s2161 + $0x60] sm:$0xff]
        %v2175 = vld [vmem:[%s2161 + $0x68] sm:$0xff]
        %v2176 = vld [vmem:[%s2161 + $0x70] sm:$0xff]
        %v2177 = vld [vmem:[%s2161 + $0x78] sm:$0xff]
        %2178 = vmatprep.subr.mxu0 0.0
        %2179 = vmatpush1.msra.mxu0 %v2162
        %2180 = vmatprep.subr.mxu0 0.0
        %2181 = vmatpush1.msra.mxu0 %v2163
        %2182 = vmatprep.subr.mxu0 0.0
        %2183 = vmatpush1.msra.mxu0 %v2164
        %2184 = vmatprep.subr.mxu0 0.0
        %2185 = vmatpush1.msra.mxu0 %v2165
        %2186 = vmatprep.subr.mxu0 0.0
        %2187 = vmatpush1.msra.mxu0 %v2166
        %2188 = vmatprep.subr.mxu0 0.0
        %2189 = vmatpush1.msra.mxu0 %v2167
        %2190 = vmatprep.subr.mxu0 0.0
        %2191 = vmatpush1.msra.mxu0 %v2168
        %2192 = vmatprep.subr.mxu0 0.0
        %2193 = vmatpush1.msra.mxu0 %v2169
        %2194 = vmatprep.subr.mxu0 0.0
        %2195 = vmatpush1.msra.mxu0 %v2170
        %2196 = vmatprep.subr.mxu0 0.0
        %2197 = vmatpush1.msra.mxu0 %v2171
        %2198 = vmatprep.subr.mxu0 0.0
        %2199 = vmatpush1.msra.mxu0 %v2172
        %2200 = vmatprep.subr.mxu0 0.0
        %2201 = vmatpush1.msra.mxu0 %v2173
        %2202 = vmatprep.subr.mxu0 0.0
        %2203 = vmatpush1.msra.mxu0 %v2174
        %2204 = vmatprep.subr.mxu0 0.0
        %2205 = vmatpush1.msra.mxu0 %v2175
        %2206 = vmatprep.subr.mxu0 0.0
        %2207 = vmatpush1.msra.mxu0 %v2176
        %2208 = vmatprep.subr.mxu0 0.0
        %2209 = vmatpush1.msra.mxu0 %v2177
        %2210 = vmatprep.subr.mxu0 0.0
        %2211 = vmatpush1.msra.mxu0 0.0
        %2212 = vmatprep.subr.mxu0 0.0
        %2213 = vmatpush1.msra.mxu0 0.0
        %2214 = vmatprep.subr.mxu0 0.0
        %2215 = vmatpush1.msra.mxu0 0.0
        %2216 = vmatprep.subr.mxu0 0.0
        %2217 = vmatpush1.msra.mxu0 0.0
        %2218 = vmatprep.subr.mxu0 0.0
        %2219 = vmatpush1.msra.mxu0 0.0
        %2220 = vmatprep.subr.mxu0 0.0
        %2221 = vmatpush1.msra.mxu0 0.0
        %2222 = vmatprep.subr.mxu0 0.0
        %2223 = vmatpush1.msra.mxu0 0.0
        %2224 = vmatprep.subr.mxu0 0.0
        %2225 = vmatpush1.msra.mxu0 0.0
        %2226 = vmatprep.subr.mxu0 0.0
        %2227 = vmatpush1.msra.mxu0 0.0
        %2228 = vmatprep.subr.mxu0 0.0
        %2229 = vmatpush1.msra.mxu0 0.0
        %2230 = vmatprep.subr.mxu0 0.0
        %2231 = vmatpush1.msra.mxu0 0.0
        %2232 = vmatprep.subr.mxu0 0.0
        %2233 = vmatpush1.msra.mxu0 0.0
        %2234 = vmatprep.subr.mxu0 0.0
        %2235 = vmatpush1.msra.mxu0 0.0
        %2236 = vmatprep.subr.mxu0 0.0
        %2237 = vmatpush1.msra.mxu0 0.0
        %2238 = vmatprep.subr.mxu0 0.0
        %2239 = vmatpush1.msra.mxu0 0.0
        %2240 = vmatprep.subr.mxu0 0.0
        %2241 = vmatpush1.msra.mxu0 0.0
        %2242 = vmatprep.mubr.f32.mxu0 0.0
        %2243 = vmatmul.mubr.f32.gmra.mrb[0].mxu0 %v2129
        %v2244 = vpop.f32.mrb[0].mxu0
        %v2245 = vadd.f32 0.0, %v2244
        %v2246 = vpop.f32.mrb[0].mxu0
        %2247 = vmatprep.mubr.f32.mxu0 0.0
        %2248 = vmatmul.mubr.f32.gmra.mrb[0].mxu0 %v2130
        %v2249 = vpop.f32.mrb[0].mxu0
        %v2250 = vadd.f32 0.0, %v2249
        %v2251 = vpop.f32.mrb[0].mxu0
        %2252 = vmatprep.mubr.f32.mxu0 0.0
        %2253 = vmatmul.mubr.f32.gmra.mrb[0].mxu0 %v2131
        %v2254 = vpop.f32.mrb[0].mxu0
        %v2255 = vadd.f32 0.0, %v2254
        %v2256 = vpop.f32.mrb[0].mxu0
        %2257 = vmatprep.mubr.f32.mxu0 0.0
        %2258 = vmatmul.mubr.f32.gmra.mrb[0].mxu0 %v2132
        %v2259 = vpop.f32.mrb[0].mxu0
        %v2260 = vadd.f32 0.0, %v2259
        %v2261 = vpop.f32.mrb[0].mxu0
        %2262 = vmatprep.mubr.f32.mxu0 0.0
        %2263 = vmatmul.mubr.f32.gmra.mrb[0].mxu0 %v2133
        %v2264 = vpop.f32.mrb[0].mxu0
        %v2265 = vadd.f32 0.0, %v2264
        %v2266 = vpop.f32.mrb[0].mxu0
        %2267 = vmatprep.mubr.f32.mxu0 0.0
        %2268 = vmatmul.mubr.f32.gmra.mrb[0].mxu0 %v2134
        %v2269 = vpop.f32.mrb[0].mxu0
        %v2270 = vadd.f32 0.0, %v2269
        %v2271 = vpop.f32.mrb[0].mxu0
        %2272 = vmatprep.mubr.f32.mxu0 0.0
        %2273 = vmatmul.mubr.f32.gmra.mrb[0].mxu0 %v2135
        %v2274 = vpop.f32.mrb[0].mxu0
        %v2275 = vadd.f32 0.0, %v2274
        %v2276 = vpop.f32.mrb[0].mxu0
        %2277 = vmatprep.mubr.f32.mxu0 0.0
        %2278 = vmatmul.mubr.f32.gmra.mrb[0].mxu0 %v2136
        %v2279 = vpop.f32.mrb[0].mxu0
        %v2280 = vadd.f32 0.0, %v2279
        %v2281 = vpop.f32.mrb[0].mxu0
        %2282 = vmatprep.mubr.f32.mxu0 0.0
        %2283 = vmatmul.mubr.f32.gmra.mrb[0].mxu0 %v2137
        %v2284 = vpop.f32.mrb[0].mxu0
        %v2285 = vadd.f32 0.0, %v2284
        %v2286 = vpop.f32.mrb[0].mxu0
        %2287 = vmatprep.mubr.f32.mxu0 0.0
        %2288 = vmatmul.mubr.f32.gmra.mrb[0].mxu0 %v2138
        %v2289 = vpop.f32.mrb[0].mxu0
        %v2290 = vadd.f32 0.0, %v2289
        %v2291 = vpop.f32.mrb[0].mxu0
        %2292 = vmatprep.mubr.f32.mxu0 0.0
        %2293 = vmatmul.mubr.f32.gmra.mrb[0].mxu0 %v2139
        %v2294 = vpop.f32.mrb[0].mxu0
        %v2295 = vadd.f32 0.0, %v2294
        %v2296 = vpop.f32.mrb[0].mxu0
        %2297 = vmatprep.mubr.f32.mxu0 0.0
        %2298 = vmatmul.mubr.f32.gmra.mrb[0].mxu0 %v2140
        %v2299 = vpop.f32.mrb[0].mxu0
        %v2300 = vadd.f32 0.0, %v2299
        %v2301 = vpop.f32.mrb[0].mxu0
        %2302 = vmatprep.mubr.f32.mxu0 0.0
        %2303 = vmatmul.mubr.f32.gmra.mrb[0].mxu0 %v2141
        %v2304 = vpop.f32.mrb[0].mxu0
        %v2305 = vadd.f32 0.0, %v2304
        %v2306 = vpop.f32.mrb[0].mxu0
        %2307 = vmatprep.mubr.f32.mxu0 0.0
        %2308 = vmatmul.mubr.f32.gmra.mrb[0].mxu0 %v2142
        %v2309 = vpop.f32.mrb[0].mxu0
        %v2310 = vadd.f32 0.0, %v2309
        %v2311 = vpop.f32.mrb[0].mxu0
        %2312 = vmatprep.mubr.f32.mxu0 0.0
        %2313 = vmatmul.mubr.f32.gmra.mrb[0].mxu0 %v2143
        %v2314 = vpop.f32.mrb[0].mxu0
        %v2315 = vadd.f32 0.0, %v2314
        %v2316 = vpop.f32.mrb[0].mxu0
        %2317 = vmatprep.mubr.f32.mxu0 0.0
        %2318 = vmatmul.mubr.f32.gmra.mrb[0].mxu0 %v2144
        %v2319 = vpop.f32.mrb[0].mxu0
        %v2320 = vadd.f32 0.0, %v2319
        %v2321 = vpop.f32.mrb[0].mxu0
        %2322 = vdwg.mxu0
        %v2323 = vadd.f32 %v2145, %v2245
        %v2324 = vadd.f32 %v2146, %v2250
        %v2325 = vadd.f32 %v2147, %v2255
        %v2326 = vadd.f32 %v2148, %v2260
        %v2327 = vadd.f32 %v2149, %v2265
        %v2328 = vadd.f32 %v2150, %v2270
        %v2329 = vadd.f32 %v2151, %v2275
        %v2330 = vadd.f32 %v2152, %v2280
        %v2331 = vadd.f32 %v2153, %v2285
        %v2332 = vadd.f32 %v2154, %v2290
        %v2333 = vadd.f32 %v2155, %v2295
        %v2334 = vadd.f32 %v2156, %v2300
        %v2335 = vadd.f32 %v2157, %v2305
        %v2336 = vadd.f32 %v2158, %v2310
        %v2337 = vadd.f32 %v2159, %v2315
        %v2338 = vadd.f32 %v2160, %v2320
        %2339 = vst [vmem:[#allocation5] sm:$0xff] %v2323
        %2340 = vst [vmem:[#allocation5 + $0x8] sm:$0xff] %v2324
        %2341 = vst [vmem:[#allocation5 + $0x10] sm:$0xff] %v2325
        %2342 = vst [vmem:[#allocation5 + $0x18] sm:$0xff] %v2326
        %2343 = vst [vmem:[#allocation5 + $0x20] sm:$0xff] %v2327
        %2344 = vst [vmem:[#allocation5 + $0x28] sm:$0xff] %v2328
        %2345 = vst [vmem:[#allocation5 + $0x30] sm:$0xff] %v2329
        %2346 = vst [vmem:[#allocation5 + $0x38] sm:$0xff] %v2330
        %2347 = vst [vmem:[#allocation5 + $0x40] sm:$0xff] %v2331
        %2348 = vst [vmem:[#allocation5 + $0x48] sm:$0xff] %v2332
        %2349 = vst [vmem:[#allocation5 + $0x50] sm:$0xff] %v2333
        %2350 = vst [vmem:[#allocation5 + $0x58] sm:$0xff] %v2334
        %2351 = vst [vmem:[#allocation5 + $0x60] sm:$0xff] %v2335
        %2352 = vst [vmem:[#allocation5 + $0x68] sm:$0xff] %v2336
        %2353 = vst [vmem:[#allocation5 + $0x70] sm:$0xff] %v2337
        %2354 = vst [vmem:[#allocation5 + $0x78] sm:$0xff] %v2338
        %s2355 = sadd.s32 %s714, 24
        %s2356 = smul.u32 %s2355, 56
        %s2357 = scalar_lea.vmem [#allocation2], %s2356
        %v2358 = vld [vmem:[%s2357 + $0xc] sm:$0xff]
        %v2359 = vld [vmem:[%s2357 + $0x14] sm:$0xff]
        %v2360 = vld [vmem:[%s2357 + $0x44] sm:$0xff]
        %v2361 = vld [vmem:[%s2357 + $0x4c] sm:$0xff]
        %v2362 = vld [vmem:[%s2357 + $0x7c] sm:$0xff]
        %v2363 = vld [vmem:[%s2357 + $0x84] sm:$0xff]
        %v2364 = vld [vmem:[%s2357 + $0xb4] sm:$0xff]
        %v2365 = vld [vmem:[%s2357 + $0xbc] sm:$0xff]
        %v2366 = vld [vmem:[%s2357 + $0xec] sm:$0xff]
        %v2367 = vld [vmem:[%s2357 + $0xf4] sm:$0xff]
        %v2368 = vld [vmem:[%s2357 + $0x124] sm:$0xff]
        %v2369 = vld [vmem:[%s2357 + $0x12c] sm:$0xff]
        %v2370 = vld [vmem:[%s2357 + $0x15c] sm:$0xff]
        %v2371 = vld [vmem:[%s2357 + $0x164] sm:$0xff]
        %v2372 = vld [vmem:[%s2357 + $0x194] sm:$0xff]
        %v2373 = vld [vmem:[%s2357 + $0x19c] sm:$0xff]
        %v2374 = vld [vmem:[#allocation5] sm:$0xff]
        %v2375 = vld [vmem:[#allocation5 + $0x8] sm:$0xff]
        %v2376 = vld [vmem:[#allocation5 + $0x10] sm:$0xff]
        %v2377 = vld [vmem:[#allocation5 + $0x18] sm:$0xff]
        %v2378 = vld [vmem:[#allocation5 + $0x20] sm:$0xff]
        %v2379 = vld [vmem:[#allocation5 + $0x28] sm:$0xff]
        %v2380 = vld [vmem:[#allocation5 + $0x30] sm:$0xff]
        %v2381 = vld [vmem:[#allocation5 + $0x38] sm:$0xff]
        %v2382 = vld [vmem:[#allocation5 + $0x40] sm:$0xff]
        %v2383 = vld [vmem:[#allocation5 + $0x48] sm:$0xff]
        %v2384 = vld [vmem:[#allocation5 + $0x50] sm:$0xff]
        %v2385 = vld [vmem:[#allocation5 + $0x58] sm:$0xff]
        %v2386 = vld [vmem:[#allocation5 + $0x60] sm:$0xff]
        %v2387 = vld [vmem:[#allocation5 + $0x68] sm:$0xff]
        %v2388 = vld [vmem:[#allocation5 + $0x70] sm:$0xff]
        %v2389 = vld [vmem:[#allocation5 + $0x78] sm:$0xff]
        %s2390 = scalar_lea.vmem [#allocation11], 768
        %v2391 = vld [vmem:[%s2390] sm:$0xff]
        %v2392 = vld [vmem:[%s2390 + $0x8] sm:$0xff]
        %v2393 = vld [vmem:[%s2390 + $0x10] sm:$0xff]
        %v2394 = vld [vmem:[%s2390 + $0x18] sm:$0xff]
        %v2395 = vld [vmem:[%s2390 + $0x20] sm:$0xff]
        %v2396 = vld [vmem:[%s2390 + $0x28] sm:$0xff]
        %v2397 = vld [vmem:[%s2390 + $0x30] sm:$0xff]
        %v2398 = vld [vmem:[%s2390 + $0x38] sm:$0xff]
        %v2399 = vld [vmem:[%s2390 + $0x40] sm:$0xff]
        %v2400 = vld [vmem:[%s2390 + $0x48] sm:$0xff]
        %v2401 = vld [vmem:[%s2390 + $0x50] sm:$0xff]
        %v2402 = vld [vmem:[%s2390 + $0x58] sm:$0xff]
        %v2403 = vld [vmem:[%s2390 + $0x60] sm:$0xff]
        %v2404 = vld [vmem:[%s2390 + $0x68] sm:$0xff]
        %v2405 = vld [vmem:[%s2390 + $0x70] sm:$0xff]
        %v2406 = vld [vmem:[%s2390 + $0x78] sm:$0xff]
        %2407 = vmatprep.subr.mxu0 0.0
        %2408 = vmatpush1.msra.mxu0 %v2391
        %2409 = vmatprep.subr.mxu0 0.0
        %2410 = vmatpush1.msra.mxu0 %v2392
        %2411 = vmatprep.subr.mxu0 0.0
        %2412 = vmatpush1.msra.mxu0 %v2393
        %2413 = vmatprep.subr.mxu0 0.0
        %2414 = vmatpush1.msra.mxu0 %v2394
        %2415 = vmatprep.subr.mxu0 0.0
        %2416 = vmatpush1.msra.mxu0 %v2395
        %2417 = vmatprep.subr.mxu0 0.0
        %2418 = vmatpush1.msra.mxu0 %v2396
        %2419 = vmatprep.subr.mxu0 0.0
        %2420 = vmatpush1.msra.mxu0 %v2397
        %2421 = vmatprep.subr.mxu0 0.0
        %2422 = vmatpush1.msra.mxu0 %v2398
        %2423 = vmatprep.subr.mxu0 0.0
        %2424 = vmatpush1.msra.mxu0 %v2399
        %2425 = vmatprep.subr.mxu0 0.0
        %2426 = vmatpush1.msra.mxu0 %v2400
        %2427 = vmatprep.subr.mxu0 0.0
        %2428 = vmatpush1.msra.mxu0 %v2401
        %2429 = vmatprep.subr.mxu0 0.0
        %2430 = vmatpush1.msra.mxu0 %v2402
        %2431 = vmatprep.subr.mxu0 0.0
        %2432 = vmatpush1.msra.mxu0 %v2403
        %2433 = vmatprep.subr.mxu0 0.0
        %2434 = vmatpush1.msra.mxu0 %v2404
        %2435 = vmatprep.subr.mxu0 0.0
        %2436 = vmatpush1.msra.mxu0 %v2405
        %2437 = vmatprep.subr.mxu0 0.0
        %2438 = vmatpush1.msra.mxu0 %v2406
        %2439 = vmatprep.subr.mxu0 0.0
        %2440 = vmatpush1.msra.mxu0 0.0
        %2441 = vmatprep.subr.mxu0 0.0
        %2442 = vmatpush1.msra.mxu0 0.0
        %2443 = vmatprep.subr.mxu0 0.0
        %2444 = vmatpush1.msra.mxu0 0.0
        %2445 = vmatprep.subr.mxu0 0.0
        %2446 = vmatpush1.msra.mxu0 0.0
        %2447 = vmatprep.subr.mxu0 0.0
        %2448 = vmatpush1.msra.mxu0 0.0
        %2449 = vmatprep.subr.mxu0 0.0
        %2450 = vmatpush1.msra.mxu0 0.0
        %2451 = vmatprep.subr.mxu0 0.0
        %2452 = vmatpush1.msra.mxu0 0.0
        %2453 = vmatprep.subr.mxu0 0.0
        %2454 = vmatpush1.msra.mxu0 0.0
        %2455 = vmatprep.subr.mxu0 0.0
        %2456 = vmatpush1.msra.mxu0 0.0
        %2457 = vmatprep.subr.mxu0 0.0
        %2458 = vmatpush1.msra.mxu0 0.0
        %2459 = vmatprep.subr.mxu0 0.0
        %2460 = vmatpush1.msra.mxu0 0.0
        %2461 = vmatprep.subr.mxu0 0.0
        %2462 = vmatpush1.msra.mxu0 0.0
        %2463 = vmatprep.subr.mxu0 0.0
        %2464 = vmatpush1.msra.mxu0 0.0
        %2465 = vmatprep.subr.mxu0 0.0
        %2466 = vmatpush1.msra.mxu0 0.0
        %2467 = vmatprep.subr.mxu0 0.0
        %2468 = vmatpush1.msra.mxu0 0.0
        %2469 = vmatprep.subr.mxu0 0.0
        %2470 = vmatpush1.msra.mxu0 0.0
        %2471 = vmatprep.mubr.f32.mxu0 0.0
        %2472 = vmatmul.mubr.f32.gmra.mrb[0].mxu0 %v2358
        %v2473 = vpop.f32.mrb[0].mxu0
        %v2474 = vadd.f32 0.0, %v2473
        %v2475 = vpop.f32.mrb[0].mxu0
        %2476 = vmatprep.mubr.f32.mxu0 0.0
        %2477 = vmatmul.mubr.f32.gmra.mrb[0].mxu0 %v2359
        %v2478 = vpop.f32.mrb[0].mxu0
        %v2479 = vadd.f32 0.0, %v2478
        %v2480 = vpop.f32.mrb[0].mxu0
        %2481 = vmatprep.mubr.f32.mxu0 0.0
        %2482 = vmatmul.mubr.f32.gmra.mrb[0].mxu0 %v2360
        %v2483 = vpop.f32.mrb[0].mxu0
        %v2484 = vadd.f32 0.0, %v2483
        %v2485 = vpop.f32.mrb[0].mxu0
        %2486 = vmatprep.mubr.f32.mxu0 0.0
        %2487 = vmatmul.mubr.f32.gmra.mrb[0].mxu0 %v2361
        %v2488 = vpop.f32.mrb[0].mxu0
        %v2489 = vadd.f32 0.0, %v2488
        %v2490 = vpop.f32.mrb[0].mxu0
        %2491 = vmatprep.mubr.f32.mxu0 0.0
        %2492 = vmatmul.mubr.f32.gmra.mrb[0].mxu0 %v2362
        %v2493 = vpop.f32.mrb[0].mxu0
        %v2494 = vadd.f32 0.0, %v2493
        %v2495 = vpop.f32.mrb[0].mxu0
        %2496 = vmatprep.mubr.f32.mxu0 0.0
        %2497 = vmatmul.mubr.f32.gmra.mrb[0].mxu0 %v2363
        %v2498 = vpop.f32.mrb[0].mxu0
        %v2499 = vadd.f32 0.0, %v2498
        %v2500 = vpop.f32.mrb[0].mxu0
        %2501 = vmatprep.mubr.f32.mxu0 0.0
        %2502 = vmatmul.mubr.f32.gmra.mrb[0].mxu0 %v2364
        %v2503 = vpop.f32.mrb[0].mxu0
        %v2504 = vadd.f32 0.0, %v2503
        %v2505 = vpop.f32.mrb[0].mxu0
        %2506 = vmatprep.mubr.f32.mxu0 0.0
        %2507 = vmatmul.mubr.f32.gmra.mrb[0].mxu0 %v2365
        %v2508 = vpop.f32.mrb[0].mxu0
        %v2509 = vadd.f32 0.0, %v2508
        %v2510 = vpop.f32.mrb[0].mxu0
        %2511 = vmatprep.mubr.f32.mxu0 0.0
        %2512 = vmatmul.mubr.f32.gmra.mrb[0].mxu0 %v2366
        %v2513 = vpop.f32.mrb[0].mxu0
        %v2514 = vadd.f32 0.0, %v2513
        %v2515 = vpop.f32.mrb[0].mxu0
        %2516 = vmatprep.mubr.f32.mxu0 0.0
        %2517 = vmatmul.mubr.f32.gmra.mrb[0].mxu0 %v2367
        %v2518 = vpop.f32.mrb[0].mxu0
        %v2519 = vadd.f32 0.0, %v2518
        %v2520 = vpop.f32.mrb[0].mxu0
        %2521 = vmatprep.mubr.f32.mxu0 0.0
        %2522 = vmatmul.mubr.f32.gmra.mrb[0].mxu0 %v2368
        %v2523 = vpop.f32.mrb[0].mxu0
        %v2524 = vadd.f32 0.0, %v2523
        %v2525 = vpop.f32.mrb[0].mxu0
        %2526 = vmatprep.mubr.f32.mxu0 0.0
        %2527 = vmatmul.mubr.f32.gmra.mrb[0].mxu0 %v2369
        %v2528 = vpop.f32.mrb[0].mxu0
        %v2529 = vadd.f32 0.0, %v2528
        %v2530 = vpop.f32.mrb[0].mxu0
        %2531 = vmatprep.mubr.f32.mxu0 0.0
        %2532 = vmatmul.mubr.f32.gmra.mrb[0].mxu0 %v2370
        %v2533 = vpop.f32.mrb[0].mxu0
        %v2534 = vadd.f32 0.0, %v2533
        %v2535 = vpop.f32.mrb[0].mxu0
        %2536 = vmatprep.mubr.f32.mxu0 0.0
        %2537 = vmatmul.mubr.f32.gmra.mrb[0].mxu0 %v2371
        %v2538 = vpop.f32.mrb[0].mxu0
        %v2539 = vadd.f32 0.0, %v2538
        %v2540 = vpop.f32.mrb[0].mxu0
        %2541 = vmatprep.mubr.f32.mxu0 0.0
        %2542 = vmatmul.mubr.f32.gmra.mrb[0].mxu0 %v2372
        %v2543 = vpop.f32.mrb[0].mxu0
        %v2544 = vadd.f32 0.0, %v2543
        %v2545 = vpop.f32.mrb[0].mxu0
        %2546 = vmatprep.mubr.f32.mxu0 0.0
        %2547 = vmatmul.mubr.f32.gmra.mrb[0].mxu0 %v2373
        %v2548 = vpop.f32.mrb[0].mxu0
        %v2549 = vadd.f32 0.0, %v2548
        %v2550 = vpop.f32.mrb[0].mxu0
        %2551 = vdwg.mxu0
        %v2552 = vadd.f32 %v2374, %v2474
        %v2553 = vadd.f32 %v2375, %v2479
        %v2554 = vadd.f32 %v2376, %v2484
        %v2555 = vadd.f32 %v2377, %v2489
        %v2556 = vadd.f32 %v2378, %v2494
        %v2557 = vadd.f32 %v2379, %v2499
        %v2558 = vadd.f32 %v2380, %v2504
        %v2559 = vadd.f32 %v2381, %v2509
        %v2560 = vadd.f32 %v2382, %v2514
        %v2561 = vadd.f32 %v2383, %v2519
        %v2562 = vadd.f32 %v2384, %v2524
        %v2563 = vadd.f32 %v2385, %v2529
        %v2564 = vadd.f32 %v2386, %v2534
        %v2565 = vadd.f32 %v2387, %v2539
        %v2566 = vadd.f32 %v2388, %v2544
        %v2567 = vadd.f32 %v2389, %v2549
        %2568 = vst [vmem:[#allocation5] sm:$0xff] %v2552
        %2569 = vst [vmem:[#allocation5 + $0x8] sm:$0xff] %v2553
        %2570 = vst [vmem:[#allocation5 + $0x10] sm:$0xff] %v2554
        %2571 = vst [vmem:[#allocation5 + $0x18] sm:$0xff] %v2555
        %2572 = vst [vmem:[#allocation5 + $0x20] sm:$0xff] %v2556
        %2573 = vst [vmem:[#allocation5 + $0x28] sm:$0xff] %v2557
        %2574 = vst [vmem:[#allocation5 + $0x30] sm:$0xff] %v2558
        %2575 = vst [vmem:[#allocation5 + $0x38] sm:$0xff] %v2559
        %2576 = vst [vmem:[#allocation5 + $0x40] sm:$0xff] %v2560
        %2577 = vst [vmem:[#allocation5 + $0x48] sm:$0xff] %v2561
        %2578 = vst [vmem:[#allocation5 + $0x50] sm:$0xff] %v2562
        %2579 = vst [vmem:[#allocation5 + $0x58] sm:$0xff] %v2563
        %2580 = vst [vmem:[#allocation5 + $0x60] sm:$0xff] %v2564
        %2581 = vst [vmem:[#allocation5 + $0x68] sm:$0xff] %v2565
        %2582 = vst [vmem:[#allocation5 + $0x70] sm:$0xff] %v2566
        %2583 = vst [vmem:[#allocation5 + $0x78] sm:$0xff] %v2567
        %v2584 = vld [vmem:[%s2357 + $0x12] sm:$0xff]
        %v2585 = vld [vmem:[%s2357 + $0x1a] sm:$0xff]
        %v2586 = vld [vmem:[%s2357 + $0x4a] sm:$0xff]
        %v2587 = vld [vmem:[%s2357 + $0x52] sm:$0xff]
        %v2588 = vld [vmem:[%s2357 + $0x82] sm:$0xff]
        %v2589 = vld [vmem:[%s2357 + $0x8a] sm:$0xff]
        %v2590 = vld [vmem:[%s2357 + $0xba] sm:$0xff]
        %v2591 = vld [vmem:[%s2357 + $0xc2] sm:$0xff]
        %v2592 = vld [vmem:[%s2357 + $0xf2] sm:$0xff]
        %v2593 = vld [vmem:[%s2357 + $0xfa] sm:$0xff]
        %v2594 = vld [vmem:[%s2357 + $0x12a] sm:$0xff]
        %v2595 = vld [vmem:[%s2357 + $0x132] sm:$0xff]
        %v2596 = vld [vmem:[%s2357 + $0x162] sm:$0xff]
        %v2597 = vld [vmem:[%s2357 + $0x16a] sm:$0xff]
        %v2598 = vld [vmem:[%s2357 + $0x19a] sm:$0xff]
        %v2599 = vld [vmem:[%s2357 + $0x1a2] sm:$0xff]
        %v2600 = vld [vmem:[#allocation5] sm:$0xff]
        %v2601 = vld [vmem:[#allocation5 + $0x8] sm:$0xff]
        %v2602 = vld [vmem:[#allocation5 + $0x10] sm:$0xff]
        %v2603 = vld [vmem:[#allocation5 + $0x18] sm:$0xff]
        %v2604 = vld [vmem:[#allocation5 + $0x20] sm:$0xff]
        %v2605 = vld [vmem:[#allocation5 + $0x28] sm:$0xff]
        %v2606 = vld [vmem:[#allocation5 + $0x30] sm:$0xff]
        %v2607 = vld [vmem:[#allocation5 + $0x38] sm:$0xff]
        %v2608 = vld [vmem:[#allocation5 + $0x40] sm:$0xff]
        %v2609 = vld [vmem:[#allocation5 + $0x48] sm:$0xff]
        %v2610 = vld [vmem:[#allocation5 + $0x50] sm:$0xff]
        %v2611 = vld [vmem:[#allocation5 + $0x58] sm:$0xff]
        %v2612 = vld [vmem:[#allocation5 + $0x60] sm:$0xff]
        %v2613 = vld [vmem:[#allocation5 + $0x68] sm:$0xff]
        %v2614 = vld [vmem:[#allocation5 + $0x70] sm:$0xff]
        %v2615 = vld [vmem:[#allocation5 + $0x78] sm:$0xff]
        %s2616 = scalar_lea.vmem [#allocation11], 896
        %v2617 = vld [vmem:[%s2616] sm:$0xff]
        %v2618 = vld [vmem:[%s2616 + $0x8] sm:$0xff]
        %v2619 = vld [vmem:[%s2616 + $0x10] sm:$0xff]
        %v2620 = vld [vmem:[%s2616 + $0x18] sm:$0xff]
        %v2621 = vld [vmem:[%s2616 + $0x20] sm:$0xff]
        %v2622 = vld [vmem:[%s2616 + $0x28] sm:$0xff]
        %v2623 = vld [vmem:[%s2616 + $0x30] sm:$0xff]
        %v2624 = vld [vmem:[%s2616 + $0x38] sm:$0xff]
        %v2625 = vld [vmem:[%s2616 + $0x40] sm:$0xff]
        %v2626 = vld [vmem:[%s2616 + $0x48] sm:$0xff]
        %v2627 = vld [vmem:[%s2616 + $0x50] sm:$0xff]
        %v2628 = vld [vmem:[%s2616 + $0x58] sm:$0xff]
        %v2629 = vld [vmem:[%s2616 + $0x60] sm:$0xff]
        %v2630 = vld [vmem:[%s2616 + $0x68] sm:$0xff]
        %v2631 = vld [vmem:[%s2616 + $0x70] sm:$0xff]
        %v2632 = vld [vmem:[%s2616 + $0x78] sm:$0xff]
        %2633 = vmatprep.subr.mxu0 0.0
        %2634 = vmatpush1.msra.mxu0 %v2617
        %2635 = vmatprep.subr.mxu0 0.0
        %2636 = vmatpush1.msra.mxu0 %v2618
        %2637 = vmatprep.subr.mxu0 0.0
        %2638 = vmatpush1.msra.mxu0 %v2619
        %2639 = vmatprep.subr.mxu0 0.0
        %2640 = vmatpush1.msra.mxu0 %v2620
        %2641 = vmatprep.subr.mxu0 0.0
        %2642 = vmatpush1.msra.mxu0 %v2621
        %2643 = vmatprep.subr.mxu0 0.0
        %2644 = vmatpush1.msra.mxu0 %v2622
        %2645 = vmatprep.subr.mxu0 0.0
        %2646 = vmatpush1.msra.mxu0 %v2623
        %2647 = vmatprep.subr.mxu0 0.0
        %2648 = vmatpush1.msra.mxu0 %v2624
        %2649 = vmatprep.subr.mxu0 0.0
        %2650 = vmatpush1.msra.mxu0 %v2625
        %2651 = vmatprep.subr.mxu0 0.0
        %2652 = vmatpush1.msra.mxu0 %v2626
        %2653 = vmatprep.subr.mxu0 0.0
        %2654 = vmatpush1.msra.mxu0 %v2627
        %2655 = vmatprep.subr.mxu0 0.0
        %2656 = vmatpush1.msra.mxu0 %v2628
        %2657 = vmatprep.subr.mxu0 0.0
        %2658 = vmatpush1.msra.mxu0 %v2629
        %2659 = vmatprep.subr.mxu0 0.0
        %2660 = vmatpush1.msra.mxu0 %v2630
        %2661 = vmatprep.subr.mxu0 0.0
        %2662 = vmatpush1.msra.mxu0 %v2631
        %2663 = vmatprep.subr.mxu0 0.0
        %2664 = vmatpush1.msra.mxu0 %v2632
        %2665 = vmatprep.subr.mxu0 0.0
        %2666 = vmatpush1.msra.mxu0 0.0
        %2667 = vmatprep.subr.mxu0 0.0
        %2668 = vmatpush1.msra.mxu0 0.0
        %2669 = vmatprep.subr.mxu0 0.0
        %2670 = vmatpush1.msra.mxu0 0.0
        %2671 = vmatprep.subr.mxu0 0.0
        %2672 = vmatpush1.msra.mxu0 0.0
        %2673 = vmatprep.subr.mxu0 0.0
        %2674 = vmatpush1.msra.mxu0 0.0
        %2675 = vmatprep.subr.mxu0 0.0
        %2676 = vmatpush1.msra.mxu0 0.0
        %2677 = vmatprep.subr.mxu0 0.0
        %2678 = vmatpush1.msra.mxu0 0.0
        %2679 = vmatprep.subr.mxu0 0.0
        %2680 = vmatpush1.msra.mxu0 0.0
        %2681 = vmatprep.subr.mxu0 0.0
        %2682 = vmatpush1.msra.mxu0 0.0
        %2683 = vmatprep.subr.mxu0 0.0
        %2684 = vmatpush1.msra.mxu0 0.0
        %2685 = vmatprep.subr.mxu0 0.0
        %2686 = vmatpush1.msra.mxu0 0.0
        %2687 = vmatprep.subr.mxu0 0.0
        %2688 = vmatpush1.msra.mxu0 0.0
        %2689 = vmatprep.subr.mxu0 0.0
        %2690 = vmatpush1.msra.mxu0 0.0
        %2691 = vmatprep.subr.mxu0 0.0
        %2692 = vmatpush1.msra.mxu0 0.0
        %2693 = vmatprep.subr.mxu0 0.0
        %2694 = vmatpush1.msra.mxu0 0.0
        %2695 = vmatprep.subr.mxu0 0.0
        %2696 = vmatpush1.msra.mxu0 0.0
        %2697 = vmatprep.mubr.f32.mxu0 0.0
        %2698 = vmatmul.mubr.f32.gmra.mrb[0].mxu0 %v2584
        %v2699 = vpop.f32.mrb[0].mxu0
        %v2700 = vadd.f32 0.0, %v2699
        %v2701 = vpop.f32.mrb[0].mxu0
        %2702 = vmatprep.mubr.f32.mxu0 0.0
        %2703 = vmatmul.mubr.f32.gmra.mrb[0].mxu0 %v2585
        %v2704 = vpop.f32.mrb[0].mxu0
        %v2705 = vadd.f32 0.0, %v2704
        %v2706 = vpop.f32.mrb[0].mxu0
        %2707 = vmatprep.mubr.f32.mxu0 0.0
        %2708 = vmatmul.mubr.f32.gmra.mrb[0].mxu0 %v2586
        %v2709 = vpop.f32.mrb[0].mxu0
        %v2710 = vadd.f32 0.0, %v2709
        %v2711 = vpop.f32.mrb[0].mxu0
        %2712 = vmatprep.mubr.f32.mxu0 0.0
        %2713 = vmatmul.mubr.f32.gmra.mrb[0].mxu0 %v2587
        %v2714 = vpop.f32.mrb[0].mxu0
        %v2715 = vadd.f32 0.0, %v2714
        %v2716 = vpop.f32.mrb[0].mxu0
        %2717 = vmatprep.mubr.f32.mxu0 0.0
        %2718 = vmatmul.mubr.f32.gmra.mrb[0].mxu0 %v2588
        %v2719 = vpop.f32.mrb[0].mxu0
        %v2720 = vadd.f32 0.0, %v2719
        %v2721 = vpop.f32.mrb[0].mxu0
        %2722 = vmatprep.mubr.f32.mxu0 0.0
        %2723 = vmatmul.mubr.f32.gmra.mrb[0].mxu0 %v2589
        %v2724 = vpop.f32.mrb[0].mxu0
        %v2725 = vadd.f32 0.0, %v2724
        %v2726 = vpop.f32.mrb[0].mxu0
        %2727 = vmatprep.mubr.f32.mxu0 0.0
        %2728 = vmatmul.mubr.f32.gmra.mrb[0].mxu0 %v2590
        %v2729 = vpop.f32.mrb[0].mxu0
        %v2730 = vadd.f32 0.0, %v2729
        %v2731 = vpop.f32.mrb[0].mxu0
        %2732 = vmatprep.mubr.f32.mxu0 0.0
        %2733 = vmatmul.mubr.f32.gmra.mrb[0].mxu0 %v2591
        %v2734 = vpop.f32.mrb[0].mxu0
        %v2735 = vadd.f32 0.0, %v2734
        %v2736 = vpop.f32.mrb[0].mxu0
        %2737 = vmatprep.mubr.f32.mxu0 0.0
        %2738 = vmatmul.mubr.f32.gmra.mrb[0].mxu0 %v2592
        %v2739 = vpop.f32.mrb[0].mxu0
        %v2740 = vadd.f32 0.0, %v2739
        %v2741 = vpop.f32.mrb[0].mxu0
        %2742 = vmatprep.mubr.f32.mxu0 0.0
        %2743 = vmatmul.mubr.f32.gmra.mrb[0].mxu0 %v2593
        %v2744 = vpop.f32.mrb[0].mxu0
        %v2745 = vadd.f32 0.0, %v2744
        %v2746 = vpop.f32.mrb[0].mxu0
        %2747 = vmatprep.mubr.f32.mxu0 0.0
        %2748 = vmatmul.mubr.f32.gmra.mrb[0].mxu0 %v2594
        %v2749 = vpop.f32.mrb[0].mxu0
        %v2750 = vadd.f32 0.0, %v2749
        %v2751 = vpop.f32.mrb[0].mxu0
        %2752 = vmatprep.mubr.f32.mxu0 0.0
        %2753 = vmatmul.mubr.f32.gmra.mrb[0].mxu0 %v2595
        %v2754 = vpop.f32.mrb[0].mxu0
        %v2755 = vadd.f32 0.0, %v2754
        %v2756 = vpop.f32.mrb[0].mxu0
        %2757 = vmatprep.mubr.f32.mxu0 0.0
        %2758 = vmatmul.mubr.f32.gmra.mrb[0].mxu0 %v2596
        %v2759 = vpop.f32.mrb[0].mxu0
        %v2760 = vadd.f32 0.0, %v2759
        %v2761 = vpop.f32.mrb[0].mxu0
        %2762 = vmatprep.mubr.f32.mxu0 0.0
        %2763 = vmatmul.mubr.f32.gmra.mrb[0].mxu0 %v2597
        %v2764 = vpop.f32.mrb[0].mxu0
        %v2765 = vadd.f32 0.0, %v2764
        %v2766 = vpop.f32.mrb[0].mxu0
        %2767 = vmatprep.mubr.f32.mxu0 0.0
        %2768 = vmatmul.mubr.f32.gmra.mrb[0].mxu0 %v2598
        %v2769 = vpop.f32.mrb[0].mxu0
        %v2770 = vadd.f32 0.0, %v2769
        %v2771 = vpop.f32.mrb[0].mxu0
        %2772 = vmatprep.mubr.f32.mxu0 0.0
        %2773 = vmatmul.mubr.f32.gmra.mrb[0].mxu0 %v2599
        %v2774 = vpop.f32.mrb[0].mxu0
        %v2775 = vadd.f32 0.0, %v2774
        %v2776 = vpop.f32.mrb[0].mxu0
        %2777 = vdwg.mxu0
        %v2778 = vadd.f32 %v2600, %v2700
        %v2779 = vadd.f32 %v2601, %v2705
        %v2780 = vadd.f32 %v2602, %v2710
        %v2781 = vadd.f32 %v2603, %v2715
        %v2782 = vadd.f32 %v2604, %v2720
        %v2783 = vadd.f32 %v2605, %v2725
        %v2784 = vadd.f32 %v2606, %v2730
        %v2785 = vadd.f32 %v2607, %v2735
        %v2786 = vadd.f32 %v2608, %v2740
        %v2787 = vadd.f32 %v2609, %v2745
        %v2788 = vadd.f32 %v2610, %v2750
        %v2789 = vadd.f32 %v2611, %v2755
        %v2790 = vadd.f32 %v2612, %v2760
        %v2791 = vadd.f32 %v2613, %v2765
        %v2792 = vadd.f32 %v2614, %v2770
        %v2793 = vadd.f32 %v2615, %v2775
        %2794 = vst [vmem:[#allocation5] sm:$0xff] %v2778
        %2795 = vst [vmem:[#allocation5 + $0x8] sm:$0xff] %v2779
        %2796 = vst [vmem:[#allocation5 + $0x10] sm:$0xff] %v2780
        %2797 = vst [vmem:[#allocation5 + $0x18] sm:$0xff] %v2781
        %2798 = vst [vmem:[#allocation5 + $0x20] sm:$0xff] %v2782
        %2799 = vst [vmem:[#allocation5 + $0x28] sm:$0xff] %v2783
        %2800 = vst [vmem:[#allocation5 + $0x30] sm:$0xff] %v2784
        %2801 = vst [vmem:[#allocation5 + $0x38] sm:$0xff] %v2785
        %2802 = vst [vmem:[#allocation5 + $0x40] sm:$0xff] %v2786
        %2803 = vst [vmem:[#allocation5 + $0x48] sm:$0xff] %v2787
        %2804 = vst [vmem:[#allocation5 + $0x50] sm:$0xff] %v2788
        %2805 = vst [vmem:[#allocation5 + $0x58] sm:$0xff] %v2789
        %2806 = vst [vmem:[#allocation5 + $0x60] sm:$0xff] %v2790
        %2807 = vst [vmem:[#allocation5 + $0x68] sm:$0xff] %v2791
        %2808 = vst [vmem:[#allocation5 + $0x70] sm:$0xff] %v2792
        %2809 = vst [vmem:[#allocation5 + $0x78] sm:$0xff] %v2793
        %v2810 = vld [vmem:[%s2357 + $0x18] sm:$0xff]
        %v2811 = vld [vmem:[%s2357 + $0x20] sm:$0xff]
        %v2812 = vld [vmem:[%s2357 + $0x50] sm:$0xff]
        %v2813 = vld [vmem:[%s2357 + $0x58] sm:$0xff]
        %v2814 = vld [vmem:[%s2357 + $0x88] sm:$0xff]
        %v2815 = vld [vmem:[%s2357 + $0x90] sm:$0xff]
        %v2816 = vld [vmem:[%s2357 + $0xc0] sm:$0xff]
        %v2817 = vld [vmem:[%s2357 + $0xc8] sm:$0xff]
        %v2818 = vld [vmem:[%s2357 + $0xf8] sm:$0xff]
        %v2819 = vld [vmem:[%s2357 + $0x100] sm:$0xff]
        %v2820 = vld [vmem:[%s2357 + $0x130] sm:$0xff]
        %v2821 = vld [vmem:[%s2357 + $0x138] sm:$0xff]
        %v2822 = vld [vmem:[%s2357 + $0x168] sm:$0xff]
        %v2823 = vld [vmem:[%s2357 + $0x170] sm:$0xff]
        %v2824 = vld [vmem:[%s2357 + $0x1a0] sm:$0xff]
        %v2825 = vld [vmem:[%s2357 + $0x1a8] sm:$0xff]
        %v2826 = vld [vmem:[#allocation5] sm:$0xff]
        %v2827 = vld [vmem:[#allocation5 + $0x8] sm:$0xff]
        %v2828 = vld [vmem:[#allocation5 + $0x10] sm:$0xff]
        %v2829 = vld [vmem:[#allocation5 + $0x18] sm:$0xff]
        %v2830 = vld [vmem:[#allocation5 + $0x20] sm:$0xff]
        %v2831 = vld [vmem:[#allocation5 + $0x28] sm:$0xff]
        %v2832 = vld [vmem:[#allocation5 + $0x30] sm:$0xff]
        %v2833 = vld [vmem:[#allocation5 + $0x38] sm:$0xff]
        %v2834 = vld [vmem:[#allocation5 + $0x40] sm:$0xff]
        %v2835 = vld [vmem:[#allocation5 + $0x48] sm:$0xff]
        %v2836 = vld [vmem:[#allocation5 + $0x50] sm:$0xff]
        %v2837 = vld [vmem:[#allocation5 + $0x58] sm:$0xff]
        %v2838 = vld [vmem:[#allocation5 + $0x60] sm:$0xff]
        %v2839 = vld [vmem:[#allocation5 + $0x68] sm:$0xff]
        %v2840 = vld [vmem:[#allocation5 + $0x70] sm:$0xff]
        %v2841 = vld [vmem:[#allocation5 + $0x78] sm:$0xff]
        %s2842 = scalar_lea.vmem [#allocation11], 1024
        %v2843 = vld [vmem:[%s2842] sm:$0xff]
        %v2844 = vld [vmem:[%s2842 + $0x8] sm:$0xff]
        %v2845 = vld [vmem:[%s2842 + $0x10] sm:$0xff]
        %v2846 = vld [vmem:[%s2842 + $0x18] sm:$0xff]
        %v2847 = vld [vmem:[%s2842 + $0x20] sm:$0xff]
        %v2848 = vld [vmem:[%s2842 + $0x28] sm:$0xff]
        %v2849 = vld [vmem:[%s2842 + $0x30] sm:$0xff]
        %v2850 = vld [vmem:[%s2842 + $0x38] sm:$0xff]
        %v2851 = vld [vmem:[%s2842 + $0x40] sm:$0xff]
        %v2852 = vld [vmem:[%s2842 + $0x48] sm:$0xff]
        %v2853 = vld [vmem:[%s2842 + $0x50] sm:$0xff]
        %v2854 = vld [vmem:[%s2842 + $0x58] sm:$0xff]
        %v2855 = vld [vmem:[%s2842 + $0x60] sm:$0xff]
        %v2856 = vld [vmem:[%s2842 + $0x68] sm:$0xff]
        %v2857 = vld [vmem:[%s2842 + $0x70] sm:$0xff]
        %v2858 = vld [vmem:[%s2842 + $0x78] sm:$0xff]
        %2859 = vmatprep.subr.mxu0 0.0
        %2860 = vmatpush1.msra.mxu0 %v2843
        %2861 = vmatprep.subr.mxu0 0.0
        %2862 = vmatpush1.msra.mxu0 %v2844
        %2863 = vmatprep.subr.mxu0 0.0
        %2864 = vmatpush1.msra.mxu0 %v2845
        %2865 = vmatprep.subr.mxu0 0.0
        %2866 = vmatpush1.msra.mxu0 %v2846
        %2867 = vmatprep.subr.mxu0 0.0
        %2868 = vmatpush1.msra.mxu0 %v2847
        %2869 = vmatprep.subr.mxu0 0.0
        %2870 = vmatpush1.msra.mxu0 %v2848
        %2871 = vmatprep.subr.mxu0 0.0
        %2872 = vmatpush1.msra.mxu0 %v2849
        %2873 = vmatprep.subr.mxu0 0.0
        %2874 = vmatpush1.msra.mxu0 %v2850
        %2875 = vmatprep.subr.mxu0 0.0
        %2876 = vmatpush1.msra.mxu0 %v2851
        %2877 = vmatprep.subr.mxu0 0.0
        %2878 = vmatpush1.msra.mxu0 %v2852
        %2879 = vmatprep.subr.mxu0 0.0
        %2880 = vmatpush1.msra.mxu0 %v2853
        %2881 = vmatprep.subr.mxu0 0.0
        %2882 = vmatpush1.msra.mxu0 %v2854
        %2883 = vmatprep.subr.mxu0 0.0
        %2884 = vmatpush1.msra.mxu0 %v2855
        %2885 = vmatprep.subr.mxu0 0.0
        %2886 = vmatpush1.msra.mxu0 %v2856
        %2887 = vmatprep.subr.mxu0 0.0
        %2888 = vmatpush1.msra.mxu0 %v2857
        %2889 = vmatprep.subr.mxu0 0.0
        %2890 = vmatpush1.msra.mxu0 %v2858
        %2891 = vmatprep.subr.mxu0 0.0
        %2892 = vmatpush1.msra.mxu0 0.0
        %2893 = vmatprep.subr.mxu0 0.0
        %2894 = vmatpush1.msra.mxu0 0.0
        %2895 = vmatprep.subr.mxu0 0.0
        %2896 = vmatpush1.msra.mxu0 0.0
        %2897 = vmatprep.subr.mxu0 0.0
        %2898 = vmatpush1.msra.mxu0 0.0
        %2899 = vmatprep.subr.mxu0 0.0
        %2900 = vmatpush1.msra.mxu0 0.0
        %2901 = vmatprep.subr.mxu0 0.0
        %2902 = vmatpush1.msra.mxu0 0.0
        %2903 = vmatprep.subr.mxu0 0.0
        %2904 = vmatpush1.msra.mxu0 0.0
        %2905 = vmatprep.subr.mxu0 0.0
        %2906 = vmatpush1.msra.mxu0 0.0
        %2907 = vmatprep.subr.mxu0 0.0
        %2908 = vmatpush1.msra.mxu0 0.0
        %2909 = vmatprep.subr.mxu0 0.0
        %2910 = vmatpush1.msra.mxu0 0.0
        %2911 = vmatprep.subr.mxu0 0.0
        %2912 = vmatpush1.msra.mxu0 0.0
        %2913 = vmatprep.subr.mxu0 0.0
        %2914 = vmatpush1.msra.mxu0 0.0
        %2915 = vmatprep.subr.mxu0 0.0
        %2916 = vmatpush1.msra.mxu0 0.0
        %2917 = vmatprep.subr.mxu0 0.0
        %2918 = vmatpush1.msra.mxu0 0.0
        %2919 = vmatprep.subr.mxu0 0.0
        %2920 = vmatpush1.msra.mxu0 0.0
        %2921 = vmatprep.subr.mxu0 0.0
        %2922 = vmatpush1.msra.mxu0 0.0
        %2923 = vmatprep.mubr.f32.mxu0 0.0
        %2924 = vmatmul.mubr.f32.gmra.mrb[0].mxu0 %v2810
        %v2925 = vpop.f32.mrb[0].mxu0
        %v2926 = vadd.f32 0.0, %v2925
        %v2927 = vpop.f32.mrb[0].mxu0
        %2928 = vmatprep.mubr.f32.mxu0 0.0
        %2929 = vmatmul.mubr.f32.gmra.mrb[0].mxu0 %v2811
        %v2930 = vpop.f32.mrb[0].mxu0
        %v2931 = vadd.f32 0.0, %v2930
        %v2932 = vpop.f32.mrb[0].mxu0
        %2933 = vmatprep.mubr.f32.mxu0 0.0
        %2934 = vmatmul.mubr.f32.gmra.mrb[0].mxu0 %v2812
        %v2935 = vpop.f32.mrb[0].mxu0
        %v2936 = vadd.f32 0.0, %v2935
        %v2937 = vpop.f32.mrb[0].mxu0
        %2938 = vmatprep.mubr.f32.mxu0 0.0
        %2939 = vmatmul.mubr.f32.gmra.mrb[0].mxu0 %v2813
        %v2940 = vpop.f32.mrb[0].mxu0
        %v2941 = vadd.f32 0.0, %v2940
        %v2942 = vpop.f32.mrb[0].mxu0
        %2943 = vmatprep.mubr.f32.mxu0 0.0
        %2944 = vmatmul.mubr.f32.gmra.mrb[0].mxu0 %v2814
        %v2945 = vpop.f32.mrb[0].mxu0
        %v2946 = vadd.f32 0.0, %v2945
        %v2947 = vpop.f32.mrb[0].mxu0
        %2948 = vmatprep.mubr.f32.mxu0 0.0
        %2949 = vmatmul.mubr.f32.gmra.mrb[0].mxu0 %v2815
        %v2950 = vpop.f32.mrb[0].mxu0
        %v2951 = vadd.f32 0.0, %v2950
        %v2952 = vpop.f32.mrb[0].mxu0
        %2953 = vmatprep.mubr.f32.mxu0 0.0
        %2954 = vmatmul.mubr.f32.gmra.mrb[0].mxu0 %v2816
        %v2955 = vpop.f32.mrb[0].mxu0
        %v2956 = vadd.f32 0.0, %v2955
        %v2957 = vpop.f32.mrb[0].mxu0
        %2958 = vmatprep.mubr.f32.mxu0 0.0
        %2959 = vmatmul.mubr.f32.gmra.mrb[0].mxu0 %v2817
        %v2960 = vpop.f32.mrb[0].mxu0
        %v2961 = vadd.f32 0.0, %v2960
        %v2962 = vpop.f32.mrb[0].mxu0
        %2963 = vmatprep.mubr.f32.mxu0 0.0
        %2964 = vmatmul.mubr.f32.gmra.mrb[0].mxu0 %v2818
        %v2965 = vpop.f32.mrb[0].mxu0
        %v2966 = vadd.f32 0.0, %v2965
        %v2967 = vpop.f32.mrb[0].mxu0
        %2968 = vmatprep.mubr.f32.mxu0 0.0
        %2969 = vmatmul.mubr.f32.gmra.mrb[0].mxu0 %v2819
        %v2970 = vpop.f32.mrb[0].mxu0
        %v2971 = vadd.f32 0.0, %v2970
        %v2972 = vpop.f32.mrb[0].mxu0
        %2973 = vmatprep.mubr.f32.mxu0 0.0
        %2974 = vmatmul.mubr.f32.gmra.mrb[0].mxu0 %v2820
        %v2975 = vpop.f32.mrb[0].mxu0
        %v2976 = vadd.f32 0.0, %v2975
        %v2977 = vpop.f32.mrb[0].mxu0
        %2978 = vmatprep.mubr.f32.mxu0 0.0
        %2979 = vmatmul.mubr.f32.gmra.mrb[0].mxu0 %v2821
        %v2980 = vpop.f32.mrb[0].mxu0
        %v2981 = vadd.f32 0.0, %v2980
        %v2982 = vpop.f32.mrb[0].mxu0
        %2983 = vmatprep.mubr.f32.mxu0 0.0
        %2984 = vmatmul.mubr.f32.gmra.mrb[0].mxu0 %v2822
        %v2985 = vpop.f32.mrb[0].mxu0
        %v2986 = vadd.f32 0.0, %v2985
        %v2987 = vpop.f32.mrb[0].mxu0
        %2988 = vmatprep.mubr.f32.mxu0 0.0
        %2989 = vmatmul.mubr.f32.gmra.mrb[0].mxu0 %v2823
        %v2990 = vpop.f32.mrb[0].mxu0
        %v2991 = vadd.f32 0.0, %v2990
        %v2992 = vpop.f32.mrb[0].mxu0
        %2993 = vmatprep.mubr.f32.mxu0 0.0
        %2994 = vmatmul.mubr.f32.gmra.mrb[0].mxu0 %v2824
        %v2995 = vpop.f32.mrb[0].mxu0
        %v2996 = vadd.f32 0.0, %v2995
        %v2997 = vpop.f32.mrb[0].mxu0
        %2998 = vmatprep.mubr.f32.mxu0 0.0
        %2999 = vmatmul.mubr.f32.gmra.mrb[0].mxu0 %v2825
        %v3000 = vpop.f32.mrb[0].mxu0
        %v3001 = vadd.f32 0.0, %v3000
        %v3002 = vpop.f32.mrb[0].mxu0
        %3003 = vdwg.mxu0
        %v3004 = vadd.f32 %v2826, %v2926
        %v3005 = vadd.f32 %v2827, %v2931
        %v3006 = vadd.f32 %v2828, %v2936
        %v3007 = vadd.f32 %v2829, %v2941
        %v3008 = vadd.f32 %v2830, %v2946
        %v3009 = vadd.f32 %v2831, %v2951
        %v3010 = vadd.f32 %v2832, %v2956
        %v3011 = vadd.f32 %v2833, %v2961
        %v3012 = vadd.f32 %v2834, %v2966
        %v3013 = vadd.f32 %v2835, %v2971
        %v3014 = vadd.f32 %v2836, %v2976
        %v3015 = vadd.f32 %v2837, %v2981
        %v3016 = vadd.f32 %v2838, %v2986
        %v3017 = vadd.f32 %v2839, %v2991
        %v3018 = vadd.f32 %v2840, %v2996
        %v3019 = vadd.f32 %v2841, %v3001
        %3020 = vst [vmem:[#allocation5] sm:$0xff] %v3004
        %3021 = vst [vmem:[#allocation5 + $0x8] sm:$0xff] %v3005
        %3022 = vst [vmem:[#allocation5 + $0x10] sm:$0xff] %v3006
        %3023 = vst [vmem:[#allocation5 + $0x18] sm:$0xff] %v3007
        %3024 = vst [vmem:[#allocation5 + $0x20] sm:$0xff] %v3008
        %3025 = vst [vmem:[#allocation5 + $0x28] sm:$0xff] %v3009
        %3026 = vst [vmem:[#allocation5 + $0x30] sm:$0xff] %v3010
        %3027 = vst [vmem:[#allocation5 + $0x38] sm:$0xff] %v3011
        %3028 = vst [vmem:[#allocation5 + $0x40] sm:$0xff] %v3012
        %3029 = vst [vmem:[#allocation5 + $0x48] sm:$0xff] %v3013
        %3030 = vst [vmem:[#allocation5 + $0x50] sm:$0xff] %v3014
        %3031 = vst [vmem:[#allocation5 + $0x58] sm:$0xff] %v3015
        %3032 = vst [vmem:[#allocation5 + $0x60] sm:$0xff] %v3016
        %3033 = vst [vmem:[#allocation5 + $0x68] sm:$0xff] %v3017
        %3034 = vst [vmem:[#allocation5 + $0x70] sm:$0xff] %v3018
        %3035 = vst [vmem:[#allocation5 + $0x78] sm:$0xff] %v3019
        %s3036 = sadd.s32 %s714, 6
        %s3037 = smul.u32 %s3036, 56
        %s3038 = scalar_lea.vmem [#allocation2], %s3037
        %v3039 = vld [vmem:[%s3038 + $0x6] sm:$0xff]
        %v3040 = vld [vmem:[%s3038 + $0xe] sm:$0xff]
        %v3041 = vld [vmem:[%s3038 + $0x3e] sm:$0xff]
        %v3042 = vld [vmem:[%s3038 + $0x46] sm:$0xff]
        %v3043 = vld [vmem:[%s3038 + $0x76] sm:$0xff]
        %v3044 = vld [vmem:[%s3038 + $0x7e] sm:$0xff]
        %v3045 = vld [vmem:[%s3038 + $0xae] sm:$0xff]
        %v3046 = vld [vmem:[%s3038 + $0xb6] sm:$0xff]
        %v3047 = vld [vmem:[%s3038 + $0xe6] sm:$0xff]
        %v3048 = vld [vmem:[%s3038 + $0xee] sm:$0xff]
        %v3049 = vld [vmem:[%s3038 + $0x11e] sm:$0xff]
        %v3050 = vld [vmem:[%s3038 + $0x126] sm:$0xff]
        %v3051 = vld [vmem:[%s3038 + $0x156] sm:$0xff]
        %v3052 = vld [vmem:[%s3038 + $0x15e] sm:$0xff]
        %v3053 = vld [vmem:[%s3038 + $0x18e] sm:$0xff]
        %v3054 = vld [vmem:[%s3038 + $0x196] sm:$0xff]
        %v3055 = vld [vmem:[#allocation6] sm:$0xff]
        %v3056 = vld [vmem:[#allocation6 + $0x8] sm:$0xff]
        %v3057 = vld [vmem:[#allocation6 + $0x10] sm:$0xff]
        %v3058 = vld [vmem:[#allocation6 + $0x18] sm:$0xff]
        %v3059 = vld [vmem:[#allocation6 + $0x20] sm:$0xff]
        %v3060 = vld [vmem:[#allocation6 + $0x28] sm:$0xff]
        %v3061 = vld [vmem:[#allocation6 + $0x30] sm:$0xff]
        %v3062 = vld [vmem:[#allocation6 + $0x38] sm:$0xff]
        %v3063 = vld [vmem:[#allocation6 + $0x40] sm:$0xff]
        %v3064 = vld [vmem:[#allocation6 + $0x48] sm:$0xff]
        %v3065 = vld [vmem:[#allocation6 + $0x50] sm:$0xff]
        %v3066 = vld [vmem:[#allocation6 + $0x58] sm:$0xff]
        %v3067 = vld [vmem:[#allocation6 + $0x60] sm:$0xff]
        %v3068 = vld [vmem:[#allocation6 + $0x68] sm:$0xff]
        %v3069 = vld [vmem:[#allocation6 + $0x70] sm:$0xff]
        %v3070 = vld [vmem:[#allocation6 + $0x78] sm:$0xff]
        %v3071 = vld [vmem:[#allocation13] sm:$0xff]
        %v3072 = vld [vmem:[#allocation13 + $0x8] sm:$0xff]
        %v3073 = vld [vmem:[#allocation13 + $0x10] sm:$0xff]
        %v3074 = vld [vmem:[#allocation13 + $0x18] sm:$0xff]
        %v3075 = vld [vmem:[#allocation13 + $0x20] sm:$0xff]
        %v3076 = vld [vmem:[#allocation13 + $0x28] sm:$0xff]
        %v3077 = vld [vmem:[#allocation13 + $0x30] sm:$0xff]
        %v3078 = vld [vmem:[#allocation13 + $0x38] sm:$0xff]
        %v3079 = vld [vmem:[#allocation13 + $0x40] sm:$0xff]
        %v3080 = vld [vmem:[#allocation13 + $0x48] sm:$0xff]
        %v3081 = vld [vmem:[#allocation13 + $0x50] sm:$0xff]
        %v3082 = vld [vmem:[#allocation13 + $0x58] sm:$0xff]
        %v3083 = vld [vmem:[#allocation13 + $0x60] sm:$0xff]
        %v3084 = vld [vmem:[#allocation13 + $0x68] sm:$0xff]
        %v3085 = vld [vmem:[#allocation13 + $0x70] sm:$0xff]
        %v3086 = vld [vmem:[#allocation13 + $0x78] sm:$0xff]
        %3087 = vmatprep.subr.mxu0 0.0
        %3088 = vmatpush1.msra.mxu0 %v3071
        %3089 = vmatprep.subr.mxu0 0.0
        %3090 = vmatpush1.msra.mxu0 %v3072
        %3091 = vmatprep.subr.mxu0 0.0
        %3092 = vmatpush1.msra.mxu0 %v3073
        %3093 = vmatprep.subr.mxu0 0.0
        %3094 = vmatpush1.msra.mxu0 %v3074
        %3095 = vmatprep.subr.mxu0 0.0
        %3096 = vmatpush1.msra.mxu0 %v3075
        %3097 = vmatprep.subr.mxu0 0.0
        %3098 = vmatpush1.msra.mxu0 %v3076
        %3099 = vmatprep.subr.mxu0 0.0
        %3100 = vmatpush1.msra.mxu0 %v3077
        %3101 = vmatprep.subr.mxu0 0.0
        %3102 = vmatpush1.msra.mxu0 %v3078
        %3103 = vmatprep.subr.mxu0 0.0
        %3104 = vmatpush1.msra.mxu0 %v3079
        %3105 = vmatprep.subr.mxu0 0.0
        %3106 = vmatpush1.msra.mxu0 %v3080
        %3107 = vmatprep.subr.mxu0 0.0
        %3108 = vmatpush1.msra.mxu0 %v3081
        %3109 = vmatprep.subr.mxu0 0.0
        %3110 = vmatpush1.msra.mxu0 %v3082
        %3111 = vmatprep.subr.mxu0 0.0
        %3112 = vmatpush1.msra.mxu0 %v3083
        %3113 = vmatprep.subr.mxu0 0.0
        %3114 = vmatpush1.msra.mxu0 %v3084
        %3115 = vmatprep.subr.mxu0 0.0
        %3116 = vmatpush1.msra.mxu0 %v3085
        %3117 = vmatprep.subr.mxu0 0.0
        %3118 = vmatpush1.msra.mxu0 %v3086
        %3119 = vmatprep.subr.mxu0 0.0
        %3120 = vmatpush1.msra.mxu0 0.0
        %3121 = vmatprep.subr.mxu0 0.0
        %3122 = vmatpush1.msra.mxu0 0.0
        %3123 = vmatprep.subr.mxu0 0.0
        %3124 = vmatpush1.msra.mxu0 0.0
        %3125 = vmatprep.subr.mxu0 0.0
        %3126 = vmatpush1.msra.mxu0 0.0
        %3127 = vmatprep.subr.mxu0 0.0
        %3128 = vmatpush1.msra.mxu0 0.0
        %3129 = vmatprep.subr.mxu0 0.0
        %3130 = vmatpush1.msra.mxu0 0.0
        %3131 = vmatprep.subr.mxu0 0.0
        %3132 = vmatpush1.msra.mxu0 0.0
        %3133 = vmatprep.subr.mxu0 0.0
        %3134 = vmatpush1.msra.mxu0 0.0
        %3135 = vmatprep.subr.mxu0 0.0
        %3136 = vmatpush1.msra.mxu0 0.0
        %3137 = vmatprep.subr.mxu0 0.0
        %3138 = vmatpush1.msra.mxu0 0.0
        %3139 = vmatprep.subr.mxu0 0.0
        %3140 = vmatpush1.msra.mxu0 0.0
        %3141 = vmatprep.subr.mxu0 0.0
        %3142 = vmatpush1.msra.mxu0 0.0
        %3143 = vmatprep.subr.mxu0 0.0
        %3144 = vmatpush1.msra.mxu0 0.0
        %3145 = vmatprep.subr.mxu0 0.0
        %3146 = vmatpush1.msra.mxu0 0.0
        %3147 = vmatprep.subr.mxu0 0.0
        %3148 = vmatpush1.msra.mxu0 0.0
        %3149 = vmatprep.subr.mxu0 0.0
        %3150 = vmatpush1.msra.mxu0 0.0
        %3151 = vmatprep.mubr.f32.mxu0 0.0
        %3152 = vmatmul.mubr.f32.gmra.mrb[0].mxu0 %v3039
        %v3153 = vpop.f32.mrb[0].mxu0
        %v3154 = vadd.f32 0.0, %v3153
        %v3155 = vpop.f32.mrb[0].mxu0
        %3156 = vmatprep.mubr.f32.mxu0 0.0
        %3157 = vmatmul.mubr.f32.gmra.mrb[0].mxu0 %v3040
        %v3158 = vpop.f32.mrb[0].mxu0
        %v3159 = vadd.f32 0.0, %v3158
        %v3160 = vpop.f32.mrb[0].mxu0
        %3161 = vmatprep.mubr.f32.mxu0 0.0
        %3162 = vmatmul.mubr.f32.gmra.mrb[0].mxu0 %v3041
        %v3163 = vpop.f32.mrb[0].mxu0
        %v3164 = vadd.f32 0.0, %v3163
        %v3165 = vpop.f32.mrb[0].mxu0
        %3166 = vmatprep.mubr.f32.mxu0 0.0
        %3167 = vmatmul.mubr.f32.gmra.mrb[0].mxu0 %v3042
        %v3168 = vpop.f32.mrb[0].mxu0
        %v3169 = vadd.f32 0.0, %v3168
        %v3170 = vpop.f32.mrb[0].mxu0
        %3171 = vmatprep.mubr.f32.mxu0 0.0
        %3172 = vmatmul.mubr.f32.gmra.mrb[0].mxu0 %v3043
        %v3173 = vpop.f32.mrb[0].mxu0
        %v3174 = vadd.f32 0.0, %v3173
        %v3175 = vpop.f32.mrb[0].mxu0
        %3176 = vmatprep.mubr.f32.mxu0 0.0
        %3177 = vmatmul.mubr.f32.gmra.mrb[0].mxu0 %v3044
        %v3178 = vpop.f32.mrb[0].mxu0
        %v3179 = vadd.f32 0.0, %v3178
        %v3180 = vpop.f32.mrb[0].mxu0
        %3181 = vmatprep.mubr.f32.mxu0 0.0
        %3182 = vmatmul.mubr.f32.gmra.mrb[0].mxu0 %v3045
        %v3183 = vpop.f32.mrb[0].mxu0
        %v3184 = vadd.f32 0.0, %v3183
        %v3185 = vpop.f32.mrb[0].mxu0
        %3186 = vmatprep.mubr.f32.mxu0 0.0
        %3187 = vmatmul.mubr.f32.gmra.mrb[0].mxu0 %v3046
        %v3188 = vpop.f32.mrb[0].mxu0
        %v3189 = vadd.f32 0.0, %v3188
        %v3190 = vpop.f32.mrb[0].mxu0
        %3191 = vmatprep.mubr.f32.mxu0 0.0
        %3192 = vmatmul.mubr.f32.gmra.mrb[0].mxu0 %v3047
        %v3193 = vpop.f32.mrb[0].mxu0
        %v3194 = vadd.f32 0.0, %v3193
        %v3195 = vpop.f32.mrb[0].mxu0
        %3196 = vmatprep.mubr.f32.mxu0 0.0
        %3197 = vmatmul.mubr.f32.gmra.mrb[0].mxu0 %v3048
        %v3198 = vpop.f32.mrb[0].mxu0
        %v3199 = vadd.f32 0.0, %v3198
        %v3200 = vpop.f32.mrb[0].mxu0
        %3201 = vmatprep.mubr.f32.mxu0 0.0
        %3202 = vmatmul.mubr.f32.gmra.mrb[0].mxu0 %v3049
        %v3203 = vpop.f32.mrb[0].mxu0
        %v3204 = vadd.f32 0.0, %v3203
        %v3205 = vpop.f32.mrb[0].mxu0
        %3206 = vmatprep.mubr.f32.mxu0 0.0
        %3207 = vmatmul.mubr.f32.gmra.mrb[0].mxu0 %v3050
        %v3208 = vpop.f32.mrb[0].mxu0
        %v3209 = vadd.f32 0.0, %v3208
        %v3210 = vpop.f32.mrb[0].mxu0
        %3211 = vmatprep.mubr.f32.mxu0 0.0
        %3212 = vmatmul.mubr.f32.gmra.mrb[0].mxu0 %v3051
        %v3213 = vpop.f32.mrb[0].mxu0
        %v3214 = vadd.f32 0.0, %v3213
        %v3215 = vpop.f32.mrb[0].mxu0
        %3216 = vmatprep.mubr.f32.mxu0 0.0
        %3217 = vmatmul.mubr.f32.gmra.mrb[0].mxu0 %v3052
        %v3218 = vpop.f32.mrb[0].mxu0
        %v3219 = vadd.f32 0.0, %v3218
        %v3220 = vpop.f32.mrb[0].mxu0
        %3221 = vmatprep.mubr.f32.mxu0 0.0
        %3222 = vmatmul.mubr.f32.gmra.mrb[0].mxu0 %v3053
        %v3223 = vpop.f32.mrb[0].mxu0
        %v3224 = vadd.f32 0.0, %v3223
        %v3225 = vpop.f32.mrb[0].mxu0
        %3226 = vmatprep.mubr.f32.mxu0 0.0
        %3227 = vmatmul.mubr.f32.gmra.mrb[0].mxu0 %v3054
        %v3228 = vpop.f32.mrb[0].mxu0
        %v3229 = vadd.f32 0.0, %v3228
        %v3230 = vpop.f32.mrb[0].mxu0
        %3231 = vdwg.mxu0
        %v3232 = vadd.f32 %v3055, %v3154
        %v3233 = vadd.f32 %v3056, %v3159
        %v3234 = vadd.f32 %v3057, %v3164
        %v3235 = vadd.f32 %v3058, %v3169
        %v3236 = vadd.f32 %v3059, %v3174
        %v3237 = vadd.f32 %v3060, %v3179
        %v3238 = vadd.f32 %v3061, %v3184
        %v3239 = vadd.f32 %v3062, %v3189
        %v3240 = vadd.f32 %v3063, %v3194
        %v3241 = vadd.f32 %v3064, %v3199
        %v3242 = vadd.f32 %v3065, %v3204
        %v3243 = vadd.f32 %v3066, %v3209
        %v3244 = vadd.f32 %v3067, %v3214
        %v3245 = vadd.f32 %v3068, %v3219
        %v3246 = vadd.f32 %v3069, %v3224
        %v3247 = vadd.f32 %v3070, %v3229
        %3248 = vst [vmem:[#allocation6] sm:$0xff] %v3232
        %3249 = vst [vmem:[#allocation6 + $0x8] sm:$0xff] %v3233
        %3250 = vst [vmem:[#allocation6 + $0x10] sm:$0xff] %v3234
        %3251 = vst [vmem:[#allocation6 + $0x18] sm:$0xff] %v3235
        %3252 = vst [vmem:[#allocation6 + $0x20] sm:$0xff] %v3236
        %3253 = vst [vmem:[#allocation6 + $0x28] sm:$0xff] %v3237
        %3254 = vst [vmem:[#allocation6 + $0x30] sm:$0xff] %v3238
        %3255 = vst [vmem:[#allocation6 + $0x38] sm:$0xff] %v3239
        %3256 = vst [vmem:[#allocation6 + $0x40] sm:$0xff] %v3240
        %3257 = vst [vmem:[#allocation6 + $0x48] sm:$0xff] %v3241
        %3258 = vst [vmem:[#allocation6 + $0x50] sm:$0xff] %v3242
        %3259 = vst [vmem:[#allocation6 + $0x58] sm:$0xff] %v3243
        %3260 = vst [vmem:[#allocation6 + $0x60] sm:$0xff] %v3244
        %3261 = vst [vmem:[#allocation6 + $0x68] sm:$0xff] %v3245
        %3262 = vst [vmem:[#allocation6 + $0x70] sm:$0xff] %v3246
        %3263 = vst [vmem:[#allocation6 + $0x78] sm:$0xff] %v3247
        %v3264 = vld [vmem:[%s3038 + $0x12] sm:$0xff]
        %v3265 = vld [vmem:[%s3038 + $0x1a] sm:$0xff]
        %v3266 = vld [vmem:[%s3038 + $0x4a] sm:$0xff]
        %v3267 = vld [vmem:[%s3038 + $0x52] sm:$0xff]
        %v3268 = vld [vmem:[%s3038 + $0x82] sm:$0xff]
        %v3269 = vld [vmem:[%s3038 + $0x8a] sm:$0xff]
        %v3270 = vld [vmem:[%s3038 + $0xba] sm:$0xff]
        %v3271 = vld [vmem:[%s3038 + $0xc2] sm:$0xff]
        %v3272 = vld [vmem:[%s3038 + $0xf2] sm:$0xff]
        %v3273 = vld [vmem:[%s3038 + $0xfa] sm:$0xff]
        %v3274 = vld [vmem:[%s3038 + $0x12a] sm:$0xff]
        %v3275 = vld [vmem:[%s3038 + $0x132] sm:$0xff]
        %v3276 = vld [vmem:[%s3038 + $0x162] sm:$0xff]
        %v3277 = vld [vmem:[%s3038 + $0x16a] sm:$0xff]
        %v3278 = vld [vmem:[%s3038 + $0x19a] sm:$0xff]
        %v3279 = vld [vmem:[%s3038 + $0x1a2] sm:$0xff]
        %v3280 = vld [vmem:[#allocation6] sm:$0xff]
        %v3281 = vld [vmem:[#allocation6 + $0x8] sm:$0xff]
        %v3282 = vld [vmem:[#allocation6 + $0x10] sm:$0xff]
        %v3283 = vld [vmem:[#allocation6 + $0x18] sm:$0xff]
        %v3284 = vld [vmem:[#allocation6 + $0x20] sm:$0xff]
        %v3285 = vld [vmem:[#allocation6 + $0x28] sm:$0xff]
        %v3286 = vld [vmem:[#allocation6 + $0x30] sm:$0xff]
        %v3287 = vld [vmem:[#allocation6 + $0x38] sm:$0xff]
        %v3288 = vld [vmem:[#allocation6 + $0x40] sm:$0xff]
        %v3289 = vld [vmem:[#allocation6 + $0x48] sm:$0xff]
        %v3290 = vld [vmem:[#allocation6 + $0x50] sm:$0xff]
        %v3291 = vld [vmem:[#allocation6 + $0x58] sm:$0xff]
        %v3292 = vld [vmem:[#allocation6 + $0x60] sm:$0xff]
        %v3293 = vld [vmem:[#allocation6 + $0x68] sm:$0xff]
        %v3294 = vld [vmem:[#allocation6 + $0x70] sm:$0xff]
        %v3295 = vld [vmem:[#allocation6 + $0x78] sm:$0xff]
        %s3296 = scalar_lea.vmem [#allocation13], 128
        %v3297 = vld [vmem:[%s3296] sm:$0xff]
        %v3298 = vld [vmem:[%s3296 + $0x8] sm:$0xff]
        %v3299 = vld [vmem:[%s3296 + $0x10] sm:$0xff]
        %v3300 = vld [vmem:[%s3296 + $0x18] sm:$0xff]
        %v3301 = vld [vmem:[%s3296 + $0x20] sm:$0xff]
        %v3302 = vld [vmem:[%s3296 + $0x28] sm:$0xff]
        %v3303 = vld [vmem:[%s3296 + $0x30] sm:$0xff]
        %v3304 = vld [vmem:[%s3296 + $0x38] sm:$0xff]
        %v3305 = vld [vmem:[%s3296 + $0x40] sm:$0xff]
        %v3306 = vld [vmem:[%s3296 + $0x48] sm:$0xff]
        %v3307 = vld [vmem:[%s3296 + $0x50] sm:$0xff]
        %v3308 = vld [vmem:[%s3296 + $0x58] sm:$0xff]
        %v3309 = vld [vmem:[%s3296 + $0x60] sm:$0xff]
        %v3310 = vld [vmem:[%s3296 + $0x68] sm:$0xff]
        %v3311 = vld [vmem:[%s3296 + $0x70] sm:$0xff]
        %v3312 = vld [vmem:[%s3296 + $0x78] sm:$0xff]
        %3313 = vmatprep.subr.mxu0 0.0
        %3314 = vmatpush1.msra.mxu0 %v3297
        %3315 = vmatprep.subr.mxu0 0.0
        %3316 = vmatpush1.msra.mxu0 %v3298
        %3317 = vmatprep.subr.mxu0 0.0
        %3318 = vmatpush1.msra.mxu0 %v3299
        %3319 = vmatprep.subr.mxu0 0.0
        %3320 = vmatpush1.msra.mxu0 %v3300
        %3321 = vmatprep.subr.mxu0 0.0
        %3322 = vmatpush1.msra.mxu0 %v3301
        %3323 = vmatprep.subr.mxu0 0.0
        %3324 = vmatpush1.msra.mxu0 %v3302
        %3325 = vmatprep.subr.mxu0 0.0
        %3326 = vmatpush1.msra.mxu0 %v3303
        %3327 = vmatprep.subr.mxu0 0.0
        %3328 = vmatpush1.msra.mxu0 %v3304
        %3329 = vmatprep.subr.mxu0 0.0
        %3330 = vmatpush1.msra.mxu0 %v3305
        %3331 = vmatprep.subr.mxu0 0.0
        %3332 = vmatpush1.msra.mxu0 %v3306
        %3333 = vmatprep.subr.mxu0 0.0
        %3334 = vmatpush1.msra.mxu0 %v3307
        %3335 = vmatprep.subr.mxu0 0.0
        %3336 = vmatpush1.msra.mxu0 %v3308
        %3337 = vmatprep.subr.mxu0 0.0
        %3338 = vmatpush1.msra.mxu0 %v3309
        %3339 = vmatprep.subr.mxu0 0.0
        %3340 = vmatpush1.msra.mxu0 %v3310
        %3341 = vmatprep.subr.mxu0 0.0
        %3342 = vmatpush1.msra.mxu0 %v3311
        %3343 = vmatprep.subr.mxu0 0.0
        %3344 = vmatpush1.msra.mxu0 %v3312
        %3345 = vmatprep.subr.mxu0 0.0
        %3346 = vmatpush1.msra.mxu0 0.0
        %3347 = vmatprep.subr.mxu0 0.0
        %3348 = vmatpush1.msra.mxu0 0.0
        %3349 = vmatprep.subr.mxu0 0.0
        %3350 = vmatpush1.msra.mxu0 0.0
        %3351 = vmatprep.subr.mxu0 0.0
        %3352 = vmatpush1.msra.mxu0 0.0
        %3353 = vmatprep.subr.mxu0 0.0
        %3354 = vmatpush1.msra.mxu0 0.0
        %3355 = vmatprep.subr.mxu0 0.0
        %3356 = vmatpush1.msra.mxu0 0.0
        %3357 = vmatprep.subr.mxu0 0.0
        %3358 = vmatpush1.msra.mxu0 0.0
        %3359 = vmatprep.subr.mxu0 0.0
        %3360 = vmatpush1.msra.mxu0 0.0
        %3361 = vmatprep.subr.mxu0 0.0
        %3362 = vmatpush1.msra.mxu0 0.0
        %3363 = vmatprep.subr.mxu0 0.0
        %3364 = vmatpush1.msra.mxu0 0.0
        %3365 = vmatprep.subr.mxu0 0.0
        %3366 = vmatpush1.msra.mxu0 0.0
        %3367 = vmatprep.subr.mxu0 0.0
        %3368 = vmatpush1.msra.mxu0 0.0
        %3369 = vmatprep.subr.mxu0 0.0
        %3370 = vmatpush1.msra.mxu0 0.0
        %3371 = vmatprep.subr.mxu0 0.0
        %3372 = vmatpush1.msra.mxu0 0.0
        %3373 = vmatprep.subr.mxu0 0.0
        %3374 = vmatpush1.msra.mxu0 0.0
        %3375 = vmatprep.subr.mxu0 0.0
        %3376 = vmatpush1.msra.mxu0 0.0
        %3377 = vmatprep.mubr.f32.mxu0 0.0
        %3378 = vmatmul.mubr.f32.gmra.mrb[0].mxu0 %v3264
        %v3379 = vpop.f32.mrb[0].mxu0
        %v3380 = vadd.f32 0.0, %v3379
        %v3381 = vpop.f32.mrb[0].mxu0
        %3382 = vmatprep.mubr.f32.mxu0 0.0
        %3383 = vmatmul.mubr.f32.gmra.mrb[0].mxu0 %v3265
        %v3384 = vpop.f32.mrb[0].mxu0
        %v3385 = vadd.f32 0.0, %v3384
        %v3386 = vpop.f32.mrb[0].mxu0
        %3387 = vmatprep.mubr.f32.mxu0 0.0
        %3388 = vmatmul.mubr.f32.gmra.mrb[0].mxu0 %v3266
        %v3389 = vpop.f32.mrb[0].mxu0
        %v3390 = vadd.f32 0.0, %v3389
        %v3391 = vpop.f32.mrb[0].mxu0
        %3392 = vmatprep.mubr.f32.mxu0 0.0
        %3393 = vmatmul.mubr.f32.gmra.mrb[0].mxu0 %v3267
        %v3394 = vpop.f32.mrb[0].mxu0
        %v3395 = vadd.f32 0.0, %v3394
        %v3396 = vpop.f32.mrb[0].mxu0
        %3397 = vmatprep.mubr.f32.mxu0 0.0
        %3398 = vmatmul.mubr.f32.gmra.mrb[0].mxu0 %v3268
        %v3399 = vpop.f32.mrb[0].mxu0
        %v3400 = vadd.f32 0.0, %v3399
        %v3401 = vpop.f32.mrb[0].mxu0
        %3402 = vmatprep.mubr.f32.mxu0 0.0
        %3403 = vmatmul.mubr.f32.gmra.mrb[0].mxu0 %v3269
        %v3404 = vpop.f32.mrb[0].mxu0
        %v3405 = vadd.f32 0.0, %v3404
        %v3406 = vpop.f32.mrb[0].mxu0
        %3407 = vmatprep.mubr.f32.mxu0 0.0
        %3408 = vmatmul.mubr.f32.gmra.mrb[0].mxu0 %v3270
        %v3409 = vpop.f32.mrb[0].mxu0
        %v3410 = vadd.f32 0.0, %v3409
        %v3411 = vpop.f32.mrb[0].mxu0
        %3412 = vmatprep.mubr.f32.mxu0 0.0
        %3413 = vmatmul.mubr.f32.gmra.mrb[0].mxu0 %v3271
        %v3414 = vpop.f32.mrb[0].mxu0
        %v3415 = vadd.f32 0.0, %v3414
        %v3416 = vpop.f32.mrb[0].mxu0
        %3417 = vmatprep.mubr.f32.mxu0 0.0
        %3418 = vmatmul.mubr.f32.gmra.mrb[0].mxu0 %v3272
        %v3419 = vpop.f32.mrb[0].mxu0
        %v3420 = vadd.f32 0.0, %v3419
        %v3421 = vpop.f32.mrb[0].mxu0
        %3422 = vmatprep.mubr.f32.mxu0 0.0
        %3423 = vmatmul.mubr.f32.gmra.mrb[0].mxu0 %v3273
        %v3424 = vpop.f32.mrb[0].mxu0
        %v3425 = vadd.f32 0.0, %v3424
        %v3426 = vpop.f32.mrb[0].mxu0
        %3427 = vmatprep.mubr.f32.mxu0 0.0
        %3428 = vmatmul.mubr.f32.gmra.mrb[0].mxu0 %v3274
        %v3429 = vpop.f32.mrb[0].mxu0
        %v3430 = vadd.f32 0.0, %v3429
        %v3431 = vpop.f32.mrb[0].mxu0
        %3432 = vmatprep.mubr.f32.mxu0 0.0
        %3433 = vmatmul.mubr.f32.gmra.mrb[0].mxu0 %v3275
        %v3434 = vpop.f32.mrb[0].mxu0
        %v3435 = vadd.f32 0.0, %v3434
        %v3436 = vpop.f32.mrb[0].mxu0
        %3437 = vmatprep.mubr.f32.mxu0 0.0
        %3438 = vmatmul.mubr.f32.gmra.mrb[0].mxu0 %v3276
        %v3439 = vpop.f32.mrb[0].mxu0
        %v3440 = vadd.f32 0.0, %v3439
        %v3441 = vpop.f32.mrb[0].mxu0
        %3442 = vmatprep.mubr.f32.mxu0 0.0
        %3443 = vmatmul.mubr.f32.gmra.mrb[0].mxu0 %v3277
        %v3444 = vpop.f32.mrb[0].mxu0
        %v3445 = vadd.f32 0.0, %v3444
        %v3446 = vpop.f32.mrb[0].mxu0
        %3447 = vmatprep.mubr.f32.mxu0 0.0
        %3448 = vmatmul.mubr.f32.gmra.mrb[0].mxu0 %v3278
        %v3449 = vpop.f32.mrb[0].mxu0
        %v3450 = vadd.f32 0.0, %v3449
        %v3451 = vpop.f32.mrb[0].mxu0
        %3452 = vmatprep.mubr.f32.mxu0 0.0
        %3453 = vmatmul.mubr.f32.gmra.mrb[0].mxu0 %v3279
        %v3454 = vpop.f32.mrb[0].mxu0
        %v3455 = vadd.f32 0.0, %v3454
        %v3456 = vpop.f32.mrb[0].mxu0
        %3457 = vdwg.mxu0
        %v3458 = vadd.f32 %v3280, %v3380
        %v3459 = vadd.f32 %v3281, %v3385
        %v3460 = vadd.f32 %v3282, %v3390
        %v3461 = vadd.f32 %v3283, %v3395
        %v3462 = vadd.f32 %v3284, %v3400
        %v3463 = vadd.f32 %v3285, %v3405
        %v3464 = vadd.f32 %v3286, %v3410
        %v3465 = vadd.f32 %v3287, %v3415
        %v3466 = vadd.f32 %v3288, %v3420
        %v3467 = vadd.f32 %v3289, %v3425
        %v3468 = vadd.f32 %v3290, %v3430
        %v3469 = vadd.f32 %v3291, %v3435
        %v3470 = vadd.f32 %v3292, %v3440
        %v3471 = vadd.f32 %v3293, %v3445
        %v3472 = vadd.f32 %v3294, %v3450
        %v3473 = vadd.f32 %v3295, %v3455
        %3474 = vst [vmem:[#allocation6] sm:$0xff] %v3458
        %3475 = vst [vmem:[#allocation6 + $0x8] sm:$0xff] %v3459
        %3476 = vst [vmem:[#allocation6 + $0x10] sm:$0xff] %v3460
        %3477 = vst [vmem:[#allocation6 + $0x18] sm:$0xff] %v3461
        %3478 = vst [vmem:[#allocation6 + $0x20] sm:$0xff] %v3462
        %3479 = vst [vmem:[#allocation6 + $0x28] sm:$0xff] %v3463
        %3480 = vst [vmem:[#allocation6 + $0x30] sm:$0xff] %v3464
        %3481 = vst [vmem:[#allocation6 + $0x38] sm:$0xff] %v3465
        %3482 = vst [vmem:[#allocation6 + $0x40] sm:$0xff] %v3466
        %3483 = vst [vmem:[#allocation6 + $0x48] sm:$0xff] %v3467
        %3484 = vst [vmem:[#allocation6 + $0x50] sm:$0xff] %v3468
        %3485 = vst [vmem:[#allocation6 + $0x58] sm:$0xff] %v3469
        %3486 = vst [vmem:[#allocation6 + $0x60] sm:$0xff] %v3470
        %3487 = vst [vmem:[#allocation6 + $0x68] sm:$0xff] %v3471
        %3488 = vst [vmem:[#allocation6 + $0x70] sm:$0xff] %v3472
        %3489 = vst [vmem:[#allocation6 + $0x78] sm:$0xff] %v3473
        %v3490 = vld [vmem:[%s3038 + $0x1e] sm:$0xff]
        %v3491 = vld [vmem:[%s3038 + $0x26] sm:$0xff]
        %v3492 = vld [vmem:[%s3038 + $0x56] sm:$0xff]
        %v3493 = vld [vmem:[%s3038 + $0x5e] sm:$0xff]
        %v3494 = vld [vmem:[%s3038 + $0x8e] sm:$0xff]
        %v3495 = vld [vmem:[%s3038 + $0x96] sm:$0xff]
        %v3496 = vld [vmem:[%s3038 + $0xc6] sm:$0xff]
        %v3497 = vld [vmem:[%s3038 + $0xce] sm:$0xff]
        %v3498 = vld [vmem:[%s3038 + $0xfe] sm:$0xff]
        %v3499 = vld [vmem:[%s3038 + $0x106] sm:$0xff]
        %v3500 = vld [vmem:[%s3038 + $0x136] sm:$0xff]
        %v3501 = vld [vmem:[%s3038 + $0x13e] sm:$0xff]
        %v3502 = vld [vmem:[%s3038 + $0x16e] sm:$0xff]
        %v3503 = vld [vmem:[%s3038 + $0x176] sm:$0xff]
        %v3504 = vld [vmem:[%s3038 + $0x1a6] sm:$0xff]
        %v3505 = vld [vmem:[%s3038 + $0x1ae] sm:$0xff]
        %v3506 = vld [vmem:[#allocation6] sm:$0xff]
        %v3507 = vld [vmem:[#allocation6 + $0x8] sm:$0xff]
        %v3508 = vld [vmem:[#allocation6 + $0x10] sm:$0xff]
        %v3509 = vld [vmem:[#allocation6 + $0x18] sm:$0xff]
        %v3510 = vld [vmem:[#allocation6 + $0x20] sm:$0xff]
        %v3511 = vld [vmem:[#allocation6 + $0x28] sm:$0xff]
        %v3512 = vld [vmem:[#allocation6 + $0x30] sm:$0xff]
        %v3513 = vld [vmem:[#allocation6 + $0x38] sm:$0xff]
        %v3514 = vld [vmem:[#allocation6 + $0x40] sm:$0xff]
        %v3515 = vld [vmem:[#allocation6 + $0x48] sm:$0xff]
        %v3516 = vld [vmem:[#allocation6 + $0x50] sm:$0xff]
        %v3517 = vld [vmem:[#allocation6 + $0x58] sm:$0xff]
        %v3518 = vld [vmem:[#allocation6 + $0x60] sm:$0xff]
        %v3519 = vld [vmem:[#allocation6 + $0x68] sm:$0xff]
        %v3520 = vld [vmem:[#allocation6 + $0x70] sm:$0xff]
        %v3521 = vld [vmem:[#allocation6 + $0x78] sm:$0xff]
        %s3522 = scalar_lea.vmem [#allocation13], 256
        %v3523 = vld [vmem:[%s3522] sm:$0xff]
        %v3524 = vld [vmem:[%s3522 + $0x8] sm:$0xff]
        %v3525 = vld [vmem:[%s3522 + $0x10] sm:$0xff]
        %v3526 = vld [vmem:[%s3522 + $0x18] sm:$0xff]
        %v3527 = vld [vmem:[%s3522 + $0x20] sm:$0xff]
        %v3528 = vld [vmem:[%s3522 + $0x28] sm:$0xff]
        %v3529 = vld [vmem:[%s3522 + $0x30] sm:$0xff]
        %v3530 = vld [vmem:[%s3522 + $0x38] sm:$0xff]
        %v3531 = vld [vmem:[%s3522 + $0x40] sm:$0xff]
        %v3532 = vld [vmem:[%s3522 + $0x48] sm:$0xff]
        %v3533 = vld [vmem:[%s3522 + $0x50] sm:$0xff]
        %v3534 = vld [vmem:[%s3522 + $0x58] sm:$0xff]
        %v3535 = vld [vmem:[%s3522 + $0x60] sm:$0xff]
        %v3536 = vld [vmem:[%s3522 + $0x68] sm:$0xff]
        %v3537 = vld [vmem:[%s3522 + $0x70] sm:$0xff]
        %v3538 = vld [vmem:[%s3522 + $0x78] sm:$0xff]
        %3539 = vmatprep.subr.mxu0 0.0
        %3540 = vmatpush1.msra.mxu0 %v3523
        %3541 = vmatprep.subr.mxu0 0.0
        %3542 = vmatpush1.msra.mxu0 %v3524
        %3543 = vmatprep.subr.mxu0 0.0
        %3544 = vmatpush1.msra.mxu0 %v3525
        %3545 = vmatprep.subr.mxu0 0.0
        %3546 = vmatpush1.msra.mxu0 %v3526
        %3547 = vmatprep.subr.mxu0 0.0
        %3548 = vmatpush1.msra.mxu0 %v3527
        %3549 = vmatprep.subr.mxu0 0.0
        %3550 = vmatpush1.msra.mxu0 %v3528
        %3551 = vmatprep.subr.mxu0 0.0
        %3552 = vmatpush1.msra.mxu0 %v3529
        %3553 = vmatprep.subr.mxu0 0.0
        %3554 = vmatpush1.msra.mxu0 %v3530
        %3555 = vmatprep.subr.mxu0 0.0
        %3556 = vmatpush1.msra.mxu0 %v3531
        %3557 = vmatprep.subr.mxu0 0.0
        %3558 = vmatpush1.msra.mxu0 %v3532
        %3559 = vmatprep.subr.mxu0 0.0
        %3560 = vmatpush1.msra.mxu0 %v3533
        %3561 = vmatprep.subr.mxu0 0.0
        %3562 = vmatpush1.msra.mxu0 %v3534
        %3563 = vmatprep.subr.mxu0 0.0
        %3564 = vmatpush1.msra.mxu0 %v3535
        %3565 = vmatprep.subr.mxu0 0.0
        %3566 = vmatpush1.msra.mxu0 %v3536
        %3567 = vmatprep.subr.mxu0 0.0
        %3568 = vmatpush1.msra.mxu0 %v3537
        %3569 = vmatprep.subr.mxu0 0.0
        %3570 = vmatpush1.msra.mxu0 %v3538
        %3571 = vmatprep.subr.mxu0 0.0
        %3572 = vmatpush1.msra.mxu0 0.0
        %3573 = vmatprep.subr.mxu0 0.0
        %3574 = vmatpush1.msra.mxu0 0.0
        %3575 = vmatprep.subr.mxu0 0.0
        %3576 = vmatpush1.msra.mxu0 0.0
        %3577 = vmatprep.subr.mxu0 0.0
        %3578 = vmatpush1.msra.mxu0 0.0
        %3579 = vmatprep.subr.mxu0 0.0
        %3580 = vmatpush1.msra.mxu0 0.0
        %3581 = vmatprep.subr.mxu0 0.0
        %3582 = vmatpush1.msra.mxu0 0.0
        %3583 = vmatprep.subr.mxu0 0.0
        %3584 = vmatpush1.msra.mxu0 0.0
        %3585 = vmatprep.subr.mxu0 0.0
        %3586 = vmatpush1.msra.mxu0 0.0
        %3587 = vmatprep.subr.mxu0 0.0
        %3588 = vmatpush1.msra.mxu0 0.0
        %3589 = vmatprep.subr.mxu0 0.0
        %3590 = vmatpush1.msra.mxu0 0.0
        %3591 = vmatprep.subr.mxu0 0.0
        %3592 = vmatpush1.msra.mxu0 0.0
        %3593 = vmatprep.subr.mxu0 0.0
        %3594 = vmatpush1.msra.mxu0 0.0
        %3595 = vmatprep.subr.mxu0 0.0
        %3596 = vmatpush1.msra.mxu0 0.0
        %3597 = vmatprep.subr.mxu0 0.0
        %3598 = vmatpush1.msra.mxu0 0.0
        %3599 = vmatprep.subr.mxu0 0.0
        %3600 = vmatpush1.msra.mxu0 0.0
        %3601 = vmatprep.subr.mxu0 0.0
        %3602 = vmatpush1.msra.mxu0 0.0
        %3603 = vmatprep.mubr.f32.mxu0 0.0
        %3604 = vmatmul.mubr.f32.gmra.mrb[0].mxu0 %v3490
        %v3605 = vpop.f32.mrb[0].mxu0
        %v3606 = vadd.f32 0.0, %v3605
        %v3607 = vpop.f32.mrb[0].mxu0
        %3608 = vmatprep.mubr.f32.mxu0 0.0
        %3609 = vmatmul.mubr.f32.gmra.mrb[0].mxu0 %v3491
        %v3610 = vpop.f32.mrb[0].mxu0
        %v3611 = vadd.f32 0.0, %v3610
        %v3612 = vpop.f32.mrb[0].mxu0
        %3613 = vmatprep.mubr.f32.mxu0 0.0
        %3614 = vmatmul.mubr.f32.gmra.mrb[0].mxu0 %v3492
        %v3615 = vpop.f32.mrb[0].mxu0
        %v3616 = vadd.f32 0.0, %v3615
        %v3617 = vpop.f32.mrb[0].mxu0
        %3618 = vmatprep.mubr.f32.mxu0 0.0
        %3619 = vmatmul.mubr.f32.gmra.mrb[0].mxu0 %v3493
        %v3620 = vpop.f32.mrb[0].mxu0
        %v3621 = vadd.f32 0.0, %v3620
        %v3622 = vpop.f32.mrb[0].mxu0
        %3623 = vmatprep.mubr.f32.mxu0 0.0
        %3624 = vmatmul.mubr.f32.gmra.mrb[0].mxu0 %v3494
        %v3625 = vpop.f32.mrb[0].mxu0
        %v3626 = vadd.f32 0.0, %v3625
        %v3627 = vpop.f32.mrb[0].mxu0
        %3628 = vmatprep.mubr.f32.mxu0 0.0
        %3629 = vmatmul.mubr.f32.gmra.mrb[0].mxu0 %v3495
        %v3630 = vpop.f32.mrb[0].mxu0
        %v3631 = vadd.f32 0.0, %v3630
        %v3632 = vpop.f32.mrb[0].mxu0
        %3633 = vmatprep.mubr.f32.mxu0 0.0
        %3634 = vmatmul.mubr.f32.gmra.mrb[0].mxu0 %v3496
        %v3635 = vpop.f32.mrb[0].mxu0
        %v3636 = vadd.f32 0.0, %v3635
        %v3637 = vpop.f32.mrb[0].mxu0
        %3638 = vmatprep.mubr.f32.mxu0 0.0
        %3639 = vmatmul.mubr.f32.gmra.mrb[0].mxu0 %v3497
        %v3640 = vpop.f32.mrb[0].mxu0
        %v3641 = vadd.f32 0.0, %v3640
        %v3642 = vpop.f32.mrb[0].mxu0
        %3643 = vmatprep.mubr.f32.mxu0 0.0
        %3644 = vmatmul.mubr.f32.gmra.mrb[0].mxu0 %v3498
        %v3645 = vpop.f32.mrb[0].mxu0
        %v3646 = vadd.f32 0.0, %v3645
        %v3647 = vpop.f32.mrb[0].mxu0
        %3648 = vmatprep.mubr.f32.mxu0 0.0
        %3649 = vmatmul.mubr.f32.gmra.mrb[0].mxu0 %v3499
        %v3650 = vpop.f32.mrb[0].mxu0
        %v3651 = vadd.f32 0.0, %v3650
        %v3652 = vpop.f32.mrb[0].mxu0
        %3653 = vmatprep.mubr.f32.mxu0 0.0
        %3654 = vmatmul.mubr.f32.gmra.mrb[0].mxu0 %v3500
        %v3655 = vpop.f32.mrb[0].mxu0
        %v3656 = vadd.f32 0.0, %v3655
        %v3657 = vpop.f32.mrb[0].mxu0
        %3658 = vmatprep.mubr.f32.mxu0 0.0
        %3659 = vmatmul.mubr.f32.gmra.mrb[0].mxu0 %v3501
        %v3660 = vpop.f32.mrb[0].mxu0
        %v3661 = vadd.f32 0.0, %v3660
        %v3662 = vpop.f32.mrb[0].mxu0
        %3663 = vmatprep.mubr.f32.mxu0 0.0
        %3664 = vmatmul.mubr.f32.gmra.mrb[0].mxu0 %v3502
        %v3665 = vpop.f32.mrb[0].mxu0
        %v3666 = vadd.f32 0.0, %v3665
        %v3667 = vpop.f32.mrb[0].mxu0
        %3668 = vmatprep.mubr.f32.mxu0 0.0
        %3669 = vmatmul.mubr.f32.gmra.mrb[0].mxu0 %v3503
        %v3670 = vpop.f32.mrb[0].mxu0
        %v3671 = vadd.f32 0.0, %v3670
        %v3672 = vpop.f32.mrb[0].mxu0
        %3673 = vmatprep.mubr.f32.mxu0 0.0
        %3674 = vmatmul.mubr.f32.gmra.mrb[0].mxu0 %v3504
        %v3675 = vpop.f32.mrb[0].mxu0
        %v3676 = vadd.f32 0.0, %v3675
        %v3677 = vpop.f32.mrb[0].mxu0
        %3678 = vmatprep.mubr.f32.mxu0 0.0
        %3679 = vmatmul.mubr.f32.gmra.mrb[0].mxu0 %v3505
        %v3680 = vpop.f32.mrb[0].mxu0
        %v3681 = vadd.f32 0.0, %v3680
        %v3682 = vpop.f32.mrb[0].mxu0
        %3683 = vdwg.mxu0
        %v3684 = vadd.f32 %v3506, %v3606
        %v3685 = vadd.f32 %v3507, %v3611
        %v3686 = vadd.f32 %v3508, %v3616
        %v3687 = vadd.f32 %v3509, %v3621
        %v3688 = vadd.f32 %v3510, %v3626
        %v3689 = vadd.f32 %v3511, %v3631
        %v3690 = vadd.f32 %v3512, %v3636
        %v3691 = vadd.f32 %v3513, %v3641
        %v3692 = vadd.f32 %v3514, %v3646
        %v3693 = vadd.f32 %v3515, %v3651
        %v3694 = vadd.f32 %v3516, %v3656
        %v3695 = vadd.f32 %v3517, %v3661
        %v3696 = vadd.f32 %v3518, %v3666
        %v3697 = vadd.f32 %v3519, %v3671
        %v3698 = vadd.f32 %v3520, %v3676
        %v3699 = vadd.f32 %v3521, %v3681
        %3700 = vst [vmem:[#allocation6] sm:$0xff] %v3684
        %3701 = vst [vmem:[#allocation6 + $0x8] sm:$0xff] %v3685
        %3702 = vst [vmem:[#allocation6 + $0x10] sm:$0xff] %v3686
        %3703 = vst [vmem:[#allocation6 + $0x18] sm:$0xff] %v3687
        %3704 = vst [vmem:[#allocation6 + $0x20] sm:$0xff] %v3688
        %3705 = vst [vmem:[#allocation6 + $0x28] sm:$0xff] %v3689
        %3706 = vst [vmem:[#allocation6 + $0x30] sm:$0xff] %v3690
        %3707 = vst [vmem:[#allocation6 + $0x38] sm:$0xff] %v3691
        %3708 = vst [vmem:[#allocation6 + $0x40] sm:$0xff] %v3692
        %3709 = vst [vmem:[#allocation6 + $0x48] sm:$0xff] %v3693
        %3710 = vst [vmem:[#allocation6 + $0x50] sm:$0xff] %v3694
        %3711 = vst [vmem:[#allocation6 + $0x58] sm:$0xff] %v3695
        %3712 = vst [vmem:[#allocation6 + $0x60] sm:$0xff] %v3696
        %3713 = vst [vmem:[#allocation6 + $0x68] sm:$0xff] %v3697
        %3714 = vst [vmem:[#allocation6 + $0x70] sm:$0xff] %v3698
        %3715 = vst [vmem:[#allocation6 + $0x78] sm:$0xff] %v3699
        %v3716 = vld [vmem:[%s749 + $0x6] sm:$0xff]
        %v3717 = vld [vmem:[%s749 + $0xe] sm:$0xff]
        %v3718 = vld [vmem:[%s749 + $0x3e] sm:$0xff]
        %v3719 = vld [vmem:[%s749 + $0x46] sm:$0xff]
        %v3720 = vld [vmem:[%s749 + $0x76] sm:$0xff]
        %v3721 = vld [vmem:[%s749 + $0x7e] sm:$0xff]
        %v3722 = vld [vmem:[%s749 + $0xae] sm:$0xff]
        %v3723 = vld [vmem:[%s749 + $0xb6] sm:$0xff]
        %v3724 = vld [vmem:[%s749 + $0xe6] sm:$0xff]
        %v3725 = vld [vmem:[%s749 + $0xee] sm:$0xff]
        %v3726 = vld [vmem:[%s749 + $0x11e] sm:$0xff]
        %v3727 = vld [vmem:[%s749 + $0x126] sm:$0xff]
        %v3728 = vld [vmem:[%s749 + $0x156] sm:$0xff]
        %v3729 = vld [vmem:[%s749 + $0x15e] sm:$0xff]
        %v3730 = vld [vmem:[%s749 + $0x18e] sm:$0xff]
        %v3731 = vld [vmem:[%s749 + $0x196] sm:$0xff]
        %v3732 = vld [vmem:[#allocation6] sm:$0xff]
        %v3733 = vld [vmem:[#allocation6 + $0x8] sm:$0xff]
        %v3734 = vld [vmem:[#allocation6 + $0x10] sm:$0xff]
        %v3735 = vld [vmem:[#allocation6 + $0x18] sm:$0xff]
        %v3736 = vld [vmem:[#allocation6 + $0x20] sm:$0xff]
        %v3737 = vld [vmem:[#allocation6 + $0x28] sm:$0xff]
        %v3738 = vld [vmem:[#allocation6 + $0x30] sm:$0xff]
        %v3739 = vld [vmem:[#allocation6 + $0x38] sm:$0xff]
        %v3740 = vld [vmem:[#allocation6 + $0x40] sm:$0xff]
        %v3741 = vld [vmem:[#allocation6 + $0x48] sm:$0xff]
        %v3742 = vld [vmem:[#allocation6 + $0x50] sm:$0xff]
        %v3743 = vld [vmem:[#allocation6 + $0x58] sm:$0xff]
        %v3744 = vld [vmem:[#allocation6 + $0x60] sm:$0xff]
        %v3745 = vld [vmem:[#allocation6 + $0x68] sm:$0xff]
        %v3746 = vld [vmem:[#allocation6 + $0x70] sm:$0xff]
        %v3747 = vld [vmem:[#allocation6 + $0x78] sm:$0xff]
        %s3748 = scalar_lea.vmem [#allocation13], 384
        %v3749 = vld [vmem:[%s3748] sm:$0xff]
        %v3750 = vld [vmem:[%s3748 + $0x8] sm:$0xff]
        %v3751 = vld [vmem:[%s3748 + $0x10] sm:$0xff]
        %v3752 = vld [vmem:[%s3748 + $0x18] sm:$0xff]
        %v3753 = vld [vmem:[%s3748 + $0x20] sm:$0xff]
        %v3754 = vld [vmem:[%s3748 + $0x28] sm:$0xff]
        %v3755 = vld [vmem:[%s3748 + $0x30] sm:$0xff]
        %v3756 = vld [vmem:[%s3748 + $0x38] sm:$0xff]
        %v3757 = vld [vmem:[%s3748 + $0x40] sm:$0xff]
        %v3758 = vld [vmem:[%s3748 + $0x48] sm:$0xff]
        %v3759 = vld [vmem:[%s3748 + $0x50] sm:$0xff]
        %v3760 = vld [vmem:[%s3748 + $0x58] sm:$0xff]
        %v3761 = vld [vmem:[%s3748 + $0x60] sm:$0xff]
        %v3762 = vld [vmem:[%s3748 + $0x68] sm:$0xff]
        %v3763 = vld [vmem:[%s3748 + $0x70] sm:$0xff]
        %v3764 = vld [vmem:[%s3748 + $0x78] sm:$0xff]
        %3765 = vmatprep.subr.mxu0 0.0
        %3766 = vmatpush1.msra.mxu0 %v3749
        %3767 = vmatprep.subr.mxu0 0.0
        %3768 = vmatpush1.msra.mxu0 %v3750
        %3769 = vmatprep.subr.mxu0 0.0
        %3770 = vmatpush1.msra.mxu0 %v3751
        %3771 = vmatprep.subr.mxu0 0.0
        %3772 = vmatpush1.msra.mxu0 %v3752
        %3773 = vmatprep.subr.mxu0 0.0
        %3774 = vmatpush1.msra.mxu0 %v3753
        %3775 = vmatprep.subr.mxu0 0.0
        %3776 = vmatpush1.msra.mxu0 %v3754
        %3777 = vmatprep.subr.mxu0 0.0
        %3778 = vmatpush1.msra.mxu0 %v3755
        %3779 = vmatprep.subr.mxu0 0.0
        %3780 = vmatpush1.msra.mxu0 %v3756
        %3781 = vmatprep.subr.mxu0 0.0
        %3782 = vmatpush1.msra.mxu0 %v3757
        %3783 = vmatprep.subr.mxu0 0.0
        %3784 = vmatpush1.msra.mxu0 %v3758
        %3785 = vmatprep.subr.mxu0 0.0
        %3786 = vmatpush1.msra.mxu0 %v3759
        %3787 = vmatprep.subr.mxu0 0.0
        %3788 = vmatpush1.msra.mxu0 %v3760
        %3789 = vmatprep.subr.mxu0 0.0
        %3790 = vmatpush1.msra.mxu0 %v3761
        %3791 = vmatprep.subr.mxu0 0.0
        %3792 = vmatpush1.msra.mxu0 %v3762
        %3793 = vmatprep.subr.mxu0 0.0
        %3794 = vmatpush1.msra.mxu0 %v3763
        %3795 = vmatprep.subr.mxu0 0.0
        %3796 = vmatpush1.msra.mxu0 %v3764
        %3797 = vmatprep.subr.mxu0 0.0
        %3798 = vmatpush1.msra.mxu0 0.0
        %3799 = vmatprep.subr.mxu0 0.0
        %3800 = vmatpush1.msra.mxu0 0.0
        %3801 = vmatprep.subr.mxu0 0.0
        %3802 = vmatpush1.msra.mxu0 0.0
        %3803 = vmatprep.subr.mxu0 0.0
        %3804 = vmatpush1.msra.mxu0 0.0
        %3805 = vmatprep.subr.mxu0 0.0
        %3806 = vmatpush1.msra.mxu0 0.0
        %3807 = vmatprep.subr.mxu0 0.0
        %3808 = vmatpush1.msra.mxu0 0.0
        %3809 = vmatprep.subr.mxu0 0.0
        %3810 = vmatpush1.msra.mxu0 0.0
        %3811 = vmatprep.subr.mxu0 0.0
        %3812 = vmatpush1.msra.mxu0 0.0
        %3813 = vmatprep.subr.mxu0 0.0
        %3814 = vmatpush1.msra.mxu0 0.0
        %3815 = vmatprep.subr.mxu0 0.0
        %3816 = vmatpush1.msra.mxu0 0.0
        %3817 = vmatprep.subr.mxu0 0.0
        %3818 = vmatpush1.msra.mxu0 0.0
        %3819 = vmatprep.subr.mxu0 0.0
        %3820 = vmatpush1.msra.mxu0 0.0
        %3821 = vmatprep.subr.mxu0 0.0
        %3822 = vmatpush1.msra.mxu0 0.0
        %3823 = vmatprep.subr.mxu0 0.0
        %3824 = vmatpush1.msra.mxu0 0.0
        %3825 = vmatprep.subr.mxu0 0.0
        %3826 = vmatpush1.msra.mxu0 0.0
        %3827 = vmatprep.subr.mxu0 0.0
        %3828 = vmatpush1.msra.mxu0 0.0
        %3829 = vmatprep.mubr.f32.mxu0 0.0
        %3830 = vmatmul.mubr.f32.gmra.mrb[0].mxu0 %v3716
        %v3831 = vpop.f32.mrb[0].mxu0
        %v3832 = vadd.f32 0.0, %v3831
        %v3833 = vpop.f32.mrb[0].mxu0
        %3834 = vmatprep.mubr.f32.mxu0 0.0
        %3835 = vmatmul.mubr.f32.gmra.mrb[0].mxu0 %v3717
        %v3836 = vpop.f32.mrb[0].mxu0
        %v3837 = vadd.f32 0.0, %v3836
        %v3838 = vpop.f32.mrb[0].mxu0
        %3839 = vmatprep.mubr.f32.mxu0 0.0
        %3840 = vmatmul.mubr.f32.gmra.mrb[0].mxu0 %v3718
        %v3841 = vpop.f32.mrb[0].mxu0
        %v3842 = vadd.f32 0.0, %v3841
        %v3843 = vpop.f32.mrb[0].mxu0
        %3844 = vmatprep.mubr.f32.mxu0 0.0
        %3845 = vmatmul.mubr.f32.gmra.mrb[0].mxu0 %v3719
        %v3846 = vpop.f32.mrb[0].mxu0
        %v3847 = vadd.f32 0.0, %v3846
        %v3848 = vpop.f32.mrb[0].mxu0
        %3849 = vmatprep.mubr.f32.mxu0 0.0
        %3850 = vmatmul.mubr.f32.gmra.mrb[0].mxu0 %v3720
        %v3851 = vpop.f32.mrb[0].mxu0
        %v3852 = vadd.f32 0.0, %v3851
        %v3853 = vpop.f32.mrb[0].mxu0
        %3854 = vmatprep.mubr.f32.mxu0 0.0
        %3855 = vmatmul.mubr.f32.gmra.mrb[0].mxu0 %v3721
        %v3856 = vpop.f32.mrb[0].mxu0
        %v3857 = vadd.f32 0.0, %v3856
        %v3858 = vpop.f32.mrb[0].mxu0
        %3859 = vmatprep.mubr.f32.mxu0 0.0
        %3860 = vmatmul.mubr.f32.gmra.mrb[0].mxu0 %v3722
        %v3861 = vpop.f32.mrb[0].mxu0
        %v3862 = vadd.f32 0.0, %v3861
        %v3863 = vpop.f32.mrb[0].mxu0
        %3864 = vmatprep.mubr.f32.mxu0 0.0
        %3865 = vmatmul.mubr.f32.gmra.mrb[0].mxu0 %v3723
        %v3866 = vpop.f32.mrb[0].mxu0
        %v3867 = vadd.f32 0.0, %v3866
        %v3868 = vpop.f32.mrb[0].mxu0
        %3869 = vmatprep.mubr.f32.mxu0 0.0
        %3870 = vmatmul.mubr.f32.gmra.mrb[0].mxu0 %v3724
        %v3871 = vpop.f32.mrb[0].mxu0
        %v3872 = vadd.f32 0.0, %v3871
        %v3873 = vpop.f32.mrb[0].mxu0
        %3874 = vmatprep.mubr.f32.mxu0 0.0
        %3875 = vmatmul.mubr.f32.gmra.mrb[0].mxu0 %v3725
        %v3876 = vpop.f32.mrb[0].mxu0
        %v3877 = vadd.f32 0.0, %v3876
        %v3878 = vpop.f32.mrb[0].mxu0
        %3879 = vmatprep.mubr.f32.mxu0 0.0
        %3880 = vmatmul.mubr.f32.gmra.mrb[0].mxu0 %v3726
        %v3881 = vpop.f32.mrb[0].mxu0
        %v3882 = vadd.f32 0.0, %v3881
        %v3883 = vpop.f32.mrb[0].mxu0
        %3884 = vmatprep.mubr.f32.mxu0 0.0
        %3885 = vmatmul.mubr.f32.gmra.mrb[0].mxu0 %v3727
        %v3886 = vpop.f32.mrb[0].mxu0
        %v3887 = vadd.f32 0.0, %v3886
        %v3888 = vpop.f32.mrb[0].mxu0
        %3889 = vmatprep.mubr.f32.mxu0 0.0
        %3890 = vmatmul.mubr.f32.gmra.mrb[0].mxu0 %v3728
        %v3891 = vpop.f32.mrb[0].mxu0
        %v3892 = vadd.f32 0.0, %v3891
        %v3893 = vpop.f32.mrb[0].mxu0
        %3894 = vmatprep.mubr.f32.mxu0 0.0
        %3895 = vmatmul.mubr.f32.gmra.mrb[0].mxu0 %v3729
        %v3896 = vpop.f32.mrb[0].mxu0
        %v3897 = vadd.f32 0.0, %v3896
        %v3898 = vpop.f32.mrb[0].mxu0
        %3899 = vmatprep.mubr.f32.mxu0 0.0
        %3900 = vmatmul.mubr.f32.gmra.mrb[0].mxu0 %v3730
        %v3901 = vpop.f32.mrb[0].mxu0
        %v3902 = vadd.f32 0.0, %v3901
        %v3903 = vpop.f32.mrb[0].mxu0
        %3904 = vmatprep.mubr.f32.mxu0 0.0
        %3905 = vmatmul.mubr.f32.gmra.mrb[0].mxu0 %v3731
        %v3906 = vpop.f32.mrb[0].mxu0
        %v3907 = vadd.f32 0.0, %v3906
        %v3908 = vpop.f32.mrb[0].mxu0
        %3909 = vdwg.mxu0
        %v3910 = vadd.f32 %v3732, %v3832
        %v3911 = vadd.f32 %v3733, %v3837
        %v3912 = vadd.f32 %v3734, %v3842
        %v3913 = vadd.f32 %v3735, %v3847
        %v3914 = vadd.f32 %v3736, %v3852
        %v3915 = vadd.f32 %v3737, %v3857
        %v3916 = vadd.f32 %v3738, %v3862
        %v3917 = vadd.f32 %v3739, %v3867
        %v3918 = vadd.f32 %v3740, %v3872
        %v3919 = vadd.f32 %v3741, %v3877
        %v3920 = vadd.f32 %v3742, %v3882
        %v3921 = vadd.f32 %v3743, %v3887
        %v3922 = vadd.f32 %v3744, %v3892
        %v3923 = vadd.f32 %v3745, %v3897
        %v3924 = vadd.f32 %v3746, %v3902
        %v3925 = vadd.f32 %v3747, %v3907
        %3926 = vst [vmem:[#allocation6] sm:$0xff] %v3910
        %3927 = vst [vmem:[#allocation6 + $0x8] sm:$0xff] %v3911
        %3928 = vst [vmem:[#allocation6 + $0x10] sm:$0xff] %v3912
        %3929 = vst [vmem:[#allocation6 + $0x18] sm:$0xff] %v3913
        %3930 = vst [vmem:[#allocation6 + $0x20] sm:$0xff] %v3914
        %3931 = vst [vmem:[#allocation6 + $0x28] sm:$0xff] %v3915
        %3932 = vst [vmem:[#allocation6 + $0x30] sm:$0xff] %v3916
        %3933 = vst [vmem:[#allocation6 + $0x38] sm:$0xff] %v3917
        %3934 = vst [vmem:[#allocation6 + $0x40] sm:$0xff] %v3918
        %3935 = vst [vmem:[#allocation6 + $0x48] sm:$0xff] %v3919
        %3936 = vst [vmem:[#allocation6 + $0x50] sm:$0xff] %v3920
        %3937 = vst [vmem:[#allocation6 + $0x58] sm:$0xff] %v3921
        %3938 = vst [vmem:[#allocation6 + $0x60] sm:$0xff] %v3922
        %3939 = vst [vmem:[#allocation6 + $0x68] sm:$0xff] %v3923
        %3940 = vst [vmem:[#allocation6 + $0x70] sm:$0xff] %v3924
        %3941 = vst [vmem:[#allocation6 + $0x78] sm:$0xff] %v3925
        %v3942 = vld [vmem:[%s749 + $0x12] sm:$0xff]
        %v3943 = vld [vmem:[%s749 + $0x1a] sm:$0xff]
        %v3944 = vld [vmem:[%s749 + $0x4a] sm:$0xff]
        %v3945 = vld [vmem:[%s749 + $0x52] sm:$0xff]
        %v3946 = vld [vmem:[%s749 + $0x82] sm:$0xff]
        %v3947 = vld [vmem:[%s749 + $0x8a] sm:$0xff]
        %v3948 = vld [vmem:[%s749 + $0xba] sm:$0xff]
        %v3949 = vld [vmem:[%s749 + $0xc2] sm:$0xff]
        %v3950 = vld [vmem:[%s749 + $0xf2] sm:$0xff]
        %v3951 = vld [vmem:[%s749 + $0xfa] sm:$0xff]
        %v3952 = vld [vmem:[%s749 + $0x12a] sm:$0xff]
        %v3953 = vld [vmem:[%s749 + $0x132] sm:$0xff]
        %v3954 = vld [vmem:[%s749 + $0x162] sm:$0xff]
        %v3955 = vld [vmem:[%s749 + $0x16a] sm:$0xff]
        %v3956 = vld [vmem:[%s749 + $0x19a] sm:$0xff]
        %v3957 = vld [vmem:[%s749 + $0x1a2] sm:$0xff]
        %v3958 = vld [vmem:[#allocation6] sm:$0xff]
        %v3959 = vld [vmem:[#allocation6 + $0x8] sm:$0xff]
        %v3960 = vld [vmem:[#allocation6 + $0x10] sm:$0xff]
        %v3961 = vld [vmem:[#allocation6 + $0x18] sm:$0xff]
        %v3962 = vld [vmem:[#allocation6 + $0x20] sm:$0xff]
        %v3963 = vld [vmem:[#allocation6 + $0x28] sm:$0xff]
        %v3964 = vld [vmem:[#allocation6 + $0x30] sm:$0xff]
        %v3965 = vld [vmem:[#allocation6 + $0x38] sm:$0xff]
        %v3966 = vld [vmem:[#allocation6 + $0x40] sm:$0xff]
        %v3967 = vld [vmem:[#allocation6 + $0x48] sm:$0xff]
        %v3968 = vld [vmem:[#allocation6 + $0x50] sm:$0xff]
        %v3969 = vld [vmem:[#allocation6 + $0x58] sm:$0xff]
        %v3970 = vld [vmem:[#allocation6 + $0x60] sm:$0xff]
        %v3971 = vld [vmem:[#allocation6 + $0x68] sm:$0xff]
        %v3972 = vld [vmem:[#allocation6 + $0x70] sm:$0xff]
        %v3973 = vld [vmem:[#allocation6 + $0x78] sm:$0xff]
        %s3974 = scalar_lea.vmem [#allocation13], 512
        %v3975 = vld [vmem:[%s3974] sm:$0xff]
        %v3976 = vld [vmem:[%s3974 + $0x8] sm:$0xff]
        %v3977 = vld [vmem:[%s3974 + $0x10] sm:$0xff]
        %v3978 = vld [vmem:[%s3974 + $0x18] sm:$0xff]
        %v3979 = vld [vmem:[%s3974 + $0x20] sm:$0xff]
        %v3980 = vld [vmem:[%s3974 + $0x28] sm:$0xff]
        %v3981 = vld [vmem:[%s3974 + $0x30] sm:$0xff]
        %v3982 = vld [vmem:[%s3974 + $0x38] sm:$0xff]
        %v3983 = vld [vmem:[%s3974 + $0x40] sm:$0xff]
        %v3984 = vld [vmem:[%s3974 + $0x48] sm:$0xff]
        %v3985 = vld [vmem:[%s3974 + $0x50] sm:$0xff]
        %v3986 = vld [vmem:[%s3974 + $0x58] sm:$0xff]
        %v3987 = vld [vmem:[%s3974 + $0x60] sm:$0xff]
        %v3988 = vld [vmem:[%s3974 + $0x68] sm:$0xff]
        %v3989 = vld [vmem:[%s3974 + $0x70] sm:$0xff]
        %v3990 = vld [vmem:[%s3974 + $0x78] sm:$0xff]
        %3991 = vmatprep.subr.mxu0 0.0
        %3992 = vmatpush1.msra.mxu0 %v3975
        %3993 = vmatprep.subr.mxu0 0.0
        %3994 = vmatpush1.msra.mxu0 %v3976
        %3995 = vmatprep.subr.mxu0 0.0
        %3996 = vmatpush1.msra.mxu0 %v3977
        %3997 = vmatprep.subr.mxu0 0.0
        %3998 = vmatpush1.msra.mxu0 %v3978
        %3999 = vmatprep.subr.mxu0 0.0
        %4000 = vmatpush1.msra.mxu0 %v3979
        %4001 = vmatprep.subr.mxu0 0.0
        %4002 = vmatpush1.msra.mxu0 %v3980
        %4003 = vmatprep.subr.mxu0 0.0
        %4004 = vmatpush1.msra.mxu0 %v3981
        %4005 = vmatprep.subr.mxu0 0.0
        %4006 = vmatpush1.msra.mxu0 %v3982
        %4007 = vmatprep.subr.mxu0 0.0
        %4008 = vmatpush1.msra.mxu0 %v3983
        %4009 = vmatprep.subr.mxu0 0.0
        %4010 = vmatpush1.msra.mxu0 %v3984
        %4011 = vmatprep.subr.mxu0 0.0
        %4012 = vmatpush1.msra.mxu0 %v3985
        %4013 = vmatprep.subr.mxu0 0.0
        %4014 = vmatpush1.msra.mxu0 %v3986
        %4015 = vmatprep.subr.mxu0 0.0
        %4016 = vmatpush1.msra.mxu0 %v3987
        %4017 = vmatprep.subr.mxu0 0.0
        %4018 = vmatpush1.msra.mxu0 %v3988
        %4019 = vmatprep.subr.mxu0 0.0
        %4020 = vmatpush1.msra.mxu0 %v3989
        %4021 = vmatprep.subr.mxu0 0.0
        %4022 = vmatpush1.msra.mxu0 %v3990
        %4023 = vmatprep.subr.mxu0 0.0
        %4024 = vmatpush1.msra.mxu0 0.0
        %4025 = vmatprep.subr.mxu0 0.0
        %4026 = vmatpush1.msra.mxu0 0.0
        %4027 = vmatprep.subr.mxu0 0.0
        %4028 = vmatpush1.msra.mxu0 0.0
        %4029 = vmatprep.subr.mxu0 0.0
        %4030 = vmatpush1.msra.mxu0 0.0
        %4031 = vmatprep.subr.mxu0 0.0
        %4032 = vmatpush1.msra.mxu0 0.0
        %4033 = vmatprep.subr.mxu0 0.0
        %4034 = vmatpush1.msra.mxu0 0.0
        %4035 = vmatprep.subr.mxu0 0.0
        %4036 = vmatpush1.msra.mxu0 0.0
        %4037 = vmatprep.subr.mxu0 0.0
        %4038 = vmatpush1.msra.mxu0 0.0
        %4039 = vmatprep.subr.mxu0 0.0
        %4040 = vmatpush1.msra.mxu0 0.0
        %4041 = vmatprep.subr.mxu0 0.0
        %4042 = vmatpush1.msra.mxu0 0.0
        %4043 = vmatprep.subr.mxu0 0.0
        %4044 = vmatpush1.msra.mxu0 0.0
        %4045 = vmatprep.subr.mxu0 0.0
        %4046 = vmatpush1.msra.mxu0 0.0
        %4047 = vmatprep.subr.mxu0 0.0
        %4048 = vmatpush1.msra.mxu0 0.0
        %4049 = vmatprep.subr.mxu0 0.0
        %4050 = vmatpush1.msra.mxu0 0.0
        %4051 = vmatprep.subr.mxu0 0.0
        %4052 = vmatpush1.msra.mxu0 0.0
        %4053 = vmatprep.subr.mxu0 0.0
        %4054 = vmatpush1.msra.mxu0 0.0
        %4055 = vmatprep.mubr.f32.mxu0 0.0
        %4056 = vmatmul.mubr.f32.gmra.mrb[0].mxu0 %v3942
        %v4057 = vpop.f32.mrb[0].mxu0
        %v4058 = vadd.f32 0.0, %v4057
        %v4059 = vpop.f32.mrb[0].mxu0
        %4060 = vmatprep.mubr.f32.mxu0 0.0
        %4061 = vmatmul.mubr.f32.gmra.mrb[0].mxu0 %v3943
        %v4062 = vpop.f32.mrb[0].mxu0
        %v4063 = vadd.f32 0.0, %v4062
        %v4064 = vpop.f32.mrb[0].mxu0
        %4065 = vmatprep.mubr.f32.mxu0 0.0
        %4066 = vmatmul.mubr.f32.gmra.mrb[0].mxu0 %v3944
        %v4067 = vpop.f32.mrb[0].mxu0
        %v4068 = vadd.f32 0.0, %v4067
        %v4069 = vpop.f32.mrb[0].mxu0
        %4070 = vmatprep.mubr.f32.mxu0 0.0
        %4071 = vmatmul.mubr.f32.gmra.mrb[0].mxu0 %v3945
        %v4072 = vpop.f32.mrb[0].mxu0
        %v4073 = vadd.f32 0.0, %v4072
        %v4074 = vpop.f32.mrb[0].mxu0
        %4075 = vmatprep.mubr.f32.mxu0 0.0
        %4076 = vmatmul.mubr.f32.gmra.mrb[0].mxu0 %v3946
        %v4077 = vpop.f32.mrb[0].mxu0
        %v4078 = vadd.f32 0.0, %v4077
        %v4079 = vpop.f32.mrb[0].mxu0
        %4080 = vmatprep.mubr.f32.mxu0 0.0
        %4081 = vmatmul.mubr.f32.gmra.mrb[0].mxu0 %v3947
        %v4082 = vpop.f32.mrb[0].mxu0
        %v4083 = vadd.f32 0.0, %v4082
        %v4084 = vpop.f32.mrb[0].mxu0
        %4085 = vmatprep.mubr.f32.mxu0 0.0
        %4086 = vmatmul.mubr.f32.gmra.mrb[0].mxu0 %v3948
        %v4087 = vpop.f32.mrb[0].mxu0
        %v4088 = vadd.f32 0.0, %v4087
        %v4089 = vpop.f32.mrb[0].mxu0
        %4090 = vmatprep.mubr.f32.mxu0 0.0
        %4091 = vmatmul.mubr.f32.gmra.mrb[0].mxu0 %v3949
        %v4092 = vpop.f32.mrb[0].mxu0
        %v4093 = vadd.f32 0.0, %v4092
        %v4094 = vpop.f32.mrb[0].mxu0
        %4095 = vmatprep.mubr.f32.mxu0 0.0
        %4096 = vmatmul.mubr.f32.gmra.mrb[0].mxu0 %v3950
        %v4097 = vpop.f32.mrb[0].mxu0
        %v4098 = vadd.f32 0.0, %v4097
        %v4099 = vpop.f32.mrb[0].mxu0
        %4100 = vmatprep.mubr.f32.mxu0 0.0
        %4101 = vmatmul.mubr.f32.gmra.mrb[0].mxu0 %v3951
        %v4102 = vpop.f32.mrb[0].mxu0
        %v4103 = vadd.f32 0.0, %v4102
        %v4104 = vpop.f32.mrb[0].mxu0
        %4105 = vmatprep.mubr.f32.mxu0 0.0
        %4106 = vmatmul.mubr.f32.gmra.mrb[0].mxu0 %v3952
        %v4107 = vpop.f32.mrb[0].mxu0
        %v4108 = vadd.f32 0.0, %v4107
        %v4109 = vpop.f32.mrb[0].mxu0
        %4110 = vmatprep.mubr.f32.mxu0 0.0
        %4111 = vmatmul.mubr.f32.gmra.mrb[0].mxu0 %v3953
        %v4112 = vpop.f32.mrb[0].mxu0
        %v4113 = vadd.f32 0.0, %v4112
        %v4114 = vpop.f32.mrb[0].mxu0
        %4115 = vmatprep.mubr.f32.mxu0 0.0
        %4116 = vmatmul.mubr.f32.gmra.mrb[0].mxu0 %v3954
        %v4117 = vpop.f32.mrb[0].mxu0
        %v4118 = vadd.f32 0.0, %v4117
        %v4119 = vpop.f32.mrb[0].mxu0
        %4120 = vmatprep.mubr.f32.mxu0 0.0
        %4121 = vmatmul.mubr.f32.gmra.mrb[0].mxu0 %v3955
        %v4122 = vpop.f32.mrb[0].mxu0
        %v4123 = vadd.f32 0.0, %v4122
        %v4124 = vpop.f32.mrb[0].mxu0
        %4125 = vmatprep.mubr.f32.mxu0 0.0
        %4126 = vmatmul.mubr.f32.gmra.mrb[0].mxu0 %v3956
        %v4127 = vpop.f32.mrb[0].mxu0
        %v4128 = vadd.f32 0.0, %v4127
        %v4129 = vpop.f32.mrb[0].mxu0
        %4130 = vmatprep.mubr.f32.mxu0 0.0
        %4131 = vmatmul.mubr.f32.gmra.mrb[0].mxu0 %v3957
        %v4132 = vpop.f32.mrb[0].mxu0
        %v4133 = vadd.f32 0.0, %v4132
        %v4134 = vpop.f32.mrb[0].mxu0
        %4135 = vdwg.mxu0
        %v4136 = vadd.f32 %v3958, %v4058
        %v4137 = vadd.f32 %v3959, %v4063
        %v4138 = vadd.f32 %v3960, %v4068
        %v4139 = vadd.f32 %v3961, %v4073
        %v4140 = vadd.f32 %v3962, %v4078
        %v4141 = vadd.f32 %v3963, %v4083
        %v4142 = vadd.f32 %v3964, %v4088
        %v4143 = vadd.f32 %v3965, %v4093
        %v4144 = vadd.f32 %v3966, %v4098
        %v4145 = vadd.f32 %v3967, %v4103
        %v4146 = vadd.f32 %v3968, %v4108
        %v4147 = vadd.f32 %v3969, %v4113
        %v4148 = vadd.f32 %v3970, %v4118
        %v4149 = vadd.f32 %v3971, %v4123
        %v4150 = vadd.f32 %v3972, %v4128
        %v4151 = vadd.f32 %v3973, %v4133
        %4152 = vst [vmem:[#allocation6] sm:$0xff] %v4136
        %4153 = vst [vmem:[#allocation6 + $0x8] sm:$0xff] %v4137
        %4154 = vst [vmem:[#allocation6 + $0x10] sm:$0xff] %v4138
        %4155 = vst [vmem:[#allocation6 + $0x18] sm:$0xff] %v4139
        %4156 = vst [vmem:[#allocation6 + $0x20] sm:$0xff] %v4140
        %4157 = vst [vmem:[#allocation6 + $0x28] sm:$0xff] %v4141
        %4158 = vst [vmem:[#allocation6 + $0x30] sm:$0xff] %v4142
        %4159 = vst [vmem:[#allocation6 + $0x38] sm:$0xff] %v4143
        %4160 = vst [vmem:[#allocation6 + $0x40] sm:$0xff] %v4144
        %4161 = vst [vmem:[#allocation6 + $0x48] sm:$0xff] %v4145
        %4162 = vst [vmem:[#allocation6 + $0x50] sm:$0xff] %v4146
        %4163 = vst [vmem:[#allocation6 + $0x58] sm:$0xff] %v4147
        %4164 = vst [vmem:[#allocation6 + $0x60] sm:$0xff] %v4148
        %4165 = vst [vmem:[#allocation6 + $0x68] sm:$0xff] %v4149
        %4166 = vst [vmem:[#allocation6 + $0x70] sm:$0xff] %v4150
        %4167 = vst [vmem:[#allocation6 + $0x78] sm:$0xff] %v4151
        %v4168 = vld [vmem:[%s749 + $0x1e] sm:$0xff]
        %v4169 = vld [vmem:[%s749 + $0x26] sm:$0xff]
        %v4170 = vld [vmem:[%s749 + $0x56] sm:$0xff]
        %v4171 = vld [vmem:[%s749 + $0x5e] sm:$0xff]
        %v4172 = vld [vmem:[%s749 + $0x8e] sm:$0xff]
        %v4173 = vld [vmem:[%s749 + $0x96] sm:$0xff]
        %v4174 = vld [vmem:[%s749 + $0xc6] sm:$0xff]
        %v4175 = vld [vmem:[%s749 + $0xce] sm:$0xff]
        %v4176 = vld [vmem:[%s749 + $0xfe] sm:$0xff]
        %v4177 = vld [vmem:[%s749 + $0x106] sm:$0xff]
        %v4178 = vld [vmem:[%s749 + $0x136] sm:$0xff]
        %v4179 = vld [vmem:[%s749 + $0x13e] sm:$0xff]
        %v4180 = vld [vmem:[%s749 + $0x16e] sm:$0xff]
        %v4181 = vld [vmem:[%s749 + $0x176] sm:$0xff]
        %v4182 = vld [vmem:[%s749 + $0x1a6] sm:$0xff]
        %v4183 = vld [vmem:[%s749 + $0x1ae] sm:$0xff]
        %v4184 = vld [vmem:[#allocation6] sm:$0xff]
        %v4185 = vld [vmem:[#allocation6 + $0x8] sm:$0xff]
        %v4186 = vld [vmem:[#allocation6 + $0x10] sm:$0xff]
        %v4187 = vld [vmem:[#allocation6 + $0x18] sm:$0xff]
        %v4188 = vld [vmem:[#allocation6 + $0x20] sm:$0xff]
        %v4189 = vld [vmem:[#allocation6 + $0x28] sm:$0xff]
        %v4190 = vld [vmem:[#allocation6 + $0x30] sm:$0xff]
        %v4191 = vld [vmem:[#allocation6 + $0x38] sm:$0xff]
        %v4192 = vld [vmem:[#allocation6 + $0x40] sm:$0xff]
        %v4193 = vld [vmem:[#allocation6 + $0x48] sm:$0xff]
        %v4194 = vld [vmem:[#allocation6 + $0x50] sm:$0xff]
        %v4195 = vld [vmem:[#allocation6 + $0x58] sm:$0xff]
        %v4196 = vld [vmem:[#allocation6 + $0x60] sm:$0xff]
        %v4197 = vld [vmem:[#allocation6 + $0x68] sm:$0xff]
        %v4198 = vld [vmem:[#allocation6 + $0x70] sm:$0xff]
        %v4199 = vld [vmem:[#allocation6 + $0x78] sm:$0xff]
        %s4200 = scalar_lea.vmem [#allocation13], 640
        %v4201 = vld [vmem:[%s4200] sm:$0xff]
        %v4202 = vld [vmem:[%s4200 + $0x8] sm:$0xff]
        %v4203 = vld [vmem:[%s4200 + $0x10] sm:$0xff]
        %v4204 = vld [vmem:[%s4200 + $0x18] sm:$0xff]
        %v4205 = vld [vmem:[%s4200 + $0x20] sm:$0xff]
        %v4206 = vld [vmem:[%s4200 + $0x28] sm:$0xff]
        %v4207 = vld [vmem:[%s4200 + $0x30] sm:$0xff]
        %v4208 = vld [vmem:[%s4200 + $0x38] sm:$0xff]
        %v4209 = vld [vmem:[%s4200 + $0x40] sm:$0xff]
        %v4210 = vld [vmem:[%s4200 + $0x48] sm:$0xff]
        %v4211 = vld [vmem:[%s4200 + $0x50] sm:$0xff]
        %v4212 = vld [vmem:[%s4200 + $0x58] sm:$0xff]
        %v4213 = vld [vmem:[%s4200 + $0x60] sm:$0xff]
        %v4214 = vld [vmem:[%s4200 + $0x68] sm:$0xff]
        %v4215 = vld [vmem:[%s4200 + $0x70] sm:$0xff]
        %v4216 = vld [vmem:[%s4200 + $0x78] sm:$0xff]
        %4217 = vmatprep.subr.mxu0 0.0
        %4218 = vmatpush1.msra.mxu0 %v4201
        %4219 = vmatprep.subr.mxu0 0.0
        %4220 = vmatpush1.msra.mxu0 %v4202
        %4221 = vmatprep.subr.mxu0 0.0
        %4222 = vmatpush1.msra.mxu0 %v4203
        %4223 = vmatprep.subr.mxu0 0.0
        %4224 = vmatpush1.msra.mxu0 %v4204
        %4225 = vmatprep.subr.mxu0 0.0
        %4226 = vmatpush1.msra.mxu0 %v4205
        %4227 = vmatprep.subr.mxu0 0.0
        %4228 = vmatpush1.msra.mxu0 %v4206
        %4229 = vmatprep.subr.mxu0 0.0
        %4230 = vmatpush1.msra.mxu0 %v4207
        %4231 = vmatprep.subr.mxu0 0.0
        %4232 = vmatpush1.msra.mxu0 %v4208
        %4233 = vmatprep.subr.mxu0 0.0
        %4234 = vmatpush1.msra.mxu0 %v4209
        %4235 = vmatprep.subr.mxu0 0.0
        %4236 = vmatpush1.msra.mxu0 %v4210
        %4237 = vmatprep.subr.mxu0 0.0
        %4238 = vmatpush1.msra.mxu0 %v4211
        %4239 = vmatprep.subr.mxu0 0.0
        %4240 = vmatpush1.msra.mxu0 %v4212
        %4241 = vmatprep.subr.mxu0 0.0
        %4242 = vmatpush1.msra.mxu0 %v4213
        %4243 = vmatprep.subr.mxu0 0.0
        %4244 = vmatpush1.msra.mxu0 %v4214
        %4245 = vmatprep.subr.mxu0 0.0
        %4246 = vmatpush1.msra.mxu0 %v4215
        %4247 = vmatprep.subr.mxu0 0.0
        %4248 = vmatpush1.msra.mxu0 %v4216
        %4249 = vmatprep.subr.mxu0 0.0
        %4250 = vmatpush1.msra.mxu0 0.0
        %4251 = vmatprep.subr.mxu0 0.0
        %4252 = vmatpush1.msra.mxu0 0.0
        %4253 = vmatprep.subr.mxu0 0.0
        %4254 = vmatpush1.msra.mxu0 0.0
        %4255 = vmatprep.subr.mxu0 0.0
        %4256 = vmatpush1.msra.mxu0 0.0
        %4257 = vmatprep.subr.mxu0 0.0
        %4258 = vmatpush1.msra.mxu0 0.0
        %4259 = vmatprep.subr.mxu0 0.0
        %4260 = vmatpush1.msra.mxu0 0.0
        %4261 = vmatprep.subr.mxu0 0.0
        %4262 = vmatpush1.msra.mxu0 0.0
        %4263 = vmatprep.subr.mxu0 0.0
        %4264 = vmatpush1.msra.mxu0 0.0
        %4265 = vmatprep.subr.mxu0 0.0
        %4266 = vmatpush1.msra.mxu0 0.0
        %4267 = vmatprep.subr.mxu0 0.0
        %4268 = vmatpush1.msra.mxu0 0.0
        %4269 = vmatprep.subr.mxu0 0.0
        %4270 = vmatpush1.msra.mxu0 0.0
        %4271 = vmatprep.subr.mxu0 0.0
        %4272 = vmatpush1.msra.mxu0 0.0
        %4273 = vmatprep.subr.mxu0 0.0
        %4274 = vmatpush1.msra.mxu0 0.0
        %4275 = vmatprep.subr.mxu0 0.0
        %4276 = vmatpush1.msra.mxu0 0.0
        %4277 = vmatprep.subr.mxu0 0.0
        %4278 = vmatpush1.msra.mxu0 0.0
        %4279 = vmatprep.subr.mxu0 0.0
        %4280 = vmatpush1.msra.mxu0 0.0
        %4281 = vmatprep.mubr.f32.mxu0 0.0
        %4282 = vmatmul.mubr.f32.gmra.mrb[0].mxu0 %v4168
        %v4283 = vpop.f32.mrb[0].mxu0
        %v4284 = vadd.f32 0.0, %v4283
        %v4285 = vpop.f32.mrb[0].mxu0
        %4286 = vmatprep.mubr.f32.mxu0 0.0
        %4287 = vmatmul.mubr.f32.gmra.mrb[0].mxu0 %v4169
        %v4288 = vpop.f32.mrb[0].mxu0
        %v4289 = vadd.f32 0.0, %v4288
        %v4290 = vpop.f32.mrb[0].mxu0
        %4291 = vmatprep.mubr.f32.mxu0 0.0
        %4292 = vmatmul.mubr.f32.gmra.mrb[0].mxu0 %v4170
        %v4293 = vpop.f32.mrb[0].mxu0
        %v4294 = vadd.f32 0.0, %v4293
        %v4295 = vpop.f32.mrb[0].mxu0
        %4296 = vmatprep.mubr.f32.mxu0 0.0
        %4297 = vmatmul.mubr.f32.gmra.mrb[0].mxu0 %v4171
        %v4298 = vpop.f32.mrb[0].mxu0
        %v4299 = vadd.f32 0.0, %v4298
        %v4300 = vpop.f32.mrb[0].mxu0
        %4301 = vmatprep.mubr.f32.mxu0 0.0
        %4302 = vmatmul.mubr.f32.gmra.mrb[0].mxu0 %v4172
        %v4303 = vpop.f32.mrb[0].mxu0
        %v4304 = vadd.f32 0.0, %v4303
        %v4305 = vpop.f32.mrb[0].mxu0
        %4306 = vmatprep.mubr.f32.mxu0 0.0
        %4307 = vmatmul.mubr.f32.gmra.mrb[0].mxu0 %v4173
        %v4308 = vpop.f32.mrb[0].mxu0
        %v4309 = vadd.f32 0.0, %v4308
        %v4310 = vpop.f32.mrb[0].mxu0
        %4311 = vmatprep.mubr.f32.mxu0 0.0
        %4312 = vmatmul.mubr.f32.gmra.mrb[0].mxu0 %v4174
        %v4313 = vpop.f32.mrb[0].mxu0
        %v4314 = vadd.f32 0.0, %v4313
        %v4315 = vpop.f32.mrb[0].mxu0
        %4316 = vmatprep.mubr.f32.mxu0 0.0
        %4317 = vmatmul.mubr.f32.gmra.mrb[0].mxu0 %v4175
        %v4318 = vpop.f32.mrb[0].mxu0
        %v4319 = vadd.f32 0.0, %v4318
        %v4320 = vpop.f32.mrb[0].mxu0
        %4321 = vmatprep.mubr.f32.mxu0 0.0
        %4322 = vmatmul.mubr.f32.gmra.mrb[0].mxu0 %v4176
        %v4323 = vpop.f32.mrb[0].mxu0
        %v4324 = vadd.f32 0.0, %v4323
        %v4325 = vpop.f32.mrb[0].mxu0
        %4326 = vmatprep.mubr.f32.mxu0 0.0
        %4327 = vmatmul.mubr.f32.gmra.mrb[0].mxu0 %v4177
        %v4328 = vpop.f32.mrb[0].mxu0
        %v4329 = vadd.f32 0.0, %v4328
        %v4330 = vpop.f32.mrb[0].mxu0
        %4331 = vmatprep.mubr.f32.mxu0 0.0
        %4332 = vmatmul.mubr.f32.gmra.mrb[0].mxu0 %v4178
        %v4333 = vpop.f32.mrb[0].mxu0
        %v4334 = vadd.f32 0.0, %v4333
        %v4335 = vpop.f32.mrb[0].mxu0
        %4336 = vmatprep.mubr.f32.mxu0 0.0
        %4337 = vmatmul.mubr.f32.gmra.mrb[0].mxu0 %v4179
        %v4338 = vpop.f32.mrb[0].mxu0
        %v4339 = vadd.f32 0.0, %v4338
        %v4340 = vpop.f32.mrb[0].mxu0
        %4341 = vmatprep.mubr.f32.mxu0 0.0
        %4342 = vmatmul.mubr.f32.gmra.mrb[0].mxu0 %v4180
        %v4343 = vpop.f32.mrb[0].mxu0
        %v4344 = vadd.f32 0.0, %v4343
        %v4345 = vpop.f32.mrb[0].mxu0
        %4346 = vmatprep.mubr.f32.mxu0 0.0
        %4347 = vmatmul.mubr.f32.gmra.mrb[0].mxu0 %v4181
        %v4348 = vpop.f32.mrb[0].mxu0
        %v4349 = vadd.f32 0.0, %v4348
        %v4350 = vpop.f32.mrb[0].mxu0
        %4351 = vmatprep.mubr.f32.mxu0 0.0
        %4352 = vmatmul.mubr.f32.gmra.mrb[0].mxu0 %v4182
        %v4353 = vpop.f32.mrb[0].mxu0
        %v4354 = vadd.f32 0.0, %v4353
        %v4355 = vpop.f32.mrb[0].mxu0
        %4356 = vmatprep.mubr.f32.mxu0 0.0
        %4357 = vmatmul.mubr.f32.gmra.mrb[0].mxu0 %v4183
        %v4358 = vpop.f32.mrb[0].mxu0
        %v4359 = vadd.f32 0.0, %v4358
        %v4360 = vpop.f32.mrb[0].mxu0
        %4361 = vdwg.mxu0
        %v4362 = vadd.f32 %v4184, %v4284
        %v4363 = vadd.f32 %v4185, %v4289
        %v4364 = vadd.f32 %v4186, %v4294
        %v4365 = vadd.f32 %v4187, %v4299
        %v4366 = vadd.f32 %v4188, %v4304
        %v4367 = vadd.f32 %v4189, %v4309
        %v4368 = vadd.f32 %v4190, %v4314
        %v4369 = vadd.f32 %v4191, %v4319
        %v4370 = vadd.f32 %v4192, %v4324
        %v4371 = vadd.f32 %v4193, %v4329
        %v4372 = vadd.f32 %v4194, %v4334
        %v4373 = vadd.f32 %v4195, %v4339
        %v4374 = vadd.f32 %v4196, %v4344
        %v4375 = vadd.f32 %v4197, %v4349
        %v4376 = vadd.f32 %v4198, %v4354
        %v4377 = vadd.f32 %v4199, %v4359
        %4378 = vst [vmem:[#allocation6] sm:$0xff] %v4362
        %4379 = vst [vmem:[#allocation6 + $0x8] sm:$0xff] %v4363
        %4380 = vst [vmem:[#allocation6 + $0x10] sm:$0xff] %v4364
        %4381 = vst [vmem:[#allocation6 + $0x18] sm:$0xff] %v4365
        %4382 = vst [vmem:[#allocation6 + $0x20] sm:$0xff] %v4366
        %4383 = vst [vmem:[#allocation6 + $0x28] sm:$0xff] %v4367
        %4384 = vst [vmem:[#allocation6 + $0x30] sm:$0xff] %v4368
        %4385 = vst [vmem:[#allocation6 + $0x38] sm:$0xff] %v4369
        %4386 = vst [vmem:[#allocation6 + $0x40] sm:$0xff] %v4370
        %4387 = vst [vmem:[#allocation6 + $0x48] sm:$0xff] %v4371
        %4388 = vst [vmem:[#allocation6 + $0x50] sm:$0xff] %v4372
        %4389 = vst [vmem:[#allocation6 + $0x58] sm:$0xff] %v4373
        %4390 = vst [vmem:[#allocation6 + $0x60] sm:$0xff] %v4374
        %4391 = vst [vmem:[#allocation6 + $0x68] sm:$0xff] %v4375
        %4392 = vst [vmem:[#allocation6 + $0x70] sm:$0xff] %v4376
        %4393 = vst [vmem:[#allocation6 + $0x78] sm:$0xff] %v4377
        %s4394 = sadd.s32 %s714, 30
        %s4395 = smul.u32 %s4394, 56
        %s4396 = scalar_lea.vmem [#allocation2], %s4395
        %v4397 = vld [vmem:[%s4396 + $0x6] sm:$0xff]
        %v4398 = vld [vmem:[%s4396 + $0xe] sm:$0xff]
        %v4399 = vld [vmem:[%s4396 + $0x3e] sm:$0xff]
        %v4400 = vld [vmem:[%s4396 + $0x46] sm:$0xff]
        %v4401 = vld [vmem:[%s4396 + $0x76] sm:$0xff]
        %v4402 = vld [vmem:[%s4396 + $0x7e] sm:$0xff]
        %v4403 = vld [vmem:[%s4396 + $0xae] sm:$0xff]
        %v4404 = vld [vmem:[%s4396 + $0xb6] sm:$0xff]
        %v4405 = vld [vmem:[%s4396 + $0xe6] sm:$0xff]
        %v4406 = vld [vmem:[%s4396 + $0xee] sm:$0xff]
        %v4407 = vld [vmem:[%s4396 + $0x11e] sm:$0xff]
        %v4408 = vld [vmem:[%s4396 + $0x126] sm:$0xff]
        %v4409 = vld [vmem:[%s4396 + $0x156] sm:$0xff]
        %v4410 = vld [vmem:[%s4396 + $0x15e] sm:$0xff]
        %v4411 = vld [vmem:[%s4396 + $0x18e] sm:$0xff]
        %v4412 = vld [vmem:[%s4396 + $0x196] sm:$0xff]
        %v4413 = vld [vmem:[#allocation6] sm:$0xff]
        %v4414 = vld [vmem:[#allocation6 + $0x8] sm:$0xff]
        %v4415 = vld [vmem:[#allocation6 + $0x10] sm:$0xff]
        %v4416 = vld [vmem:[#allocation6 + $0x18] sm:$0xff]
        %v4417 = vld [vmem:[#allocation6 + $0x20] sm:$0xff]
        %v4418 = vld [vmem:[#allocation6 + $0x28] sm:$0xff]
        %v4419 = vld [vmem:[#allocation6 + $0x30] sm:$0xff]
        %v4420 = vld [vmem:[#allocation6 + $0x38] sm:$0xff]
        %v4421 = vld [vmem:[#allocation6 + $0x40] sm:$0xff]
        %v4422 = vld [vmem:[#allocation6 + $0x48] sm:$0xff]
        %v4423 = vld [vmem:[#allocation6 + $0x50] sm:$0xff]
        %v4424 = vld [vmem:[#allocation6 + $0x58] sm:$0xff]
        %v4425 = vld [vmem:[#allocation6 + $0x60] sm:$0xff]
        %v4426 = vld [vmem:[#allocation6 + $0x68] sm:$0xff]
        %v4427 = vld [vmem:[#allocation6 + $0x70] sm:$0xff]
        %v4428 = vld [vmem:[#allocation6 + $0x78] sm:$0xff]
        %s4429 = scalar_lea.vmem [#allocation13], 768
        %v4430 = vld [vmem:[%s4429] sm:$0xff]
        %v4431 = vld [vmem:[%s4429 + $0x8] sm:$0xff]
        %v4432 = vld [vmem:[%s4429 + $0x10] sm:$0xff]
        %v4433 = vld [vmem:[%s4429 + $0x18] sm:$0xff]
        %v4434 = vld [vmem:[%s4429 + $0x20] sm:$0xff]
        %v4435 = vld [vmem:[%s4429 + $0x28] sm:$0xff]
        %v4436 = vld [vmem:[%s4429 + $0x30] sm:$0xff]
        %v4437 = vld [vmem:[%s4429 + $0x38] sm:$0xff]
        %v4438 = vld [vmem:[%s4429 + $0x40] sm:$0xff]
        %v4439 = vld [vmem:[%s4429 + $0x48] sm:$0xff]
        %v4440 = vld [vmem:[%s4429 + $0x50] sm:$0xff]
        %v4441 = vld [vmem:[%s4429 + $0x58] sm:$0xff]
        %v4442 = vld [vmem:[%s4429 + $0x60] sm:$0xff]
        %v4443 = vld [vmem:[%s4429 + $0x68] sm:$0xff]
        %v4444 = vld [vmem:[%s4429 + $0x70] sm:$0xff]
        %v4445 = vld [vmem:[%s4429 + $0x78] sm:$0xff]
        %4446 = vmatprep.subr.mxu0 0.0
        %4447 = vmatpush1.msra.mxu0 %v4430
        %4448 = vmatprep.subr.mxu0 0.0
        %4449 = vmatpush1.msra.mxu0 %v4431
        %4450 = vmatprep.subr.mxu0 0.0
        %4451 = vmatpush1.msra.mxu0 %v4432
        %4452 = vmatprep.subr.mxu0 0.0
        %4453 = vmatpush1.msra.mxu0 %v4433
        %4454 = vmatprep.subr.mxu0 0.0
        %4455 = vmatpush1.msra.mxu0 %v4434
        %4456 = vmatprep.subr.mxu0 0.0
        %4457 = vmatpush1.msra.mxu0 %v4435
        %4458 = vmatprep.subr.mxu0 0.0
        %4459 = vmatpush1.msra.mxu0 %v4436
        %4460 = vmatprep.subr.mxu0 0.0
        %4461 = vmatpush1.msra.mxu0 %v4437
        %4462 = vmatprep.subr.mxu0 0.0
        %4463 = vmatpush1.msra.mxu0 %v4438
        %4464 = vmatprep.subr.mxu0 0.0
        %4465 = vmatpush1.msra.mxu0 %v4439
        %4466 = vmatprep.subr.mxu0 0.0
        %4467 = vmatpush1.msra.mxu0 %v4440
        %4468 = vmatprep.subr.mxu0 0.0
        %4469 = vmatpush1.msra.mxu0 %v4441
        %4470 = vmatprep.subr.mxu0 0.0
        %4471 = vmatpush1.msra.mxu0 %v4442
        %4472 = vmatprep.subr.mxu0 0.0
        %4473 = vmatpush1.msra.mxu0 %v4443
        %4474 = vmatprep.subr.mxu0 0.0
        %4475 = vmatpush1.msra.mxu0 %v4444
        %4476 = vmatprep.subr.mxu0 0.0
        %4477 = vmatpush1.msra.mxu0 %v4445
        %4478 = vmatprep.subr.mxu0 0.0
        %4479 = vmatpush1.msra.mxu0 0.0
        %4480 = vmatprep.subr.mxu0 0.0
        %4481 = vmatpush1.msra.mxu0 0.0
        %4482 = vmatprep.subr.mxu0 0.0
        %4483 = vmatpush1.msra.mxu0 0.0
        %4484 = vmatprep.subr.mxu0 0.0
        %4485 = vmatpush1.msra.mxu0 0.0
        %4486 = vmatprep.subr.mxu0 0.0
        %4487 = vmatpush1.msra.mxu0 0.0
        %4488 = vmatprep.subr.mxu0 0.0
        %4489 = vmatpush1.msra.mxu0 0.0
        %4490 = vmatprep.subr.mxu0 0.0
        %4491 = vmatpush1.msra.mxu0 0.0
        %4492 = vmatprep.subr.mxu0 0.0
        %4493 = vmatpush1.msra.mxu0 0.0
        %4494 = vmatprep.subr.mxu0 0.0
        %4495 = vmatpush1.msra.mxu0 0.0
        %4496 = vmatprep.subr.mxu0 0.0
        %4497 = vmatpush1.msra.mxu0 0.0
        %4498 = vmatprep.subr.mxu0 0.0
        %4499 = vmatpush1.msra.mxu0 0.0
        %4500 = vmatprep.subr.mxu0 0.0
        %4501 = vmatpush1.msra.mxu0 0.0
        %4502 = vmatprep.subr.mxu0 0.0
        %4503 = vmatpush1.msra.mxu0 0.0
        %4504 = vmatprep.subr.mxu0 0.0
        %4505 = vmatpush1.msra.mxu0 0.0
        %4506 = vmatprep.subr.mxu0 0.0
        %4507 = vmatpush1.msra.mxu0 0.0
        %4508 = vmatprep.subr.mxu0 0.0
        %4509 = vmatpush1.msra.mxu0 0.0
        %4510 = vmatprep.mubr.f32.mxu0 0.0
        %4511 = vmatmul.mubr.f32.gmra.mrb[0].mxu0 %v4397
        %v4512 = vpop.f32.mrb[0].mxu0
        %v4513 = vadd.f32 0.0, %v4512
        %v4514 = vpop.f32.mrb[0].mxu0
        %4515 = vmatprep.mubr.f32.mxu0 0.0
        %4516 = vmatmul.mubr.f32.gmra.mrb[0].mxu0 %v4398
        %v4517 = vpop.f32.mrb[0].mxu0
        %v4518 = vadd.f32 0.0, %v4517
        %v4519 = vpop.f32.mrb[0].mxu0
        %4520 = vmatprep.mubr.f32.mxu0 0.0
        %4521 = vmatmul.mubr.f32.gmra.mrb[0].mxu0 %v4399
        %v4522 = vpop.f32.mrb[0].mxu0
        %v4523 = vadd.f32 0.0, %v4522
        %v4524 = vpop.f32.mrb[0].mxu0
        %4525 = vmatprep.mubr.f32.mxu0 0.0
        %4526 = vmatmul.mubr.f32.gmra.mrb[0].mxu0 %v4400
        %v4527 = vpop.f32.mrb[0].mxu0
        %v4528 = vadd.f32 0.0, %v4527
        %v4529 = vpop.f32.mrb[0].mxu0
        %4530 = vmatprep.mubr.f32.mxu0 0.0
        %4531 = vmatmul.mubr.f32.gmra.mrb[0].mxu0 %v4401
        %v4532 = vpop.f32.mrb[0].mxu0
        %v4533 = vadd.f32 0.0, %v4532
        %v4534 = vpop.f32.mrb[0].mxu0
        %4535 = vmatprep.mubr.f32.mxu0 0.0
        %4536 = vmatmul.mubr.f32.gmra.mrb[0].mxu0 %v4402
        %v4537 = vpop.f32.mrb[0].mxu0
        %v4538 = vadd.f32 0.0, %v4537
        %v4539 = vpop.f32.mrb[0].mxu0
        %4540 = vmatprep.mubr.f32.mxu0 0.0
        %4541 = vmatmul.mubr.f32.gmra.mrb[0].mxu0 %v4403
        %v4542 = vpop.f32.mrb[0].mxu0
        %v4543 = vadd.f32 0.0, %v4542
        %v4544 = vpop.f32.mrb[0].mxu0
        %4545 = vmatprep.mubr.f32.mxu0 0.0
        %4546 = vmatmul.mubr.f32.gmra.mrb[0].mxu0 %v4404
        %v4547 = vpop.f32.mrb[0].mxu0
        %v4548 = vadd.f32 0.0, %v4547
        %v4549 = vpop.f32.mrb[0].mxu0
        %4550 = vmatprep.mubr.f32.mxu0 0.0
        %4551 = vmatmul.mubr.f32.gmra.mrb[0].mxu0 %v4405
        %v4552 = vpop.f32.mrb[0].mxu0
        %v4553 = vadd.f32 0.0, %v4552
        %v4554 = vpop.f32.mrb[0].mxu0
        %4555 = vmatprep.mubr.f32.mxu0 0.0
        %4556 = vmatmul.mubr.f32.gmra.mrb[0].mxu0 %v4406
        %v4557 = vpop.f32.mrb[0].mxu0
        %v4558 = vadd.f32 0.0, %v4557
        %v4559 = vpop.f32.mrb[0].mxu0
        %4560 = vmatprep.mubr.f32.mxu0 0.0
        %4561 = vmatmul.mubr.f32.gmra.mrb[0].mxu0 %v4407
        %v4562 = vpop.f32.mrb[0].mxu0
        %v4563 = vadd.f32 0.0, %v4562
        %v4564 = vpop.f32.mrb[0].mxu0
        %4565 = vmatprep.mubr.f32.mxu0 0.0
        %4566 = vmatmul.mubr.f32.gmra.mrb[0].mxu0 %v4408
        %v4567 = vpop.f32.mrb[0].mxu0
        %v4568 = vadd.f32 0.0, %v4567
        %v4569 = vpop.f32.mrb[0].mxu0
        %4570 = vmatprep.mubr.f32.mxu0 0.0
        %4571 = vmatmul.mubr.f32.gmra.mrb[0].mxu0 %v4409
        %v4572 = vpop.f32.mrb[0].mxu0
        %v4573 = vadd.f32 0.0, %v4572
        %v4574 = vpop.f32.mrb[0].mxu0
        %4575 = vmatprep.mubr.f32.mxu0 0.0
        %4576 = vmatmul.mubr.f32.gmra.mrb[0].mxu0 %v4410
        %v4577 = vpop.f32.mrb[0].mxu0
        %v4578 = vadd.f32 0.0, %v4577
        %v4579 = vpop.f32.mrb[0].mxu0
        %4580 = vmatprep.mubr.f32.mxu0 0.0
        %4581 = vmatmul.mubr.f32.gmra.mrb[0].mxu0 %v4411
        %v4582 = vpop.f32.mrb[0].mxu0
        %v4583 = vadd.f32 0.0, %v4582
        %v4584 = vpop.f32.mrb[0].mxu0
        %4585 = vmatprep.mubr.f32.mxu0 0.0
        %4586 = vmatmul.mubr.f32.gmra.mrb[0].mxu0 %v4412
        %v4587 = vpop.f32.mrb[0].mxu0
        %v4588 = vadd.f32 0.0, %v4587
        %v4589 = vpop.f32.mrb[0].mxu0
        %4590 = vdwg.mxu0
        %v4591 = vadd.f32 %v4413, %v4513
        %v4592 = vadd.f32 %v4414, %v4518
        %v4593 = vadd.f32 %v4415, %v4523
        %v4594 = vadd.f32 %v4416, %v4528
        %v4595 = vadd.f32 %v4417, %v4533
        %v4596 = vadd.f32 %v4418, %v4538
        %v4597 = vadd.f32 %v4419, %v4543
        %v4598 = vadd.f32 %v4420, %v4548
        %v4599 = vadd.f32 %v4421, %v4553
        %v4600 = vadd.f32 %v4422, %v4558
        %v4601 = vadd.f32 %v4423, %v4563
        %v4602 = vadd.f32 %v4424, %v4568
        %v4603 = vadd.f32 %v4425, %v4573
        %v4604 = vadd.f32 %v4426, %v4578
        %v4605 = vadd.f32 %v4427, %v4583
        %v4606 = vadd.f32 %v4428, %v4588
        %4607 = vst [vmem:[#allocation6] sm:$0xff] %v4591
        %4608 = vst [vmem:[#allocation6 + $0x8] sm:$0xff] %v4592
        %4609 = vst [vmem:[#allocation6 + $0x10] sm:$0xff] %v4593
        %4610 = vst [vmem:[#allocation6 + $0x18] sm:$0xff] %v4594
        %4611 = vst [vmem:[#allocation6 + $0x20] sm:$0xff] %v4595
        %4612 = vst [vmem:[#allocation6 + $0x28] sm:$0xff] %v4596
        %4613 = vst [vmem:[#allocation6 + $0x30] sm:$0xff] %v4597
        %4614 = vst [vmem:[#allocation6 + $0x38] sm:$0xff] %v4598
        %4615 = vst [vmem:[#allocation6 + $0x40] sm:$0xff] %v4599
        %4616 = vst [vmem:[#allocation6 + $0x48] sm:$0xff] %v4600
        %4617 = vst [vmem:[#allocation6 + $0x50] sm:$0xff] %v4601
        %4618 = vst [vmem:[#allocation6 + $0x58] sm:$0xff] %v4602
        %4619 = vst [vmem:[#allocation6 + $0x60] sm:$0xff] %v4603
        %4620 = vst [vmem:[#allocation6 + $0x68] sm:$0xff] %v4604
        %4621 = vst [vmem:[#allocation6 + $0x70] sm:$0xff] %v4605
        %4622 = vst [vmem:[#allocation6 + $0x78] sm:$0xff] %v4606
        %v4623 = vld [vmem:[%s4396 + $0x12] sm:$0xff]
        %v4624 = vld [vmem:[%s4396 + $0x1a] sm:$0xff]
        %v4625 = vld [vmem:[%s4396 + $0x4a] sm:$0xff]
        %v4626 = vld [vmem:[%s4396 + $0x52] sm:$0xff]
        %v4627 = vld [vmem:[%s4396 + $0x82] sm:$0xff]
        %v4628 = vld [vmem:[%s4396 + $0x8a] sm:$0xff]
        %v4629 = vld [vmem:[%s4396 + $0xba] sm:$0xff]
        %v4630 = vld [vmem:[%s4396 + $0xc2] sm:$0xff]
        %v4631 = vld [vmem:[%s4396 + $0xf2] sm:$0xff]
        %v4632 = vld [vmem:[%s4396 + $0xfa] sm:$0xff]
        %v4633 = vld [vmem:[%s4396 + $0x12a] sm:$0xff]
        %v4634 = vld [vmem:[%s4396 + $0x132] sm:$0xff]
        %v4635 = vld [vmem:[%s4396 + $0x162] sm:$0xff]
        %v4636 = vld [vmem:[%s4396 + $0x16a] sm:$0xff]
        %v4637 = vld [vmem:[%s4396 + $0x19a] sm:$0xff]
        %v4638 = vld [vmem:[%s4396 + $0x1a2] sm:$0xff]
        %v4639 = vld [vmem:[#allocation6] sm:$0xff]
        %v4640 = vld [vmem:[#allocation6 + $0x8] sm:$0xff]
        %v4641 = vld [vmem:[#allocation6 + $0x10] sm:$0xff]
        %v4642 = vld [vmem:[#allocation6 + $0x18] sm:$0xff]
        %v4643 = vld [vmem:[#allocation6 + $0x20] sm:$0xff]
        %v4644 = vld [vmem:[#allocation6 + $0x28] sm:$0xff]
        %v4645 = vld [vmem:[#allocation6 + $0x30] sm:$0xff]
        %v4646 = vld [vmem:[#allocation6 + $0x38] sm:$0xff]
        %v4647 = vld [vmem:[#allocation6 + $0x40] sm:$0xff]
        %v4648 = vld [vmem:[#allocation6 + $0x48] sm:$0xff]
        %v4649 = vld [vmem:[#allocation6 + $0x50] sm:$0xff]
        %v4650 = vld [vmem:[#allocation6 + $0x58] sm:$0xff]
        %v4651 = vld [vmem:[#allocation6 + $0x60] sm:$0xff]
        %v4652 = vld [vmem:[#allocation6 + $0x68] sm:$0xff]
        %v4653 = vld [vmem:[#allocation6 + $0x70] sm:$0xff]
        %v4654 = vld [vmem:[#allocation6 + $0x78] sm:$0xff]
        %s4655 = scalar_lea.vmem [#allocation13], 896
        %v4656 = vld [vmem:[%s4655] sm:$0xff]
        %v4657 = vld [vmem:[%s4655 + $0x8] sm:$0xff]
        %v4658 = vld [vmem:[%s4655 + $0x10] sm:$0xff]
        %v4659 = vld [vmem:[%s4655 + $0x18] sm:$0xff]
        %v4660 = vld [vmem:[%s4655 + $0x20] sm:$0xff]
        %v4661 = vld [vmem:[%s4655 + $0x28] sm:$0xff]
        %v4662 = vld [vmem:[%s4655 + $0x30] sm:$0xff]
        %v4663 = vld [vmem:[%s4655 + $0x38] sm:$0xff]
        %v4664 = vld [vmem:[%s4655 + $0x40] sm:$0xff]
        %v4665 = vld [vmem:[%s4655 + $0x48] sm:$0xff]
        %v4666 = vld [vmem:[%s4655 + $0x50] sm:$0xff]
        %v4667 = vld [vmem:[%s4655 + $0x58] sm:$0xff]
        %v4668 = vld [vmem:[%s4655 + $0x60] sm:$0xff]
        %v4669 = vld [vmem:[%s4655 + $0x68] sm:$0xff]
        %v4670 = vld [vmem:[%s4655 + $0x70] sm:$0xff]
        %v4671 = vld [vmem:[%s4655 + $0x78] sm:$0xff]
        %4672 = vmatprep.subr.mxu0 0.0
        %4673 = vmatpush1.msra.mxu0 %v4656
        %4674 = vmatprep.subr.mxu0 0.0
        %4675 = vmatpush1.msra.mxu0 %v4657
        %4676 = vmatprep.subr.mxu0 0.0
        %4677 = vmatpush1.msra.mxu0 %v4658
        %4678 = vmatprep.subr.mxu0 0.0
        %4679 = vmatpush1.msra.mxu0 %v4659
        %4680 = vmatprep.subr.mxu0 0.0
        %4681 = vmatpush1.msra.mxu0 %v4660
        %4682 = vmatprep.subr.mxu0 0.0
        %4683 = vmatpush1.msra.mxu0 %v4661
        %4684 = vmatprep.subr.mxu0 0.0
        %4685 = vmatpush1.msra.mxu0 %v4662
        %4686 = vmatprep.subr.mxu0 0.0
        %4687 = vmatpush1.msra.mxu0 %v4663
        %4688 = vmatprep.subr.mxu0 0.0
        %4689 = vmatpush1.msra.mxu0 %v4664
        %4690 = vmatprep.subr.mxu0 0.0
        %4691 = vmatpush1.msra.mxu0 %v4665
        %4692 = vmatprep.subr.mxu0 0.0
        %4693 = vmatpush1.msra.mxu0 %v4666
        %4694 = vmatprep.subr.mxu0 0.0
        %4695 = vmatpush1.msra.mxu0 %v4667
        %4696 = vmatprep.subr.mxu0 0.0
        %4697 = vmatpush1.msra.mxu0 %v4668
        %4698 = vmatprep.subr.mxu0 0.0
        %4699 = vmatpush1.msra.mxu0 %v4669
        %4700 = vmatprep.subr.mxu0 0.0
        %4701 = vmatpush1.msra.mxu0 %v4670
        %4702 = vmatprep.subr.mxu0 0.0
        %4703 = vmatpush1.msra.mxu0 %v4671
        %4704 = vmatprep.subr.mxu0 0.0
        %4705 = vmatpush1.msra.mxu0 0.0
        %4706 = vmatprep.subr.mxu0 0.0
        %4707 = vmatpush1.msra.mxu0 0.0
        %4708 = vmatprep.subr.mxu0 0.0
        %4709 = vmatpush1.msra.mxu0 0.0
        %4710 = vmatprep.subr.mxu0 0.0
        %4711 = vmatpush1.msra.mxu0 0.0
        %4712 = vmatprep.subr.mxu0 0.0
        %4713 = vmatpush1.msra.mxu0 0.0
        %4714 = vmatprep.subr.mxu0 0.0
        %4715 = vmatpush1.msra.mxu0 0.0
        %4716 = vmatprep.subr.mxu0 0.0
        %4717 = vmatpush1.msra.mxu0 0.0
        %4718 = vmatprep.subr.mxu0 0.0
        %4719 = vmatpush1.msra.mxu0 0.0
        %4720 = vmatprep.subr.mxu0 0.0
        %4721 = vmatpush1.msra.mxu0 0.0
        %4722 = vmatprep.subr.mxu0 0.0
        %4723 = vmatpush1.msra.mxu0 0.0
        %4724 = vmatprep.subr.mxu0 0.0
        %4725 = vmatpush1.msra.mxu0 0.0
        %4726 = vmatprep.subr.mxu0 0.0
        %4727 = vmatpush1.msra.mxu0 0.0
        %4728 = vmatprep.subr.mxu0 0.0
        %4729 = vmatpush1.msra.mxu0 0.0
        %4730 = vmatprep.subr.mxu0 0.0
        %4731 = vmatpush1.msra.mxu0 0.0
        %4732 = vmatprep.subr.mxu0 0.0
        %4733 = vmatpush1.msra.mxu0 0.0
        %4734 = vmatprep.subr.mxu0 0.0
        %4735 = vmatpush1.msra.mxu0 0.0
        %4736 = vmatprep.mubr.f32.mxu0 0.0
        %4737 = vmatmul.mubr.f32.gmra.mrb[0].mxu0 %v4623
        %v4738 = vpop.f32.mrb[0].mxu0
        %v4739 = vadd.f32 0.0, %v4738
        %v4740 = vpop.f32.mrb[0].mxu0
        %4741 = vmatprep.mubr.f32.mxu0 0.0
        %4742 = vmatmul.mubr.f32.gmra.mrb[0].mxu0 %v4624
        %v4743 = vpop.f32.mrb[0].mxu0
        %v4744 = vadd.f32 0.0, %v4743
        %v4745 = vpop.f32.mrb[0].mxu0
        %4746 = vmatprep.mubr.f32.mxu0 0.0
        %4747 = vmatmul.mubr.f32.gmra.mrb[0].mxu0 %v4625
        %v4748 = vpop.f32.mrb[0].mxu0
        %v4749 = vadd.f32 0.0, %v4748
        %v4750 = vpop.f32.mrb[0].mxu0
        %4751 = vmatprep.mubr.f32.mxu0 0.0
        %4752 = vmatmul.mubr.f32.gmra.mrb[0].mxu0 %v4626
        %v4753 = vpop.f32.mrb[0].mxu0
        %v4754 = vadd.f32 0.0, %v4753
        %v4755 = vpop.f32.mrb[0].mxu0
        %4756 = vmatprep.mubr.f32.mxu0 0.0
        %4757 = vmatmul.mubr.f32.gmra.mrb[0].mxu0 %v4627
        %v4758 = vpop.f32.mrb[0].mxu0
        %v4759 = vadd.f32 0.0, %v4758
        %v4760 = vpop.f32.mrb[0].mxu0
        %4761 = vmatprep.mubr.f32.mxu0 0.0
        %4762 = vmatmul.mubr.f32.gmra.mrb[0].mxu0 %v4628
        %v4763 = vpop.f32.mrb[0].mxu0
        %v4764 = vadd.f32 0.0, %v4763
        %v4765 = vpop.f32.mrb[0].mxu0
        %4766 = vmatprep.mubr.f32.mxu0 0.0
        %4767 = vmatmul.mubr.f32.gmra.mrb[0].mxu0 %v4629
        %v4768 = vpop.f32.mrb[0].mxu0
        %v4769 = vadd.f32 0.0, %v4768
        %v4770 = vpop.f32.mrb[0].mxu0
        %4771 = vmatprep.mubr.f32.mxu0 0.0
        %4772 = vmatmul.mubr.f32.gmra.mrb[0].mxu0 %v4630
        %v4773 = vpop.f32.mrb[0].mxu0
        %v4774 = vadd.f32 0.0, %v4773
        %v4775 = vpop.f32.mrb[0].mxu0
        %4776 = vmatprep.mubr.f32.mxu0 0.0
        %4777 = vmatmul.mubr.f32.gmra.mrb[0].mxu0 %v4631
        %v4778 = vpop.f32.mrb[0].mxu0
        %v4779 = vadd.f32 0.0, %v4778
        %v4780 = vpop.f32.mrb[0].mxu0
        %4781 = vmatprep.mubr.f32.mxu0 0.0
        %4782 = vmatmul.mubr.f32.gmra.mrb[0].mxu0 %v4632
        %v4783 = vpop.f32.mrb[0].mxu0
        %v4784 = vadd.f32 0.0, %v4783
        %v4785 = vpop.f32.mrb[0].mxu0
        %4786 = vmatprep.mubr.f32.mxu0 0.0
        %4787 = vmatmul.mubr.f32.gmra.mrb[0].mxu0 %v4633
        %v4788 = vpop.f32.mrb[0].mxu0
        %v4789 = vadd.f32 0.0, %v4788
        %v4790 = vpop.f32.mrb[0].mxu0
        %4791 = vmatprep.mubr.f32.mxu0 0.0
        %4792 = vmatmul.mubr.f32.gmra.mrb[0].mxu0 %v4634
        %v4793 = vpop.f32.mrb[0].mxu0
        %v4794 = vadd.f32 0.0, %v4793
        %v4795 = vpop.f32.mrb[0].mxu0
        %4796 = vmatprep.mubr.f32.mxu0 0.0
        %4797 = vmatmul.mubr.f32.gmra.mrb[0].mxu0 %v4635
        %v4798 = vpop.f32.mrb[0].mxu0
        %v4799 = vadd.f32 0.0, %v4798
        %v4800 = vpop.f32.mrb[0].mxu0
        %4801 = vmatprep.mubr.f32.mxu0 0.0
        %4802 = vmatmul.mubr.f32.gmra.mrb[0].mxu0 %v4636
        %v4803 = vpop.f32.mrb[0].mxu0
        %v4804 = vadd.f32 0.0, %v4803
        %v4805 = vpop.f32.mrb[0].mxu0
        %4806 = vmatprep.mubr.f32.mxu0 0.0
        %4807 = vmatmul.mubr.f32.gmra.mrb[0].mxu0 %v4637
        %v4808 = vpop.f32.mrb[0].mxu0
        %v4809 = vadd.f32 0.0, %v4808
        %v4810 = vpop.f32.mrb[0].mxu0
        %4811 = vmatprep.mubr.f32.mxu0 0.0
        %4812 = vmatmul.mubr.f32.gmra.mrb[0].mxu0 %v4638
        %v4813 = vpop.f32.mrb[0].mxu0
        %v4814 = vadd.f32 0.0, %v4813
        %v4815 = vpop.f32.mrb[0].mxu0
        %4816 = vdwg.mxu0
        %v4817 = vadd.f32 %v4639, %v4739
        %v4818 = vadd.f32 %v4640, %v4744
        %v4819 = vadd.f32 %v4641, %v4749
        %v4820 = vadd.f32 %v4642, %v4754
        %v4821 = vadd.f32 %v4643, %v4759
        %v4822 = vadd.f32 %v4644, %v4764
        %v4823 = vadd.f32 %v4645, %v4769
        %v4824 = vadd.f32 %v4646, %v4774
        %v4825 = vadd.f32 %v4647, %v4779
        %v4826 = vadd.f32 %v4648, %v4784
        %v4827 = vadd.f32 %v4649, %v4789
        %v4828 = vadd.f32 %v4650, %v4794
        %v4829 = vadd.f32 %v4651, %v4799
        %v4830 = vadd.f32 %v4652, %v4804
        %v4831 = vadd.f32 %v4653, %v4809
        %v4832 = vadd.f32 %v4654, %v4814
        %4833 = vst [vmem:[#allocation6] sm:$0xff] %v4817
        %4834 = vst [vmem:[#allocation6 + $0x8] sm:$0xff] %v4818
        %4835 = vst [vmem:[#allocation6 + $0x10] sm:$0xff] %v4819
        %4836 = vst [vmem:[#allocation6 + $0x18] sm:$0xff] %v4820
        %4837 = vst [vmem:[#allocation6 + $0x20] sm:$0xff] %v4821
        %4838 = vst [vmem:[#allocation6 + $0x28] sm:$0xff] %v4822
        %4839 = vst [vmem:[#allocation6 + $0x30] sm:$0xff] %v4823
        %4840 = vst [vmem:[#allocation6 + $0x38] sm:$0xff] %v4824
        %4841 = vst [vmem:[#allocation6 + $0x40] sm:$0xff] %v4825
        %4842 = vst [vmem:[#allocation6 + $0x48] sm:$0xff] %v4826
        %4843 = vst [vmem:[#allocation6 + $0x50] sm:$0xff] %v4827
        %4844 = vst [vmem:[#allocation6 + $0x58] sm:$0xff] %v4828
        %4845 = vst [vmem:[#allocation6 + $0x60] sm:$0xff] %v4829
        %4846 = vst [vmem:[#allocation6 + $0x68] sm:$0xff] %v4830
        %4847 = vst [vmem:[#allocation6 + $0x70] sm:$0xff] %v4831
        %4848 = vst [vmem:[#allocation6 + $0x78] sm:$0xff] %v4832
        %v4849 = vld [vmem:[%s4396 + $0x1e] sm:$0xff]
        %v4850 = vld [vmem:[%s4396 + $0x26] sm:$0xff]
        %v4851 = vld [vmem:[%s4396 + $0x56] sm:$0xff]
        %v4852 = vld [vmem:[%s4396 + $0x5e] sm:$0xff]
        %v4853 = vld [vmem:[%s4396 + $0x8e] sm:$0xff]
        %v4854 = vld [vmem:[%s4396 + $0x96] sm:$0xff]
        %v4855 = vld [vmem:[%s4396 + $0xc6] sm:$0xff]
        %v4856 = vld [vmem:[%s4396 + $0xce] sm:$0xff]
        %v4857 = vld [vmem:[%s4396 + $0xfe] sm:$0xff]
        %v4858 = vld [vmem:[%s4396 + $0x106] sm:$0xff]
        %v4859 = vld [vmem:[%s4396 + $0x136] sm:$0xff]
        %v4860 = vld [vmem:[%s4396 + $0x13e] sm:$0xff]
        %v4861 = vld [vmem:[%s4396 + $0x16e] sm:$0xff]
        %v4862 = vld [vmem:[%s4396 + $0x176] sm:$0xff]
        %v4863 = vld [vmem:[%s4396 + $0x1a6] sm:$0xff]
        %v4864 = vld [vmem:[%s4396 + $0x1ae] sm:$0xff]
        %v4865 = vld [vmem:[#allocation6] sm:$0xff]
        %v4866 = vld [vmem:[#allocation6 + $0x8] sm:$0xff]
        %v4867 = vld [vmem:[#allocation6 + $0x10] sm:$0xff]
        %v4868 = vld [vmem:[#allocation6 + $0x18] sm:$0xff]
        %v4869 = vld [vmem:[#allocation6 + $0x20] sm:$0xff]
        %v4870 = vld [vmem:[#allocation6 + $0x28] sm:$0xff]
        %v4871 = vld [vmem:[#allocation6 + $0x30] sm:$0xff]
        %v4872 = vld [vmem:[#allocation6 + $0x38] sm:$0xff]
        %v4873 = vld [vmem:[#allocation6 + $0x40] sm:$0xff]
        %v4874 = vld [vmem:[#allocation6 + $0x48] sm:$0xff]
        %v4875 = vld [vmem:[#allocation6 + $0x50] sm:$0xff]
        %v4876 = vld [vmem:[#allocation6 + $0x58] sm:$0xff]
        %v4877 = vld [vmem:[#allocation6 + $0x60] sm:$0xff]
        %v4878 = vld [vmem:[#allocation6 + $0x68] sm:$0xff]
        %v4879 = vld [vmem:[#allocation6 + $0x70] sm:$0xff]
        %v4880 = vld [vmem:[#allocation6 + $0x78] sm:$0xff]
        %s4881 = scalar_lea.vmem [#allocation13], 1024
        %v4882 = vld [vmem:[%s4881] sm:$0xff]
        %v4883 = vld [vmem:[%s4881 + $0x8] sm:$0xff]
        %v4884 = vld [vmem:[%s4881 + $0x10] sm:$0xff]
        %v4885 = vld [vmem:[%s4881 + $0x18] sm:$0xff]
        %v4886 = vld [vmem:[%s4881 + $0x20] sm:$0xff]
        %v4887 = vld [vmem:[%s4881 + $0x28] sm:$0xff]
        %v4888 = vld [vmem:[%s4881 + $0x30] sm:$0xff]
        %v4889 = vld [vmem:[%s4881 + $0x38] sm:$0xff]
        %v4890 = vld [vmem:[%s4881 + $0x40] sm:$0xff]
        %v4891 = vld [vmem:[%s4881 + $0x48] sm:$0xff]
        %v4892 = vld [vmem:[%s4881 + $0x50] sm:$0xff]
        %v4893 = vld [vmem:[%s4881 + $0x58] sm:$0xff]
        %v4894 = vld [vmem:[%s4881 + $0x60] sm:$0xff]
        %v4895 = vld [vmem:[%s4881 + $0x68] sm:$0xff]
        %v4896 = vld [vmem:[%s4881 + $0x70] sm:$0xff]
        %v4897 = vld [vmem:[%s4881 + $0x78] sm:$0xff]
        %4898 = vmatprep.subr.mxu0 0.0
        %4899 = vmatpush1.msra.mxu0 %v4882
        %4900 = vmatprep.subr.mxu0 0.0
        %4901 = vmatpush1.msra.mxu0 %v4883
        %4902 = vmatprep.subr.mxu0 0.0
        %4903 = vmatpush1.msra.mxu0 %v4884
        %4904 = vmatprep.subr.mxu0 0.0
        %4905 = vmatpush1.msra.mxu0 %v4885
        %4906 = vmatprep.subr.mxu0 0.0
        %4907 = vmatpush1.msra.mxu0 %v4886
        %4908 = vmatprep.subr.mxu0 0.0
        %4909 = vmatpush1.msra.mxu0 %v4887
        %4910 = vmatprep.subr.mxu0 0.0
        %4911 = vmatpush1.msra.mxu0 %v4888
        %4912 = vmatprep.subr.mxu0 0.0
        %4913 = vmatpush1.msra.mxu0 %v4889
        %4914 = vmatprep.subr.mxu0 0.0
        %4915 = vmatpush1.msra.mxu0 %v4890
        %4916 = vmatprep.subr.mxu0 0.0
        %4917 = vmatpush1.msra.mxu0 %v4891
        %4918 = vmatprep.subr.mxu0 0.0
        %4919 = vmatpush1.msra.mxu0 %v4892
        %4920 = vmatprep.subr.mxu0 0.0
        %4921 = vmatpush1.msra.mxu0 %v4893
        %4922 = vmatprep.subr.mxu0 0.0
        %4923 = vmatpush1.msra.mxu0 %v4894
        %4924 = vmatprep.subr.mxu0 0.0
        %4925 = vmatpush1.msra.mxu0 %v4895
        %4926 = vmatprep.subr.mxu0 0.0
        %4927 = vmatpush1.msra.mxu0 %v4896
        %4928 = vmatprep.subr.mxu0 0.0
        %4929 = vmatpush1.msra.mxu0 %v4897
        %4930 = vmatprep.subr.mxu0 0.0
        %4931 = vmatpush1.msra.mxu0 0.0
        %4932 = vmatprep.subr.mxu0 0.0
        %4933 = vmatpush1.msra.mxu0 0.0
        %4934 = vmatprep.subr.mxu0 0.0
        %4935 = vmatpush1.msra.mxu0 0.0
        %4936 = vmatprep.subr.mxu0 0.0
        %4937 = vmatpush1.msra.mxu0 0.0
        %4938 = vmatprep.subr.mxu0 0.0
        %4939 = vmatpush1.msra.mxu0 0.0
        %4940 = vmatprep.subr.mxu0 0.0
        %4941 = vmatpush1.msra.mxu0 0.0
        %4942 = vmatprep.subr.mxu0 0.0
        %4943 = vmatpush1.msra.mxu0 0.0
        %4944 = vmatprep.subr.mxu0 0.0
        %4945 = vmatpush1.msra.mxu0 0.0
        %4946 = vmatprep.subr.mxu0 0.0
        %4947 = vmatpush1.msra.mxu0 0.0
        %4948 = vmatprep.subr.mxu0 0.0
        %4949 = vmatpush1.msra.mxu0 0.0
        %4950 = vmatprep.subr.mxu0 0.0
        %4951 = vmatpush1.msra.mxu0 0.0
        %4952 = vmatprep.subr.mxu0 0.0
        %4953 = vmatpush1.msra.mxu0 0.0
        %4954 = vmatprep.subr.mxu0 0.0
        %4955 = vmatpush1.msra.mxu0 0.0
        %4956 = vmatprep.subr.mxu0 0.0
        %4957 = vmatpush1.msra.mxu0 0.0
        %4958 = vmatprep.subr.mxu0 0.0
        %4959 = vmatpush1.msra.mxu0 0.0
        %4960 = vmatprep.subr.mxu0 0.0
        %4961 = vmatpush1.msra.mxu0 0.0
        %4962 = vmatprep.mubr.f32.mxu0 0.0
        %4963 = vmatmul.mubr.f32.gmra.mrb[0].mxu0 %v4849
        %v4964 = vpop.f32.mrb[0].mxu0
        %v4965 = vadd.f32 0.0, %v4964
        %v4966 = vpop.f32.mrb[0].mxu0
        %4967 = vmatprep.mubr.f32.mxu0 0.0
        %4968 = vmatmul.mubr.f32.gmra.mrb[0].mxu0 %v4850
        %v4969 = vpop.f32.mrb[0].mxu0
        %v4970 = vadd.f32 0.0, %v4969
        %v4971 = vpop.f32.mrb[0].mxu0
        %4972 = vmatprep.mubr.f32.mxu0 0.0
        %4973 = vmatmul.mubr.f32.gmra.mrb[0].mxu0 %v4851
        %v4974 = vpop.f32.mrb[0].mxu0
        %v4975 = vadd.f32 0.0, %v4974
        %v4976 = vpop.f32.mrb[0].mxu0
        %4977 = vmatprep.mubr.f32.mxu0 0.0
        %4978 = vmatmul.mubr.f32.gmra.mrb[0].mxu0 %v4852
        %v4979 = vpop.f32.mrb[0].mxu0
        %v4980 = vadd.f32 0.0, %v4979
        %v4981 = vpop.f32.mrb[0].mxu0
        %4982 = vmatprep.mubr.f32.mxu0 0.0
        %4983 = vmatmul.mubr.f32.gmra.mrb[0].mxu0 %v4853
        %v4984 = vpop.f32.mrb[0].mxu0
        %v4985 = vadd.f32 0.0, %v4984
        %v4986 = vpop.f32.mrb[0].mxu0
        %4987 = vmatprep.mubr.f32.mxu0 0.0
        %4988 = vmatmul.mubr.f32.gmra.mrb[0].mxu0 %v4854
        %v4989 = vpop.f32.mrb[0].mxu0
        %v4990 = vadd.f32 0.0, %v4989
        %v4991 = vpop.f32.mrb[0].mxu0
        %4992 = vmatprep.mubr.f32.mxu0 0.0
        %4993 = vmatmul.mubr.f32.gmra.mrb[0].mxu0 %v4855
        %v4994 = vpop.f32.mrb[0].mxu0
        %v4995 = vadd.f32 0.0, %v4994
        %v4996 = vpop.f32.mrb[0].mxu0
        %4997 = vmatprep.mubr.f32.mxu0 0.0
        %4998 = vmatmul.mubr.f32.gmra.mrb[0].mxu0 %v4856
        %v4999 = vpop.f32.mrb[0].mxu0
        %v5000 = vadd.f32 0.0, %v4999
        %v5001 = vpop.f32.mrb[0].mxu0
        %5002 = vmatprep.mubr.f32.mxu0 0.0
        %5003 = vmatmul.mubr.f32.gmra.mrb[0].mxu0 %v4857
        %v5004 = vpop.f32.mrb[0].mxu0
        %v5005 = vadd.f32 0.0, %v5004
        %v5006 = vpop.f32.mrb[0].mxu0
        %5007 = vmatprep.mubr.f32.mxu0 0.0
        %5008 = vmatmul.mubr.f32.gmra.mrb[0].mxu0 %v4858
        %v5009 = vpop.f32.mrb[0].mxu0
        %v5010 = vadd.f32 0.0, %v5009
        %v5011 = vpop.f32.mrb[0].mxu0
        %5012 = vmatprep.mubr.f32.mxu0 0.0
        %5013 = vmatmul.mubr.f32.gmra.mrb[0].mxu0 %v4859
        %v5014 = vpop.f32.mrb[0].mxu0
        %v5015 = vadd.f32 0.0, %v5014
        %v5016 = vpop.f32.mrb[0].mxu0
        %5017 = vmatprep.mubr.f32.mxu0 0.0
        %5018 = vmatmul.mubr.f32.gmra.mrb[0].mxu0 %v4860
        %v5019 = vpop.f32.mrb[0].mxu0
        %v5020 = vadd.f32 0.0, %v5019
        %v5021 = vpop.f32.mrb[0].mxu0
        %5022 = vmatprep.mubr.f32.mxu0 0.0
        %5023 = vmatmul.mubr.f32.gmra.mrb[0].mxu0 %v4861
        %v5024 = vpop.f32.mrb[0].mxu0
        %v5025 = vadd.f32 0.0, %v5024
        %v5026 = vpop.f32.mrb[0].mxu0
        %5027 = vmatprep.mubr.f32.mxu0 0.0
        %5028 = vmatmul.mubr.f32.gmra.mrb[0].mxu0 %v4862
        %v5029 = vpop.f32.mrb[0].mxu0
        %v5030 = vadd.f32 0.0, %v5029
        %v5031 = vpop.f32.mrb[0].mxu0
        %5032 = vmatprep.mubr.f32.mxu0 0.0
        %5033 = vmatmul.mubr.f32.gmra.mrb[0].mxu0 %v4863
        %v5034 = vpop.f32.mrb[0].mxu0
        %v5035 = vadd.f32 0.0, %v5034
        %v5036 = vpop.f32.mrb[0].mxu0
        %5037 = vmatprep.mubr.f32.mxu0 0.0
        %5038 = vmatmul.mubr.f32.gmra.mrb[0].mxu0 %v4864
        %v5039 = vpop.f32.mrb[0].mxu0
        %v5040 = vadd.f32 0.0, %v5039
        %v5041 = vpop.f32.mrb[0].mxu0
        %5042 = vdwg.mxu0
        %v5043 = vadd.f32 %v4865, %v4965
        %v5044 = vadd.f32 %v4866, %v4970
        %v5045 = vadd.f32 %v4867, %v4975
        %v5046 = vadd.f32 %v4868, %v4980
        %v5047 = vadd.f32 %v4869, %v4985
        %v5048 = vadd.f32 %v4870, %v4990
        %v5049 = vadd.f32 %v4871, %v4995
        %v5050 = vadd.f32 %v4872, %v5000
        %v5051 = vadd.f32 %v4873, %v5005
        %v5052 = vadd.f32 %v4874, %v5010
        %v5053 = vadd.f32 %v4875, %v5015
        %v5054 = vadd.f32 %v4876, %v5020
        %v5055 = vadd.f32 %v4877, %v5025
        %v5056 = vadd.f32 %v4878, %v5030
        %v5057 = vadd.f32 %v4879, %v5035
        %v5058 = vadd.f32 %v4880, %v5040
        %5059 = vst [vmem:[#allocation6] sm:$0xff] %v5043
        %5060 = vst [vmem:[#allocation6 + $0x8] sm:$0xff] %v5044
        %5061 = vst [vmem:[#allocation6 + $0x10] sm:$0xff] %v5045
        %5062 = vst [vmem:[#allocation6 + $0x18] sm:$0xff] %v5046
        %5063 = vst [vmem:[#allocation6 + $0x20] sm:$0xff] %v5047
        %5064 = vst [vmem:[#allocation6 + $0x28] sm:$0xff] %v5048
        %5065 = vst [vmem:[#allocation6 + $0x30] sm:$0xff] %v5049
        %5066 = vst [vmem:[#allocation6 + $0x38] sm:$0xff] %v5050
        %5067 = vst [vmem:[#allocation6 + $0x40] sm:$0xff] %v5051
        %5068 = vst [vmem:[#allocation6 + $0x48] sm:$0xff] %v5052
        %5069 = vst [vmem:[#allocation6 + $0x50] sm:$0xff] %v5053
        %5070 = vst [vmem:[#allocation6 + $0x58] sm:$0xff] %v5054
        %5071 = vst [vmem:[#allocation6 + $0x60] sm:$0xff] %v5055
        %5072 = vst [vmem:[#allocation6 + $0x68] sm:$0xff] %v5056
        %5073 = vst [vmem:[#allocation6 + $0x70] sm:$0xff] %v5057
        %5074 = vst [vmem:[#allocation6 + $0x78] sm:$0xff] %v5058
        %s5075 = smul.u32 %s714, 56
        %s5076 = scalar_lea.vmem [#allocation2], %s5075
        %v5077 = vld [vmem:[%s5076] sm:$0xff]
        %v5078 = vld [vmem:[%s5076 + $0x8] sm:$0xff]
        %v5079 = vld [vmem:[%s5076 + $0x38] sm:$0xff]
        %v5080 = vld [vmem:[%s5076 + $0x40] sm:$0xff]
        %v5081 = vld [vmem:[%s5076 + $0x70] sm:$0xff]
        %v5082 = vld [vmem:[%s5076 + $0x78] sm:$0xff]
        %v5083 = vld [vmem:[%s5076 + $0xa8] sm:$0xff]
        %v5084 = vld [vmem:[%s5076 + $0xb0] sm:$0xff]
        %v5085 = vld [vmem:[%s5076 + $0xe0] sm:$0xff]
        %v5086 = vld [vmem:[%s5076 + $0xe8] sm:$0xff]
        %v5087 = vld [vmem:[%s5076 + $0x118] sm:$0xff]
        %v5088 = vld [vmem:[%s5076 + $0x120] sm:$0xff]
        %v5089 = vld [vmem:[%s5076 + $0x150] sm:$0xff]
        %v5090 = vld [vmem:[%s5076 + $0x158] sm:$0xff]
        %v5091 = vld [vmem:[%s5076 + $0x188] sm:$0xff]
        %v5092 = vld [vmem:[%s5076 + $0x190] sm:$0xff]
        %v5093 = vld [vmem:[#allocation7] sm:$0xff]
        %v5094 = vld [vmem:[#allocation7 + $0x8] sm:$0xff]
        %v5095 = vld [vmem:[#allocation7 + $0x10] sm:$0xff]
        %v5096 = vld [vmem:[#allocation7 + $0x18] sm:$0xff]
        %v5097 = vld [vmem:[#allocation7 + $0x20] sm:$0xff]
        %v5098 = vld [vmem:[#allocation7 + $0x28] sm:$0xff]
        %v5099 = vld [vmem:[#allocation7 + $0x30] sm:$0xff]
        %v5100 = vld [vmem:[#allocation7 + $0x38] sm:$0xff]
        %v5101 = vld [vmem:[#allocation7 + $0x40] sm:$0xff]
        %v5102 = vld [vmem:[#allocation7 + $0x48] sm:$0xff]
        %v5103 = vld [vmem:[#allocation7 + $0x50] sm:$0xff]
        %v5104 = vld [vmem:[#allocation7 + $0x58] sm:$0xff]
        %v5105 = vld [vmem:[#allocation7 + $0x60] sm:$0xff]
        %v5106 = vld [vmem:[#allocation7 + $0x68] sm:$0xff]
        %v5107 = vld [vmem:[#allocation7 + $0x70] sm:$0xff]
        %v5108 = vld [vmem:[#allocation7 + $0x78] sm:$0xff]
        %v5109 = vld [vmem:[#allocation14] sm:$0xff]
        %v5110 = vld [vmem:[#allocation14 + $0x8] sm:$0xff]
        %v5111 = vld [vmem:[#allocation14 + $0x10] sm:$0xff]
        %v5112 = vld [vmem:[#allocation14 + $0x18] sm:$0xff]
        %v5113 = vld [vmem:[#allocation14 + $0x20] sm:$0xff]
        %v5114 = vld [vmem:[#allocation14 + $0x28] sm:$0xff]
        %v5115 = vld [vmem:[#allocation14 + $0x30] sm:$0xff]
        %v5116 = vld [vmem:[#allocation14 + $0x38] sm:$0xff]
        %v5117 = vld [vmem:[#allocation14 + $0x40] sm:$0xff]
        %v5118 = vld [vmem:[#allocation14 + $0x48] sm:$0xff]
        %v5119 = vld [vmem:[#allocation14 + $0x50] sm:$0xff]
        %v5120 = vld [vmem:[#allocation14 + $0x58] sm:$0xff]
        %v5121 = vld [vmem:[#allocation14 + $0x60] sm:$0xff]
        %v5122 = vld [vmem:[#allocation14 + $0x68] sm:$0xff]
        %v5123 = vld [vmem:[#allocation14 + $0x70] sm:$0xff]
        %v5124 = vld [vmem:[#allocation14 + $0x78] sm:$0xff]
        %5125 = vmatprep.subr.mxu0 0.0
        %5126 = vmatpush1.msra.mxu0 %v5109
        %5127 = vmatprep.subr.mxu0 0.0
        %5128 = vmatpush1.msra.mxu0 %v5110
        %5129 = vmatprep.subr.mxu0 0.0
        %5130 = vmatpush1.msra.mxu0 %v5111
        %5131 = vmatprep.subr.mxu0 0.0
        %5132 = vmatpush1.msra.mxu0 %v5112
        %5133 = vmatprep.subr.mxu0 0.0
        %5134 = vmatpush1.msra.mxu0 %v5113
        %5135 = vmatprep.subr.mxu0 0.0
        %5136 = vmatpush1.msra.mxu0 %v5114
        %5137 = vmatprep.subr.mxu0 0.0
        %5138 = vmatpush1.msra.mxu0 %v5115
        %5139 = vmatprep.subr.mxu0 0.0
        %5140 = vmatpush1.msra.mxu0 %v5116
        %5141 = vmatprep.subr.mxu0 0.0
        %5142 = vmatpush1.msra.mxu0 %v5117
        %5143 = vmatprep.subr.mxu0 0.0
        %5144 = vmatpush1.msra.mxu0 %v5118
        %5145 = vmatprep.subr.mxu0 0.0
        %5146 = vmatpush1.msra.mxu0 %v5119
        %5147 = vmatprep.subr.mxu0 0.0
        %5148 = vmatpush1.msra.mxu0 %v5120
        %5149 = vmatprep.subr.mxu0 0.0
        %5150 = vmatpush1.msra.mxu0 %v5121
        %5151 = vmatprep.subr.mxu0 0.0
        %5152 = vmatpush1.msra.mxu0 %v5122
        %5153 = vmatprep.subr.mxu0 0.0
        %5154 = vmatpush1.msra.mxu0 %v5123
        %5155 = vmatprep.subr.mxu0 0.0
        %5156 = vmatpush1.msra.mxu0 %v5124
        %5157 = vmatprep.subr.mxu0 0.0
        %5158 = vmatpush1.msra.mxu0 0.0
        %5159 = vmatprep.subr.mxu0 0.0
        %5160 = vmatpush1.msra.mxu0 0.0
        %5161 = vmatprep.subr.mxu0 0.0
        %5162 = vmatpush1.msra.mxu0 0.0
        %5163 = vmatprep.subr.mxu0 0.0
        %5164 = vmatpush1.msra.mxu0 0.0
        %5165 = vmatprep.subr.mxu0 0.0
        %5166 = vmatpush1.msra.mxu0 0.0
        %5167 = vmatprep.subr.mxu0 0.0
        %5168 = vmatpush1.msra.mxu0 0.0
        %5169 = vmatprep.subr.mxu0 0.0
        %5170 = vmatpush1.msra.mxu0 0.0
        %5171 = vmatprep.subr.mxu0 0.0
        %5172 = vmatpush1.msra.mxu0 0.0
        %5173 = vmatprep.subr.mxu0 0.0
        %5174 = vmatpush1.msra.mxu0 0.0
        %5175 = vmatprep.subr.mxu0 0.0
        %5176 = vmatpush1.msra.mxu0 0.0
        %5177 = vmatprep.subr.mxu0 0.0
        %5178 = vmatpush1.msra.mxu0 0.0
        %5179 = vmatprep.subr.mxu0 0.0
        %5180 = vmatpush1.msra.mxu0 0.0
        %5181 = vmatprep.subr.mxu0 0.0
        %5182 = vmatpush1.msra.mxu0 0.0
        %5183 = vmatprep.subr.mxu0 0.0
        %5184 = vmatpush1.msra.mxu0 0.0
        %5185 = vmatprep.subr.mxu0 0.0
        %5186 = vmatpush1.msra.mxu0 0.0
        %5187 = vmatprep.subr.mxu0 0.0
        %5188 = vmatpush1.msra.mxu0 0.0
        %5189 = vmatprep.mubr.f32.mxu0 0.0
        %5190 = vmatmul.mubr.f32.gmra.mrb[0].mxu0 %v5077
        %v5191 = vpop.f32.mrb[0].mxu0
        %v5192 = vadd.f32 0.0, %v5191
        %v5193 = vpop.f32.mrb[0].mxu0
        %5194 = vmatprep.mubr.f32.mxu0 0.0
        %5195 = vmatmul.mubr.f32.gmra.mrb[0].mxu0 %v5078
        %v5196 = vpop.f32.mrb[0].mxu0
        %v5197 = vadd.f32 0.0, %v5196
        %v5198 = vpop.f32.mrb[0].mxu0
        %5199 = vmatprep.mubr.f32.mxu0 0.0
        %5200 = vmatmul.mubr.f32.gmra.mrb[0].mxu0 %v5079
        %v5201 = vpop.f32.mrb[0].mxu0
        %v5202 = vadd.f32 0.0, %v5201
        %v5203 = vpop.f32.mrb[0].mxu0
        %5204 = vmatprep.mubr.f32.mxu0 0.0
        %5205 = vmatmul.mubr.f32.gmra.mrb[0].mxu0 %v5080
        %v5206 = vpop.f32.mrb[0].mxu0
        %v5207 = vadd.f32 0.0, %v5206
        %v5208 = vpop.f32.mrb[0].mxu0
        %5209 = vmatprep.mubr.f32.mxu0 0.0
        %5210 = vmatmul.mubr.f32.gmra.mrb[0].mxu0 %v5081
        %v5211 = vpop.f32.mrb[0].mxu0
        %v5212 = vadd.f32 0.0, %v5211
        %v5213 = vpop.f32.mrb[0].mxu0
        %5214 = vmatprep.mubr.f32.mxu0 0.0
        %5215 = vmatmul.mubr.f32.gmra.mrb[0].mxu0 %v5082
        %v5216 = vpop.f32.mrb[0].mxu0
        %v5217 = vadd.f32 0.0, %v5216
        %v5218 = vpop.f32.mrb[0].mxu0
        %5219 = vmatprep.mubr.f32.mxu0 0.0
        %5220 = vmatmul.mubr.f32.gmra.mrb[0].mxu0 %v5083
        %v5221 = vpop.f32.mrb[0].mxu0
        %v5222 = vadd.f32 0.0, %v5221
        %v5223 = vpop.f32.mrb[0].mxu0
        %5224 = vmatprep.mubr.f32.mxu0 0.0
        %5225 = vmatmul.mubr.f32.gmra.mrb[0].mxu0 %v5084
        %v5226 = vpop.f32.mrb[0].mxu0
        %v5227 = vadd.f32 0.0, %v5226
        %v5228 = vpop.f32.mrb[0].mxu0
        %5229 = vmatprep.mubr.f32.mxu0 0.0
        %5230 = vmatmul.mubr.f32.gmra.mrb[0].mxu0 %v5085
        %v5231 = vpop.f32.mrb[0].mxu0
        %v5232 = vadd.f32 0.0, %v5231
        %v5233 = vpop.f32.mrb[0].mxu0
        %5234 = vmatprep.mubr.f32.mxu0 0.0
        %5235 = vmatmul.mubr.f32.gmra.mrb[0].mxu0 %v5086
        %v5236 = vpop.f32.mrb[0].mxu0
        %v5237 = vadd.f32 0.0, %v5236
        %v5238 = vpop.f32.mrb[0].mxu0
        %5239 = vmatprep.mubr.f32.mxu0 0.0
        %5240 = vmatmul.mubr.f32.gmra.mrb[0].mxu0 %v5087
        %v5241 = vpop.f32.mrb[0].mxu0
        %v5242 = vadd.f32 0.0, %v5241
        %v5243 = vpop.f32.mrb[0].mxu0
        %5244 = vmatprep.mubr.f32.mxu0 0.0
        %5245 = vmatmul.mubr.f32.gmra.mrb[0].mxu0 %v5088
        %v5246 = vpop.f32.mrb[0].mxu0
        %v5247 = vadd.f32 0.0, %v5246
        %v5248 = vpop.f32.mrb[0].mxu0
        %5249 = vmatprep.mubr.f32.mxu0 0.0
        %5250 = vmatmul.mubr.f32.gmra.mrb[0].mxu0 %v5089
        %v5251 = vpop.f32.mrb[0].mxu0
        %v5252 = vadd.f32 0.0, %v5251
        %v5253 = vpop.f32.mrb[0].mxu0
        %5254 = vmatprep.mubr.f32.mxu0 0.0
        %5255 = vmatmul.mubr.f32.gmra.mrb[0].mxu0 %v5090
        %v5256 = vpop.f32.mrb[0].mxu0
        %v5257 = vadd.f32 0.0, %v5256
        %v5258 = vpop.f32.mrb[0].mxu0
        %5259 = vmatprep.mubr.f32.mxu0 0.0
        %5260 = vmatmul.mubr.f32.gmra.mrb[0].mxu0 %v5091
        %v5261 = vpop.f32.mrb[0].mxu0
        %v5262 = vadd.f32 0.0, %v5261
        %v5263 = vpop.f32.mrb[0].mxu0
        %5264 = vmatprep.mubr.f32.mxu0 0.0
        %5265 = vmatmul.mubr.f32.gmra.mrb[0].mxu0 %v5092
        %v5266 = vpop.f32.mrb[0].mxu0
        %v5267 = vadd.f32 0.0, %v5266
        %v5268 = vpop.f32.mrb[0].mxu0
        %5269 = vdwg.mxu0
        %v5270 = vadd.f32 %v5093, %v5192
        %v5271 = vadd.f32 %v5094, %v5197
        %v5272 = vadd.f32 %v5095, %v5202
        %v5273 = vadd.f32 %v5096, %v5207
        %v5274 = vadd.f32 %v5097, %v5212
        %v5275 = vadd.f32 %v5098, %v5217
        %v5276 = vadd.f32 %v5099, %v5222
        %v5277 = vadd.f32 %v5100, %v5227
        %v5278 = vadd.f32 %v5101, %v5232
        %v5279 = vadd.f32 %v5102, %v5237
        %v5280 = vadd.f32 %v5103, %v5242
        %v5281 = vadd.f32 %v5104, %v5247
        %v5282 = vadd.f32 %v5105, %v5252
        %v5283 = vadd.f32 %v5106, %v5257
        %v5284 = vadd.f32 %v5107, %v5262
        %v5285 = vadd.f32 %v5108, %v5267
        %5286 = vst [vmem:[#allocation7] sm:$0xff] %v5270
        %5287 = vst [vmem:[#allocation7 + $0x8] sm:$0xff] %v5271
        %5288 = vst [vmem:[#allocation7 + $0x10] sm:$0xff] %v5272
        %5289 = vst [vmem:[#allocation7 + $0x18] sm:$0xff] %v5273
        %5290 = vst [vmem:[#allocation7 + $0x20] sm:$0xff] %v5274
        %5291 = vst [vmem:[#allocation7 + $0x28] sm:$0xff] %v5275
        %5292 = vst [vmem:[#allocation7 + $0x30] sm:$0xff] %v5276
        %5293 = vst [vmem:[#allocation7 + $0x38] sm:$0xff] %v5277
        %5294 = vst [vmem:[#allocation7 + $0x40] sm:$0xff] %v5278
        %5295 = vst [vmem:[#allocation7 + $0x48] sm:$0xff] %v5279
        %5296 = vst [vmem:[#allocation7 + $0x50] sm:$0xff] %v5280
        %5297 = vst [vmem:[#allocation7 + $0x58] sm:$0xff] %v5281
        %5298 = vst [vmem:[#allocation7 + $0x60] sm:$0xff] %v5282
        %5299 = vst [vmem:[#allocation7 + $0x68] sm:$0xff] %v5283
        %5300 = vst [vmem:[#allocation7 + $0x70] sm:$0xff] %v5284
        %5301 = vst [vmem:[#allocation7 + $0x78] sm:$0xff] %v5285
        %v5302 = vld [vmem:[%s5076 + $0x12] sm:$0xff]
        %v5303 = vld [vmem:[%s5076 + $0x1a] sm:$0xff]
        %v5304 = vld [vmem:[%s5076 + $0x4a] sm:$0xff]
        %v5305 = vld [vmem:[%s5076 + $0x52] sm:$0xff]
        %v5306 = vld [vmem:[%s5076 + $0x82] sm:$0xff]
        %v5307 = vld [vmem:[%s5076 + $0x8a] sm:$0xff]
        %v5308 = vld [vmem:[%s5076 + $0xba] sm:$0xff]
        %v5309 = vld [vmem:[%s5076 + $0xc2] sm:$0xff]
        %v5310 = vld [vmem:[%s5076 + $0xf2] sm:$0xff]
        %v5311 = vld [vmem:[%s5076 + $0xfa] sm:$0xff]
        %v5312 = vld [vmem:[%s5076 + $0x12a] sm:$0xff]
        %v5313 = vld [vmem:[%s5076 + $0x132] sm:$0xff]
        %v5314 = vld [vmem:[%s5076 + $0x162] sm:$0xff]
        %v5315 = vld [vmem:[%s5076 + $0x16a] sm:$0xff]
        %v5316 = vld [vmem:[%s5076 + $0x19a] sm:$0xff]
        %v5317 = vld [vmem:[%s5076 + $0x1a2] sm:$0xff]
        %v5318 = vld [vmem:[#allocation7] sm:$0xff]
        %v5319 = vld [vmem:[#allocation7 + $0x8] sm:$0xff]
        %v5320 = vld [vmem:[#allocation7 + $0x10] sm:$0xff]
        %v5321 = vld [vmem:[#allocation7 + $0x18] sm:$0xff]
        %v5322 = vld [vmem:[#allocation7 + $0x20] sm:$0xff]
        %v5323 = vld [vmem:[#allocation7 + $0x28] sm:$0xff]
        %v5324 = vld [vmem:[#allocation7 + $0x30] sm:$0xff]
        %v5325 = vld [vmem:[#allocation7 + $0x38] sm:$0xff]
        %v5326 = vld [vmem:[#allocation7 + $0x40] sm:$0xff]
        %v5327 = vld [vmem:[#allocation7 + $0x48] sm:$0xff]
        %v5328 = vld [vmem:[#allocation7 + $0x50] sm:$0xff]
        %v5329 = vld [vmem:[#allocation7 + $0x58] sm:$0xff]
        %v5330 = vld [vmem:[#allocation7 + $0x60] sm:$0xff]
        %v5331 = vld [vmem:[#allocation7 + $0x68] sm:$0xff]
        %v5332 = vld [vmem:[#allocation7 + $0x70] sm:$0xff]
        %v5333 = vld [vmem:[#allocation7 + $0x78] sm:$0xff]
        %s5334 = scalar_lea.vmem [#allocation14], 128
        %v5335 = vld [vmem:[%s5334] sm:$0xff]
        %v5336 = vld [vmem:[%s5334 + $0x8] sm:$0xff]
        %v5337 = vld [vmem:[%s5334 + $0x10] sm:$0xff]
        %v5338 = vld [vmem:[%s5334 + $0x18] sm:$0xff]
        %v5339 = vld [vmem:[%s5334 + $0x20] sm:$0xff]
        %v5340 = vld [vmem:[%s5334 + $0x28] sm:$0xff]
        %v5341 = vld [vmem:[%s5334 + $0x30] sm:$0xff]
        %v5342 = vld [vmem:[%s5334 + $0x38] sm:$0xff]
        %v5343 = vld [vmem:[%s5334 + $0x40] sm:$0xff]
        %v5344 = vld [vmem:[%s5334 + $0x48] sm:$0xff]
        %v5345 = vld [vmem:[%s5334 + $0x50] sm:$0xff]
        %v5346 = vld [vmem:[%s5334 + $0x58] sm:$0xff]
        %v5347 = vld [vmem:[%s5334 + $0x60] sm:$0xff]
        %v5348 = vld [vmem:[%s5334 + $0x68] sm:$0xff]
        %v5349 = vld [vmem:[%s5334 + $0x70] sm:$0xff]
        %v5350 = vld [vmem:[%s5334 + $0x78] sm:$0xff]
        %5351 = vmatprep.subr.mxu0 0.0
        %5352 = vmatpush1.msra.mxu0 %v5335
        %5353 = vmatprep.subr.mxu0 0.0
        %5354 = vmatpush1.msra.mxu0 %v5336
        %5355 = vmatprep.subr.mxu0 0.0
        %5356 = vmatpush1.msra.mxu0 %v5337
        %5357 = vmatprep.subr.mxu0 0.0
        %5358 = vmatpush1.msra.mxu0 %v5338
        %5359 = vmatprep.subr.mxu0 0.0
        %5360 = vmatpush1.msra.mxu0 %v5339
        %5361 = vmatprep.subr.mxu0 0.0
        %5362 = vmatpush1.msra.mxu0 %v5340
        %5363 = vmatprep.subr.mxu0 0.0
        %5364 = vmatpush1.msra.mxu0 %v5341
        %5365 = vmatprep.subr.mxu0 0.0
        %5366 = vmatpush1.msra.mxu0 %v5342
        %5367 = vmatprep.subr.mxu0 0.0
        %5368 = vmatpush1.msra.mxu0 %v5343
        %5369 = vmatprep.subr.mxu0 0.0
        %5370 = vmatpush1.msra.mxu0 %v5344
        %5371 = vmatprep.subr.mxu0 0.0
        %5372 = vmatpush1.msra.mxu0 %v5345
        %5373 = vmatprep.subr.mxu0 0.0
        %5374 = vmatpush1.msra.mxu0 %v5346
        %5375 = vmatprep.subr.mxu0 0.0
        %5376 = vmatpush1.msra.mxu0 %v5347
        %5377 = vmatprep.subr.mxu0 0.0
        %5378 = vmatpush1.msra.mxu0 %v5348
        %5379 = vmatprep.subr.mxu0 0.0
        %5380 = vmatpush1.msra.mxu0 %v5349
        %5381 = vmatprep.subr.mxu0 0.0
        %5382 = vmatpush1.msra.mxu0 %v5350
        %5383 = vmatprep.subr.mxu0 0.0
        %5384 = vmatpush1.msra.mxu0 0.0
        %5385 = vmatprep.subr.mxu0 0.0
        %5386 = vmatpush1.msra.mxu0 0.0
        %5387 = vmatprep.subr.mxu0 0.0
        %5388 = vmatpush1.msra.mxu0 0.0
        %5389 = vmatprep.subr.mxu0 0.0
        %5390 = vmatpush1.msra.mxu0 0.0
        %5391 = vmatprep.subr.mxu0 0.0
        %5392 = vmatpush1.msra.mxu0 0.0
        %5393 = vmatprep.subr.mxu0 0.0
        %5394 = vmatpush1.msra.mxu0 0.0
        %5395 = vmatprep.subr.mxu0 0.0
        %5396 = vmatpush1.msra.mxu0 0.0
        %5397 = vmatprep.subr.mxu0 0.0
        %5398 = vmatpush1.msra.mxu0 0.0
        %5399 = vmatprep.subr.mxu0 0.0
        %5400 = vmatpush1.msra.mxu0 0.0
        %5401 = vmatprep.subr.mxu0 0.0
        %5402 = vmatpush1.msra.mxu0 0.0
        %5403 = vmatprep.subr.mxu0 0.0
        %5404 = vmatpush1.msra.mxu0 0.0
        %5405 = vmatprep.subr.mxu0 0.0
        %5406 = vmatpush1.msra.mxu0 0.0
        %5407 = vmatprep.subr.mxu0 0.0
        %5408 = vmatpush1.msra.mxu0 0.0
        %5409 = vmatprep.subr.mxu0 0.0
        %5410 = vmatpush1.msra.mxu0 0.0
        %5411 = vmatprep.subr.mxu0 0.0
        %5412 = vmatpush1.msra.mxu0 0.0
        %5413 = vmatprep.subr.mxu0 0.0
        %5414 = vmatpush1.msra.mxu0 0.0
        %5415 = vmatprep.mubr.f32.mxu0 0.0
        %5416 = vmatmul.mubr.f32.gmra.mrb[0].mxu0 %v5302
        %v5417 = vpop.f32.mrb[0].mxu0
        %v5418 = vadd.f32 0.0, %v5417
        %v5419 = vpop.f32.mrb[0].mxu0
        %5420 = vmatprep.mubr.f32.mxu0 0.0
        %5421 = vmatmul.mubr.f32.gmra.mrb[0].mxu0 %v5303
        %v5422 = vpop.f32.mrb[0].mxu0
        %v5423 = vadd.f32 0.0, %v5422
        %v5424 = vpop.f32.mrb[0].mxu0
        %5425 = vmatprep.mubr.f32.mxu0 0.0
        %5426 = vmatmul.mubr.f32.gmra.mrb[0].mxu0 %v5304
        %v5427 = vpop.f32.mrb[0].mxu0
        %v5428 = vadd.f32 0.0, %v5427
        %v5429 = vpop.f32.mrb[0].mxu0
        %5430 = vmatprep.mubr.f32.mxu0 0.0
        %5431 = vmatmul.mubr.f32.gmra.mrb[0].mxu0 %v5305
        %v5432 = vpop.f32.mrb[0].mxu0
        %v5433 = vadd.f32 0.0, %v5432
        %v5434 = vpop.f32.mrb[0].mxu0
        %5435 = vmatprep.mubr.f32.mxu0 0.0
        %5436 = vmatmul.mubr.f32.gmra.mrb[0].mxu0 %v5306
        %v5437 = vpop.f32.mrb[0].mxu0
        %v5438 = vadd.f32 0.0, %v5437
        %v5439 = vpop.f32.mrb[0].mxu0
        %5440 = vmatprep.mubr.f32.mxu0 0.0
        %5441 = vmatmul.mubr.f32.gmra.mrb[0].mxu0 %v5307
        %v5442 = vpop.f32.mrb[0].mxu0
        %v5443 = vadd.f32 0.0, %v5442
        %v5444 = vpop.f32.mrb[0].mxu0
        %5445 = vmatprep.mubr.f32.mxu0 0.0
        %5446 = vmatmul.mubr.f32.gmra.mrb[0].mxu0 %v5308
        %v5447 = vpop.f32.mrb[0].mxu0
        %v5448 = vadd.f32 0.0, %v5447
        %v5449 = vpop.f32.mrb[0].mxu0
        %5450 = vmatprep.mubr.f32.mxu0 0.0
        %5451 = vmatmul.mubr.f32.gmra.mrb[0].mxu0 %v5309
        %v5452 = vpop.f32.mrb[0].mxu0
        %v5453 = vadd.f32 0.0, %v5452
        %v5454 = vpop.f32.mrb[0].mxu0
        %5455 = vmatprep.mubr.f32.mxu0 0.0
        %5456 = vmatmul.mubr.f32.gmra.mrb[0].mxu0 %v5310
        %v5457 = vpop.f32.mrb[0].mxu0
        %v5458 = vadd.f32 0.0, %v5457
        %v5459 = vpop.f32.mrb[0].mxu0
        %5460 = vmatprep.mubr.f32.mxu0 0.0
        %5461 = vmatmul.mubr.f32.gmra.mrb[0].mxu0 %v5311
        %v5462 = vpop.f32.mrb[0].mxu0
        %v5463 = vadd.f32 0.0, %v5462
        %v5464 = vpop.f32.mrb[0].mxu0
        %5465 = vmatprep.mubr.f32.mxu0 0.0
        %5466 = vmatmul.mubr.f32.gmra.mrb[0].mxu0 %v5312
        %v5467 = vpop.f32.mrb[0].mxu0
        %v5468 = vadd.f32 0.0, %v5467
        %v5469 = vpop.f32.mrb[0].mxu0
        %5470 = vmatprep.mubr.f32.mxu0 0.0
        %5471 = vmatmul.mubr.f32.gmra.mrb[0].mxu0 %v5313
        %v5472 = vpop.f32.mrb[0].mxu0
        %v5473 = vadd.f32 0.0, %v5472
        %v5474 = vpop.f32.mrb[0].mxu0
        %5475 = vmatprep.mubr.f32.mxu0 0.0
        %5476 = vmatmul.mubr.f32.gmra.mrb[0].mxu0 %v5314
        %v5477 = vpop.f32.mrb[0].mxu0
        %v5478 = vadd.f32 0.0, %v5477
        %v5479 = vpop.f32.mrb[0].mxu0
        %5480 = vmatprep.mubr.f32.mxu0 0.0
        %5481 = vmatmul.mubr.f32.gmra.mrb[0].mxu0 %v5315
        %v5482 = vpop.f32.mrb[0].mxu0
        %v5483 = vadd.f32 0.0, %v5482
        %v5484 = vpop.f32.mrb[0].mxu0
        %5485 = vmatprep.mubr.f32.mxu0 0.0
        %5486 = vmatmul.mubr.f32.gmra.mrb[0].mxu0 %v5316
        %v5487 = vpop.f32.mrb[0].mxu0
        %v5488 = vadd.f32 0.0, %v5487
        %v5489 = vpop.f32.mrb[0].mxu0
        %5490 = vmatprep.mubr.f32.mxu0 0.0
        %5491 = vmatmul.mubr.f32.gmra.mrb[0].mxu0 %v5317
        %v5492 = vpop.f32.mrb[0].mxu0
        %v5493 = vadd.f32 0.0, %v5492
        %v5494 = vpop.f32.mrb[0].mxu0
        %5495 = vdwg.mxu0
        %v5496 = vadd.f32 %v5318, %v5418
        %v5497 = vadd.f32 %v5319, %v5423
        %v5498 = vadd.f32 %v5320, %v5428
        %v5499 = vadd.f32 %v5321, %v5433
        %v5500 = vadd.f32 %v5322, %v5438
        %v5501 = vadd.f32 %v5323, %v5443
        %v5502 = vadd.f32 %v5324, %v5448
        %v5503 = vadd.f32 %v5325, %v5453
        %v5504 = vadd.f32 %v5326, %v5458
        %v5505 = vadd.f32 %v5327, %v5463
        %v5506 = vadd.f32 %v5328, %v5468
        %v5507 = vadd.f32 %v5329, %v5473
        %v5508 = vadd.f32 %v5330, %v5478
        %v5509 = vadd.f32 %v5331, %v5483
        %v5510 = vadd.f32 %v5332, %v5488
        %v5511 = vadd.f32 %v5333, %v5493
        %5512 = vst [vmem:[#allocation7] sm:$0xff] %v5496
        %5513 = vst [vmem:[#allocation7 + $0x8] sm:$0xff] %v5497
        %5514 = vst [vmem:[#allocation7 + $0x10] sm:$0xff] %v5498
        %5515 = vst [vmem:[#allocation7 + $0x18] sm:$0xff] %v5499
        %5516 = vst [vmem:[#allocation7 + $0x20] sm:$0xff] %v5500
        %5517 = vst [vmem:[#allocation7 + $0x28] sm:$0xff] %v5501
        %5518 = vst [vmem:[#allocation7 + $0x30] sm:$0xff] %v5502
        %5519 = vst [vmem:[#allocation7 + $0x38] sm:$0xff] %v5503
        %5520 = vst [vmem:[#allocation7 + $0x40] sm:$0xff] %v5504
        %5521 = vst [vmem:[#allocation7 + $0x48] sm:$0xff] %v5505
        %5522 = vst [vmem:[#allocation7 + $0x50] sm:$0xff] %v5506
        %5523 = vst [vmem:[#allocation7 + $0x58] sm:$0xff] %v5507
        %5524 = vst [vmem:[#allocation7 + $0x60] sm:$0xff] %v5508
        %5525 = vst [vmem:[#allocation7 + $0x68] sm:$0xff] %v5509
        %5526 = vst [vmem:[#allocation7 + $0x70] sm:$0xff] %v5510
        %5527 = vst [vmem:[#allocation7 + $0x78] sm:$0xff] %v5511
        %v5528 = vld [vmem:[%s5076 + $0x24] sm:$0xff]
        %v5529 = vld [vmem:[%s5076 + $0x2c] sm:$0xff]
        %v5530 = vld [vmem:[%s5076 + $0x5c] sm:$0xff]
        %v5531 = vld [vmem:[%s5076 + $0x64] sm:$0xff]
        %v5532 = vld [vmem:[%s5076 + $0x94] sm:$0xff]
        %v5533 = vld [vmem:[%s5076 + $0x9c] sm:$0xff]
        %v5534 = vld [vmem:[%s5076 + $0xcc] sm:$0xff]
        %v5535 = vld [vmem:[%s5076 + $0xd4] sm:$0xff]
        %v5536 = vld [vmem:[%s5076 + $0x104] sm:$0xff]
        %v5537 = vld [vmem:[%s5076 + $0x10c] sm:$0xff]
        %v5538 = vld [vmem:[%s5076 + $0x13c] sm:$0xff]
        %v5539 = vld [vmem:[%s5076 + $0x144] sm:$0xff]
        %v5540 = vld [vmem:[%s5076 + $0x174] sm:$0xff]
        %v5541 = vld [vmem:[%s5076 + $0x17c] sm:$0xff]
        %v5542 = vld [vmem:[%s5076 + $0x1ac] sm:$0xff]
        %v5543 = vld [vmem:[%s5076 + $0x1b4] sm:$0xff]
        %v5544 = vld [vmem:[#allocation7] sm:$0xff]
        %v5545 = vld [vmem:[#allocation7 + $0x8] sm:$0xff]
        %v5546 = vld [vmem:[#allocation7 + $0x10] sm:$0xff]
        %v5547 = vld [vmem:[#allocation7 + $0x18] sm:$0xff]
        %v5548 = vld [vmem:[#allocation7 + $0x20] sm:$0xff]
        %v5549 = vld [vmem:[#allocation7 + $0x28] sm:$0xff]
        %v5550 = vld [vmem:[#allocation7 + $0x30] sm:$0xff]
        %v5551 = vld [vmem:[#allocation7 + $0x38] sm:$0xff]
        %v5552 = vld [vmem:[#allocation7 + $0x40] sm:$0xff]
        %v5553 = vld [vmem:[#allocation7 + $0x48] sm:$0xff]
        %v5554 = vld [vmem:[#allocation7 + $0x50] sm:$0xff]
        %v5555 = vld [vmem:[#allocation7 + $0x58] sm:$0xff]
        %v5556 = vld [vmem:[#allocation7 + $0x60] sm:$0xff]
        %v5557 = vld [vmem:[#allocation7 + $0x68] sm:$0xff]
        %v5558 = vld [vmem:[#allocation7 + $0x70] sm:$0xff]
        %v5559 = vld [vmem:[#allocation7 + $0x78] sm:$0xff]
        %s5560 = scalar_lea.vmem [#allocation14], 256
        %v5561 = vld [vmem:[%s5560] sm:$0xff]
        %v5562 = vld [vmem:[%s5560 + $0x8] sm:$0xff]
        %v5563 = vld [vmem:[%s5560 + $0x10] sm:$0xff]
        %v5564 = vld [vmem:[%s5560 + $0x18] sm:$0xff]
        %v5565 = vld [vmem:[%s5560 + $0x20] sm:$0xff]
        %v5566 = vld [vmem:[%s5560 + $0x28] sm:$0xff]
        %v5567 = vld [vmem:[%s5560 + $0x30] sm:$0xff]
        %v5568 = vld [vmem:[%s5560 + $0x38] sm:$0xff]
        %v5569 = vld [vmem:[%s5560 + $0x40] sm:$0xff]
        %v5570 = vld [vmem:[%s5560 + $0x48] sm:$0xff]
        %v5571 = vld [vmem:[%s5560 + $0x50] sm:$0xff]
        %v5572 = vld [vmem:[%s5560 + $0x58] sm:$0xff]
        %v5573 = vld [vmem:[%s5560 + $0x60] sm:$0xff]
        %v5574 = vld [vmem:[%s5560 + $0x68] sm:$0xff]
        %v5575 = vld [vmem:[%s5560 + $0x70] sm:$0xff]
        %v5576 = vld [vmem:[%s5560 + $0x78] sm:$0xff]
        %5577 = vmatprep.subr.mxu0 0.0
        %5578 = vmatpush1.msra.mxu0 %v5561
        %5579 = vmatprep.subr.mxu0 0.0
        %5580 = vmatpush1.msra.mxu0 %v5562
        %5581 = vmatprep.subr.mxu0 0.0
        %5582 = vmatpush1.msra.mxu0 %v5563
        %5583 = vmatprep.subr.mxu0 0.0
        %5584 = vmatpush1.msra.mxu0 %v5564
        %5585 = vmatprep.subr.mxu0 0.0
        %5586 = vmatpush1.msra.mxu0 %v5565
        %5587 = vmatprep.subr.mxu0 0.0
        %5588 = vmatpush1.msra.mxu0 %v5566
        %5589 = vmatprep.subr.mxu0 0.0
        %5590 = vmatpush1.msra.mxu0 %v5567
        %5591 = vmatprep.subr.mxu0 0.0
        %5592 = vmatpush1.msra.mxu0 %v5568
        %5593 = vmatprep.subr.mxu0 0.0
        %5594 = vmatpush1.msra.mxu0 %v5569
        %5595 = vmatprep.subr.mxu0 0.0
        %5596 = vmatpush1.msra.mxu0 %v5570
        %5597 = vmatprep.subr.mxu0 0.0
        %5598 = vmatpush1.msra.mxu0 %v5571
        %5599 = vmatprep.subr.mxu0 0.0
        %5600 = vmatpush1.msra.mxu0 %v5572
        %5601 = vmatprep.subr.mxu0 0.0
        %5602 = vmatpush1.msra.mxu0 %v5573
        %5603 = vmatprep.subr.mxu0 0.0
        %5604 = vmatpush1.msra.mxu0 %v5574
        %5605 = vmatprep.subr.mxu0 0.0
        %5606 = vmatpush1.msra.mxu0 %v5575
        %5607 = vmatprep.subr.mxu0 0.0
        %5608 = vmatpush1.msra.mxu0 %v5576
        %5609 = vmatprep.subr.mxu0 0.0
        %5610 = vmatpush1.msra.mxu0 0.0
        %5611 = vmatprep.subr.mxu0 0.0
        %5612 = vmatpush1.msra.mxu0 0.0
        %5613 = vmatprep.subr.mxu0 0.0
        %5614 = vmatpush1.msra.mxu0 0.0
        %5615 = vmatprep.subr.mxu0 0.0
        %5616 = vmatpush1.msra.mxu0 0.0
        %5617 = vmatprep.subr.mxu0 0.0
        %5618 = vmatpush1.msra.mxu0 0.0
        %5619 = vmatprep.subr.mxu0 0.0
        %5620 = vmatpush1.msra.mxu0 0.0
        %5621 = vmatprep.subr.mxu0 0.0
        %5622 = vmatpush1.msra.mxu0 0.0
        %5623 = vmatprep.subr.mxu0 0.0
        %5624 = vmatpush1.msra.mxu0 0.0
        %5625 = vmatprep.subr.mxu0 0.0
        %5626 = vmatpush1.msra.mxu0 0.0
        %5627 = vmatprep.subr.mxu0 0.0
        %5628 = vmatpush1.msra.mxu0 0.0
        %5629 = vmatprep.subr.mxu0 0.0
        %5630 = vmatpush1.msra.mxu0 0.0
        %5631 = vmatprep.subr.mxu0 0.0
        %5632 = vmatpush1.msra.mxu0 0.0
        %5633 = vmatprep.subr.mxu0 0.0
        %5634 = vmatpush1.msra.mxu0 0.0
        %5635 = vmatprep.subr.mxu0 0.0
        %5636 = vmatpush1.msra.mxu0 0.0
        %5637 = vmatprep.subr.mxu0 0.0
        %5638 = vmatpush1.msra.mxu0 0.0
        %5639 = vmatprep.subr.mxu0 0.0
        %5640 = vmatpush1.msra.mxu0 0.0
        %5641 = vmatprep.mubr.f32.mxu0 0.0
        %5642 = vmatmul.mubr.f32.gmra.mrb[0].mxu0 %v5528
        %v5643 = vpop.f32.mrb[0].mxu0
        %v5644 = vadd.f32 0.0, %v5643
        %v5645 = vpop.f32.mrb[0].mxu0
        %5646 = vmatprep.mubr.f32.mxu0 0.0
        %5647 = vmatmul.mubr.f32.gmra.mrb[0].mxu0 %v5529
        %v5648 = vpop.f32.mrb[0].mxu0
        %v5649 = vadd.f32 0.0, %v5648
        %v5650 = vpop.f32.mrb[0].mxu0
        %5651 = vmatprep.mubr.f32.mxu0 0.0
        %5652 = vmatmul.mubr.f32.gmra.mrb[0].mxu0 %v5530
        %v5653 = vpop.f32.mrb[0].mxu0
        %v5654 = vadd.f32 0.0, %v5653
        %v5655 = vpop.f32.mrb[0].mxu0
        %5656 = vmatprep.mubr.f32.mxu0 0.0
        %5657 = vmatmul.mubr.f32.gmra.mrb[0].mxu0 %v5531
        %v5658 = vpop.f32.mrb[0].mxu0
        %v5659 = vadd.f32 0.0, %v5658
        %v5660 = vpop.f32.mrb[0].mxu0
        %5661 = vmatprep.mubr.f32.mxu0 0.0
        %5662 = vmatmul.mubr.f32.gmra.mrb[0].mxu0 %v5532
        %v5663 = vpop.f32.mrb[0].mxu0
        %v5664 = vadd.f32 0.0, %v5663
        %v5665 = vpop.f32.mrb[0].mxu0
        %5666 = vmatprep.mubr.f32.mxu0 0.0
        %5667 = vmatmul.mubr.f32.gmra.mrb[0].mxu0 %v5533
        %v5668 = vpop.f32.mrb[0].mxu0
        %v5669 = vadd.f32 0.0, %v5668
        %v5670 = vpop.f32.mrb[0].mxu0
        %5671 = vmatprep.mubr.f32.mxu0 0.0
        %5672 = vmatmul.mubr.f32.gmra.mrb[0].mxu0 %v5534
        %v5673 = vpop.f32.mrb[0].mxu0
        %v5674 = vadd.f32 0.0, %v5673
        %v5675 = vpop.f32.mrb[0].mxu0
        %5676 = vmatprep.mubr.f32.mxu0 0.0
        %5677 = vmatmul.mubr.f32.gmra.mrb[0].mxu0 %v5535
        %v5678 = vpop.f32.mrb[0].mxu0
        %v5679 = vadd.f32 0.0, %v5678
        %v5680 = vpop.f32.mrb[0].mxu0
        %5681 = vmatprep.mubr.f32.mxu0 0.0
        %5682 = vmatmul.mubr.f32.gmra.mrb[0].mxu0 %v5536
        %v5683 = vpop.f32.mrb[0].mxu0
        %v5684 = vadd.f32 0.0, %v5683
        %v5685 = vpop.f32.mrb[0].mxu0
        %5686 = vmatprep.mubr.f32.mxu0 0.0
        %5687 = vmatmul.mubr.f32.gmra.mrb[0].mxu0 %v5537
        %v5688 = vpop.f32.mrb[0].mxu0
        %v5689 = vadd.f32 0.0, %v5688
        %v5690 = vpop.f32.mrb[0].mxu0
        %5691 = vmatprep.mubr.f32.mxu0 0.0
        %5692 = vmatmul.mubr.f32.gmra.mrb[0].mxu0 %v5538
        %v5693 = vpop.f32.mrb[0].mxu0
        %v5694 = vadd.f32 0.0, %v5693
        %v5695 = vpop.f32.mrb[0].mxu0
        %5696 = vmatprep.mubr.f32.mxu0 0.0
        %5697 = vmatmul.mubr.f32.gmra.mrb[0].mxu0 %v5539
        %v5698 = vpop.f32.mrb[0].mxu0
        %v5699 = vadd.f32 0.0, %v5698
        %v5700 = vpop.f32.mrb[0].mxu0
        %5701 = vmatprep.mubr.f32.mxu0 0.0
        %5702 = vmatmul.mubr.f32.gmra.mrb[0].mxu0 %v5540
        %v5703 = vpop.f32.mrb[0].mxu0
        %v5704 = vadd.f32 0.0, %v5703
        %v5705 = vpop.f32.mrb[0].mxu0
        %5706 = vmatprep.mubr.f32.mxu0 0.0
        %5707 = vmatmul.mubr.f32.gmra.mrb[0].mxu0 %v5541
        %v5708 = vpop.f32.mrb[0].mxu0
        %v5709 = vadd.f32 0.0, %v5708
        %v5710 = vpop.f32.mrb[0].mxu0
        %5711 = vmatprep.mubr.f32.mxu0 0.0
        %5712 = vmatmul.mubr.f32.gmra.mrb[0].mxu0 %v5542
        %v5713 = vpop.f32.mrb[0].mxu0
        %v5714 = vadd.f32 0.0, %v5713
        %v5715 = vpop.f32.mrb[0].mxu0
        %5716 = vmatprep.mubr.f32.mxu0 0.0
        %5717 = vmatmul.mubr.f32.gmra.mrb[0].mxu0 %v5543
        %v5718 = vpop.f32.mrb[0].mxu0
        %v5719 = vadd.f32 0.0, %v5718
        %v5720 = vpop.f32.mrb[0].mxu0
        %5721 = vdwg.mxu0
        %v5722 = vadd.f32 %v5544, %v5644
        %v5723 = vadd.f32 %v5545, %v5649
        %v5724 = vadd.f32 %v5546, %v5654
        %v5725 = vadd.f32 %v5547, %v5659
        %v5726 = vadd.f32 %v5548, %v5664
        %v5727 = vadd.f32 %v5549, %v5669
        %v5728 = vadd.f32 %v5550, %v5674
        %v5729 = vadd.f32 %v5551, %v5679
        %v5730 = vadd.f32 %v5552, %v5684
        %v5731 = vadd.f32 %v5553, %v5689
        %v5732 = vadd.f32 %v5554, %v5694
        %v5733 = vadd.f32 %v5555, %v5699
        %v5734 = vadd.f32 %v5556, %v5704
        %v5735 = vadd.f32 %v5557, %v5709
        %v5736 = vadd.f32 %v5558, %v5714
        %v5737 = vadd.f32 %v5559, %v5719
        %5738 = vst [vmem:[#allocation7] sm:$0xff] %v5722
        %5739 = vst [vmem:[#allocation7 + $0x8] sm:$0xff] %v5723
        %5740 = vst [vmem:[#allocation7 + $0x10] sm:$0xff] %v5724
        %5741 = vst [vmem:[#allocation7 + $0x18] sm:$0xff] %v5725
        %5742 = vst [vmem:[#allocation7 + $0x20] sm:$0xff] %v5726
        %5743 = vst [vmem:[#allocation7 + $0x28] sm:$0xff] %v5727
        %5744 = vst [vmem:[#allocation7 + $0x30] sm:$0xff] %v5728
        %5745 = vst [vmem:[#allocation7 + $0x38] sm:$0xff] %v5729
        %5746 = vst [vmem:[#allocation7 + $0x40] sm:$0xff] %v5730
        %5747 = vst [vmem:[#allocation7 + $0x48] sm:$0xff] %v5731
        %5748 = vst [vmem:[#allocation7 + $0x50] sm:$0xff] %v5732
        %5749 = vst [vmem:[#allocation7 + $0x58] sm:$0xff] %v5733
        %5750 = vst [vmem:[#allocation7 + $0x60] sm:$0xff] %v5734
        %5751 = vst [vmem:[#allocation7 + $0x68] sm:$0xff] %v5735
        %5752 = vst [vmem:[#allocation7 + $0x70] sm:$0xff] %v5736
        %5753 = vst [vmem:[#allocation7 + $0x78] sm:$0xff] %v5737
        %v5754 = vld [vmem:[%s749] sm:$0xff]
        %v5755 = vld [vmem:[%s749 + $0x8] sm:$0xff]
        %v5756 = vld [vmem:[%s749 + $0x38] sm:$0xff]
        %v5757 = vld [vmem:[%s749 + $0x40] sm:$0xff]
        %v5758 = vld [vmem:[%s749 + $0x70] sm:$0xff]
        %v5759 = vld [vmem:[%s749 + $0x78] sm:$0xff]
        %v5760 = vld [vmem:[%s749 + $0xa8] sm:$0xff]
        %v5761 = vld [vmem:[%s749 + $0xb0] sm:$0xff]
        %v5762 = vld [vmem:[%s749 + $0xe0] sm:$0xff]
        %v5763 = vld [vmem:[%s749 + $0xe8] sm:$0xff]
        %v5764 = vld [vmem:[%s749 + $0x118] sm:$0xff]
        %v5765 = vld [vmem:[%s749 + $0x120] sm:$0xff]
        %v5766 = vld [vmem:[%s749 + $0x150] sm:$0xff]
        %v5767 = vld [vmem:[%s749 + $0x158] sm:$0xff]
        %v5768 = vld [vmem:[%s749 + $0x188] sm:$0xff]
        %v5769 = vld [vmem:[%s749 + $0x190] sm:$0xff]
        %v5770 = vld [vmem:[#allocation7] sm:$0xff]
        %v5771 = vld [vmem:[#allocation7 + $0x8] sm:$0xff]
        %v5772 = vld [vmem:[#allocation7 + $0x10] sm:$0xff]
        %v5773 = vld [vmem:[#allocation7 + $0x18] sm:$0xff]
        %v5774 = vld [vmem:[#allocation7 + $0x20] sm:$0xff]
        %v5775 = vld [vmem:[#allocation7 + $0x28] sm:$0xff]
        %v5776 = vld [vmem:[#allocation7 + $0x30] sm:$0xff]
        %v5777 = vld [vmem:[#allocation7 + $0x38] sm:$0xff]
        %v5778 = vld [vmem:[#allocation7 + $0x40] sm:$0xff]
        %v5779 = vld [vmem:[#allocation7 + $0x48] sm:$0xff]
        %v5780 = vld [vmem:[#allocation7 + $0x50] sm:$0xff]
        %v5781 = vld [vmem:[#allocation7 + $0x58] sm:$0xff]
        %v5782 = vld [vmem:[#allocation7 + $0x60] sm:$0xff]
        %v5783 = vld [vmem:[#allocation7 + $0x68] sm:$0xff]
        %v5784 = vld [vmem:[#allocation7 + $0x70] sm:$0xff]
        %v5785 = vld [vmem:[#allocation7 + $0x78] sm:$0xff]
        %s5786 = scalar_lea.vmem [#allocation14], 384
        %v5787 = vld [vmem:[%s5786] sm:$0xff]
        %v5788 = vld [vmem:[%s5786 + $0x8] sm:$0xff]
        %v5789 = vld [vmem:[%s5786 + $0x10] sm:$0xff]
        %v5790 = vld [vmem:[%s5786 + $0x18] sm:$0xff]
        %v5791 = vld [vmem:[%s5786 + $0x20] sm:$0xff]
        %v5792 = vld [vmem:[%s5786 + $0x28] sm:$0xff]
        %v5793 = vld [vmem:[%s5786 + $0x30] sm:$0xff]
        %v5794 = vld [vmem:[%s5786 + $0x38] sm:$0xff]
        %v5795 = vld [vmem:[%s5786 + $0x40] sm:$0xff]
        %v5796 = vld [vmem:[%s5786 + $0x48] sm:$0xff]
        %v5797 = vld [vmem:[%s5786 + $0x50] sm:$0xff]
        %v5798 = vld [vmem:[%s5786 + $0x58] sm:$0xff]
        %v5799 = vld [vmem:[%s5786 + $0x60] sm:$0xff]
        %v5800 = vld [vmem:[%s5786 + $0x68] sm:$0xff]
        %v5801 = vld [vmem:[%s5786 + $0x70] sm:$0xff]
        %v5802 = vld [vmem:[%s5786 + $0x78] sm:$0xff]
        %5803 = vmatprep.subr.mxu0 0.0
        %5804 = vmatpush1.msra.mxu0 %v5787
        %5805 = vmatprep.subr.mxu0 0.0
        %5806 = vmatpush1.msra.mxu0 %v5788
        %5807 = vmatprep.subr.mxu0 0.0
        %5808 = vmatpush1.msra.mxu0 %v5789
        %5809 = vmatprep.subr.mxu0 0.0
        %5810 = vmatpush1.msra.mxu0 %v5790
        %5811 = vmatprep.subr.mxu0 0.0
        %5812 = vmatpush1.msra.mxu0 %v5791
        %5813 = vmatprep.subr.mxu0 0.0
        %5814 = vmatpush1.msra.mxu0 %v5792
        %5815 = vmatprep.subr.mxu0 0.0
        %5816 = vmatpush1.msra.mxu0 %v5793
        %5817 = vmatprep.subr.mxu0 0.0
        %5818 = vmatpush1.msra.mxu0 %v5794
        %5819 = vmatprep.subr.mxu0 0.0
        %5820 = vmatpush1.msra.mxu0 %v5795
        %5821 = vmatprep.subr.mxu0 0.0
        %5822 = vmatpush1.msra.mxu0 %v5796
        %5823 = vmatprep.subr.mxu0 0.0
        %5824 = vmatpush1.msra.mxu0 %v5797
        %5825 = vmatprep.subr.mxu0 0.0
        %5826 = vmatpush1.msra.mxu0 %v5798
        %5827 = vmatprep.subr.mxu0 0.0
        %5828 = vmatpush1.msra.mxu0 %v5799
        %5829 = vmatprep.subr.mxu0 0.0
        %5830 = vmatpush1.msra.mxu0 %v5800
        %5831 = vmatprep.subr.mxu0 0.0
        %5832 = vmatpush1.msra.mxu0 %v5801
        %5833 = vmatprep.subr.mxu0 0.0
        %5834 = vmatpush1.msra.mxu0 %v5802
        %5835 = vmatprep.subr.mxu0 0.0
        %5836 = vmatpush1.msra.mxu0 0.0
        %5837 = vmatprep.subr.mxu0 0.0
        %5838 = vmatpush1.msra.mxu0 0.0
        %5839 = vmatprep.subr.mxu0 0.0
        %5840 = vmatpush1.msra.mxu0 0.0
        %5841 = vmatprep.subr.mxu0 0.0
        %5842 = vmatpush1.msra.mxu0 0.0
        %5843 = vmatprep.subr.mxu0 0.0
        %5844 = vmatpush1.msra.mxu0 0.0
        %5845 = vmatprep.subr.mxu0 0.0
        %5846 = vmatpush1.msra.mxu0 0.0
        %5847 = vmatprep.subr.mxu0 0.0
        %5848 = vmatpush1.msra.mxu0 0.0
        %5849 = vmatprep.subr.mxu0 0.0
        %5850 = vmatpush1.msra.mxu0 0.0
        %5851 = vmatprep.subr.mxu0 0.0
        %5852 = vmatpush1.msra.mxu0 0.0
        %5853 = vmatprep.subr.mxu0 0.0
        %5854 = vmatpush1.msra.mxu0 0.0
        %5855 = vmatprep.subr.mxu0 0.0
        %5856 = vmatpush1.msra.mxu0 0.0
        %5857 = vmatprep.subr.mxu0 0.0
        %5858 = vmatpush1.msra.mxu0 0.0
        %5859 = vmatprep.subr.mxu0 0.0
        %5860 = vmatpush1.msra.mxu0 0.0
        %5861 = vmatprep.subr.mxu0 0.0
        %5862 = vmatpush1.msra.mxu0 0.0
        %5863 = vmatprep.subr.mxu0 0.0
        %5864 = vmatpush1.msra.mxu0 0.0
        %5865 = vmatprep.subr.mxu0 0.0
        %5866 = vmatpush1.msra.mxu0 0.0
        %5867 = vmatprep.mubr.f32.mxu0 0.0
        %5868 = vmatmul.mubr.f32.gmra.mrb[0].mxu0 %v5754
        %v5869 = vpop.f32.mrb[0].mxu0
        %v5870 = vadd.f32 0.0, %v5869
        %v5871 = vpop.f32.mrb[0].mxu0
        %5872 = vmatprep.mubr.f32.mxu0 0.0
        %5873 = vmatmul.mubr.f32.gmra.mrb[0].mxu0 %v5755
        %v5874 = vpop.f32.mrb[0].mxu0
        %v5875 = vadd.f32 0.0, %v5874
        %v5876 = vpop.f32.mrb[0].mxu0
        %5877 = vmatprep.mubr.f32.mxu0 0.0
        %5878 = vmatmul.mubr.f32.gmra.mrb[0].mxu0 %v5756
        %v5879 = vpop.f32.mrb[0].mxu0
        %v5880 = vadd.f32 0.0, %v5879
        %v5881 = vpop.f32.mrb[0].mxu0
        %5882 = vmatprep.mubr.f32.mxu0 0.0
        %5883 = vmatmul.mubr.f32.gmra.mrb[0].mxu0 %v5757
        %v5884 = vpop.f32.mrb[0].mxu0
        %v5885 = vadd.f32 0.0, %v5884
        %v5886 = vpop.f32.mrb[0].mxu0
        %5887 = vmatprep.mubr.f32.mxu0 0.0
        %5888 = vmatmul.mubr.f32.gmra.mrb[0].mxu0 %v5758
        %v5889 = vpop.f32.mrb[0].mxu0
        %v5890 = vadd.f32 0.0, %v5889
        %v5891 = vpop.f32.mrb[0].mxu0
        %5892 = vmatprep.mubr.f32.mxu0 0.0
        %5893 = vmatmul.mubr.f32.gmra.mrb[0].mxu0 %v5759
        %v5894 = vpop.f32.mrb[0].mxu0
        %v5895 = vadd.f32 0.0, %v5894
        %v5896 = vpop.f32.mrb[0].mxu0
        %5897 = vmatprep.mubr.f32.mxu0 0.0
        %5898 = vmatmul.mubr.f32.gmra.mrb[0].mxu0 %v5760
        %v5899 = vpop.f32.mrb[0].mxu0
        %v5900 = vadd.f32 0.0, %v5899
        %v5901 = vpop.f32.mrb[0].mxu0
        %5902 = vmatprep.mubr.f32.mxu0 0.0
        %5903 = vmatmul.mubr.f32.gmra.mrb[0].mxu0 %v5761
        %v5904 = vpop.f32.mrb[0].mxu0
        %v5905 = vadd.f32 0.0, %v5904
        %v5906 = vpop.f32.mrb[0].mxu0
        %5907 = vmatprep.mubr.f32.mxu0 0.0
        %5908 = vmatmul.mubr.f32.gmra.mrb[0].mxu0 %v5762
        %v5909 = vpop.f32.mrb[0].mxu0
        %v5910 = vadd.f32 0.0, %v5909
        %v5911 = vpop.f32.mrb[0].mxu0
        %5912 = vmatprep.mubr.f32.mxu0 0.0
        %5913 = vmatmul.mubr.f32.gmra.mrb[0].mxu0 %v5763
        %v5914 = vpop.f32.mrb[0].mxu0
        %v5915 = vadd.f32 0.0, %v5914
        %v5916 = vpop.f32.mrb[0].mxu0
        %5917 = vmatprep.mubr.f32.mxu0 0.0
        %5918 = vmatmul.mubr.f32.gmra.mrb[0].mxu0 %v5764
        %v5919 = vpop.f32.mrb[0].mxu0
        %v5920 = vadd.f32 0.0, %v5919
        %v5921 = vpop.f32.mrb[0].mxu0
        %5922 = vmatprep.mubr.f32.mxu0 0.0
        %5923 = vmatmul.mubr.f32.gmra.mrb[0].mxu0 %v5765
        %v5924 = vpop.f32.mrb[0].mxu0
        %v5925 = vadd.f32 0.0, %v5924
        %v5926 = vpop.f32.mrb[0].mxu0
        %5927 = vmatprep.mubr.f32.mxu0 0.0
        %5928 = vmatmul.mubr.f32.gmra.mrb[0].mxu0 %v5766
        %v5929 = vpop.f32.mrb[0].mxu0
        %v5930 = vadd.f32 0.0, %v5929
        %v5931 = vpop.f32.mrb[0].mxu0
        %5932 = vmatprep.mubr.f32.mxu0 0.0
        %5933 = vmatmul.mubr.f32.gmra.mrb[0].mxu0 %v5767
        %v5934 = vpop.f32.mrb[0].mxu0
        %v5935 = vadd.f32 0.0, %v5934
        %v5936 = vpop.f32.mrb[0].mxu0
        %5937 = vmatprep.mubr.f32.mxu0 0.0
        %5938 = vmatmul.mubr.f32.gmra.mrb[0].mxu0 %v5768
        %v5939 = vpop.f32.mrb[0].mxu0
        %v5940 = vadd.f32 0.0, %v5939
        %v5941 = vpop.f32.mrb[0].mxu0
        %5942 = vmatprep.mubr.f32.mxu0 0.0
        %5943 = vmatmul.mubr.f32.gmra.mrb[0].mxu0 %v5769
        %v5944 = vpop.f32.mrb[0].mxu0
        %v5945 = vadd.f32 0.0, %v5944
        %v5946 = vpop.f32.mrb[0].mxu0
        %5947 = vdwg.mxu0
        %v5948 = vadd.f32 %v5770, %v5870
        %v5949 = vadd.f32 %v5771, %v5875
        %v5950 = vadd.f32 %v5772, %v5880
        %v5951 = vadd.f32 %v5773, %v5885
        %v5952 = vadd.f32 %v5774, %v5890
        %v5953 = vadd.f32 %v5775, %v5895
        %v5954 = vadd.f32 %v5776, %v5900
        %v5955 = vadd.f32 %v5777, %v5905
        %v5956 = vadd.f32 %v5778, %v5910
        %v5957 = vadd.f32 %v5779, %v5915
        %v5958 = vadd.f32 %v5780, %v5920
        %v5959 = vadd.f32 %v5781, %v5925
        %v5960 = vadd.f32 %v5782, %v5930
        %v5961 = vadd.f32 %v5783, %v5935
        %v5962 = vadd.f32 %v5784, %v5940
        %v5963 = vadd.f32 %v5785, %v5945
        %5964 = vst [vmem:[#allocation7] sm:$0xff] %v5948
        %5965 = vst [vmem:[#allocation7 + $0x8] sm:$0xff] %v5949
        %5966 = vst [vmem:[#allocation7 + $0x10] sm:$0xff] %v5950
        %5967 = vst [vmem:[#allocation7 + $0x18] sm:$0xff] %v5951
        %5968 = vst [vmem:[#allocation7 + $0x20] sm:$0xff] %v5952
        %5969 = vst [vmem:[#allocation7 + $0x28] sm:$0xff] %v5953
        %5970 = vst [vmem:[#allocation7 + $0x30] sm:$0xff] %v5954
        %5971 = vst [vmem:[#allocation7 + $0x38] sm:$0xff] %v5955
        %5972 = vst [vmem:[#allocation7 + $0x40] sm:$0xff] %v5956
        %5973 = vst [vmem:[#allocation7 + $0x48] sm:$0xff] %v5957
        %5974 = vst [vmem:[#allocation7 + $0x50] sm:$0xff] %v5958
        %5975 = vst [vmem:[#allocation7 + $0x58] sm:$0xff] %v5959
        %5976 = vst [vmem:[#allocation7 + $0x60] sm:$0xff] %v5960
        %5977 = vst [vmem:[#allocation7 + $0x68] sm:$0xff] %v5961
        %5978 = vst [vmem:[#allocation7 + $0x70] sm:$0xff] %v5962
        %5979 = vst [vmem:[#allocation7 + $0x78] sm:$0xff] %v5963
        %v5980 = vld [vmem:[%s749 + $0x12] sm:$0xff]
        %v5981 = vld [vmem:[%s749 + $0x1a] sm:$0xff]
        %v5982 = vld [vmem:[%s749 + $0x4a] sm:$0xff]
        %v5983 = vld [vmem:[%s749 + $0x52] sm:$0xff]
        %v5984 = vld [vmem:[%s749 + $0x82] sm:$0xff]
        %v5985 = vld [vmem:[%s749 + $0x8a] sm:$0xff]
        %v5986 = vld [vmem:[%s749 + $0xba] sm:$0xff]
        %v5987 = vld [vmem:[%s749 + $0xc2] sm:$0xff]
        %v5988 = vld [vmem:[%s749 + $0xf2] sm:$0xff]
        %v5989 = vld [vmem:[%s749 + $0xfa] sm:$0xff]
        %v5990 = vld [vmem:[%s749 + $0x12a] sm:$0xff]
        %v5991 = vld [vmem:[%s749 + $0x132] sm:$0xff]
        %v5992 = vld [vmem:[%s749 + $0x162] sm:$0xff]
        %v5993 = vld [vmem:[%s749 + $0x16a] sm:$0xff]
        %v5994 = vld [vmem:[%s749 + $0x19a] sm:$0xff]
        %v5995 = vld [vmem:[%s749 + $0x1a2] sm:$0xff]
        %v5996 = vld [vmem:[#allocation7] sm:$0xff]
        %v5997 = vld [vmem:[#allocation7 + $0x8] sm:$0xff]
        %v5998 = vld [vmem:[#allocation7 + $0x10] sm:$0xff]
        %v5999 = vld [vmem:[#allocation7 + $0x18] sm:$0xff]
        %v6000 = vld [vmem:[#allocation7 + $0x20] sm:$0xff]
        %v6001 = vld [vmem:[#allocation7 + $0x28] sm:$0xff]
        %v6002 = vld [vmem:[#allocation7 + $0x30] sm:$0xff]
        %v6003 = vld [vmem:[#allocation7 + $0x38] sm:$0xff]
        %v6004 = vld [vmem:[#allocation7 + $0x40] sm:$0xff]
        %v6005 = vld [vmem:[#allocation7 + $0x48] sm:$0xff]
        %v6006 = vld [vmem:[#allocation7 + $0x50] sm:$0xff]
        %v6007 = vld [vmem:[#allocation7 + $0x58] sm:$0xff]
        %v6008 = vld [vmem:[#allocation7 + $0x60] sm:$0xff]
        %v6009 = vld [vmem:[#allocation7 + $0x68] sm:$0xff]
        %v6010 = vld [vmem:[#allocation7 + $0x70] sm:$0xff]
        %v6011 = vld [vmem:[#allocation7 + $0x78] sm:$0xff]
        %s6012 = scalar_lea.vmem [#allocation14], 512
        %v6013 = vld [vmem:[%s6012] sm:$0xff]
        %v6014 = vld [vmem:[%s6012 + $0x8] sm:$0xff]
        %v6015 = vld [vmem:[%s6012 + $0x10] sm:$0xff]
        %v6016 = vld [vmem:[%s6012 + $0x18] sm:$0xff]
        %v6017 = vld [vmem:[%s6012 + $0x20] sm:$0xff]
        %v6018 = vld [vmem:[%s6012 + $0x28] sm:$0xff]
        %v6019 = vld [vmem:[%s6012 + $0x30] sm:$0xff]
        %v6020 = vld [vmem:[%s6012 + $0x38] sm:$0xff]
        %v6021 = vld [vmem:[%s6012 + $0x40] sm:$0xff]
        %v6022 = vld [vmem:[%s6012 + $0x48] sm:$0xff]
        %v6023 = vld [vmem:[%s6012 + $0x50] sm:$0xff]
        %v6024 = vld [vmem:[%s6012 + $0x58] sm:$0xff]
        %v6025 = vld [vmem:[%s6012 + $0x60] sm:$0xff]
        %v6026 = vld [vmem:[%s6012 + $0x68] sm:$0xff]
        %v6027 = vld [vmem:[%s6012 + $0x70] sm:$0xff]
        %v6028 = vld [vmem:[%s6012 + $0x78] sm:$0xff]
        %6029 = vmatprep.subr.mxu0 0.0
        %6030 = vmatpush1.msra.mxu0 %v6013
        %6031 = vmatprep.subr.mxu0 0.0
        %6032 = vmatpush1.msra.mxu0 %v6014
        %6033 = vmatprep.subr.mxu0 0.0
        %6034 = vmatpush1.msra.mxu0 %v6015
        %6035 = vmatprep.subr.mxu0 0.0
        %6036 = vmatpush1.msra.mxu0 %v6016
        %6037 = vmatprep.subr.mxu0 0.0
        %6038 = vmatpush1.msra.mxu0 %v6017
        %6039 = vmatprep.subr.mxu0 0.0
        %6040 = vmatpush1.msra.mxu0 %v6018
        %6041 = vmatprep.subr.mxu0 0.0
        %6042 = vmatpush1.msra.mxu0 %v6019
        %6043 = vmatprep.subr.mxu0 0.0
        %6044 = vmatpush1.msra.mxu0 %v6020
        %6045 = vmatprep.subr.mxu0 0.0
        %6046 = vmatpush1.msra.mxu0 %v6021
        %6047 = vmatprep.subr.mxu0 0.0
        %6048 = vmatpush1.msra.mxu0 %v6022
        %6049 = vmatprep.subr.mxu0 0.0
        %6050 = vmatpush1.msra.mxu0 %v6023
        %6051 = vmatprep.subr.mxu0 0.0
        %6052 = vmatpush1.msra.mxu0 %v6024
        %6053 = vmatprep.subr.mxu0 0.0
        %6054 = vmatpush1.msra.mxu0 %v6025
        %6055 = vmatprep.subr.mxu0 0.0
        %6056 = vmatpush1.msra.mxu0 %v6026
        %6057 = vmatprep.subr.mxu0 0.0
        %6058 = vmatpush1.msra.mxu0 %v6027
        %6059 = vmatprep.subr.mxu0 0.0
        %6060 = vmatpush1.msra.mxu0 %v6028
        %6061 = vmatprep.subr.mxu0 0.0
        %6062 = vmatpush1.msra.mxu0 0.0
        %6063 = vmatprep.subr.mxu0 0.0
        %6064 = vmatpush1.msra.mxu0 0.0
        %6065 = vmatprep.subr.mxu0 0.0
        %6066 = vmatpush1.msra.mxu0 0.0
        %6067 = vmatprep.subr.mxu0 0.0
        %6068 = vmatpush1.msra.mxu0 0.0
        %6069 = vmatprep.subr.mxu0 0.0
        %6070 = vmatpush1.msra.mxu0 0.0
        %6071 = vmatprep.subr.mxu0 0.0
        %6072 = vmatpush1.msra.mxu0 0.0
        %6073 = vmatprep.subr.mxu0 0.0
        %6074 = vmatpush1.msra.mxu0 0.0
        %6075 = vmatprep.subr.mxu0 0.0
        %6076 = vmatpush1.msra.mxu0 0.0
        %6077 = vmatprep.subr.mxu0 0.0
        %6078 = vmatpush1.msra.mxu0 0.0
        %6079 = vmatprep.subr.mxu0 0.0
        %6080 = vmatpush1.msra.mxu0 0.0
        %6081 = vmatprep.subr.mxu0 0.0
        %6082 = vmatpush1.msra.mxu0 0.0
        %6083 = vmatprep.subr.mxu0 0.0
        %6084 = vmatpush1.msra.mxu0 0.0
        %6085 = vmatprep.subr.mxu0 0.0
        %6086 = vmatpush1.msra.mxu0 0.0
        %6087 = vmatprep.subr.mxu0 0.0
        %6088 = vmatpush1.msra.mxu0 0.0
        %6089 = vmatprep.subr.mxu0 0.0
        %6090 = vmatpush1.msra.mxu0 0.0
        %6091 = vmatprep.subr.mxu0 0.0
        %6092 = vmatpush1.msra.mxu0 0.0
        %6093 = vmatprep.mubr.f32.mxu0 0.0
        %6094 = vmatmul.mubr.f32.gmra.mrb[0].mxu0 %v5980
        %v6095 = vpop.f32.mrb[0].mxu0
        %v6096 = vadd.f32 0.0, %v6095
        %v6097 = vpop.f32.mrb[0].mxu0
        %6098 = vmatprep.mubr.f32.mxu0 0.0
        %6099 = vmatmul.mubr.f32.gmra.mrb[0].mxu0 %v5981
        %v6100 = vpop.f32.mrb[0].mxu0
        %v6101 = vadd.f32 0.0, %v6100
        %v6102 = vpop.f32.mrb[0].mxu0
        %6103 = vmatprep.mubr.f32.mxu0 0.0
        %6104 = vmatmul.mubr.f32.gmra.mrb[0].mxu0 %v5982
        %v6105 = vpop.f32.mrb[0].mxu0
        %v6106 = vadd.f32 0.0, %v6105
        %v6107 = vpop.f32.mrb[0].mxu0
        %6108 = vmatprep.mubr.f32.mxu0 0.0
        %6109 = vmatmul.mubr.f32.gmra.mrb[0].mxu0 %v5983
        %v6110 = vpop.f32.mrb[0].mxu0
        %v6111 = vadd.f32 0.0, %v6110
        %v6112 = vpop.f32.mrb[0].mxu0
        %6113 = vmatprep.mubr.f32.mxu0 0.0
        %6114 = vmatmul.mubr.f32.gmra.mrb[0].mxu0 %v5984
        %v6115 = vpop.f32.mrb[0].mxu0
        %v6116 = vadd.f32 0.0, %v6115
        %v6117 = vpop.f32.mrb[0].mxu0
        %6118 = vmatprep.mubr.f32.mxu0 0.0
        %6119 = vmatmul.mubr.f32.gmra.mrb[0].mxu0 %v5985
        %v6120 = vpop.f32.mrb[0].mxu0
        %v6121 = vadd.f32 0.0, %v6120
        %v6122 = vpop.f32.mrb[0].mxu0
        %6123 = vmatprep.mubr.f32.mxu0 0.0
        %6124 = vmatmul.mubr.f32.gmra.mrb[0].mxu0 %v5986
        %v6125 = vpop.f32.mrb[0].mxu0
        %v6126 = vadd.f32 0.0, %v6125
        %v6127 = vpop.f32.mrb[0].mxu0
        %6128 = vmatprep.mubr.f32.mxu0 0.0
        %6129 = vmatmul.mubr.f32.gmra.mrb[0].mxu0 %v5987
        %v6130 = vpop.f32.mrb[0].mxu0
        %v6131 = vadd.f32 0.0, %v6130
        %v6132 = vpop.f32.mrb[0].mxu0
        %6133 = vmatprep.mubr.f32.mxu0 0.0
        %6134 = vmatmul.mubr.f32.gmra.mrb[0].mxu0 %v5988
        %v6135 = vpop.f32.mrb[0].mxu0
        %v6136 = vadd.f32 0.0, %v6135
        %v6137 = vpop.f32.mrb[0].mxu0
        %6138 = vmatprep.mubr.f32.mxu0 0.0
        %6139 = vmatmul.mubr.f32.gmra.mrb[0].mxu0 %v5989
        %v6140 = vpop.f32.mrb[0].mxu0
        %v6141 = vadd.f32 0.0, %v6140
        %v6142 = vpop.f32.mrb[0].mxu0
        %6143 = vmatprep.mubr.f32.mxu0 0.0
        %6144 = vmatmul.mubr.f32.gmra.mrb[0].mxu0 %v5990
        %v6145 = vpop.f32.mrb[0].mxu0
        %v6146 = vadd.f32 0.0, %v6145
        %v6147 = vpop.f32.mrb[0].mxu0
        %6148 = vmatprep.mubr.f32.mxu0 0.0
        %6149 = vmatmul.mubr.f32.gmra.mrb[0].mxu0 %v5991
        %v6150 = vpop.f32.mrb[0].mxu0
        %v6151 = vadd.f32 0.0, %v6150
        %v6152 = vpop.f32.mrb[0].mxu0
        %6153 = vmatprep.mubr.f32.mxu0 0.0
        %6154 = vmatmul.mubr.f32.gmra.mrb[0].mxu0 %v5992
        %v6155 = vpop.f32.mrb[0].mxu0
        %v6156 = vadd.f32 0.0, %v6155
        %v6157 = vpop.f32.mrb[0].mxu0
        %6158 = vmatprep.mubr.f32.mxu0 0.0
        %6159 = vmatmul.mubr.f32.gmra.mrb[0].mxu0 %v5993
        %v6160 = vpop.f32.mrb[0].mxu0
        %v6161 = vadd.f32 0.0, %v6160
        %v6162 = vpop.f32.mrb[0].mxu0
        %6163 = vmatprep.mubr.f32.mxu0 0.0
        %6164 = vmatmul.mubr.f32.gmra.mrb[0].mxu0 %v5994
        %v6165 = vpop.f32.mrb[0].mxu0
        %v6166 = vadd.f32 0.0, %v6165
        %v6167 = vpop.f32.mrb[0].mxu0
        %6168 = vmatprep.mubr.f32.mxu0 0.0
        %6169 = vmatmul.mubr.f32.gmra.mrb[0].mxu0 %v5995
        %v6170 = vpop.f32.mrb[0].mxu0
        %v6171 = vadd.f32 0.0, %v6170
        %v6172 = vpop.f32.mrb[0].mxu0
        %6173 = vdwg.mxu0
        %v6174 = vadd.f32 %v5996, %v6096
        %v6175 = vadd.f32 %v5997, %v6101
        %v6176 = vadd.f32 %v5998, %v6106
        %v6177 = vadd.f32 %v5999, %v6111
        %v6178 = vadd.f32 %v6000, %v6116
        %v6179 = vadd.f32 %v6001, %v6121
        %v6180 = vadd.f32 %v6002, %v6126
        %v6181 = vadd.f32 %v6003, %v6131
        %v6182 = vadd.f32 %v6004, %v6136
        %v6183 = vadd.f32 %v6005, %v6141
        %v6184 = vadd.f32 %v6006, %v6146
        %v6185 = vadd.f32 %v6007, %v6151
        %v6186 = vadd.f32 %v6008, %v6156
        %v6187 = vadd.f32 %v6009, %v6161
        %v6188 = vadd.f32 %v6010, %v6166
        %v6189 = vadd.f32 %v6011, %v6171
        %6190 = vst [vmem:[#allocation7] sm:$0xff] %v6174
        %6191 = vst [vmem:[#allocation7 + $0x8] sm:$0xff] %v6175
        %6192 = vst [vmem:[#allocation7 + $0x10] sm:$0xff] %v6176
        %6193 = vst [vmem:[#allocation7 + $0x18] sm:$0xff] %v6177
        %6194 = vst [vmem:[#allocation7 + $0x20] sm:$0xff] %v6178
        %6195 = vst [vmem:[#allocation7 + $0x28] sm:$0xff] %v6179
        %6196 = vst [vmem:[#allocation7 + $0x30] sm:$0xff] %v6180
        %6197 = vst [vmem:[#allocation7 + $0x38] sm:$0xff] %v6181
        %6198 = vst [vmem:[#allocation7 + $0x40] sm:$0xff] %v6182
        %6199 = vst [vmem:[#allocation7 + $0x48] sm:$0xff] %v6183
        %6200 = vst [vmem:[#allocation7 + $0x50] sm:$0xff] %v6184
        %6201 = vst [vmem:[#allocation7 + $0x58] sm:$0xff] %v6185
        %6202 = vst [vmem:[#allocation7 + $0x60] sm:$0xff] %v6186
        %6203 = vst [vmem:[#allocation7 + $0x68] sm:$0xff] %v6187
        %6204 = vst [vmem:[#allocation7 + $0x70] sm:$0xff] %v6188
        %6205 = vst [vmem:[#allocation7 + $0x78] sm:$0xff] %v6189
        %v6206 = vld [vmem:[%s749 + $0x24] sm:$0xff]
        %v6207 = vld [vmem:[%s749 + $0x2c] sm:$0xff]
        %v6208 = vld [vmem:[%s749 + $0x5c] sm:$0xff]
        %v6209 = vld [vmem:[%s749 + $0x64] sm:$0xff]
        %v6210 = vld [vmem:[%s749 + $0x94] sm:$0xff]
        %v6211 = vld [vmem:[%s749 + $0x9c] sm:$0xff]
        %v6212 = vld [vmem:[%s749 + $0xcc] sm:$0xff]
        %v6213 = vld [vmem:[%s749 + $0xd4] sm:$0xff]
        %v6214 = vld [vmem:[%s749 + $0x104] sm:$0xff]
        %v6215 = vld [vmem:[%s749 + $0x10c] sm:$0xff]
        %v6216 = vld [vmem:[%s749 + $0x13c] sm:$0xff]
        %v6217 = vld [vmem:[%s749 + $0x144] sm:$0xff]
        %v6218 = vld [vmem:[%s749 + $0x174] sm:$0xff]
        %v6219 = vld [vmem:[%s749 + $0x17c] sm:$0xff]
        %v6220 = vld [vmem:[%s749 + $0x1ac] sm:$0xff]
        %v6221 = vld [vmem:[%s749 + $0x1b4] sm:$0xff]
        %v6222 = vld [vmem:[#allocation7] sm:$0xff]
        %v6223 = vld [vmem:[#allocation7 + $0x8] sm:$0xff]
        %v6224 = vld [vmem:[#allocation7 + $0x10] sm:$0xff]
        %v6225 = vld [vmem:[#allocation7 + $0x18] sm:$0xff]
        %v6226 = vld [vmem:[#allocation7 + $0x20] sm:$0xff]
        %v6227 = vld [vmem:[#allocation7 + $0x28] sm:$0xff]
        %v6228 = vld [vmem:[#allocation7 + $0x30] sm:$0xff]
        %v6229 = vld [vmem:[#allocation7 + $0x38] sm:$0xff]
        %v6230 = vld [vmem:[#allocation7 + $0x40] sm:$0xff]
        %v6231 = vld [vmem:[#allocation7 + $0x48] sm:$0xff]
        %v6232 = vld [vmem:[#allocation7 + $0x50] sm:$0xff]
        %v6233 = vld [vmem:[#allocation7 + $0x58] sm:$0xff]
        %v6234 = vld [vmem:[#allocation7 + $0x60] sm:$0xff]
        %v6235 = vld [vmem:[#allocation7 + $0x68] sm:$0xff]
        %v6236 = vld [vmem:[#allocation7 + $0x70] sm:$0xff]
        %v6237 = vld [vmem:[#allocation7 + $0x78] sm:$0xff]
        %s6238 = scalar_lea.vmem [#allocation14], 640
        %v6239 = vld [vmem:[%s6238] sm:$0xff]
        %v6240 = vld [vmem:[%s6238 + $0x8] sm:$0xff]
        %v6241 = vld [vmem:[%s6238 + $0x10] sm:$0xff]
        %v6242 = vld [vmem:[%s6238 + $0x18] sm:$0xff]
        %v6243 = vld [vmem:[%s6238 + $0x20] sm:$0xff]
        %v6244 = vld [vmem:[%s6238 + $0x28] sm:$0xff]
        %v6245 = vld [vmem:[%s6238 + $0x30] sm:$0xff]
        %v6246 = vld [vmem:[%s6238 + $0x38] sm:$0xff]
        %v6247 = vld [vmem:[%s6238 + $0x40] sm:$0xff]
        %v6248 = vld [vmem:[%s6238 + $0x48] sm:$0xff]
        %v6249 = vld [vmem:[%s6238 + $0x50] sm:$0xff]
        %v6250 = vld [vmem:[%s6238 + $0x58] sm:$0xff]
        %v6251 = vld [vmem:[%s6238 + $0x60] sm:$0xff]
        %v6252 = vld [vmem:[%s6238 + $0x68] sm:$0xff]
        %v6253 = vld [vmem:[%s6238 + $0x70] sm:$0xff]
        %v6254 = vld [vmem:[%s6238 + $0x78] sm:$0xff]
        %6255 = vmatprep.subr.mxu0 0.0
        %6256 = vmatpush1.msra.mxu0 %v6239
        %6257 = vmatprep.subr.mxu0 0.0
        %6258 = vmatpush1.msra.mxu0 %v6240
        %6259 = vmatprep.subr.mxu0 0.0
        %6260 = vmatpush1.msra.mxu0 %v6241
        %6261 = vmatprep.subr.mxu0 0.0
        %6262 = vmatpush1.msra.mxu0 %v6242
        %6263 = vmatprep.subr.mxu0 0.0
        %6264 = vmatpush1.msra.mxu0 %v6243
        %6265 = vmatprep.subr.mxu0 0.0
        %6266 = vmatpush1.msra.mxu0 %v6244
        %6267 = vmatprep.subr.mxu0 0.0
        %6268 = vmatpush1.msra.mxu0 %v6245
        %6269 = vmatprep.subr.mxu0 0.0
        %6270 = vmatpush1.msra.mxu0 %v6246
        %6271 = vmatprep.subr.mxu0 0.0
        %6272 = vmatpush1.msra.mxu0 %v6247
        %6273 = vmatprep.subr.mxu0 0.0
        %6274 = vmatpush1.msra.mxu0 %v6248
        %6275 = vmatprep.subr.mxu0 0.0
        %6276 = vmatpush1.msra.mxu0 %v6249
        %6277 = vmatprep.subr.mxu0 0.0
        %6278 = vmatpush1.msra.mxu0 %v6250
        %6279 = vmatprep.subr.mxu0 0.0
        %6280 = vmatpush1.msra.mxu0 %v6251
        %6281 = vmatprep.subr.mxu0 0.0
        %6282 = vmatpush1.msra.mxu0 %v6252
        %6283 = vmatprep.subr.mxu0 0.0
        %6284 = vmatpush1.msra.mxu0 %v6253
        %6285 = vmatprep.subr.mxu0 0.0
        %6286 = vmatpush1.msra.mxu0 %v6254
        %6287 = vmatprep.subr.mxu0 0.0
        %6288 = vmatpush1.msra.mxu0 0.0
        %6289 = vmatprep.subr.mxu0 0.0
        %6290 = vmatpush1.msra.mxu0 0.0
        %6291 = vmatprep.subr.mxu0 0.0
        %6292 = vmatpush1.msra.mxu0 0.0
        %6293 = vmatprep.subr.mxu0 0.0
        %6294 = vmatpush1.msra.mxu0 0.0
        %6295 = vmatprep.subr.mxu0 0.0
        %6296 = vmatpush1.msra.mxu0 0.0
        %6297 = vmatprep.subr.mxu0 0.0
        %6298 = vmatpush1.msra.mxu0 0.0
        %6299 = vmatprep.subr.mxu0 0.0
        %6300 = vmatpush1.msra.mxu0 0.0
        %6301 = vmatprep.subr.mxu0 0.0
        %6302 = vmatpush1.msra.mxu0 0.0
        %6303 = vmatprep.subr.mxu0 0.0
        %6304 = vmatpush1.msra.mxu0 0.0
        %6305 = vmatprep.subr.mxu0 0.0
        %6306 = vmatpush1.msra.mxu0 0.0
        %6307 = vmatprep.subr.mxu0 0.0
        %6308 = vmatpush1.msra.mxu0 0.0
        %6309 = vmatprep.subr.mxu0 0.0
        %6310 = vmatpush1.msra.mxu0 0.0
        %6311 = vmatprep.subr.mxu0 0.0
        %6312 = vmatpush1.msra.mxu0 0.0
        %6313 = vmatprep.subr.mxu0 0.0
        %6314 = vmatpush1.msra.mxu0 0.0
        %6315 = vmatprep.subr.mxu0 0.0
        %6316 = vmatpush1.msra.mxu0 0.0
        %6317 = vmatprep.subr.mxu0 0.0
        %6318 = vmatpush1.msra.mxu0 0.0
        %6319 = vmatprep.mubr.f32.mxu0 0.0
        %6320 = vmatmul.mubr.f32.gmra.mrb[0].mxu0 %v6206
        %v6321 = vpop.f32.mrb[0].mxu0
        %v6322 = vadd.f32 0.0, %v6321
        %v6323 = vpop.f32.mrb[0].mxu0
        %6324 = vmatprep.mubr.f32.mxu0 0.0
        %6325 = vmatmul.mubr.f32.gmra.mrb[0].mxu0 %v6207
        %v6326 = vpop.f32.mrb[0].mxu0
        %v6327 = vadd.f32 0.0, %v6326
        %v6328 = vpop.f32.mrb[0].mxu0
        %6329 = vmatprep.mubr.f32.mxu0 0.0
        %6330 = vmatmul.mubr.f32.gmra.mrb[0].mxu0 %v6208
        %v6331 = vpop.f32.mrb[0].mxu0
        %v6332 = vadd.f32 0.0, %v6331
        %v6333 = vpop.f32.mrb[0].mxu0
        %6334 = vmatprep.mubr.f32.mxu0 0.0
        %6335 = vmatmul.mubr.f32.gmra.mrb[0].mxu0 %v6209
        %v6336 = vpop.f32.mrb[0].mxu0
        %v6337 = vadd.f32 0.0, %v6336
        %v6338 = vpop.f32.mrb[0].mxu0
        %6339 = vmatprep.mubr.f32.mxu0 0.0
        %6340 = vmatmul.mubr.f32.gmra.mrb[0].mxu0 %v6210
        %v6341 = vpop.f32.mrb[0].mxu0
        %v6342 = vadd.f32 0.0, %v6341
        %v6343 = vpop.f32.mrb[0].mxu0
        %6344 = vmatprep.mubr.f32.mxu0 0.0
        %6345 = vmatmul.mubr.f32.gmra.mrb[0].mxu0 %v6211
        %v6346 = vpop.f32.mrb[0].mxu0
        %v6347 = vadd.f32 0.0, %v6346
        %v6348 = vpop.f32.mrb[0].mxu0
        %6349 = vmatprep.mubr.f32.mxu0 0.0
        %6350 = vmatmul.mubr.f32.gmra.mrb[0].mxu0 %v6212
        %v6351 = vpop.f32.mrb[0].mxu0
        %v6352 = vadd.f32 0.0, %v6351
        %v6353 = vpop.f32.mrb[0].mxu0
        %6354 = vmatprep.mubr.f32.mxu0 0.0
        %6355 = vmatmul.mubr.f32.gmra.mrb[0].mxu0 %v6213
        %v6356 = vpop.f32.mrb[0].mxu0
        %v6357 = vadd.f32 0.0, %v6356
        %v6358 = vpop.f32.mrb[0].mxu0
        %6359 = vmatprep.mubr.f32.mxu0 0.0
        %6360 = vmatmul.mubr.f32.gmra.mrb[0].mxu0 %v6214
        %v6361 = vpop.f32.mrb[0].mxu0
        %v6362 = vadd.f32 0.0, %v6361
        %v6363 = vpop.f32.mrb[0].mxu0
        %6364 = vmatprep.mubr.f32.mxu0 0.0
        %6365 = vmatmul.mubr.f32.gmra.mrb[0].mxu0 %v6215
        %v6366 = vpop.f32.mrb[0].mxu0
        %v6367 = vadd.f32 0.0, %v6366
        %v6368 = vpop.f32.mrb[0].mxu0
        %6369 = vmatprep.mubr.f32.mxu0 0.0
        %6370 = vmatmul.mubr.f32.gmra.mrb[0].mxu0 %v6216
        %v6371 = vpop.f32.mrb[0].mxu0
        %v6372 = vadd.f32 0.0, %v6371
        %v6373 = vpop.f32.mrb[0].mxu0
        %6374 = vmatprep.mubr.f32.mxu0 0.0
        %6375 = vmatmul.mubr.f32.gmra.mrb[0].mxu0 %v6217
        %v6376 = vpop.f32.mrb[0].mxu0
        %v6377 = vadd.f32 0.0, %v6376
        %v6378 = vpop.f32.mrb[0].mxu0
        %6379 = vmatprep.mubr.f32.mxu0 0.0
        %6380 = vmatmul.mubr.f32.gmra.mrb[0].mxu0 %v6218
        %v6381 = vpop.f32.mrb[0].mxu0
        %v6382 = vadd.f32 0.0, %v6381
        %v6383 = vpop.f32.mrb[0].mxu0
        %6384 = vmatprep.mubr.f32.mxu0 0.0
        %6385 = vmatmul.mubr.f32.gmra.mrb[0].mxu0 %v6219
        %v6386 = vpop.f32.mrb[0].mxu0
        %v6387 = vadd.f32 0.0, %v6386
        %v6388 = vpop.f32.mrb[0].mxu0
        %6389 = vmatprep.mubr.f32.mxu0 0.0
        %6390 = vmatmul.mubr.f32.gmra.mrb[0].mxu0 %v6220
        %v6391 = vpop.f32.mrb[0].mxu0
        %v6392 = vadd.f32 0.0, %v6391
        %v6393 = vpop.f32.mrb[0].mxu0
        %6394 = vmatprep.mubr.f32.mxu0 0.0
        %6395 = vmatmul.mubr.f32.gmra.mrb[0].mxu0 %v6221
        %v6396 = vpop.f32.mrb[0].mxu0
        %v6397 = vadd.f32 0.0, %v6396
        %v6398 = vpop.f32.mrb[0].mxu0
        %6399 = vdwg.mxu0
        %v6400 = vadd.f32 %v6222, %v6322
        %v6401 = vadd.f32 %v6223, %v6327
        %v6402 = vadd.f32 %v6224, %v6332
        %v6403 = vadd.f32 %v6225, %v6337
        %v6404 = vadd.f32 %v6226, %v6342
        %v6405 = vadd.f32 %v6227, %v6347
        %v6406 = vadd.f32 %v6228, %v6352
        %v6407 = vadd.f32 %v6229, %v6357
        %v6408 = vadd.f32 %v6230, %v6362
        %v6409 = vadd.f32 %v6231, %v6367
        %v6410 = vadd.f32 %v6232, %v6372
        %v6411 = vadd.f32 %v6233, %v6377
        %v6412 = vadd.f32 %v6234, %v6382
        %v6413 = vadd.f32 %v6235, %v6387
        %v6414 = vadd.f32 %v6236, %v6392
        %v6415 = vadd.f32 %v6237, %v6397
        %6416 = vst [vmem:[#allocation7] sm:$0xff] %v6400
        %6417 = vst [vmem:[#allocation7 + $0x8] sm:$0xff] %v6401
        %6418 = vst [vmem:[#allocation7 + $0x10] sm:$0xff] %v6402
        %6419 = vst [vmem:[#allocation7 + $0x18] sm:$0xff] %v6403
        %6420 = vst [vmem:[#allocation7 + $0x20] sm:$0xff] %v6404
        %6421 = vst [vmem:[#allocation7 + $0x28] sm:$0xff] %v6405
        %6422 = vst [vmem:[#allocation7 + $0x30] sm:$0xff] %v6406
        %6423 = vst [vmem:[#allocation7 + $0x38] sm:$0xff] %v6407
        %6424 = vst [vmem:[#allocation7 + $0x40] sm:$0xff] %v6408
        %6425 = vst [vmem:[#allocation7 + $0x48] sm:$0xff] %v6409
        %6426 = vst [vmem:[#allocation7 + $0x50] sm:$0xff] %v6410
        %6427 = vst [vmem:[#allocation7 + $0x58] sm:$0xff] %v6411
        %6428 = vst [vmem:[#allocation7 + $0x60] sm:$0xff] %v6412
        %6429 = vst [vmem:[#allocation7 + $0x68] sm:$0xff] %v6413
        %6430 = vst [vmem:[#allocation7 + $0x70] sm:$0xff] %v6414
        %6431 = vst [vmem:[#allocation7 + $0x78] sm:$0xff] %v6415
        %s6432 = sadd.s32 %s714, 36
        %s6433 = smul.u32 %s6432, 56
        %s6434 = scalar_lea.vmem [#allocation2], %s6433
        %v6435 = vld [vmem:[%s6434] sm:$0xff]
        %v6436 = vld [vmem:[%s6434 + $0x8] sm:$0xff]
        %v6437 = vld [vmem:[%s6434 + $0x38] sm:$0xff]
        %v6438 = vld [vmem:[%s6434 + $0x40] sm:$0xff]
        %v6439 = vld [vmem:[%s6434 + $0x70] sm:$0xff]
        %v6440 = vld [vmem:[%s6434 + $0x78] sm:$0xff]
        %v6441 = vld [vmem:[%s6434 + $0xa8] sm:$0xff]
        %v6442 = vld [vmem:[%s6434 + $0xb0] sm:$0xff]
        %v6443 = vld [vmem:[%s6434 + $0xe0] sm:$0xff]
        %v6444 = vld [vmem:[%s6434 + $0xe8] sm:$0xff]
        %v6445 = vld [vmem:[%s6434 + $0x118] sm:$0xff]
        %v6446 = vld [vmem:[%s6434 + $0x120] sm:$0xff]
        %v6447 = vld [vmem:[%s6434 + $0x150] sm:$0xff]
        %v6448 = vld [vmem:[%s6434 + $0x158] sm:$0xff]
        %v6449 = vld [vmem:[%s6434 + $0x188] sm:$0xff]
        %v6450 = vld [vmem:[%s6434 + $0x190] sm:$0xff]
        %v6451 = vld [vmem:[#allocation7] sm:$0xff]
        %v6452 = vld [vmem:[#allocation7 + $0x8] sm:$0xff]
        %v6453 = vld [vmem:[#allocation7 + $0x10] sm:$0xff]
        %v6454 = vld [vmem:[#allocation7 + $0x18] sm:$0xff]
        %v6455 = vld [vmem:[#allocation7 + $0x20] sm:$0xff]
        %v6456 = vld [vmem:[#allocation7 + $0x28] sm:$0xff]
        %v6457 = vld [vmem:[#allocation7 + $0x30] sm:$0xff]
        %v6458 = vld [vmem:[#allocation7 + $0x38] sm:$0xff]
        %v6459 = vld [vmem:[#allocation7 + $0x40] sm:$0xff]
        %v6460 = vld [vmem:[#allocation7 + $0x48] sm:$0xff]
        %v6461 = vld [vmem:[#allocation7 + $0x50] sm:$0xff]
        %v6462 = vld [vmem:[#allocation7 + $0x58] sm:$0xff]
        %v6463 = vld [vmem:[#allocation7 + $0x60] sm:$0xff]
        %v6464 = vld [vmem:[#allocation7 + $0x68] sm:$0xff]
        %v6465 = vld [vmem:[#allocation7 + $0x70] sm:$0xff]
        %v6466 = vld [vmem:[#allocation7 + $0x78] sm:$0xff]
        %s6467 = scalar_lea.vmem [#allocation14], 768
        %v6468 = vld [vmem:[%s6467] sm:$0xff]
        %v6469 = vld [vmem:[%s6467 + $0x8] sm:$0xff]
        %v6470 = vld [vmem:[%s6467 + $0x10] sm:$0xff]
        %v6471 = vld [vmem:[%s6467 + $0x18] sm:$0xff]
        %v6472 = vld [vmem:[%s6467 + $0x20] sm:$0xff]
        %v6473 = vld [vmem:[%s6467 + $0x28] sm:$0xff]
        %v6474 = vld [vmem:[%s6467 + $0x30] sm:$0xff]
        %v6475 = vld [vmem:[%s6467 + $0x38] sm:$0xff]
        %v6476 = vld [vmem:[%s6467 + $0x40] sm:$0xff]
        %v6477 = vld [vmem:[%s6467 + $0x48] sm:$0xff]
        %v6478 = vld [vmem:[%s6467 + $0x50] sm:$0xff]
        %v6479 = vld [vmem:[%s6467 + $0x58] sm:$0xff]
        %v6480 = vld [vmem:[%s6467 + $0x60] sm:$0xff]
        %v6481 = vld [vmem:[%s6467 + $0x68] sm:$0xff]
        %v6482 = vld [vmem:[%s6467 + $0x70] sm:$0xff]
        %v6483 = vld [vmem:[%s6467 + $0x78] sm:$0xff]
        %6484 = vmatprep.subr.mxu0 0.0
        %6485 = vmatpush1.msra.mxu0 %v6468
        %6486 = vmatprep.subr.mxu0 0.0
        %6487 = vmatpush1.msra.mxu0 %v6469
        %6488 = vmatprep.subr.mxu0 0.0
        %6489 = vmatpush1.msra.mxu0 %v6470
        %6490 = vmatprep.subr.mxu0 0.0
        %6491 = vmatpush1.msra.mxu0 %v6471
        %6492 = vmatprep.subr.mxu0 0.0
        %6493 = vmatpush1.msra.mxu0 %v6472
        %6494 = vmatprep.subr.mxu0 0.0
        %6495 = vmatpush1.msra.mxu0 %v6473
        %6496 = vmatprep.subr.mxu0 0.0
        %6497 = vmatpush1.msra.mxu0 %v6474
        %6498 = vmatprep.subr.mxu0 0.0
        %6499 = vmatpush1.msra.mxu0 %v6475
        %6500 = vmatprep.subr.mxu0 0.0
        %6501 = vmatpush1.msra.mxu0 %v6476
        %6502 = vmatprep.subr.mxu0 0.0
        %6503 = vmatpush1.msra.mxu0 %v6477
        %6504 = vmatprep.subr.mxu0 0.0
        %6505 = vmatpush1.msra.mxu0 %v6478
        %6506 = vmatprep.subr.mxu0 0.0
        %6507 = vmatpush1.msra.mxu0 %v6479
        %6508 = vmatprep.subr.mxu0 0.0
        %6509 = vmatpush1.msra.mxu0 %v6480
        %6510 = vmatprep.subr.mxu0 0.0
        %6511 = vmatpush1.msra.mxu0 %v6481
        %6512 = vmatprep.subr.mxu0 0.0
        %6513 = vmatpush1.msra.mxu0 %v6482
        %6514 = vmatprep.subr.mxu0 0.0
        %6515 = vmatpush1.msra.mxu0 %v6483
        %6516 = vmatprep.subr.mxu0 0.0
        %6517 = vmatpush1.msra.mxu0 0.0
        %6518 = vmatprep.subr.mxu0 0.0
        %6519 = vmatpush1.msra.mxu0 0.0
        %6520 = vmatprep.subr.mxu0 0.0
        %6521 = vmatpush1.msra.mxu0 0.0
        %6522 = vmatprep.subr.mxu0 0.0
        %6523 = vmatpush1.msra.mxu0 0.0
        %6524 = vmatprep.subr.mxu0 0.0
        %6525 = vmatpush1.msra.mxu0 0.0
        %6526 = vmatprep.subr.mxu0 0.0
        %6527 = vmatpush1.msra.mxu0 0.0
        %6528 = vmatprep.subr.mxu0 0.0
        %6529 = vmatpush1.msra.mxu0 0.0
        %6530 = vmatprep.subr.mxu0 0.0
        %6531 = vmatpush1.msra.mxu0 0.0
        %6532 = vmatprep.subr.mxu0 0.0
        %6533 = vmatpush1.msra.mxu0 0.0
        %6534 = vmatprep.subr.mxu0 0.0
        %6535 = vmatpush1.msra.mxu0 0.0
        %6536 = vmatprep.subr.mxu0 0.0
        %6537 = vmatpush1.msra.mxu0 0.0
        %6538 = vmatprep.subr.mxu0 0.0
        %6539 = vmatpush1.msra.mxu0 0.0
        %6540 = vmatprep.subr.mxu0 0.0
        %6541 = vmatpush1.msra.mxu0 0.0
        %6542 = vmatprep.subr.mxu0 0.0
        %6543 = vmatpush1.msra.mxu0 0.0
        %6544 = vmatprep.subr.mxu0 0.0
        %6545 = vmatpush1.msra.mxu0 0.0
        %6546 = vmatprep.subr.mxu0 0.0
        %6547 = vmatpush1.msra.mxu0 0.0
        %6548 = vmatprep.mubr.f32.mxu0 0.0
        %6549 = vmatmul.mubr.f32.gmra.mrb[0].mxu0 %v6435
        %v6550 = vpop.f32.mrb[0].mxu0
        %v6551 = vadd.f32 0.0, %v6550
        %v6552 = vpop.f32.mrb[0].mxu0
        %6553 = vmatprep.mubr.f32.mxu0 0.0
        %6554 = vmatmul.mubr.f32.gmra.mrb[0].mxu0 %v6436
        %v6555 = vpop.f32.mrb[0].mxu0
        %v6556 = vadd.f32 0.0, %v6555
        %v6557 = vpop.f32.mrb[0].mxu0
        %6558 = vmatprep.mubr.f32.mxu0 0.0
        %6559 = vmatmul.mubr.f32.gmra.mrb[0].mxu0 %v6437
        %v6560 = vpop.f32.mrb[0].mxu0
        %v6561 = vadd.f32 0.0, %v6560
        %v6562 = vpop.f32.mrb[0].mxu0
        %6563 = vmatprep.mubr.f32.mxu0 0.0
        %6564 = vmatmul.mubr.f32.gmra.mrb[0].mxu0 %v6438
        %v6565 = vpop.f32.mrb[0].mxu0
        %v6566 = vadd.f32 0.0, %v6565
        %v6567 = vpop.f32.mrb[0].mxu0
        %6568 = vmatprep.mubr.f32.mxu0 0.0
        %6569 = vmatmul.mubr.f32.gmra.mrb[0].mxu0 %v6439
        %v6570 = vpop.f32.mrb[0].mxu0
        %v6571 = vadd.f32 0.0, %v6570
        %v6572 = vpop.f32.mrb[0].mxu0
        %6573 = vmatprep.mubr.f32.mxu0 0.0
        %6574 = vmatmul.mubr.f32.gmra.mrb[0].mxu0 %v6440
        %v6575 = vpop.f32.mrb[0].mxu0
        %v6576 = vadd.f32 0.0, %v6575
        %v6577 = vpop.f32.mrb[0].mxu0
        %6578 = vmatprep.mubr.f32.mxu0 0.0
        %6579 = vmatmul.mubr.f32.gmra.mrb[0].mxu0 %v6441
        %v6580 = vpop.f32.mrb[0].mxu0
        %v6581 = vadd.f32 0.0, %v6580
        %v6582 = vpop.f32.mrb[0].mxu0
        %6583 = vmatprep.mubr.f32.mxu0 0.0
        %6584 = vmatmul.mubr.f32.gmra.mrb[0].mxu0 %v6442
        %v6585 = vpop.f32.mrb[0].mxu0
        %v6586 = vadd.f32 0.0, %v6585
        %v6587 = vpop.f32.mrb[0].mxu0
        %6588 = vmatprep.mubr.f32.mxu0 0.0
        %6589 = vmatmul.mubr.f32.gmra.mrb[0].mxu0 %v6443
        %v6590 = vpop.f32.mrb[0].mxu0
        %v6591 = vadd.f32 0.0, %v6590
        %v6592 = vpop.f32.mrb[0].mxu0
        %6593 = vmatprep.mubr.f32.mxu0 0.0
        %6594 = vmatmul.mubr.f32.gmra.mrb[0].mxu0 %v6444
        %v6595 = vpop.f32.mrb[0].mxu0
        %v6596 = vadd.f32 0.0, %v6595
        %v6597 = vpop.f32.mrb[0].mxu0
        %6598 = vmatprep.mubr.f32.mxu0 0.0
        %6599 = vmatmul.mubr.f32.gmra.mrb[0].mxu0 %v6445
        %v6600 = vpop.f32.mrb[0].mxu0
        %v6601 = vadd.f32 0.0, %v6600
        %v6602 = vpop.f32.mrb[0].mxu0
        %6603 = vmatprep.mubr.f32.mxu0 0.0
        %6604 = vmatmul.mubr.f32.gmra.mrb[0].mxu0 %v6446
        %v6605 = vpop.f32.mrb[0].mxu0
        %v6606 = vadd.f32 0.0, %v6605
        %v6607 = vpop.f32.mrb[0].mxu0
        %6608 = vmatprep.mubr.f32.mxu0 0.0
        %6609 = vmatmul.mubr.f32.gmra.mrb[0].mxu0 %v6447
        %v6610 = vpop.f32.mrb[0].mxu0
        %v6611 = vadd.f32 0.0, %v6610
        %v6612 = vpop.f32.mrb[0].mxu0
        %6613 = vmatprep.mubr.f32.mxu0 0.0
        %6614 = vmatmul.mubr.f32.gmra.mrb[0].mxu0 %v6448
        %v6615 = vpop.f32.mrb[0].mxu0
        %v6616 = vadd.f32 0.0, %v6615
        %v6617 = vpop.f32.mrb[0].mxu0
        %6618 = vmatprep.mubr.f32.mxu0 0.0
        %6619 = vmatmul.mubr.f32.gmra.mrb[0].mxu0 %v6449
        %v6620 = vpop.f32.mrb[0].mxu0
        %v6621 = vadd.f32 0.0, %v6620
        %v6622 = vpop.f32.mrb[0].mxu0
        %6623 = vmatprep.mubr.f32.mxu0 0.0
        %6624 = vmatmul.mubr.f32.gmra.mrb[0].mxu0 %v6450
        %v6625 = vpop.f32.mrb[0].mxu0
        %v6626 = vadd.f32 0.0, %v6625
        %v6627 = vpop.f32.mrb[0].mxu0
        %6628 = vdwg.mxu0
        %v6629 = vadd.f32 %v6451, %v6551
        %v6630 = vadd.f32 %v6452, %v6556
        %v6631 = vadd.f32 %v6453, %v6561
        %v6632 = vadd.f32 %v6454, %v6566
        %v6633 = vadd.f32 %v6455, %v6571
        %v6634 = vadd.f32 %v6456, %v6576
        %v6635 = vadd.f32 %v6457, %v6581
        %v6636 = vadd.f32 %v6458, %v6586
        %v6637 = vadd.f32 %v6459, %v6591
        %v6638 = vadd.f32 %v6460, %v6596
        %v6639 = vadd.f32 %v6461, %v6601
        %v6640 = vadd.f32 %v6462, %v6606
        %v6641 = vadd.f32 %v6463, %v6611
        %v6642 = vadd.f32 %v6464, %v6616
        %v6643 = vadd.f32 %v6465, %v6621
        %v6644 = vadd.f32 %v6466, %v6626
        %6645 = vst [vmem:[#allocation7] sm:$0xff] %v6629
        %6646 = vst [vmem:[#allocation7 + $0x8] sm:$0xff] %v6630
        %6647 = vst [vmem:[#allocation7 + $0x10] sm:$0xff] %v6631
        %6648 = vst [vmem:[#allocation7 + $0x18] sm:$0xff] %v6632
        %6649 = vst [vmem:[#allocation7 + $0x20] sm:$0xff] %v6633
        %6650 = vst [vmem:[#allocation7 + $0x28] sm:$0xff] %v6634
        %6651 = vst [vmem:[#allocation7 + $0x30] sm:$0xff] %v6635
        %6652 = vst [vmem:[#allocation7 + $0x38] sm:$0xff] %v6636
        %6653 = vst [vmem:[#allocation7 + $0x40] sm:$0xff] %v6637
        %6654 = vst [vmem:[#allocation7 + $0x48] sm:$0xff] %v6638
        %6655 = vst [vmem:[#allocation7 + $0x50] sm:$0xff] %v6639
        %6656 = vst [vmem:[#allocation7 + $0x58] sm:$0xff] %v6640
        %6657 = vst [vmem:[#allocation7 + $0x60] sm:$0xff] %v6641
        %6658 = vst [vmem:[#allocation7 + $0x68] sm:$0xff] %v6642
        %6659 = vst [vmem:[#allocation7 + $0x70] sm:$0xff] %v6643
        %6660 = vst [vmem:[#allocation7 + $0x78] sm:$0xff] %v6644
        %v6661 = vld [vmem:[%s6434 + $0x12] sm:$0xff]
        %v6662 = vld [vmem:[%s6434 + $0x1a] sm:$0xff]
        %v6663 = vld [vmem:[%s6434 + $0x4a] sm:$0xff]
        %v6664 = vld [vmem:[%s6434 + $0x52] sm:$0xff]
        %v6665 = vld [vmem:[%s6434 + $0x82] sm:$0xff]
        %v6666 = vld [vmem:[%s6434 + $0x8a] sm:$0xff]
        %v6667 = vld [vmem:[%s6434 + $0xba] sm:$0xff]
        %v6668 = vld [vmem:[%s6434 + $0xc2] sm:$0xff]
        %v6669 = vld [vmem:[%s6434 + $0xf2] sm:$0xff]
        %v6670 = vld [vmem:[%s6434 + $0xfa] sm:$0xff]
        %v6671 = vld [vmem:[%s6434 + $0x12a] sm:$0xff]
        %v6672 = vld [vmem:[%s6434 + $0x132] sm:$0xff]
        %v6673 = vld [vmem:[%s6434 + $0x162] sm:$0xff]
        %v6674 = vld [vmem:[%s6434 + $0x16a] sm:$0xff]
        %v6675 = vld [vmem:[%s6434 + $0x19a] sm:$0xff]
        %v6676 = vld [vmem:[%s6434 + $0x1a2] sm:$0xff]
        %v6677 = vld [vmem:[#allocation7] sm:$0xff]
        %v6678 = vld [vmem:[#allocation7 + $0x8] sm:$0xff]
        %v6679 = vld [vmem:[#allocation7 + $0x10] sm:$0xff]
        %v6680 = vld [vmem:[#allocation7 + $0x18] sm:$0xff]
        %v6681 = vld [vmem:[#allocation7 + $0x20] sm:$0xff]
        %v6682 = vld [vmem:[#allocation7 + $0x28] sm:$0xff]
        %v6683 = vld [vmem:[#allocation7 + $0x30] sm:$0xff]
        %v6684 = vld [vmem:[#allocation7 + $0x38] sm:$0xff]
        %v6685 = vld [vmem:[#allocation7 + $0x40] sm:$0xff]
        %v6686 = vld [vmem:[#allocation7 + $0x48] sm:$0xff]
        %v6687 = vld [vmem:[#allocation7 + $0x50] sm:$0xff]
        %v6688 = vld [vmem:[#allocation7 + $0x58] sm:$0xff]
        %v6689 = vld [vmem:[#allocation7 + $0x60] sm:$0xff]
        %v6690 = vld [vmem:[#allocation7 + $0x68] sm:$0xff]
        %v6691 = vld [vmem:[#allocation7 + $0x70] sm:$0xff]
        %v6692 = vld [vmem:[#allocation7 + $0x78] sm:$0xff]
        %s6693 = scalar_lea.vmem [#allocation14], 896
        %v6694 = vld [vmem:[%s6693] sm:$0xff]
        %v6695 = vld [vmem:[%s6693 + $0x8] sm:$0xff]
        %v6696 = vld [vmem:[%s6693 + $0x10] sm:$0xff]
        %v6697 = vld [vmem:[%s6693 + $0x18] sm:$0xff]
        %v6698 = vld [vmem:[%s6693 + $0x20] sm:$0xff]
        %v6699 = vld [vmem:[%s6693 + $0x28] sm:$0xff]
        %v6700 = vld [vmem:[%s6693 + $0x30] sm:$0xff]
        %v6701 = vld [vmem:[%s6693 + $0x38] sm:$0xff]
        %v6702 = vld [vmem:[%s6693 + $0x40] sm:$0xff]
        %v6703 = vld [vmem:[%s6693 + $0x48] sm:$0xff]
        %v6704 = vld [vmem:[%s6693 + $0x50] sm:$0xff]
        %v6705 = vld [vmem:[%s6693 + $0x58] sm:$0xff]
        %v6706 = vld [vmem:[%s6693 + $0x60] sm:$0xff]
        %v6707 = vld [vmem:[%s6693 + $0x68] sm:$0xff]
        %v6708 = vld [vmem:[%s6693 + $0x70] sm:$0xff]
        %v6709 = vld [vmem:[%s6693 + $0x78] sm:$0xff]
        %6710 = vmatprep.subr.mxu0 0.0
        %6711 = vmatpush1.msra.mxu0 %v6694
        %6712 = vmatprep.subr.mxu0 0.0
        %6713 = vmatpush1.msra.mxu0 %v6695
        %6714 = vmatprep.subr.mxu0 0.0
        %6715 = vmatpush1.msra.mxu0 %v6696
        %6716 = vmatprep.subr.mxu0 0.0
        %6717 = vmatpush1.msra.mxu0 %v6697
        %6718 = vmatprep.subr.mxu0 0.0
        %6719 = vmatpush1.msra.mxu0 %v6698
        %6720 = vmatprep.subr.mxu0 0.0
        %6721 = vmatpush1.msra.mxu0 %v6699
        %6722 = vmatprep.subr.mxu0 0.0
        %6723 = vmatpush1.msra.mxu0 %v6700
        %6724 = vmatprep.subr.mxu0 0.0
        %6725 = vmatpush1.msra.mxu0 %v6701
        %6726 = vmatprep.subr.mxu0 0.0
        %6727 = vmatpush1.msra.mxu0 %v6702
        %6728 = vmatprep.subr.mxu0 0.0
        %6729 = vmatpush1.msra.mxu0 %v6703
        %6730 = vmatprep.subr.mxu0 0.0
        %6731 = vmatpush1.msra.mxu0 %v6704
        %6732 = vmatprep.subr.mxu0 0.0
        %6733 = vmatpush1.msra.mxu0 %v6705
        %6734 = vmatprep.subr.mxu0 0.0
        %6735 = vmatpush1.msra.mxu0 %v6706
        %6736 = vmatprep.subr.mxu0 0.0
        %6737 = vmatpush1.msra.mxu0 %v6707
        %6738 = vmatprep.subr.mxu0 0.0
        %6739 = vmatpush1.msra.mxu0 %v6708
        %6740 = vmatprep.subr.mxu0 0.0
        %6741 = vmatpush1.msra.mxu0 %v6709
        %6742 = vmatprep.subr.mxu0 0.0
        %6743 = vmatpush1.msra.mxu0 0.0
        %6744 = vmatprep.subr.mxu0 0.0
        %6745 = vmatpush1.msra.mxu0 0.0
        %6746 = vmatprep.subr.mxu0 0.0
        %6747 = vmatpush1.msra.mxu0 0.0
        %6748 = vmatprep.subr.mxu0 0.0
        %6749 = vmatpush1.msra.mxu0 0.0
        %6750 = vmatprep.subr.mxu0 0.0
        %6751 = vmatpush1.msra.mxu0 0.0
        %6752 = vmatprep.subr.mxu0 0.0
        %6753 = vmatpush1.msra.mxu0 0.0
        %6754 = vmatprep.subr.mxu0 0.0
        %6755 = vmatpush1.msra.mxu0 0.0
        %6756 = vmatprep.subr.mxu0 0.0
        %6757 = vmatpush1.msra.mxu0 0.0
        %6758 = vmatprep.subr.mxu0 0.0
        %6759 = vmatpush1.msra.mxu0 0.0
        %6760 = vmatprep.subr.mxu0 0.0
        %6761 = vmatpush1.msra.mxu0 0.0
        %6762 = vmatprep.subr.mxu0 0.0
        %6763 = vmatpush1.msra.mxu0 0.0
        %6764 = vmatprep.subr.mxu0 0.0
        %6765 = vmatpush1.msra.mxu0 0.0
        %6766 = vmatprep.subr.mxu0 0.0
        %6767 = vmatpush1.msra.mxu0 0.0
        %6768 = vmatprep.subr.mxu0 0.0
        %6769 = vmatpush1.msra.mxu0 0.0
        %6770 = vmatprep.subr.mxu0 0.0
        %6771 = vmatpush1.msra.mxu0 0.0
        %6772 = vmatprep.subr.mxu0 0.0
        %6773 = vmatpush1.msra.mxu0 0.0
        %6774 = vmatprep.mubr.f32.mxu0 0.0
        %6775 = vmatmul.mubr.f32.gmra.mrb[0].mxu0 %v6661
        %v6776 = vpop.f32.mrb[0].mxu0
        %v6777 = vadd.f32 0.0, %v6776
        %v6778 = vpop.f32.mrb[0].mxu0
        %6779 = vmatprep.mubr.f32.mxu0 0.0
        %6780 = vmatmul.mubr.f32.gmra.mrb[0].mxu0 %v6662
        %v6781 = vpop.f32.mrb[0].mxu0
        %v6782 = vadd.f32 0.0, %v6781
        %v6783 = vpop.f32.mrb[0].mxu0
        %6784 = vmatprep.mubr.f32.mxu0 0.0
        %6785 = vmatmul.mubr.f32.gmra.mrb[0].mxu0 %v6663
        %v6786 = vpop.f32.mrb[0].mxu0
        %v6787 = vadd.f32 0.0, %v6786
        %v6788 = vpop.f32.mrb[0].mxu0
        %6789 = vmatprep.mubr.f32.mxu0 0.0
        %6790 = vmatmul.mubr.f32.gmra.mrb[0].mxu0 %v6664
        %v6791 = vpop.f32.mrb[0].mxu0
        %v6792 = vadd.f32 0.0, %v6791
        %v6793 = vpop.f32.mrb[0].mxu0
        %6794 = vmatprep.mubr.f32.mxu0 0.0
        %6795 = vmatmul.mubr.f32.gmra.mrb[0].mxu0 %v6665
        %v6796 = vpop.f32.mrb[0].mxu0
        %v6797 = vadd.f32 0.0, %v6796
        %v6798 = vpop.f32.mrb[0].mxu0
        %6799 = vmatprep.mubr.f32.mxu0 0.0
        %6800 = vmatmul.mubr.f32.gmra.mrb[0].mxu0 %v6666
        %v6801 = vpop.f32.mrb[0].mxu0
        %v6802 = vadd.f32 0.0, %v6801
        %v6803 = vpop.f32.mrb[0].mxu0
        %6804 = vmatprep.mubr.f32.mxu0 0.0
        %6805 = vmatmul.mubr.f32.gmra.mrb[0].mxu0 %v6667
        %v6806 = vpop.f32.mrb[0].mxu0
        %v6807 = vadd.f32 0.0, %v6806
        %v6808 = vpop.f32.mrb[0].mxu0
        %6809 = vmatprep.mubr.f32.mxu0 0.0
        %6810 = vmatmul.mubr.f32.gmra.mrb[0].mxu0 %v6668
        %v6811 = vpop.f32.mrb[0].mxu0
        %v6812 = vadd.f32 0.0, %v6811
        %v6813 = vpop.f32.mrb[0].mxu0
        %6814 = vmatprep.mubr.f32.mxu0 0.0
        %6815 = vmatmul.mubr.f32.gmra.mrb[0].mxu0 %v6669
        %v6816 = vpop.f32.mrb[0].mxu0
        %v6817 = vadd.f32 0.0, %v6816
        %v6818 = vpop.f32.mrb[0].mxu0
        %6819 = vmatprep.mubr.f32.mxu0 0.0
        %6820 = vmatmul.mubr.f32.gmra.mrb[0].mxu0 %v6670
        %v6821 = vpop.f32.mrb[0].mxu0
        %v6822 = vadd.f32 0.0, %v6821
        %v6823 = vpop.f32.mrb[0].mxu0
        %6824 = vmatprep.mubr.f32.mxu0 0.0
        %6825 = vmatmul.mubr.f32.gmra.mrb[0].mxu0 %v6671
        %v6826 = vpop.f32.mrb[0].mxu0
        %v6827 = vadd.f32 0.0, %v6826
        %v6828 = vpop.f32.mrb[0].mxu0
        %6829 = vmatprep.mubr.f32.mxu0 0.0
        %6830 = vmatmul.mubr.f32.gmra.mrb[0].mxu0 %v6672
        %v6831 = vpop.f32.mrb[0].mxu0
        %v6832 = vadd.f32 0.0, %v6831
        %v6833 = vpop.f32.mrb[0].mxu0
        %6834 = vmatprep.mubr.f32.mxu0 0.0
        %6835 = vmatmul.mubr.f32.gmra.mrb[0].mxu0 %v6673
        %v6836 = vpop.f32.mrb[0].mxu0
        %v6837 = vadd.f32 0.0, %v6836
        %v6838 = vpop.f32.mrb[0].mxu0
        %6839 = vmatprep.mubr.f32.mxu0 0.0
        %6840 = vmatmul.mubr.f32.gmra.mrb[0].mxu0 %v6674
        %v6841 = vpop.f32.mrb[0].mxu0
        %v6842 = vadd.f32 0.0, %v6841
        %v6843 = vpop.f32.mrb[0].mxu0
        %6844 = vmatprep.mubr.f32.mxu0 0.0
        %6845 = vmatmul.mubr.f32.gmra.mrb[0].mxu0 %v6675
        %v6846 = vpop.f32.mrb[0].mxu0
        %v6847 = vadd.f32 0.0, %v6846
        %v6848 = vpop.f32.mrb[0].mxu0
        %6849 = vmatprep.mubr.f32.mxu0 0.0
        %6850 = vmatmul.mubr.f32.gmra.mrb[0].mxu0 %v6676
        %v6851 = vpop.f32.mrb[0].mxu0
        %v6852 = vadd.f32 0.0, %v6851
        %v6853 = vpop.f32.mrb[0].mxu0
        %6854 = vdwg.mxu0
        %v6855 = vadd.f32 %v6677, %v6777
        %v6856 = vadd.f32 %v6678, %v6782
        %v6857 = vadd.f32 %v6679, %v6787
        %v6858 = vadd.f32 %v6680, %v6792
        %v6859 = vadd.f32 %v6681, %v6797
        %v6860 = vadd.f32 %v6682, %v6802
        %v6861 = vadd.f32 %v6683, %v6807
        %v6862 = vadd.f32 %v6684, %v6812
        %v6863 = vadd.f32 %v6685, %v6817
        %v6864 = vadd.f32 %v6686, %v6822
        %v6865 = vadd.f32 %v6687, %v6827
        %v6866 = vadd.f32 %v6688, %v6832
        %v6867 = vadd.f32 %v6689, %v6837
        %v6868 = vadd.f32 %v6690, %v6842
        %v6869 = vadd.f32 %v6691, %v6847
        %v6870 = vadd.f32 %v6692, %v6852
        %6871 = vst [vmem:[#allocation7] sm:$0xff] %v6855
        %6872 = vst [vmem:[#allocation7 + $0x8] sm:$0xff] %v6856
        %6873 = vst [vmem:[#allocation7 + $0x10] sm:$0xff] %v6857
        %6874 = vst [vmem:[#allocation7 + $0x18] sm:$0xff] %v6858
        %6875 = vst [vmem:[#allocation7 + $0x20] sm:$0xff] %v6859
        %6876 = vst [vmem:[#allocation7 + $0x28] sm:$0xff] %v6860
        %6877 = vst [vmem:[#allocation7 + $0x30] sm:$0xff] %v6861
        %6878 = vst [vmem:[#allocation7 + $0x38] sm:$0xff] %v6862
        %6879 = vst [vmem:[#allocation7 + $0x40] sm:$0xff] %v6863
        %6880 = vst [vmem:[#allocation7 + $0x48] sm:$0xff] %v6864
        %6881 = vst [vmem:[#allocation7 + $0x50] sm:$0xff] %v6865
        %6882 = vst [vmem:[#allocation7 + $0x58] sm:$0xff] %v6866
        %6883 = vst [vmem:[#allocation7 + $0x60] sm:$0xff] %v6867
        %6884 = vst [vmem:[#allocation7 + $0x68] sm:$0xff] %v6868
        %6885 = vst [vmem:[#allocation7 + $0x70] sm:$0xff] %v6869
        %6886 = vst [vmem:[#allocation7 + $0x78] sm:$0xff] %v6870
        %v6887 = vld [vmem:[%s6434 + $0x24] sm:$0xff]
        %v6888 = vld [vmem:[%s6434 + $0x2c] sm:$0xff]
        %v6889 = vld [vmem:[%s6434 + $0x5c] sm:$0xff]
        %v6890 = vld [vmem:[%s6434 + $0x64] sm:$0xff]
        %v6891 = vld [vmem:[%s6434 + $0x94] sm:$0xff]
        %v6892 = vld [vmem:[%s6434 + $0x9c] sm:$0xff]
        %v6893 = vld [vmem:[%s6434 + $0xcc] sm:$0xff]
        %v6894 = vld [vmem:[%s6434 + $0xd4] sm:$0xff]
        %v6895 = vld [vmem:[%s6434 + $0x104] sm:$0xff]
        %v6896 = vld [vmem:[%s6434 + $0x10c] sm:$0xff]
        %v6897 = vld [vmem:[%s6434 + $0x13c] sm:$0xff]
        %v6898 = vld [vmem:[%s6434 + $0x144] sm:$0xff]
        %v6899 = vld [vmem:[%s6434 + $0x174] sm:$0xff]
        %v6900 = vld [vmem:[%s6434 + $0x17c] sm:$0xff]
        %v6901 = vld [vmem:[%s6434 + $0x1ac] sm:$0xff]
        %v6902 = vld [vmem:[%s6434 + $0x1b4] sm:$0xff]
        %v6903 = vld [vmem:[#allocation7] sm:$0xff]
        %v6904 = vld [vmem:[#allocation7 + $0x8] sm:$0xff]
        %v6905 = vld [vmem:[#allocation7 + $0x10] sm:$0xff]
        %v6906 = vld [vmem:[#allocation7 + $0x18] sm:$0xff]
        %v6907 = vld [vmem:[#allocation7 + $0x20] sm:$0xff]
        %v6908 = vld [vmem:[#allocation7 + $0x28] sm:$0xff]
        %v6909 = vld [vmem:[#allocation7 + $0x30] sm:$0xff]
        %v6910 = vld [vmem:[#allocation7 + $0x38] sm:$0xff]
        %v6911 = vld [vmem:[#allocation7 + $0x40] sm:$0xff]
        %v6912 = vld [vmem:[#allocation7 + $0x48] sm:$0xff]
        %v6913 = vld [vmem:[#allocation7 + $0x50] sm:$0xff]
        %v6914 = vld [vmem:[#allocation7 + $0x58] sm:$0xff]
        %v6915 = vld [vmem:[#allocation7 + $0x60] sm:$0xff]
        %v6916 = vld [vmem:[#allocation7 + $0x68] sm:$0xff]
        %v6917 = vld [vmem:[#allocation7 + $0x70] sm:$0xff]
        %v6918 = vld [vmem:[#allocation7 + $0x78] sm:$0xff]
        %s6919 = scalar_lea.vmem [#allocation14], 1024
        %v6920 = vld [vmem:[%s6919] sm:$0xff]
        %v6921 = vld [vmem:[%s6919 + $0x8] sm:$0xff]
        %v6922 = vld [vmem:[%s6919 + $0x10] sm:$0xff]
        %v6923 = vld [vmem:[%s6919 + $0x18] sm:$0xff]
        %v6924 = vld [vmem:[%s6919 + $0x20] sm:$0xff]
        %v6925 = vld [vmem:[%s6919 + $0x28] sm:$0xff]
        %v6926 = vld [vmem:[%s6919 + $0x30] sm:$0xff]
        %v6927 = vld [vmem:[%s6919 + $0x38] sm:$0xff]
        %v6928 = vld [vmem:[%s6919 + $0x40] sm:$0xff]
        %v6929 = vld [vmem:[%s6919 + $0x48] sm:$0xff]
        %v6930 = vld [vmem:[%s6919 + $0x50] sm:$0xff]
        %v6931 = vld [vmem:[%s6919 + $0x58] sm:$0xff]
        %v6932 = vld [vmem:[%s6919 + $0x60] sm:$0xff]
        %v6933 = vld [vmem:[%s6919 + $0x68] sm:$0xff]
        %v6934 = vld [vmem:[%s6919 + $0x70] sm:$0xff]
        %v6935 = vld [vmem:[%s6919 + $0x78] sm:$0xff]
        %6936 = vmatprep.subr.mxu0 0.0
        %6937 = vmatpush1.msra.mxu0 %v6920
        %6938 = vmatprep.subr.mxu0 0.0
        %6939 = vmatpush1.msra.mxu0 %v6921
        %6940 = vmatprep.subr.mxu0 0.0
        %6941 = vmatpush1.msra.mxu0 %v6922
        %6942 = vmatprep.subr.mxu0 0.0
        %6943 = vmatpush1.msra.mxu0 %v6923
        %6944 = vmatprep.subr.mxu0 0.0
        %6945 = vmatpush1.msra.mxu0 %v6924
        %6946 = vmatprep.subr.mxu0 0.0
        %6947 = vmatpush1.msra.mxu0 %v6925
        %6948 = vmatprep.subr.mxu0 0.0
        %6949 = vmatpush1.msra.mxu0 %v6926
        %6950 = vmatprep.subr.mxu0 0.0
        %6951 = vmatpush1.msra.mxu0 %v6927
        %6952 = vmatprep.subr.mxu0 0.0
        %6953 = vmatpush1.msra.mxu0 %v6928
        %6954 = vmatprep.subr.mxu0 0.0
        %6955 = vmatpush1.msra.mxu0 %v6929
        %6956 = vmatprep.subr.mxu0 0.0
        %6957 = vmatpush1.msra.mxu0 %v6930
        %6958 = vmatprep.subr.mxu0 0.0
        %6959 = vmatpush1.msra.mxu0 %v6931
        %6960 = vmatprep.subr.mxu0 0.0
        %6961 = vmatpush1.msra.mxu0 %v6932
        %6962 = vmatprep.subr.mxu0 0.0
        %6963 = vmatpush1.msra.mxu0 %v6933
        %6964 = vmatprep.subr.mxu0 0.0
        %6965 = vmatpush1.msra.mxu0 %v6934
        %6966 = vmatprep.subr.mxu0 0.0
        %6967 = vmatpush1.msra.mxu0 %v6935
        %6968 = vmatprep.subr.mxu0 0.0
        %6969 = vmatpush1.msra.mxu0 0.0
        %6970 = vmatprep.subr.mxu0 0.0
        %6971 = vmatpush1.msra.mxu0 0.0
        %6972 = vmatprep.subr.mxu0 0.0
        %6973 = vmatpush1.msra.mxu0 0.0
        %6974 = vmatprep.subr.mxu0 0.0
        %6975 = vmatpush1.msra.mxu0 0.0
        %6976 = vmatprep.subr.mxu0 0.0
        %6977 = vmatpush1.msra.mxu0 0.0
        %6978 = vmatprep.subr.mxu0 0.0
        %6979 = vmatpush1.msra.mxu0 0.0
        %6980 = vmatprep.subr.mxu0 0.0
        %6981 = vmatpush1.msra.mxu0 0.0
        %6982 = vmatprep.subr.mxu0 0.0
        %6983 = vmatpush1.msra.mxu0 0.0
        %6984 = vmatprep.subr.mxu0 0.0
        %6985 = vmatpush1.msra.mxu0 0.0
        %6986 = vmatprep.subr.mxu0 0.0
        %6987 = vmatpush1.msra.mxu0 0.0
        %6988 = vmatprep.subr.mxu0 0.0
        %6989 = vmatpush1.msra.mxu0 0.0
        %6990 = vmatprep.subr.mxu0 0.0
        %6991 = vmatpush1.msra.mxu0 0.0
        %6992 = vmatprep.subr.mxu0 0.0
        %6993 = vmatpush1.msra.mxu0 0.0
        %6994 = vmatprep.subr.mxu0 0.0
        %6995 = vmatpush1.msra.mxu0 0.0
        %6996 = vmatprep.subr.mxu0 0.0
        %6997 = vmatpush1.msra.mxu0 0.0
        %6998 = vmatprep.subr.mxu0 0.0
        %6999 = vmatpush1.msra.mxu0 0.0
        %7000 = vmatprep.mubr.f32.mxu0 0.0
        %7001 = vmatmul.mubr.f32.gmra.mrb[0].mxu0 %v6887
        %v7002 = vpop.f32.mrb[0].mxu0
        %v7003 = vadd.f32 0.0, %v7002
        %v7004 = vpop.f32.mrb[0].mxu0
        %7005 = vmatprep.mubr.f32.mxu0 0.0
        %7006 = vmatmul.mubr.f32.gmra.mrb[0].mxu0 %v6888
        %v7007 = vpop.f32.mrb[0].mxu0
        %v7008 = vadd.f32 0.0, %v7007
        %v7009 = vpop.f32.mrb[0].mxu0
        %7010 = vmatprep.mubr.f32.mxu0 0.0
        %7011 = vmatmul.mubr.f32.gmra.mrb[0].mxu0 %v6889
        %v7012 = vpop.f32.mrb[0].mxu0
        %v7013 = vadd.f32 0.0, %v7012
        %v7014 = vpop.f32.mrb[0].mxu0
        %7015 = vmatprep.mubr.f32.mxu0 0.0
        %7016 = vmatmul.mubr.f32.gmra.mrb[0].mxu0 %v6890
        %v7017 = vpop.f32.mrb[0].mxu0
        %v7018 = vadd.f32 0.0, %v7017
        %v7019 = vpop.f32.mrb[0].mxu0
        %7020 = vmatprep.mubr.f32.mxu0 0.0
        %7021 = vmatmul.mubr.f32.gmra.mrb[0].mxu0 %v6891
        %v7022 = vpop.f32.mrb[0].mxu0
        %v7023 = vadd.f32 0.0, %v7022
        %v7024 = vpop.f32.mrb[0].mxu0
        %7025 = vmatprep.mubr.f32.mxu0 0.0
        %7026 = vmatmul.mubr.f32.gmra.mrb[0].mxu0 %v6892
        %v7027 = vpop.f32.mrb[0].mxu0
        %v7028 = vadd.f32 0.0, %v7027
        %v7029 = vpop.f32.mrb[0].mxu0
        %7030 = vmatprep.mubr.f32.mxu0 0.0
        %7031 = vmatmul.mubr.f32.gmra.mrb[0].mxu0 %v6893
        %v7032 = vpop.f32.mrb[0].mxu0
        %v7033 = vadd.f32 0.0, %v7032
        %v7034 = vpop.f32.mrb[0].mxu0
        %7035 = vmatprep.mubr.f32.mxu0 0.0
        %7036 = vmatmul.mubr.f32.gmra.mrb[0].mxu0 %v6894
        %v7037 = vpop.f32.mrb[0].mxu0
        %v7038 = vadd.f32 0.0, %v7037
        %v7039 = vpop.f32.mrb[0].mxu0
        %7040 = vmatprep.mubr.f32.mxu0 0.0
        %7041 = vmatmul.mubr.f32.gmra.mrb[0].mxu0 %v6895
        %v7042 = vpop.f32.mrb[0].mxu0
        %v7043 = vadd.f32 0.0, %v7042
        %v7044 = vpop.f32.mrb[0].mxu0
        %7045 = vmatprep.mubr.f32.mxu0 0.0
        %7046 = vmatmul.mubr.f32.gmra.mrb[0].mxu0 %v6896
        %v7047 = vpop.f32.mrb[0].mxu0
        %v7048 = vadd.f32 0.0, %v7047
        %v7049 = vpop.f32.mrb[0].mxu0
        %7050 = vmatprep.mubr.f32.mxu0 0.0
        %7051 = vmatmul.mubr.f32.gmra.mrb[0].mxu0 %v6897
        %v7052 = vpop.f32.mrb[0].mxu0
        %v7053 = vadd.f32 0.0, %v7052
        %v7054 = vpop.f32.mrb[0].mxu0
        %7055 = vmatprep.mubr.f32.mxu0 0.0
        %7056 = vmatmul.mubr.f32.gmra.mrb[0].mxu0 %v6898
        %v7057 = vpop.f32.mrb[0].mxu0
        %v7058 = vadd.f32 0.0, %v7057
        %v7059 = vpop.f32.mrb[0].mxu0
        %7060 = vmatprep.mubr.f32.mxu0 0.0
        %7061 = vmatmul.mubr.f32.gmra.mrb[0].mxu0 %v6899
        %v7062 = vpop.f32.mrb[0].mxu0
        %v7063 = vadd.f32 0.0, %v7062
        %v7064 = vpop.f32.mrb[0].mxu0
        %7065 = vmatprep.mubr.f32.mxu0 0.0
        %7066 = vmatmul.mubr.f32.gmra.mrb[0].mxu0 %v6900
        %v7067 = vpop.f32.mrb[0].mxu0
        %v7068 = vadd.f32 0.0, %v7067
        %v7069 = vpop.f32.mrb[0].mxu0
        %7070 = vmatprep.mubr.f32.mxu0 0.0
        %7071 = vmatmul.mubr.f32.gmra.mrb[0].mxu0 %v6901
        %v7072 = vpop.f32.mrb[0].mxu0
        %v7073 = vadd.f32 0.0, %v7072
        %v7074 = vpop.f32.mrb[0].mxu0
        %7075 = vmatprep.mubr.f32.mxu0 0.0
        %7076 = vmatmul.mubr.f32.gmra.mrb[0].mxu0 %v6902
        %v7077 = vpop.f32.mrb[0].mxu0
        %v7078 = vadd.f32 0.0, %v7077
        %v7079 = vpop.f32.mrb[0].mxu0
        %7080 = vdwg.mxu0
        %v7081 = vadd.f32 %v6903, %v7003
        %v7082 = vadd.f32 %v6904, %v7008
        %v7083 = vadd.f32 %v6905, %v7013
        %v7084 = vadd.f32 %v6906, %v7018
        %v7085 = vadd.f32 %v6907, %v7023
        %v7086 = vadd.f32 %v6908, %v7028
        %v7087 = vadd.f32 %v6909, %v7033
        %v7088 = vadd.f32 %v6910, %v7038
        %v7089 = vadd.f32 %v6911, %v7043
        %v7090 = vadd.f32 %v6912, %v7048
        %v7091 = vadd.f32 %v6913, %v7053
        %v7092 = vadd.f32 %v6914, %v7058
        %v7093 = vadd.f32 %v6915, %v7063
        %v7094 = vadd.f32 %v6916, %v7068
        %v7095 = vadd.f32 %v6917, %v7073
        %v7096 = vadd.f32 %v6918, %v7078
        %7097 = vst [vmem:[#allocation7] sm:$0xff] %v7081
        %7098 = vst [vmem:[#allocation7 + $0x8] sm:$0xff] %v7082
        %7099 = vst [vmem:[#allocation7 + $0x10] sm:$0xff] %v7083
        %7100 = vst [vmem:[#allocation7 + $0x18] sm:$0xff] %v7084
        %7101 = vst [vmem:[#allocation7 + $0x20] sm:$0xff] %v7085
        %7102 = vst [vmem:[#allocation7 + $0x28] sm:$0xff] %v7086
        %7103 = vst [vmem:[#allocation7 + $0x30] sm:$0xff] %v7087
        %7104 = vst [vmem:[#allocation7 + $0x38] sm:$0xff] %v7088
        %7105 = vst [vmem:[#allocation7 + $0x40] sm:$0xff] %v7089
        %7106 = vst [vmem:[#allocation7 + $0x48] sm:$0xff] %v7090
        %7107 = vst [vmem:[#allocation7 + $0x50] sm:$0xff] %v7091
        %7108 = vst [vmem:[#allocation7 + $0x58] sm:$0xff] %v7092
        %7109 = vst [vmem:[#allocation7 + $0x60] sm:$0xff] %v7093
        %7110 = vst [vmem:[#allocation7 + $0x68] sm:$0xff] %v7094
        %7111 = vst [vmem:[#allocation7 + $0x70] sm:$0xff] %v7095
        %7112 = vst [vmem:[#allocation7 + $0x78] sm:$0xff] %v7096
        // Predicated region
        $region101: #{tpu_custom_call.1} parent=51 // pred_check
          %p7113 = pneg %p623
        $region102: #{tpu_custom_call.1} parent=51 // pred_check_branch
          %7115 = sbr.rel (%p7113) target = $region104
        $region103: #{tpu_custom_call.1} parent=51 // pred_region
          %v7116 = vld [vmem:[#allocation4] sm:$0xff]
          %v7117 = vld [vmem:[#allocation4 + $0x8] sm:$0xff]
          %v7118 = vld [vmem:[#allocation4 + $0x10] sm:$0xff]
          %v7119 = vld [vmem:[#allocation4 + $0x18] sm:$0xff]
          %v7120 = vld [vmem:[#allocation4 + $0x20] sm:$0xff]
          %v7121 = vld [vmem:[#allocation4 + $0x28] sm:$0xff]
          %v7122 = vld [vmem:[#allocation4 + $0x30] sm:$0xff]
          %v7123 = vld [vmem:[#allocation4 + $0x38] sm:$0xff]
          %v7124 = vld [vmem:[#allocation4 + $0x40] sm:$0xff]
          %v7125 = vld [vmem:[#allocation4 + $0x48] sm:$0xff]
          %v7126 = vld [vmem:[#allocation4 + $0x50] sm:$0xff]
          %v7127 = vld [vmem:[#allocation4 + $0x58] sm:$0xff]
          %v7128 = vld [vmem:[#allocation4 + $0x60] sm:$0xff]
          %v7129 = vld [vmem:[#allocation4 + $0x68] sm:$0xff]
          %v7130 = vld [vmem:[#allocation4 + $0x70] sm:$0xff]
          %v7131 = vld [vmem:[#allocation4 + $0x78] sm:$0xff]
          %v7132 = vld [vmem:[#allocation16] sm:$0x1]
          %v7134 = vlaneseq
          %v7135 = vshrl.u32 %v7134, 7
          %v7136 = vsub.s32 0, %v7135
          %v7137 = vrot.slane %v7132, %v7136
          %v7139 = vadd.f32 %v7116, %v7137
          %v7140 = vadd.f32 %v7117, %v7137
          %v7141 = vadd.f32 %v7118, %v7137
          %v7142 = vadd.f32 %v7119, %v7137
          %v7143 = vadd.f32 %v7120, %v7137
          %v7144 = vadd.f32 %v7121, %v7137
          %v7145 = vadd.f32 %v7122, %v7137
          %v7146 = vadd.f32 %v7123, %v7137
          %v7147 = vadd.f32 %v7124, %v7137
          %v7148 = vadd.f32 %v7125, %v7137
          %v7149 = vadd.f32 %v7126, %v7137
          %v7150 = vadd.f32 %v7127, %v7137
          %v7151 = vadd.f32 %v7128, %v7137
          %v7152 = vadd.f32 %v7129, %v7137
          %v7153 = vadd.f32 %v7130, %v7137
          %v7154 = vadd.f32 %v7131, %v7137
          %v7155 = vmax.f32 %v7139, 0.0
          %v7156 = vmax.f32 %v7140, 0.0
          %v7157 = vmax.f32 %v7141, 0.0
          %v7158 = vmax.f32 %v7142, 0.0
          %v7159 = vmax.f32 %v7143, 0.0
          %v7160 = vmax.f32 %v7144, 0.0
          %v7161 = vmax.f32 %v7145, 0.0
          %v7162 = vmax.f32 %v7146, 0.0
          %v7163 = vmax.f32 %v7147, 0.0
          %v7164 = vmax.f32 %v7148, 0.0
          %v7165 = vmax.f32 %v7149, 0.0
          %v7166 = vmax.f32 %v7150, 0.0
          %v7167 = vmax.f32 %v7151, 0.0
          %v7168 = vmax.f32 %v7152, 0.0
          %v7169 = vmax.f32 %v7153, 0.0
          %v7170 = vmax.f32 %v7154, 0.0
          %7171 = vst [vmem:[%s573] sm:$0xff] %v7155
          %7172 = vst [vmem:[%s573 + $0x8] sm:$0xff] %v7156
          %7173 = vst [vmem:[%s573 + $0x10] sm:$0xff] %v7157
          %7174 = vst [vmem:[%s573 + $0x18] sm:$0xff] %v7158
          %7175 = vst [vmem:[%s573 + $0x20] sm:$0xff] %v7159
          %7176 = vst [vmem:[%s573 + $0x28] sm:$0xff] %v7160
          %7177 = vst [vmem:[%s573 + $0x30] sm:$0xff] %v7161
          %7178 = vst [vmem:[%s573 + $0x38] sm:$0xff] %v7162
          %7179 = vst [vmem:[%s573 + $0x40] sm:$0xff] %v7163
          %7180 = vst [vmem:[%s573 + $0x48] sm:$0xff] %v7164
          %7181 = vst [vmem:[%s573 + $0x50] sm:$0xff] %v7165
          %7182 = vst [vmem:[%s573 + $0x58] sm:$0xff] %v7166
          %7183 = vst [vmem:[%s573 + $0x60] sm:$0xff] %v7167
          %7184 = vst [vmem:[%s573 + $0x68] sm:$0xff] %v7168
          %7185 = vst [vmem:[%s573 + $0x70] sm:$0xff] %v7169
          %7186 = vst [vmem:[%s573 + $0x78] sm:$0xff] %v7170
          %v7187 = vld [vmem:[#allocation5] sm:$0xff]
          %v7188 = vld [vmem:[#allocation5 + $0x8] sm:$0xff]
          %v7189 = vld [vmem:[#allocation5 + $0x10] sm:$0xff]
          %v7190 = vld [vmem:[#allocation5 + $0x18] sm:$0xff]
          %v7191 = vld [vmem:[#allocation5 + $0x20] sm:$0xff]
          %v7192 = vld [vmem:[#allocation5 + $0x28] sm:$0xff]
          %v7193 = vld [vmem:[#allocation5 + $0x30] sm:$0xff]
          %v7194 = vld [vmem:[#allocation5 + $0x38] sm:$0xff]
          %v7195 = vld [vmem:[#allocation5 + $0x40] sm:$0xff]
          %v7196 = vld [vmem:[#allocation5 + $0x48] sm:$0xff]
          %v7197 = vld [vmem:[#allocation5 + $0x50] sm:$0xff]
          %v7198 = vld [vmem:[#allocation5 + $0x58] sm:$0xff]
          %v7199 = vld [vmem:[#allocation5 + $0x60] sm:$0xff]
          %v7200 = vld [vmem:[#allocation5 + $0x68] sm:$0xff]
          %v7201 = vld [vmem:[#allocation5 + $0x70] sm:$0xff]
          %v7202 = vld [vmem:[#allocation5 + $0x78] sm:$0xff]
          %v7203 = vld [vmem:[#allocation17] sm:$0x1]
          %v7205 = vlaneseq
          %v7206 = vshrl.u32 %v7205, 7
          %v7207 = vsub.s32 0, %v7206
          %v7208 = vrot.slane %v7203, %v7207
          %v7210 = vadd.f32 %v7187, %v7208
          %v7211 = vadd.f32 %v7188, %v7208
          %v7212 = vadd.f32 %v7189, %v7208
          %v7213 = vadd.f32 %v7190, %v7208
          %v7214 = vadd.f32 %v7191, %v7208
          %v7215 = vadd.f32 %v7192, %v7208
          %v7216 = vadd.f32 %v7193, %v7208
          %v7217 = vadd.f32 %v7194, %v7208
          %v7218 = vadd.f32 %v7195, %v7208
          %v7219 = vadd.f32 %v7196, %v7208
          %v7220 = vadd.f32 %v7197, %v7208
          %v7221 = vadd.f32 %v7198, %v7208
          %v7222 = vadd.f32 %v7199, %v7208
          %v7223 = vadd.f32 %v7200, %v7208
          %v7224 = vadd.f32 %v7201, %v7208
          %v7225 = vadd.f32 %v7202, %v7208
          %v7226 = vmax.f32 %v7210, 0.0
          %v7227 = vmax.f32 %v7211, 0.0
          %v7228 = vmax.f32 %v7212, 0.0
          %v7229 = vmax.f32 %v7213, 0.0
          %v7230 = vmax.f32 %v7214, 0.0
          %v7231 = vmax.f32 %v7215, 0.0
          %v7232 = vmax.f32 %v7216, 0.0
          %v7233 = vmax.f32 %v7217, 0.0
          %v7234 = vmax.f32 %v7218, 0.0
          %v7235 = vmax.f32 %v7219, 0.0
          %v7236 = vmax.f32 %v7220, 0.0
          %v7237 = vmax.f32 %v7221, 0.0
          %v7238 = vmax.f32 %v7222, 0.0
          %v7239 = vmax.f32 %v7223, 0.0
          %v7240 = vmax.f32 %v7224, 0.0
          %v7241 = vmax.f32 %v7225, 0.0
          %7242 = vst [vmem:[%s580] sm:$0xff] %v7226
          %7243 = vst [vmem:[%s580 + $0x8] sm:$0xff] %v7227
          %7244 = vst [vmem:[%s580 + $0x10] sm:$0xff] %v7228
          %7245 = vst [vmem:[%s580 + $0x18] sm:$0xff] %v7229
          %7246 = vst [vmem:[%s580 + $0x20] sm:$0xff] %v7230
          %7247 = vst [vmem:[%s580 + $0x28] sm:$0xff] %v7231
          %7248 = vst [vmem:[%s580 + $0x30] sm:$0xff] %v7232
          %7249 = vst [vmem:[%s580 + $0x38] sm:$0xff] %v7233
          %7250 = vst [vmem:[%s580 + $0x40] sm:$0xff] %v7234
          %7251 = vst [vmem:[%s580 + $0x48] sm:$0xff] %v7235
          %7252 = vst [vmem:[%s580 + $0x50] sm:$0xff] %v7236
          %7253 = vst [vmem:[%s580 + $0x58] sm:$0xff] %v7237
          %7254 = vst [vmem:[%s580 + $0x60] sm:$0xff] %v7238
          %7255 = vst [vmem:[%s580 + $0x68] sm:$0xff] %v7239
          %7256 = vst [vmem:[%s580 + $0x70] sm:$0xff] %v7240
          %7257 = vst [vmem:[%s580 + $0x78] sm:$0xff] %v7241
          %v7258 = vld [vmem:[#allocation6] sm:$0xff]
          %v7259 = vld [vmem:[#allocation6 + $0x8] sm:$0xff]
          %v7260 = vld [vmem:[#allocation6 + $0x10] sm:$0xff]
          %v7261 = vld [vmem:[#allocation6 + $0x18] sm:$0xff]
          %v7262 = vld [vmem:[#allocation6 + $0x20] sm:$0xff]
          %v7263 = vld [vmem:[#allocation6 + $0x28] sm:$0xff]
          %v7264 = vld [vmem:[#allocation6 + $0x30] sm:$0xff]
          %v7265 = vld [vmem:[#allocation6 + $0x38] sm:$0xff]
          %v7266 = vld [vmem:[#allocation6 + $0x40] sm:$0xff]
          %v7267 = vld [vmem:[#allocation6 + $0x48] sm:$0xff]
          %v7268 = vld [vmem:[#allocation6 + $0x50] sm:$0xff]
          %v7269 = vld [vmem:[#allocation6 + $0x58] sm:$0xff]
          %v7270 = vld [vmem:[#allocation6 + $0x60] sm:$0xff]
          %v7271 = vld [vmem:[#allocation6 + $0x68] sm:$0xff]
          %v7272 = vld [vmem:[#allocation6 + $0x70] sm:$0xff]
          %v7273 = vld [vmem:[#allocation6 + $0x78] sm:$0xff]
          %v7274 = vld [vmem:[#allocation19] sm:$0x1]
          %v7276 = vlaneseq
          %v7277 = vshrl.u32 %v7276, 7
          %v7278 = vsub.s32 0, %v7277
          %v7279 = vrot.slane %v7274, %v7278
          %v7281 = vadd.f32 %v7258, %v7279
          %v7282 = vadd.f32 %v7259, %v7279
          %v7283 = vadd.f32 %v7260, %v7279
          %v7284 = vadd.f32 %v7261, %v7279
          %v7285 = vadd.f32 %v7262, %v7279
          %v7286 = vadd.f32 %v7263, %v7279
          %v7287 = vadd.f32 %v7264, %v7279
          %v7288 = vadd.f32 %v7265, %v7279
          %v7289 = vadd.f32 %v7266, %v7279
          %v7290 = vadd.f32 %v7267, %v7279
          %v7291 = vadd.f32 %v7268, %v7279
          %v7292 = vadd.f32 %v7269, %v7279
          %v7293 = vadd.f32 %v7270, %v7279
          %v7294 = vadd.f32 %v7271, %v7279
          %v7295 = vadd.f32 %v7272, %v7279
          %v7296 = vadd.f32 %v7273, %v7279
          %v7297 = vmax.f32 %v7281, 0.0
          %v7298 = vmax.f32 %v7282, 0.0
          %v7299 = vmax.f32 %v7283, 0.0
          %v7300 = vmax.f32 %v7284, 0.0
          %v7301 = vmax.f32 %v7285, 0.0
          %v7302 = vmax.f32 %v7286, 0.0
          %v7303 = vmax.f32 %v7287, 0.0
          %v7304 = vmax.f32 %v7288, 0.0
          %v7305 = vmax.f32 %v7289, 0.0
          %v7306 = vmax.f32 %v7290, 0.0
          %v7307 = vmax.f32 %v7291, 0.0
          %v7308 = vmax.f32 %v7292, 0.0
          %v7309 = vmax.f32 %v7293, 0.0
          %v7310 = vmax.f32 %v7294, 0.0
          %v7311 = vmax.f32 %v7295, 0.0
          %v7312 = vmax.f32 %v7296, 0.0
          %7313 = vst [vmem:[%s587] sm:$0xff] %v7297
          %7314 = vst [vmem:[%s587 + $0x8] sm:$0xff] %v7298
          %7315 = vst [vmem:[%s587 + $0x10] sm:$0xff] %v7299
          %7316 = vst [vmem:[%s587 + $0x18] sm:$0xff] %v7300
          %7317 = vst [vmem:[%s587 + $0x20] sm:$0xff] %v7301
          %7318 = vst [vmem:[%s587 + $0x28] sm:$0xff] %v7302
          %7319 = vst [vmem:[%s587 + $0x30] sm:$0xff] %v7303
          %7320 = vst [vmem:[%s587 + $0x38] sm:$0xff] %v7304
          %7321 = vst [vmem:[%s587 + $0x40] sm:$0xff] %v7305
          %7322 = vst [vmem:[%s587 + $0x48] sm:$0xff] %v7306
          %7323 = vst [vmem:[%s587 + $0x50] sm:$0xff] %v7307
          %7324 = vst [vmem:[%s587 + $0x58] sm:$0xff] %v7308
          %7325 = vst [vmem:[%s587 + $0x60] sm:$0xff] %v7309
          %7326 = vst [vmem:[%s587 + $0x68] sm:$0xff] %v7310
          %7327 = vst [vmem:[%s587 + $0x70] sm:$0xff] %v7311
          %7328 = vst [vmem:[%s587 + $0x78] sm:$0xff] %v7312
          %v7329 = vld [vmem:[#allocation7] sm:$0xff]
          %v7330 = vld [vmem:[#allocation7 + $0x8] sm:$0xff]
          %v7331 = vld [vmem:[#allocation7 + $0x10] sm:$0xff]
          %v7332 = vld [vmem:[#allocation7 + $0x18] sm:$0xff]
          %v7333 = vld [vmem:[#allocation7 + $0x20] sm:$0xff]
          %v7334 = vld [vmem:[#allocation7 + $0x28] sm:$0xff]
          %v7335 = vld [vmem:[#allocation7 + $0x30] sm:$0xff]
          %v7336 = vld [vmem:[#allocation7 + $0x38] sm:$0xff]
          %v7337 = vld [vmem:[#allocation7 + $0x40] sm:$0xff]
          %v7338 = vld [vmem:[#allocation7 + $0x48] sm:$0xff]
          %v7339 = vld [vmem:[#allocation7 + $0x50] sm:$0xff]
          %v7340 = vld [vmem:[#allocation7 + $0x58] sm:$0xff]
          %v7341 = vld [vmem:[#allocation7 + $0x60] sm:$0xff]
          %v7342 = vld [vmem:[#allocation7 + $0x68] sm:$0xff]
          %v7343 = vld [vmem:[#allocation7 + $0x70] sm:$0xff]
          %v7344 = vld [vmem:[#allocation7 + $0x78] sm:$0xff]
          %v7345 = vld [vmem:[#allocation20] sm:$0x1]
          %v7347 = vlaneseq
          %v7348 = vshrl.u32 %v7347, 7
          %v7349 = vsub.s32 0, %v7348
          %v7350 = vrot.slane %v7345, %v7349
          %v7352 = vadd.f32 %v7329, %v7350
          %v7353 = vadd.f32 %v7330, %v7350
          %v7354 = vadd.f32 %v7331, %v7350
          %v7355 = vadd.f32 %v7332, %v7350
          %v7356 = vadd.f32 %v7333, %v7350
          %v7357 = vadd.f32 %v7334, %v7350
          %v7358 = vadd.f32 %v7335, %v7350
          %v7359 = vadd.f32 %v7336, %v7350
          %v7360 = vadd.f32 %v7337, %v7350
          %v7361 = vadd.f32 %v7338, %v7350
          %v7362 = vadd.f32 %v7339, %v7350
          %v7363 = vadd.f32 %v7340, %v7350
          %v7364 = vadd.f32 %v7341, %v7350
          %v7365 = vadd.f32 %v7342, %v7350
          %v7366 = vadd.f32 %v7343, %v7350
          %v7367 = vadd.f32 %v7344, %v7350
          %v7368 = vmax.f32 %v7352, 0.0
          %v7369 = vmax.f32 %v7353, 0.0
          %v7370 = vmax.f32 %v7354, 0.0
          %v7371 = vmax.f32 %v7355, 0.0
          %v7372 = vmax.f32 %v7356, 0.0
          %v7373 = vmax.f32 %v7357, 0.0
          %v7374 = vmax.f32 %v7358, 0.0
          %v7375 = vmax.f32 %v7359, 0.0
          %v7376 = vmax.f32 %v7360, 0.0
          %v7377 = vmax.f32 %v7361, 0.0
          %v7378 = vmax.f32 %v7362, 0.0
          %v7379 = vmax.f32 %v7363, 0.0
          %v7380 = vmax.f32 %v7364, 0.0
          %v7381 = vmax.f32 %v7365, 0.0
          %v7382 = vmax.f32 %v7366, 0.0
          %v7383 = vmax.f32 %v7367, 0.0
          %7384 = vst [vmem:[%s594] sm:$0xff] %v7368
          %7385 = vst [vmem:[%s594 + $0x8] sm:$0xff] %v7369
          %7386 = vst [vmem:[%s594 + $0x10] sm:$0xff] %v7370
          %7387 = vst [vmem:[%s594 + $0x18] sm:$0xff] %v7371
          %7388 = vst [vmem:[%s594 + $0x20] sm:$0xff] %v7372
          %7389 = vst [vmem:[%s594 + $0x28] sm:$0xff] %v7373
          %7390 = vst [vmem:[%s594 + $0x30] sm:$0xff] %v7374
          %7391 = vst [vmem:[%s594 + $0x38] sm:$0xff] %v7375
          %7392 = vst [vmem:[%s594 + $0x40] sm:$0xff] %v7376
          %7393 = vst [vmem:[%s594 + $0x48] sm:$0xff] %v7377
          %7394 = vst [vmem:[%s594 + $0x50] sm:$0xff] %v7378
          %7395 = vst [vmem:[%s594 + $0x58] sm:$0xff] %v7379
          %7396 = vst [vmem:[%s594 + $0x60] sm:$0xff] %v7380
          %7397 = vst [vmem:[%s594 + $0x68] sm:$0xff] %v7381
          %7398 = vst [vmem:[%s594 + $0x70] sm:$0xff] %v7382
          %7399 = vst [vmem:[%s594 + $0x78] sm:$0xff] %v7383
        $region104: #{tpu_custom_call.1} parent=51 // pred_fallthru
          _
        %s7400 = sand.u32 %s256, 1
        %s7401 = scalar_lea.sflag [#allocation10], %s7400
        %s7402 = sand.u32 %s256, 1
        %s7403 = smul.addr %s7402, 128
        %s7404 = scalar_lea.vmem [#allocation22], %s7403
        %s7405 = sand.u32 %s39, 1
        %s7406 = scalar_lea.sflag [#allocation24], %s7405
        %s7407 = sand.u32 %s284, 1
        %s7408 = smul.addr %s7407, 128
        %s7409 = scalar_lea.vmem [#allocation23], %s7408
        %s7410 = sand.u32 %s39, 1
        %s7411 = scalar_lea.sflag [#allocation24], %s7410
        %s7412 = sand.u32 %s312, 1
        %s7413 = smul.addr %s7412, 128
        %s7414 = scalar_lea.vmem [#allocation25], %s7413
        %s7415 = sand.u32 %s39, 1
        %s7416 = scalar_lea.sflag [#allocation27], %s7415
        %s7417 = sand.u32 %s340, 1
        %s7418 = smul.addr %s7417, 128
        %s7419 = scalar_lea.vmem [#allocation26], %s7418
        %s7420 = sand.u32 %s39, 1
        %s7421 = scalar_lea.sflag [#allocation27], %s7420
        %s7422 = sand.u32 %s372, 1
        %s7423 = scalar_lea.vmem [#allocation28], %s7422
        // Predicated region
        $region105: #{tpu_custom_call.1} parent=51 // pred_check
          %p7424 = pneg %p266
        $region106: #{tpu_custom_call.1} parent=51 // pred_check_branch
          %7426 = sbr.rel (%p7424) target = $region108
        $region107: #{tpu_custom_call.1} parent=51 // pred_region
          %s7427 = smul.u32 16, %s45
          %s7429 = ssub.s32 2048, 2048
          %7430 = vsyncadd %s7401, %s7429
          %s7431 = smul.addr %s44, 32
          %s7432 = sadd.s32 %s7427, %s7431
          %s7433 = smul.addr %s7432, 128
          %s7434 = scalar_lea.hbm %s9, %s7433
          %s7435 = sshll.u32 %s7404, 4
          %s7436 = int_to_ptr.vmem [resolvable:$true] %s7435
          %7441 = dma.vmem_to_hbm [thread:$0]  %s7436, 2048, %s7434, %s7401, 128, 128, 8
        $region108: #{tpu_custom_call.1} parent=51 // pred_fallthru
          _
        // Predicated region
        $region109: #{tpu_custom_call.1} parent=51 // pred_check
          %p7442 = pneg %p294
        $region110: #{tpu_custom_call.1} parent=51 // pred_check_branch
          %7444 = sbr.rel (%p7442) target = $region112
        $region111: #{tpu_custom_call.1} parent=51 // pred_region
          %s7445 = smul.u32 16, %s45
          %s7447 = ssub.s32 2048, 2048
          %7448 = vsyncadd %s7406, %s7447
          %s7449 = smul.addr %s44, 32
          %s7450 = sadd.s32 %s7445, %s7449
          %s7451 = smul.addr %s7450, 128
          %s7452 = scalar_lea.hbm %s10, %s7451
          %s7453 = sshll.u32 %s7409, 4
          %s7454 = int_to_ptr.vmem [resolvable:$true] %s7453
          %7459 = dma.vmem_to_hbm [thread:$0]  %s7454, 2048, %s7452, %s7406, 128, 128, 8
        $region112: #{tpu_custom_call.1} parent=51 // pred_fallthru
          _
        // Predicated region
        $region113: #{tpu_custom_call.1} parent=51 // pred_check
          %p7460 = pneg %p322
        $region114: #{tpu_custom_call.1} parent=51 // pred_check_branch
          %7462 = sbr.rel (%p7460) target = $region116
        $region115: #{tpu_custom_call.1} parent=51 // pred_region
          %s7463 = smul.u32 16, %s45
          %s7465 = ssub.s32 2048, 2048
          %7466 = vsyncadd %s7411, %s7465
          %s7467 = smul.addr %s44, 32
          %s7468 = sadd.s32 %s7463, %s7467
          %s7469 = smul.addr %s7468, 128
          %s7470 = scalar_lea.hbm %s11, %s7469
          %s7471 = sshll.u32 %s7414, 4
          %s7472 = int_to_ptr.vmem [resolvable:$true] %s7471
          %7477 = dma.vmem_to_hbm [thread:$0]  %s7472, 2048, %s7470, %s7411, 128, 128, 8
        $region116: #{tpu_custom_call.1} parent=51 // pred_fallthru
          _
        // Predicated region
        $region117: #{tpu_custom_call.1} parent=51 // pred_check
          %p7478 = pneg %p350
        $region118: #{tpu_custom_call.1} parent=51 // pred_check_branch
          %7480 = sbr.rel (%p7478) target = $region120
        $region119: #{tpu_custom_call.1} parent=51 // pred_region
          %s7481 = smul.u32 16, %s45
          %s7483 = ssub.s32 2048, 2048
          %7484 = vsyncadd %s7416, %s7483
          %s7485 = smul.addr %s44, 32
          %s7486 = sadd.s32 %s7481, %s7485
          %s7487 = smul.addr %s7486, 128
          %s7488 = scalar_lea.hbm %s12, %s7487
          %s7489 = sshll.u32 %s7419, 4
          %s7490 = int_to_ptr.vmem [resolvable:$true] %s7489
          %7495 = dma.vmem_to_hbm [thread:$0]  %s7490, 2048, %s7488, %s7416, 128, 128, 8
        $region120: #{tpu_custom_call.1} parent=51 // pred_fallthru
          _
        // Predicated region
        $region121: #{tpu_custom_call.1} parent=51 // pred_check
          %p7496 = pneg %p382
        $region122: #{tpu_custom_call.1} parent=51 // pred_check_branch
          %7498 = sbr.rel (%p7496) target = $region124
        $region123: #{tpu_custom_call.1} parent=51 // pred_region
          %s7499 = smul.u32 %s44, 2
          %s7500 = sadd.s32 %s7499, %s45
          %s7502 = ssub.s32 16, 16
          %7503 = vsyncadd %s7421, %s7502
          %s7504 = sadd.s32 %s46, %s7500
          %s7505 = smul.addr %s7504, 16
          %s7506 = scalar_lea.hbm %s13, %s7505
          %s7508 = sshll.u32 %s7423, 4
          %s7509 = int_to_ptr.vmem [resolvable:$true] %s7508
          %7511 = dma.vmem_to_hbm [thread:$0]  %s7509, 16, %s7506, %s7421
        $region124: #{tpu_custom_call.1} parent=51 // pred_fallthru
          _
      $region52: #{tpu_custom_call.1} parent=5 // pred_fallthru
        _
      %p7512 = scmp.le.s32.totalorder 2, %s34
      // Predicated region
      $region125: #{tpu_custom_call.1} parent=5 // pred_check
        %p7513 = pneg %p7512
      $region126: #{tpu_custom_call.1} parent=5 // pred_check_branch
        %7515 = sbr.rel (%p7513) target = $region128
      $region127: #{tpu_custom_call.1} parent=5 // pred_region
        %s7516 = ssub.s32 %s34, 2
        // Predicated region
        $region129: #{tpu_custom_call.1} parent=127 // pred_check
          %p7517 = pneg %p272
        $region130: #{tpu_custom_call.1} parent=127 // pred_check_branch
          %7519 = sbr.rel (%p7517) target = $region132
        $region131: #{tpu_custom_call.1} parent=127 // pred_region
          %s7520 = sand.u32 %s257, 1
          %s7521 = scalar_lea.sflag [#allocation10], %s7520
          %s7522 = sand.u32 %s257, 1
          %s7523 = smul.addr %s7522, 128
          %s7524 = scalar_lea.vmem [#allocation22], %s7523
          %7525 = dma.done %s7521, 2048
        $region132: #{tpu_custom_call.1} parent=127 // pred_fallthru
          _
        // Predicated region
        $region133: #{tpu_custom_call.1} parent=127 // pred_check
          %p7526 = pneg %p300
        $region134: #{tpu_custom_call.1} parent=127 // pred_check_branch
          %7528 = sbr.rel (%p7526) target = $region136
        $region135: #{tpu_custom_call.1} parent=127 // pred_region
          %s7529 = sand.u32 %s40, 1
          %s7530 = scalar_lea.sflag [#allocation24], %s7529
          %s7531 = sand.u32 %s285, 1
          %s7532 = smul.addr %s7531, 128
          %s7533 = scalar_lea.vmem [#allocation23], %s7532
          %7534 = dma.done %s7530, 2048
        $region136: #{tpu_custom_call.1} parent=127 // pred_fallthru
          _
        // Predicated region
        $region137: #{tpu_custom_call.1} parent=127 // pred_check
          %p7535 = pneg %p328
        $region138: #{tpu_custom_call.1} parent=127 // pred_check_branch
          %7537 = sbr.rel (%p7535) target = $region140
        $region139: #{tpu_custom_call.1} parent=127 // pred_region
          %s7538 = sand.u32 %s40, 1
          %s7539 = scalar_lea.sflag [#allocation24], %s7538
          %s7540 = sand.u32 %s313, 1
          %s7541 = smul.addr %s7540, 128
          %s7542 = scalar_lea.vmem [#allocation25], %s7541
          %7543 = dma.done %s7539, 2048
        $region140: #{tpu_custom_call.1} parent=127 // pred_fallthru
          _
        // Predicated region
        $region141: #{tpu_custom_call.1} parent=127 // pred_check
          %p7544 = pneg %p356
        $region142: #{tpu_custom_call.1} parent=127 // pred_check_branch
          %7546 = sbr.rel (%p7544) target = $region144
        $region143: #{tpu_custom_call.1} parent=127 // pred_region
          %s7547 = sand.u32 %s40, 1
          %s7548 = scalar_lea.sflag [#allocation27], %s7547
          %s7549 = sand.u32 %s341, 1
          %s7550 = smul.addr %s7549, 128
          %s7551 = scalar_lea.vmem [#allocation26], %s7550
          %7552 = dma.done %s7548, 2048
        $region144: #{tpu_custom_call.1} parent=127 // pred_fallthru
          _
        // Predicated region
        $region145: #{tpu_custom_call.1} parent=127 // pred_check
          %p7553 = pneg %p388
        $region146: #{tpu_custom_call.1} parent=127 // pred_check_branch
          %7555 = sbr.rel (%p7553) target = $region148
        $region147: #{tpu_custom_call.1} parent=127 // pred_region
          %s7556 = sand.u32 %s40, 1
          %s7557 = scalar_lea.sflag [#allocation27], %s7556
          %s7558 = sand.u32 %s373, 1
          %s7559 = scalar_lea.vmem [#allocation28], %s7558
          %7560 = dma.done %s7557, 16
        $region148: #{tpu_custom_call.1} parent=127 // pred_fallthru
          _
      $region128: #{tpu_custom_call.1} parent=5 // pred_fallthru
        _
    $region6: #{tpu_custom_call.1} parent=1 // loop_footer
      %s38 = sadd.s32 1, %s34
    $region7: #{tpu_custom_call.1} parent=1 // loop_footer_branch
      %33 = sbr.rel target = $region3
    $region8: #{tpu_custom_call.1} parent=1 // loop_exit
      _
    %7561 = vsyncpa [#allocation9], 1
    %s7562 = scalar_lea.sflag [#allocation9], 1
    %7563 = vsyncpa %s7562, 1
    %7564 = vsyncpa [#allocation12], 1
    %7565 = vsyncpa [#allocation15], 1
    %7566 = vsyncpa [#allocation18], 1
    %7567 = vsyncpa [#allocation21], 1
    %7568 = vsyncpa [#allocation10], 1
    %s7569 = scalar_lea.sflag [#allocation10], 1
    %7570 = vsyncpa %s7569, 1
    %7571 = vsyncpa [#allocation24], 1
    %s7572 = scalar_lea.sflag [#allocation24], 1
    %7573 = vsyncpa %s7572, 1
    %7574 = vsyncpa [#allocation27], 1
    %s7575 = scalar_lea.sflag [#allocation27], 1
    %7576 = vsyncpa %s7575, 1
  %7577 = vsyncmov [#allocation3]
  %s7578 = vpop.sfrf %7577
  %p7579 = scmp.eq.s32.totalorder %s7578, 0
  %p7580 = pneg %p7579
  %7582 = shalt.err (%p7580)
  %s7583 = scalar_lea.sflag [#allocation3], 1
  %7584 = vsyncmov %s7583
  %s7585 = vpop.sfrf %7584
  %p7586 = scmp.eq.s32.totalorder %s7585, 0
  %p7587 = pneg %p7586
  %7589 = shalt.err (%p7587)

</llo_original>
